<compile_context>
chip_gen: v5e
topology: v5e:2x2
jax: 0.10.0
libtpu: 0.0.40
codegen_flags: <defaults>
</compile_context>

<pallas_src>
import math
import functools

import jax
import jax.numpy as jnp
from jax.experimental import pallas as pl
from jax.experimental.pallas import tpu as pltpu


_VMEM_LIMIT = 48 * 1024 * 1024  # conservative for v7x (64 MiB physical VMEM)


def _largest_divisor_leq(n, cap):
    cap = int(max(1, min(cap, n)))
    for d in range(cap, 0, -1):
        if n % d == 0:
            return d
    return n


def _conv_row_tile(H, W, C):
    # Keep per-step im2col patch + padded tile + in/out blocks well inside VMEM.
    budget = 6 * 1024 * 1024
    per_row = (9 * W * C + (W + 2) * C + 4 * W * C) * 4
    return _largest_divisor_leq(H, budget // max(per_row, 1))


def _tconv_row_tile(Ht, Wt, C, K):
    budget = 4 * 1024 * 1024
    per_row = (Wt * C + Wt * K * C) * 4
    return _largest_divisor_leq(Ht, budget // max(per_row, 1))


# ----------------------------------------------------------------------------
# Kernel 1: ConvTranspose2d (K == stride) fused with the pixel shuffle.
# Output array is (B, Ht, K, Wt, K*C); a free contiguous reshape gives NHWC.
# ----------------------------------------------------------------------------
def _tconv_kernel_factory(Tht, Wt, C, K):
    def kernel(x_ref, w_ref, b_ref, o_ref):
        x = x_ref[0].reshape(Tht * Wt, C)                     # (tokens, Cin)
        y = jnp.dot(x, w_ref[0], preferred_element_type=jnp.float32)
        y = y + b_ref[...]                                    # (tokens, K*C)
        o_ref[...] = y.reshape(1, Tht, 1, Wt, K * C).astype(o_ref.dtype)
    return kernel


def tconv_pixelshuffle(x_tok, wt, bias, K):
    # x_tok: (B, Ht, Wt, C) tokens in NHWC; wt: torch layout (Cin, Cout, K, K).
    B, Ht, Wt, C = x_tok.shape
    # w_r[ky, ci, kx*C + co] = wt[ci, co, ky, kx]
    w_r = jnp.transpose(wt, (2, 0, 3, 1)).reshape(K, C, K * C)
    b_r = jnp.tile(bias, K).reshape(1, K * C)                 # [kx*C + co]

    Tht = _tconv_row_tile(Ht, Wt, C, K)
    Tt = Ht // Tht

    y = pl.pallas_call(
        _tconv_kernel_factory(Tht, Wt, C, K),
        out_shape=jax.ShapeDtypeStruct((B, Ht, K, Wt, K * C), x_tok.dtype),
        grid=(B, Tt, K),
        in_specs=[
            # token block is re-used across the ky axis (index_map ignores ky)
            pl.BlockSpec((1, Tht, Wt, C), lambda b, t, ky: (b, t, 0, 0)),
            pl.BlockSpec((1, C, K * C), lambda b, t, ky: (ky, 0, 0)),
            pl.BlockSpec((1, K * C), lambda b, t, ky: (0, 0)),
        ],
        out_specs=pl.BlockSpec((1, Tht, 1, Wt, K * C),
                               lambda b, t, ky: (b, t, ky, 0, 0)),
        compiler_params=pltpu.CompilerParams(
            dimension_semantics=("parallel", "parallel", "parallel"),
            vmem_limit_bytes=_VMEM_LIMIT),
    )(x_tok, w_r, b_r)
    # contiguous reshapes only (no relayout): (B,Ht,K,Wt,K,C) -> (B,Ht*K,Wt*K,C)
    return y.reshape(B, Ht, K, Wt, K, C).reshape(B, Ht * K, Wt * K, C)


# ----------------------------------------------------------------------------
# Kernel 2: 3x3 conv (padding=1), NHWC, row-tiled with halo, im2col + one dot.
# Optional ReLU and fused residual add.
# ----------------------------------------------------------------------------
def _conv3x3_kernel_factory(Th, W, Cin, Cout, T, relu, with_res):
    tiled = T > 1

    def kernel(*refs):
        i = 0
        x_ref = refs[i]; i += 1
        if tiled:
            up_ref, dn_ref = refs[i], refs[i + 1]; i += 2
        w_ref, b_ref = refs[i], refs[i + 1]; i += 2
        if with_res:
            res_ref = refs[i]; i += 1
        o_ref = refs[i]
        xp_ref = refs[i + 1]
        patch_ref = refs[i + 2]

        # Build zero-padded tile (row halo from neighbours, columns zero).
        xp_ref[...] = jnp.zeros((Th + 2, W + 2, Cin), jnp.float32)
        xp_ref[1:Th + 1, 1:W + 1, :] = x_ref[0].astype(jnp.float32)
        if tiled:
            t = pl.program_id(1)
            top_ok = (t > 0).astype(jnp.float32)
            bot_ok = (t < T - 1).astype(jnp.float32)
            xp_ref[0:1, 1:W + 1, :] = up_ref[0].astype(jnp.float32) * top_ok
            xp_ref[Th + 1:Th + 2, 1:W + 1, :] = (
                dn_ref[0].astype(jnp.float32) * bot_ok)
        xp = xp_ref[...]

        # im2col: (Th*W, 9*Cin) patch built once, single K-packed MXU dot.
        for ky in range(3):
            for kx in range(3):
                idx = ky * 3 + kx
                patch_ref[:, idx * Cin:(idx + 1) * Cin] = (
                    xp[ky:ky + Th, kx:kx + W, :].reshape(Th * W, Cin))

        acc = jnp.dot(patch_ref[...], w_ref[...],
                      preferred_element_type=jnp.float32)
        acc = acc + b_ref[...]
        if relu:
            acc = jnp.maximum(acc, 0.0)
        acc = acc.reshape(Th, W, Cout)
        if with_res:
            acc = acc + res_ref[0].astype(jnp.float32)
        o_ref[0] = acc.astype(o_ref.dtype)

    return kernel


def conv3x3(x, w, b, *, relu=False, residual=None, row_tile=None):
    # x: (B, H, W, Cin) NHWC; w: (3, 3, Cin, Cout); b: (Cout,)
    B, H, W, Cin = x.shape
    Cout = w.shape[-1]
    Th = row_tile if row_tile is not None else _conv_row_tile(H, W, Cin)
    assert H % Th == 0, (H, Th)
    T = H // Th
    tiled = T > 1

    w9 = w.reshape(9 * Cin, Cout)           # rows ordered (ky, kx, ci)
    b2 = b.reshape(1, Cout)

    in_specs = [pl.BlockSpec((1, Th, W, Cin), lambda bi, t: (bi, t, 0, 0))]
    args = [x]
    if tiled:
        in_specs.append(pl.BlockSpec(
            (1, 1, W, Cin),
            lambda bi, t: (bi, jnp.maximum(t * Th - 1, 0), 0, 0)))
        in_specs.append(pl.BlockSpec(
            (1, 1, W, Cin),
            lambda bi, t: (bi, jnp.minimum((t + 1) * Th, H - 1), 0, 0)))
        args += [x, x]
    in_specs += [pl.BlockSpec((9 * Cin, Cout), lambda bi, t: (0, 0)),
                 pl.BlockSpec((1, Cout), lambda bi, t: (0, 0))]
    args += [w9, b2]
    if residual is not None:
        in_specs.append(pl.BlockSpec((1, Th, W, Cout),
                                     lambda bi, t: (bi, t, 0, 0)))
        args.append(residual)

    return pl.pallas_call(
        _conv3x3_kernel_factory(Th, W, Cin, Cout, T, relu, residual is not None),
        out_shape=jax.ShapeDtypeStruct((B, H, W, Cout), x.dtype),
        grid=(B, T),
        in_specs=in_specs,
        out_specs=pl.BlockSpec((1, Th, W, Cout), lambda bi, t: (bi, t, 0, 0)),
        scratch_shapes=[pltpu.VMEM((Th + 2, W + 2, Cin), jnp.float32),
                        pltpu.VMEM((Th * W, 9 * Cin), jnp.float32)],
        compiler_params=pltpu.CompilerParams(
            dimension_semantics=("parallel", "parallel"),
            vmem_limit_bytes=_VMEM_LIMIT),
    )(*args)


# ----------------------------------------------------------------------------
# Kernel 3: fused spectral-attention residual block (+ optional global skip):
#   u = conv1x1(relu(conv1x1(x)))
#   g = sigmoid(relu(mean_hw(u) @ Wd + bd) @ Wu + bu)
#   out = x + u * g  [+ skip]
# ----------------------------------------------------------------------------
def _spectral_kernel_factory(H, W, C, with_skip):
    def kernel(*refs):
        if with_skip:
            (x_ref, w1_ref, b1_ref, w2_ref, b2_ref,
             wd_ref, bd_ref, wu_ref, bu_ref, skip_ref, o_ref) = refs
        else:
            (x_ref, w1_ref, b1_ref, w2_ref, b2_ref,
             wd_ref, bd_ref, wu_ref, bu_ref, o_ref) = refs
            skip_ref = None

        x = x_ref[0].reshape(H * W, C).astype(jnp.float32)
        u = jnp.dot(x, w1_ref[...], preferred_element_type=jnp.float32)
        u = jnp.maximum(u + b1_ref[...], 0.0)
        u = jnp.dot(u, w2_ref[...], preferred_element_type=jnp.float32)
        u = u + b2_ref[...]

        pooled = jnp.mean(u, axis=0, keepdims=True)                 # (1, C)
        g = jnp.dot(pooled, wd_ref[...], preferred_element_type=jnp.float32)
        g = jnp.maximum(g + bd_ref[...], 0.0)                       # (1, Crp)
        g = jnp.dot(g, wu_ref[...], preferred_element_type=jnp.float32)
        g = jax.nn.sigmoid(g + bu_ref[...])                         # (1, C)

        out = x + u * g
        if with_skip:
            out = out + skip_ref[0].reshape(H * W, C).astype(jnp.float32)
        o_ref[0] = out.reshape(H, W, C).astype(o_ref.dtype)

    return kernel


def spectral_ca_block(h, w1, b1, w2, b2, wd, bd, wu, bu, *, skip=None):
    # h, skip: (B, H, W, C); w1/w2: (C, C); wd: (C, Cr); wu: (Cr, C)
    B, H, W, C = h.shape
    Cr = wd.shape[1]
    Crp = max(8, ((Cr + 7) // 8) * 8)
    # Zero-padded squeeze width: padded Wu rows are zero -> exact semantics.
    wd_p = jnp.pad(wd, ((0, 0), (0, Crp - Cr)))
    bd_p = jnp.pad(bd, (0, Crp - Cr)).reshape(1, Crp)
    wu_p = jnp.pad(wu, ((0, Crp - Cr), (0, 0)))
    b1_2 = b1.reshape(1, C)
    b2_2 = b2.reshape(1, C)
    bu_2 = bu.reshape(1, C)
    with_skip = skip is not None

    in_specs = [
        pl.BlockSpec((1, H, W, C), lambda b: (b, 0, 0, 0)),
        pl.BlockSpec((C, C), lambda b: (0, 0)),
        pl.BlockSpec((1, C), lambda b: (0, 0)),
        pl.BlockSpec((C, C), lambda b: (0, 0)),
        pl.BlockSpec((1, C), lambda b: (0, 0)),
        pl.BlockSpec((C, Crp), lambda b: (0, 0)),
        pl.BlockSpec((1, Crp), lambda b: (0, 0)),
        pl.BlockSpec((Crp, C), lambda b: (0, 0)),
        pl.BlockSpec((1, C), lambda b: (0, 0)),
    ]
    args = [h, w1, b1_2, w2, b2_2, wd_p, bd_p, wu_p, bu_2]
    if with_skip:
        in_specs.append(pl.BlockSpec((1, H, W, C), lambda b: (b, 0, 0, 0)))
        args.append(skip)

    return pl.pallas_call(
        _spectral_kernel_factory(H, W, C, with_skip),
        out_shape=jax.ShapeDtypeStruct((B, H, W, C), h.dtype),
        grid=(B,),
        in_specs=in_specs,
        out_specs=pl.BlockSpec((1, H, W, C), lambda b: (b, 0, 0, 0)),
        compiler_params=pltpu.CompilerParams(
            dimension_semantics=("parallel",),
            vmem_limit_bytes=_VMEM_LIMIT),
    )(*args)


# ----------------------------------------------------------------------------
# Parameter init (deterministic, synthetic).
# ----------------------------------------------------------------------------
def init_decoder_params(key, in_feats, n_blocks, kernel_size, reduction=16):
    C, K = in_feats, kernel_size
    Cr = max(C // reduction, 1)
    keys = iter(jax.random.split(key, 2 + n_blocks * 12))

    def nrm(shape, scale):
        return scale * jax.random.normal(next(keys), shape, jnp.float32)

    params = {
        # ConvTranspose2d weight, torch layout (C_in, C_out, K, K)
        "tconv_w": nrm((C, C, K, K), 1.0 / math.sqrt(C * K * K)),
        "tconv_b": nrm((C,), 0.01),
        "blocks": [],
    }
    for _ in range(n_blocks):
        params["blocks"].append({
            "spa_w1": nrm((3, 3, C, C), 1.0 / math.sqrt(9 * C)),
            "spa_b1": nrm((C,), 0.01),
            "spa_w2": nrm((3, 3, C, C), 1.0 / math.sqrt(9 * C)),
            "spa_b2": nrm((C,), 0.01),
            "spc_w1": nrm((C, C), 1.0 / math.sqrt(C)),
            "spc_b1": nrm((C,), 0.01),
            "spc_w2": nrm((C, C), 1.0 / math.sqrt(C)),
            "spc_b2": nrm((C,), 0.01),
            "ca_wd": nrm((C, Cr), 1.0 / math.sqrt(C)),
            "ca_bd": nrm((Cr,), 0.01),
            "ca_wu": nrm((Cr, C), 1.0 / math.sqrt(Cr)),
            "ca_bu": nrm((C,), 0.01),
        })
    return params


# ----------------------------------------------------------------------------
# Decoder forward: tokens -> tconv(+pixel shuffle) -> SSPN -> NCHW output.
# ----------------------------------------------------------------------------
def decoder_forward(params, x, *, kernel_size, stride, row_tile=None):
    # x: (B, N, C) tokens; N must be a perfect square.
    B, N, C = x.shape
    Ht = int(math.isqrt(N))
    Wt = Ht
    assert Ht * Wt == N, "token count must be a perfect square"
    K, S = kernel_size, stride
    # TODO(synk): general ConvTranspose2d with kernel_size != stride
    # (overlapping output taps) is not implemented; only the K == S case.
    assert K == S, "transpose_conv implemented for kernel_size == stride"
    assert params["blocks"], "n_blocks must be >= 1"

    x_tok = x.reshape(B, Ht, Wt, C)                              # NHWC tokens
    y = tconv_pixelshuffle(x_tok, params["tconv_w"], params["tconv_b"], K)

    skip = y
    h = y
    n_blk = len(params["blocks"])
    for bi, blk in enumerate(params["blocks"]):
        # SpatialResBlock: h + conv3x3(relu(conv3x3(h)))   (res_scale = 1)
        t = conv3x3(h, blk["spa_w1"], blk["spa_b1"], relu=True,
                    row_tile=row_tile)
        h = conv3x3(t, blk["spa_w2"], blk["spa_b2"], residual=h,
                    row_tile=row_tile)
        # SpectralAttentionResBlock fused (1x1, relu, 1x1, CA, +h); the SSPN
        # global residual (+skip) is folded into the last block's kernel.
        h = spectral_ca_block(
            h, blk["spc_w1"], blk["spc_b1"], blk["spc_w2"], blk["spc_b2"],
            blk["ca_wd"], blk["ca_bd"], blk["ca_wu"], blk["ca_bu"],
            skip=skip if bi == n_blk - 1 else None)

    # Convert to NCHW to match the PyTorch module's output layout.
    return h.transpose(0, 3, 1, 2)


if __name__ == "__main__":
    in_feats = 32      # channels (>= 16 so channel-attention reduction works)
    n_blocks = 2
    kernel_size = 2
    stride = 2
    B, N = 2, 64       # tokens -> 8x8 spatial grid -> 16x16 after upsample

    key = jax.random.PRNGKey(0)
    kx_, kp_ = jax.random.split(key)
    x = jax.random.normal(kx_, (B, N, in_feats), jnp.float32)
    params = init_decoder_params(kp_, in_feats, n_blocks, kernel_size)

    # row_tile=8 -> 2 row tiles per image so the halo path is exercised.
    fwd = jax.jit(functools.partial(decoder_forward, kernel_size=kernel_size,
                                    stride=stride, row_tile=8))
    out = jax.block_until_ready(fwd(params, x))

    H_out = int(math.isqrt(N)) * stride
    assert out.shape == (B, in_feats, H_out, H_out), out.shape
    assert bool(jnp.all(jnp.isfinite(out)))
    print("KERNEL_OK")
</pallas_src>

<mosaic_0001>
module attributes {stable_mosaic.version = 11 : i64} {
  func.func @kernel(%arg0: i32, %arg1: i32, %arg2: i32, %arg3: memref<1x8x8x32xf32, #tpu.memory_space<vmem>>, %arg4: memref<1x32x64xf32, #tpu.memory_space<vmem>>, %arg5: memref<1x64xf32, #tpu.memory_space<vmem>>, %arg6: memref<1x8x1x8x64xf32, #tpu.memory_space<vmem>>) attributes {dimension_semantics = [#tpu.dimension_semantics<parallel>, #tpu.dimension_semantics<parallel>, #tpu.dimension_semantics<parallel>], iteration_bounds = array<i64: 2, 1, 2>, scalar_prefetch = 0 : i64, scratch_operands = 0 : i64, tpu.core_type = #tpu.core_type<tc>, window_params = [{transform_indices = @transform_0, window_bounds = array<i64: 1, 8, 8, 32>}, {transform_indices = @transform_1, window_bounds = array<i64: 1, 32, 64>}, {pipeline_mode = #tpu.pipeline_mode<synchronous>, transform_indices = @transform_2, window_bounds = array<i64: 1, 64>}, {transform_indices = @transform_3, window_bounds = array<i64: 1, 8, 1, 8, 64>}]} {
    %c0 = arith.constant 0 : index
    %c0_0 = arith.constant 0 : index
    %c0_1 = arith.constant 0 : index
    %c0_2 = arith.constant 0 : index
    %0 = vector.load %arg3[%c0, %c0_0, %c0_1, %c0_2] : memref<1x8x8x32xf32, #tpu.memory_space<vmem>>, vector<1x8x8x32xf32>
    %1 = vector.shape_cast %0 : vector<1x8x8x32xf32> to vector<8x8x32xf32>
    %2 = vector.shape_cast %1 : vector<8x8x32xf32> to vector<64x32xf32>
    %c0_3 = arith.constant 0 : index
    %c0_4 = arith.constant 0 : index
    %c0_5 = arith.constant 0 : index
    %3 = vector.load %arg4[%c0_3, %c0_4, %c0_5] : memref<1x32x64xf32, #tpu.memory_space<vmem>>, vector<1x32x64xf32>
    %4 = vector.shape_cast %3 : vector<1x32x64xf32> to vector<32x64xf32>
    %cst = arith.constant dense<0.000000e+00> : vector<64x64xf32>
    %5 = tpu.matmul %2, %4, %cst {dimension_numbers = #tpu.dot_dimension_numbers<[1], [0], [0], [1], [0, 0, 1, 1], [], []>} : vector<64x32xf32>, vector<32x64xf32>, vector<64x64xf32> -> vector<64x64xf32>
    %c0_6 = arith.constant 0 : index
    %c0_7 = arith.constant 0 : index
    %6 = vector.load %arg5[%c0_6, %c0_7] : memref<1x64xf32, #tpu.memory_space<vmem>>, vector<1x64xf32>
    %7 = vector.broadcast %6 : vector<1x64xf32> to vector<64x64xf32>
    %8 = arith.addf %5, %7 : vector<64x64xf32>
    %9 = vector.shape_cast %8 : vector<64x64xf32> to vector<1x8x1x8x64xf32>
    %c0_8 = arith.constant 0 : index
    %c0_9 = arith.constant 0 : index
    %c0_10 = arith.constant 0 : index
    %c0_11 = arith.constant 0 : index
    %c0_12 = arith.constant 0 : index
    %10 = vector.load %arg6[%c0_8, %c0_9, %c0_10, %c0_11, %c0_12] : memref<1x8x1x8x64xf32, #tpu.memory_space<vmem>>, vector<1x8x1x8x64xf32>
    tpu.vector_store %arg6[%c0_8, %c0_9, %c0_10, %c0_11, %c0_12], %9 {strides = array<i32>} : memref<1x8x1x8x64xf32, #tpu.memory_space<vmem>>, vector<1x8x1x8x64xf32>,
    return
  }
  func.func @transform_0(%arg0: i32, %arg1: i32, %arg2: i32) -> (i32, i32, i32, i32) {
    %c0_i32 = arith.constant 0 : i32
    %c0_i32_0 = arith.constant 0 : i32
    %c0_i32_1 = arith.constant 0 : i32
    return %arg0, %arg1, %c0_i32, %c0_i32_0 : i32, i32, i32, i32
  }
  func.func @transform_1(%arg0: i32, %arg1: i32, %arg2: i32) -> (i32, i32, i32) {
    %c0_i32 = arith.constant 0 : i32
    %c0_i32_0 = arith.constant 0 : i32
    %c0_i32_1 = arith.constant 0 : i32
    return %arg2, %c0_i32, %c0_i32_0 : i32, i32, i32
  }
  func.func @transform_2(%arg0: i32, %arg1: i32, %arg2: i32) -> (i32, i32) {
    %c0_i32 = arith.constant 0 : i32
    %c0_i32_0 = arith.constant 0 : i32
    %c0_i32_1 = arith.constant 0 : i32
    return %c0_i32, %c0_i32_0 : i32, i32
  }
  func.func @transform_3(%arg0: i32, %arg1: i32, %arg2: i32) -> (i32, i32, i32, i32, i32) {
    %c0_i32 = arith.constant 0 : i32
    %c0_i32_0 = arith.constant 0 : i32
    %c0_i32_1 = arith.constant 0 : i32
    return %arg0, %arg1, %arg2, %c0_i32, %c0_i32_0 : i32, i32, i32, i32, i32
  }
}

module attributes {stable_mosaic.version = 11 : i64} {
  func.func @kernel(%arg0: i32, %arg1: i32, %arg2: memref<1x8x16x32xf32, #tpu.memory_space<vmem>>, %arg3: memref<1x1x16x32xf32, #tpu.memory_space<vmem>>, %arg4: memref<1x1x16x32xf32, #tpu.memory_space<vmem>>, %arg5: memref<288x32xf32, #tpu.memory_space<vmem>>, %arg6: memref<1x32xf32, #tpu.memory_space<vmem>>, %arg7: memref<1x8x16x32xf32, #tpu.memory_space<vmem>>, %arg8: memref<10x18x32xf32, #tpu.memory_space<vmem>>, %arg9: memref<128x288xf32, #tpu.memory_space<vmem>>) attributes {dimension_semantics = [#tpu.dimension_semantics<parallel>, #tpu.dimension_semantics<parallel>], iteration_bounds = array<i64: 2, 2>, scalar_prefetch = 0 : i64, scratch_operands = 2 : i64, tpu.core_type = #tpu.core_type<tc>, window_params = [{transform_indices = @transform_0, window_bounds = array<i64: 1, 8, 16, 32>}, {transform_indices = @transform_1, window_bounds = array<i64: 1, 1, 16, 32>}, {transform_indices = @transform_2, window_bounds = array<i64: 1, 1, 16, 32>}, {pipeline_mode = #tpu.pipeline_mode<synchronous>, transform_indices = @transform_3, window_bounds = array<i64: 288, 32>}, {pipeline_mode = #tpu.pipeline_mode<synchronous>, transform_indices = @transform_4, window_bounds = array<i64: 1, 32>}, {transform_indices = @transform_5, window_bounds = array<i64: 1, 8, 16, 32>}]} {
    %cst = arith.constant 0.000000e+00 : f32
    %0 = vector.broadcast %cst : f32 to vector<10x18x32xf32>
    %c0 = arith.constant 0 : index
    %c0_0 = arith.constant 0 : index
    %c0_1 = arith.constant 0 : index
    %1 = vector.load %arg8[%c0, %c0_0, %c0_1] : memref<10x18x32xf32, #tpu.memory_space<vmem>>, vector<10x18x32xf32>
    tpu.vector_store %arg8[%c0, %c0_0, %c0_1], %0 {strides = array<i32>} : memref<10x18x32xf32, #tpu.memory_space<vmem>>, vector<10x18x32xf32>,
    %c0_2 = arith.constant 0 : index
    %c0_3 = arith.constant 0 : index
    %c0_4 = arith.constant 0 : index
    %c0_5 = arith.constant 0 : index
    %2 = vector.load %arg2[%c0_2, %c0_3, %c0_4, %c0_5] : memref<1x8x16x32xf32, #tpu.memory_space<vmem>>, vector<1x8x16x32xf32>
    %3 = vector.shape_cast %2 : vector<1x8x16x32xf32> to vector<8x16x32xf32>
    %c1 = arith.constant 1 : index
    %c1_6 = arith.constant 1 : index
    %c0_7 = arith.constant 0 : index
    %4 = vector.load %arg8[%c1, %c1_6, %c0_7] : memref<10x18x32xf32, #tpu.memory_space<vmem>>, vector<8x16x32xf32>
    tpu.vector_store %arg8[%c1, %c1_6, %c0_7], %3 {strides = array<i32>} : memref<10x18x32xf32, #tpu.memory_space<vmem>>, vector<8x16x32xf32>,
    %c0_i32 = arith.constant 0 : i32
    %5 = arith.cmpi sgt, %arg1, %c0_i32 : i32
    %6 = arith.extui %5 : i1 to i32
    %7 = arith.sitofp %6 : i32 to f32
    %c1_i32 = arith.constant 1 : i32
    %8 = arith.cmpi slt, %arg1, %c1_i32 : i32
    %9 = arith.extui %8 : i1 to i32
    %10 = arith.sitofp %9 : i32 to f32
    %c0_8 = arith.constant 0 : index
    %c0_9 = arith.constant 0 : index
    %c0_10 = arith.constant 0 : index
    %c0_11 = arith.constant 0 : index
    %11 = vector.load %arg3[%c0_8, %c0_9, %c0_10, %c0_11] : memref<1x1x16x32xf32, #tpu.memory_space<vmem>>, vector<1x1x16x32xf32>
    %12 = vector.shape_cast %11 : vector<1x1x16x32xf32> to vector<1x16x32xf32>
    %13 = vector.broadcast %7 : f32 to vector<1x16x32xf32>
    %14 = arith.mulf %12, %13 : vector<1x16x32xf32>
    %c0_12 = arith.constant 0 : index
    %c1_13 = arith.constant 1 : index
    %c0_14 = arith.constant 0 : index
    %15 = vector.load %arg8[%c0_12, %c1_13, %c0_14] : memref<10x18x32xf32, #tpu.memory_space<vmem>>, vector<1x16x32xf32>
    tpu.vector_store %arg8[%c0_12, %c1_13, %c0_14], %14 {strides = array<i32>} : memref<10x18x32xf32, #tpu.memory_space<vmem>>, vector<1x16x32xf32>,
    %c0_15 = arith.constant 0 : index
    %c0_16 = arith.constant 0 : index
    %c0_17 = arith.constant 0 : index
    %c0_18 = arith.constant 0 : index
    %16 = vector.load %arg4[%c0_15, %c0_16, %c0_17, %c0_18] : memref<1x1x16x32xf32, #tpu.memory_space<vmem>>, vector<1x1x16x32xf32>
    %17 = vector.shape_cast %16 : vector<1x1x16x32xf32> to vector<1x16x32xf32>
    %18 = vector.broadcast %10 : f32 to vector<1x16x32xf32>
    %19 = arith.mulf %17, %18 : vector<1x16x32xf32>
    %c9 = arith.constant 9 : index
    %c1_19 = arith.constant 1 : index
    %c0_20 = arith.constant 0 : index
    %20 = vector.load %arg8[%c9, %c1_19, %c0_20] : memref<10x18x32xf32, #tpu.memory_space<vmem>>, vector<1x16x32xf32>
    tpu.vector_store %arg8[%c9, %c1_19, %c0_20], %19 {strides = array<i32>} : memref<10x18x32xf32, #tpu.memory_space<vmem>>, vector<1x16x32xf32>,
    %c0_21 = arith.constant 0 : index
    %c0_22 = arith.constant 0 : index
    %c0_23 = arith.constant 0 : index
    %21 = vector.load %arg8[%c0_21, %c0_22, %c0_23] : memref<10x18x32xf32, #tpu.memory_space<vmem>>, vector<10x18x32xf32>
    %22 = vector.extract_strided_slice %21 {offsets = [0, 0, 0], sizes = [8, 16, 32], strides = [1, 1, 1]} : vector<10x18x32xf32> to vector<8x16x32xf32>
    %23 = vector.shape_cast %22 : vector<8x16x32xf32> to vector<128x32xf32>
    %c0_24 = arith.constant 0 : index
    %c0_25 = arith.constant 0 : index
    %24 = vector.load %arg9[%c0_24, %c0_25] : memref<128x288xf32, #tpu.memory_space<vmem>>, vector<128x32xf32>
    tpu.vector_store %arg9[%c0_24, %c0_25], %23 {strides = array<i32>} : memref<128x288xf32, #tpu.memory_space<vmem>>, vector<128x32xf32>,
    %25 = vector.extract_strided_slice %21 {offsets = [0, 1, 0], sizes = [8, 16, 32], strides = [1, 1, 1]} : vector<10x18x32xf32> to vector<8x16x32xf32>
    %26 = vector.shape_cast %25 : vector<8x16x32xf32> to vector<128x32xf32>
    %c0_26 = arith.constant 0 : index
    %c32 = arith.constant 32 : index
    %27 = vector.load %arg9[%c0_26, %c32] : memref<128x288xf32, #tpu.memory_space<vmem>>, vector<128x32xf32>
    tpu.vector_store %arg9[%c0_26, %c32], %26 {strides = array<i32>} : memref<128x288xf32, #tpu.memory_space<vmem>>, vector<128x32xf32>,
    %28 = vector.extract_strided_slice %21 {offsets = [0, 2, 0], sizes = [8, 16, 32], strides = [1, 1, 1]} : vector<10x18x32xf32> to vector<8x16x32xf32>
    %29 = vector.shape_cast %28 : vector<8x16x32xf32> to vector<128x32xf32>
    %c0_27 = arith.constant 0 : index
    %c64 = arith.constant 64 : index
    %30 = vector.load %arg9[%c0_27, %c64] : memref<128x288xf32, #tpu.memory_space<vmem>>, vector<128x32xf32>
    tpu.vector_store %arg9[%c0_27, %c64], %29 {strides = array<i32>} : memref<128x288xf32, #tpu.memory_space<vmem>>, vector<128x32xf32>,
    %31 = vector.extract_strided_slice %21 {offsets = [1, 0, 0], sizes = [8, 16, 32], strides = [1, 1, 1]} : vector<10x18x32xf32> to vector<8x16x32xf32>
    %32 = vector.shape_cast %31 : vector<8x16x32xf32> to vector<128x32xf32>
    %c0_28 = arith.constant 0 : index
    %c96 = arith.constant 96 : index
    %33 = vector.load %arg9[%c0_28, %c96] : memref<128x288xf32, #tpu.memory_space<vmem>>, vector<128x32xf32>
    tpu.vector_store %arg9[%c0_28, %c96], %32 {strides = array<i32>} : memref<128x288xf32, #tpu.memory_space<vmem>>, vector<128x32xf32>,
    %34 = vector.extract_strided_slice %21 {offsets = [1, 1, 0], sizes = [8, 16, 32], strides = [1, 1, 1]} : vector<10x18x32xf32> to vector<8x16x32xf32>
    %35 = vector.shape_cast %34 : vector<8x16x32xf32> to vector<128x32xf32>
    %c0_29 = arith.constant 0 : index
    %c128 = arith.constant 128 : index
    %36 = vector.load %arg9[%c0_29, %c128] : memref<128x288xf32, #tpu.memory_space<vmem>>, vector<128x32xf32>
    tpu.vector_store %arg9[%c0_29, %c128], %35 {strides = array<i32>} : memref<128x288xf32, #tpu.memory_space<vmem>>, vector<128x32xf32>,
    %37 = vector.extract_strided_slice %21 {offsets = [1, 2, 0], sizes = [8, 16, 32], strides = [1, 1, 1]} : vector<10x18x32xf32> to vector<8x16x32xf32>
    %38 = vector.shape_cast %37 : vector<8x16x32xf32> to vector<128x32xf32>
    %c0_30 = arith.constant 0 : index
    %c160 = arith.constant 160 : index
    %39 = vector.load %arg9[%c0_30, %c160] : memref<128x288xf32, #tpu.memory_space<vmem>>, vector<128x32xf32>
    tpu.vector_store %arg9[%c0_30, %c160], %38 {strides = array<i32>} : memref<128x288xf32, #tpu.memory_space<vmem>>, vector<128x32xf32>,
    %40 = vector.extract_strided_slice %21 {offsets = [2, 0, 0], sizes = [8, 16, 32], strides = [1, 1, 1]} : vector<10x18x32xf32> to vector<8x16x32xf32>
    %41 = vector.shape_cast %40 : vector<8x16x32xf32> to vector<128x32xf32>
    %c0_31 = arith.constant 0 : index
    %c192 = arith.constant 192 : index
    %42 = vector.load %arg9[%c0_31, %c192] : memref<128x288xf32, #tpu.memory_space<vmem>>, vector<128x32xf32>
    tpu.vector_store %arg9[%c0_31, %c192], %41 {strides = array<i32>} : memref<128x288xf32, #tpu.memory_space<vmem>>, vector<128x32xf32>,
    %43 = vector.extract_strided_slice %21 {offsets = [2, 1, 0], sizes = [8, 16, 32], strides = [1, 1, 1]} : vector<10x18x32xf32> to vector<8x16x32xf32>
    %44 = vector.shape_cast %43 : vector<8x16x32xf32> to vector<128x32xf32>
    %c0_32 = arith.constant 0 : index
    %c224 = arith.constant 224 : index
    %45 = vector.load %arg9[%c0_32, %c224] : memref<128x288xf32, #tpu.memory_space<vmem>>, vector<128x32xf32>
    tpu.vector_store %arg9[%c0_32, %c224], %44 {strides = array<i32>} : memref<128x288xf32, #tpu.memory_space<vmem>>, vector<128x32xf32>,
    %46 = vector.extract_strided_slice %21 {offsets = [2, 2, 0], sizes = [8, 16, 32], strides = [1, 1, 1]} : vector<10x18x32xf32> to vector<8x16x32xf32>
    %47 = vector.shape_cast %46 : vector<8x16x32xf32> to vector<128x32xf32>
    %c0_33 = arith.constant 0 : index
    %c256 = arith.constant 256 : index
    %48 = vector.load %arg9[%c0_33, %c256] : memref<128x288xf32, #tpu.memory_space<vmem>>, vector<128x32xf32>
    tpu.vector_store %arg9[%c0_33, %c256], %47 {strides = array<i32>} : memref<128x288xf32, #tpu.memory_space<vmem>>, vector<128x32xf32>,
    %c0_34 = arith.constant 0 : index
    %c0_35 = arith.constant 0 : index
    %49 = vector.load %arg9[%c0_34, %c0_35] : memref<128x288xf32, #tpu.memory_space<vmem>>, vector<128x288xf32>
    %c0_36 = arith.constant 0 : index
    %c0_37 = arith.constant 0 : index
    %50 = vector.load %arg5[%c0_36, %c0_37] : memref<288x32xf32, #tpu.memory_space<vmem>>, vector<288x32xf32>
    %cst_38 = arith.constant dense<0.000000e+00> : vector<128x32xf32>
    %51 = tpu.matmul %49, %50, %cst_38 {dimension_numbers = #tpu.dot_dimension_numbers<[1], [0], [0], [1], [0, 0, 1, 1], [], []>} : vector<128x288xf32>, vector<288x32xf32>, vector<128x32xf32> -> vector<128x32xf32>
    %c0_39 = arith.constant 0 : index
    %c0_40 = arith.constant 0 : index
    %52 = vector.load %arg6[%c0_39, %c0_40] : memref<1x32xf32, #tpu.memory_space<vmem>>, vector<1x32xf32>
    %53 = vector.broadcast %52 : vector<1x32xf32> to vector<128x32xf32>
    %54 = arith.addf %51, %53 : vector<128x32xf32>
    %cst_41 = arith.constant 0.000000e+00 : f32
    %55 = vector.broadcast %cst_41 : f32 to vector<128x32xf32>
    %56 = arith.maximumf %54, %55 : vector<128x32xf32>
    %57 = vector.shape_cast %56 : vector<128x32xf32> to vector<8x16x32xf32>
    %c0_42 = arith.constant 0 : index
    %c0_43 = arith.constant 0 : index
    %c0_44 = arith.constant 0 : index
    %c0_45 = arith.constant 0 : index
    %58 = vector.load %arg7[%c0_42, %c0_43, %c0_44, %c0_45] : memref<1x8x16x32xf32, #tpu.memory_space<vmem>>, vector<1x8x16x32xf32>
    %59 = vector.shape_cast %58 : vector<1x8x16x32xf32> to vector<8x16x32xf32>
    %60 = vector.shape_cast %57 : vector<8x16x32xf32> to vector<1x8x16x32xf32>
    tpu.vector_store %arg7[%c0_42, %c0_43, %c0_44, %c0_45], %60 {strides = array<i32>} : memref<1x8x16x32xf32, #tpu.memory_space<vmem>>, vector<1x8x16x32xf32>,
    return
  }
  func.func @transform_0(%arg0: i32, %arg1: i32) -> (i32, i32, i32, i32) {
    %c0_i32 = arith.constant 0 : i32
    %c0_i32_0 = arith.constant 0 : i32
    %c0_i32_1 = arith.constant 0 : i32
    return %arg0, %arg1, %c0_i32, %c0_i32_0 : i32, i32, i32, i32
  }
  func.func @transform_1(%arg0: i32, %arg1: i32) -> (i32, i32, i32, i32) {
    %c8_i32 = arith.constant 8 : i32
    %0 = arith.muli %arg1, %c8_i32 : i32
    %c1_i32 = arith.constant 1 : i32
    %1 = arith.subi %0, %c1_i32 : i32
    %c0_i32 = arith.constant 0 : i32
    %2 = arith.maxsi %1, %c0_i32 : i32
    %c0_i32_0 = arith.constant 0 : i32
    %c0_i32_1 = arith.constant 0 : i32
    %c0_i32_2 = arith.constant 0 : i32
    return %arg0, %2, %c0_i32_0, %c0_i32_1 : i32, i32, i32, i32
  }
  func.func @transform_2(%arg0: i32, %arg1: i32) -> (i32, i32, i32, i32) {
    %c1_i32 = arith.constant 1 : i32
    %0 = arith.addi %arg1, %c1_i32 : i32
    %c8_i32 = arith.constant 8 : i32
    %1 = arith.muli %0, %c8_i32 : i32
    %c15_i32 = arith.constant 15 : i32
    %2 = arith.minsi %1, %c15_i32 : i32
    %c0_i32 = arith.constant 0 : i32
    %c0_i32_0 = arith.constant 0 : i32
    %c0_i32_1 = arith.constant 0 : i32
    return %arg0, %2, %c0_i32, %c0_i32_0 : i32, i32, i32, i32
  }
  func.func @transform_3(%arg0: i32, %arg1: i32) -> (i32, i32) {
    %c0_i32 = arith.constant 0 : i32
    %c0_i32_0 = arith.constant 0 : i32
    %c0_i32_1 = arith.constant 0 : i32
    return %c0_i32, %c0_i32_0 : i32, i32
  }
  func.func @transform_4(%arg0: i32, %arg1: i32) -> (i32, i32) {
    %c0_i32 = arith.constant 0 : i32
    %c0_i32_0 = arith.constant 0 : i32
    %c0_i32_1 = arith.constant 0 : i32
    return %c0_i32, %c0_i32_0 : i32, i32
  }
  func.func @transform_5(%arg0: i32, %arg1: i32) -> (i32, i32, i32, i32) {
    %c0_i32 = arith.constant 0 : i32
    %c0_i32_0 = arith.constant 0 : i32
    %c0_i32_1 = arith.constant 0 : i32
    return %arg0, %arg1, %c0_i32, %c0_i32_0 : i32, i32, i32, i32
  }
}

module attributes {stable_mosaic.version = 11 : i64} {
  func.func @kernel(%arg0: i32, %arg1: i32, %arg2: memref<1x8x16x32xf32, #tpu.memory_space<vmem>>, %arg3: memref<1x1x16x32xf32, #tpu.memory_space<vmem>>, %arg4: memref<1x1x16x32xf32, #tpu.memory_space<vmem>>, %arg5: memref<288x32xf32, #tpu.memory_space<vmem>>, %arg6: memref<1x32xf32, #tpu.memory_space<vmem>>, %arg7: memref<1x8x16x32xf32, #tpu.memory_space<vmem>>, %arg8: memref<1x8x16x32xf32, #tpu.memory_space<vmem>>, %arg9: memref<10x18x32xf32, #tpu.memory_space<vmem>>, %arg10: memref<128x288xf32, #tpu.memory_space<vmem>>) attributes {dimension_semantics = [#tpu.dimension_semantics<parallel>, #tpu.dimension_semantics<parallel>], iteration_bounds = array<i64: 2, 2>, scalar_prefetch = 0 : i64, scratch_operands = 2 : i64, tpu.core_type = #tpu.core_type<tc>, window_params = [{transform_indices = @transform_0, window_bounds = array<i64: 1, 8, 16, 32>}, {transform_indices = @transform_1, window_bounds = array<i64: 1, 1, 16, 32>}, {transform_indices = @transform_2, window_bounds = array<i64: 1, 1, 16, 32>}, {pipeline_mode = #tpu.pipeline_mode<synchronous>, transform_indices = @transform_3, window_bounds = array<i64: 288, 32>}, {pipeline_mode = #tpu.pipeline_mode<synchronous>, transform_indices = @transform_4, window_bounds = array<i64: 1, 32>}, {transform_indices = @transform_5, window_bounds = array<i64: 1, 8, 16, 32>}, {transform_indices = @transform_6, window_bounds = array<i64: 1, 8, 16, 32>}]} {
    %cst = arith.constant 0.000000e+00 : f32
    %0 = vector.broadcast %cst : f32 to vector<10x18x32xf32>
    %c0 = arith.constant 0 : index
    %c0_0 = arith.constant 0 : index
    %c0_1 = arith.constant 0 : index
    %1 = vector.load %arg9[%c0, %c0_0, %c0_1] : memref<10x18x32xf32, #tpu.memory_space<vmem>>, vector<10x18x32xf32>
    tpu.vector_store %arg9[%c0, %c0_0, %c0_1], %0 {strides = array<i32>} : memref<10x18x32xf32, #tpu.memory_space<vmem>>, vector<10x18x32xf32>,
    %c0_2 = arith.constant 0 : index
    %c0_3 = arith.constant 0 : index
    %c0_4 = arith.constant 0 : index
    %c0_5 = arith.constant 0 : index
    %2 = vector.load %arg2[%c0_2, %c0_3, %c0_4, %c0_5] : memref<1x8x16x32xf32, #tpu.memory_space<vmem>>, vector<1x8x16x32xf32>
    %3 = vector.shape_cast %2 : vector<1x8x16x32xf32> to vector<8x16x32xf32>
    %c1 = arith.constant 1 : index
    %c1_6 = arith.constant 1 : index
    %c0_7 = arith.constant 0 : index
    %4 = vector.load %arg9[%c1, %c1_6, %c0_7] : memref<10x18x32xf32, #tpu.memory_space<vmem>>, vector<8x16x32xf32>
    tpu.vector_store %arg9[%c1, %c1_6, %c0_7], %3 {strides = array<i32>} : memref<10x18x32xf32, #tpu.memory_space<vmem>>, vector<8x16x32xf32>,
    %c0_i32 = arith.constant 0 : i32
    %5 = arith.cmpi sgt, %arg1, %c0_i32 : i32
    %6 = arith.extui %5 : i1 to i32
    %7 = arith.sitofp %6 : i32 to f32
    %c1_i32 = arith.constant 1 : i32
    %8 = arith.cmpi slt, %arg1, %c1_i32 : i32
    %9 = arith.extui %8 : i1 to i32
    %10 = arith.sitofp %9 : i32 to f32
    %c0_8 = arith.constant 0 : index
    %c0_9 = arith.constant 0 : index
    %c0_10 = arith.constant 0 : index
    %c0_11 = arith.constant 0 : index
    %11 = vector.load %arg3[%c0_8, %c0_9, %c0_10, %c0_11] : memref<1x1x16x32xf32, #tpu.memory_space<vmem>>, vector<1x1x16x32xf32>
    %12 = vector.shape_cast %11 : vector<1x1x16x32xf32> to vector<1x16x32xf32>
    %13 = vector.broadcast %7 : f32 to vector<1x16x32xf32>
    %14 = arith.mulf %12, %13 : vector<1x16x32xf32>
    %c0_12 = arith.constant 0 : index
    %c1_13 = arith.constant 1 : index
    %c0_14 = arith.constant 0 : index
    %15 = vector.load %arg9[%c0_12, %c1_13, %c0_14] : memref<10x18x32xf32, #tpu.memory_space<vmem>>, vector<1x16x32xf32>
    tpu.vector_store %arg9[%c0_12, %c1_13, %c0_14], %14 {strides = array<i32>} : memref<10x18x32xf32, #tpu.memory_space<vmem>>, vector<1x16x32xf32>,
    %c0_15 = arith.constant 0 : index
    %c0_16 = arith.constant 0 : index
    %c0_17 = arith.constant 0 : index
    %c0_18 = arith.constant 0 : index
    %16 = vector.load %arg4[%c0_15, %c0_16, %c0_17, %c0_18] : memref<1x1x16x32xf32, #tpu.memory_space<vmem>>, vector<1x1x16x32xf32>
    %17 = vector.shape_cast %16 : vector<1x1x16x32xf32> to vector<1x16x32xf32>
    %18 = vector.broadcast %10 : f32 to vector<1x16x32xf32>
    %19 = arith.mulf %17, %18 : vector<1x16x32xf32>
    %c9 = arith.constant 9 : index
    %c1_19 = arith.constant 1 : index
    %c0_20 = arith.constant 0 : index
    %20 = vector.load %arg9[%c9, %c1_19, %c0_20] : memref<10x18x32xf32, #tpu.memory_space<vmem>>, vector<1x16x32xf32>
    tpu.vector_store %arg9[%c9, %c1_19, %c0_20], %19 {strides = array<i32>} : memref<10x18x32xf32, #tpu.memory_space<vmem>>, vector<1x16x32xf32>,
    %c0_21 = arith.constant 0 : index
    %c0_22 = arith.constant 0 : index
    %c0_23 = arith.constant 0 : index
    %21 = vector.load %arg9[%c0_21, %c0_22, %c0_23] : memref<10x18x32xf32, #tpu.memory_space<vmem>>, vector<10x18x32xf32>
    %22 = vector.extract_strided_slice %21 {offsets = [0, 0, 0], sizes = [8, 16, 32], strides = [1, 1, 1]} : vector<10x18x32xf32> to vector<8x16x32xf32>
    %23 = vector.shape_cast %22 : vector<8x16x32xf32> to vector<128x32xf32>
    %c0_24 = arith.constant 0 : index
    %c0_25 = arith.constant 0 : index
    %24 = vector.load %arg10[%c0_24, %c0_25] : memref<128x288xf32, #tpu.memory_space<vmem>>, vector<128x32xf32>
    tpu.vector_store %arg10[%c0_24, %c0_25], %23 {strides = array<i32>} : memref<128x288xf32, #tpu.memory_space<vmem>>, vector<128x32xf32>,
    %25 = vector.extract_strided_slice %21 {offsets = [0, 1, 0], sizes = [8, 16, 32], strides = [1, 1, 1]} : vector<10x18x32xf32> to vector<8x16x32xf32>
    %26 = vector.shape_cast %25 : vector<8x16x32xf32> to vector<128x32xf32>
    %c0_26 = arith.constant 0 : index
    %c32 = arith.constant 32 : index
    %27 = vector.load %arg10[%c0_26, %c32] : memref<128x288xf32, #tpu.memory_space<vmem>>, vector<128x32xf32>
    tpu.vector_store %arg10[%c0_26, %c32], %26 {strides = array<i32>} : memref<128x288xf32, #tpu.memory_space<vmem>>, vector<128x32xf32>,
    %28 = vector.extract_strided_slice %21 {offsets = [0, 2, 0], sizes = [8, 16, 32], strides = [1, 1, 1]} : vector<10x18x32xf32> to vector<8x16x32xf32>
    %29 = vector.shape_cast %28 : vector<8x16x32xf32> to vector<128x32xf32>
    %c0_27 = arith.constant 0 : index
    %c64 = arith.constant 64 : index
    %30 = vector.load %arg10[%c0_27, %c64] : memref<128x288xf32, #tpu.memory_space<vmem>>, vector<128x32xf32>
    tpu.vector_store %arg10[%c0_27, %c64], %29 {strides = array<i32>} : memref<128x288xf32, #tpu.memory_space<vmem>>, vector<128x32xf32>,
    %31 = vector.extract_strided_slice %21 {offsets = [1, 0, 0], sizes = [8, 16, 32], strides = [1, 1, 1]} : vector<10x18x32xf32> to vector<8x16x32xf32>
    %32 = vector.shape_cast %31 : vector<8x16x32xf32> to vector<128x32xf32>
    %c0_28 = arith.constant 0 : index
    %c96 = arith.constant 96 : index
    %33 = vector.load %arg10[%c0_28, %c96] : memref<128x288xf32, #tpu.memory_space<vmem>>, vector<128x32xf32>
    tpu.vector_store %arg10[%c0_28, %c96], %32 {strides = array<i32>} : memref<128x288xf32, #tpu.memory_space<vmem>>, vector<128x32xf32>,
    %34 = vector.extract_strided_slice %21 {offsets = [1, 1, 0], sizes = [8, 16, 32], strides = [1, 1, 1]} : vector<10x18x32xf32> to vector<8x16x32xf32>
    %35 = vector.shape_cast %34 : vector<8x16x32xf32> to vector<128x32xf32>
    %c0_29 = arith.constant 0 : index
    %c128 = arith.constant 128 : index
    %36 = vector.load %arg10[%c0_29, %c128] : memref<128x288xf32, #tpu.memory_space<vmem>>, vector<128x32xf32>
    tpu.vector_store %arg10[%c0_29, %c128], %35 {strides = array<i32>} : memref<128x288xf32, #tpu.memory_space<vmem>>, vector<128x32xf32>,
    %37 = vector.extract_strided_slice %21 {offsets = [1, 2, 0], sizes = [8, 16, 32], strides = [1, 1, 1]} : vector<10x18x32xf32> to vector<8x16x32xf32>
    %38 = vector.shape_cast %37 : vector<8x16x32xf32> to vector<128x32xf32>
    %c0_30 = arith.constant 0 : index
    %c160 = arith.constant 160 : index
    %39 = vector.load %arg10[%c0_30, %c160] : memref<128x288xf32, #tpu.memory_space<vmem>>, vector<128x32xf32>
    tpu.vector_store %arg10[%c0_30, %c160], %38 {strides = array<i32>} : memref<128x288xf32, #tpu.memory_space<vmem>>, vector<128x32xf32>,
    %40 = vector.extract_strided_slice %21 {offsets = [2, 0, 0], sizes = [8, 16, 32], strides = [1, 1, 1]} : vector<10x18x32xf32> to vector<8x16x32xf32>
    %41 = vector.shape_cast %40 : vector<8x16x32xf32> to vector<128x32xf32>
    %c0_31 = arith.constant 0 : index
    %c192 = arith.constant 192 : index
    %42 = vector.load %arg10[%c0_31, %c192] : memref<128x288xf32, #tpu.memory_space<vmem>>, vector<128x32xf32>
    tpu.vector_store %arg10[%c0_31, %c192], %41 {strides = array<i32>} : memref<128x288xf32, #tpu.memory_space<vmem>>, vector<128x32xf32>,
    %43 = vector.extract_strided_slice %21 {offsets = [2, 1, 0], sizes = [8, 16, 32], strides = [1, 1, 1]} : vector<10x18x32xf32> to vector<8x16x32xf32>
    %44 = vector.shape_cast %43 : vector<8x16x32xf32> to vector<128x32xf32>
    %c0_32 = arith.constant 0 : index
    %c224 = arith.constant 224 : index
    %45 = vector.load %arg10[%c0_32, %c224] : memref<128x288xf32, #tpu.memory_space<vmem>>, vector<128x32xf32>
    tpu.vector_store %arg10[%c0_32, %c224], %44 {strides = array<i32>} : memref<128x288xf32, #tpu.memory_space<vmem>>, vector<128x32xf32>,
    %46 = vector.extract_strided_slice %21 {offsets = [2, 2, 0], sizes = [8, 16, 32], strides = [1, 1, 1]} : vector<10x18x32xf32> to vector<8x16x32xf32>
    %47 = vector.shape_cast %46 : vector<8x16x32xf32> to vector<128x32xf32>
    %c0_33 = arith.constant 0 : index
    %c256 = arith.constant 256 : index
    %48 = vector.load %arg10[%c0_33, %c256] : memref<128x288xf32, #tpu.memory_space<vmem>>, vector<128x32xf32>
    tpu.vector_store %arg10[%c0_33, %c256], %47 {strides = array<i32>} : memref<128x288xf32, #tpu.memory_space<vmem>>, vector<128x32xf32>,
    %c0_34 = arith.constant 0 : index
    %c0_35 = arith.constant 0 : index
    %49 = vector.load %arg10[%c0_34, %c0_35] : memref<128x288xf32, #tpu.memory_space<vmem>>, vector<128x288xf32>
    %c0_36 = arith.constant 0 : index
    %c0_37 = arith.constant 0 : index
    %50 = vector.load %arg5[%c0_36, %c0_37] : memref<288x32xf32, #tpu.memory_space<vmem>>, vector<288x32xf32>
    %cst_38 = arith.constant dense<0.000000e+00> : vector<128x32xf32>
    %51 = tpu.matmul %49, %50, %cst_38 {dimension_numbers = #tpu.dot_dimension_numbers<[1], [0], [0], [1], [0, 0, 1, 1], [], []>} : vector<128x288xf32>, vector<288x32xf32>, vector<128x32xf32> -> vector<128x32xf32>
    %c0_39 = arith.constant 0 : index
    %c0_40 = arith.constant 0 : index
    %52 = vector.load %arg6[%c0_39, %c0_40] : memref<1x32xf32, #tpu.memory_space<vmem>>, vector<1x32xf32>
    %53 = vector.broadcast %52 : vector<1x32xf32> to vector<128x32xf32>
    %54 = arith.addf %51, %53 : vector<128x32xf32>
    %55 = vector.shape_cast %54 : vector<128x32xf32> to vector<8x16x32xf32>
    %c0_41 = arith.constant 0 : index
    %c0_42 = arith.constant 0 : index
    %c0_43 = arith.constant 0 : index
    %c0_44 = arith.constant 0 : index
    %56 = vector.load %arg7[%c0_41, %c0_42, %c0_43, %c0_44] : memref<1x8x16x32xf32, #tpu.memory_space<vmem>>, vector<1x8x16x32xf32>
    %57 = vector.shape_cast %56 : vector<1x8x16x32xf32> to vector<8x16x32xf32>
    %58 = arith.addf %55, %57 : vector<8x16x32xf32>
    %c0_45 = arith.constant 0 : index
    %c0_46 = arith.constant 0 : index
    %c0_47 = arith.constant 0 : index
    %c0_48 = arith.constant 0 : index
    %59 = vector.load %arg8[%c0_45, %c0_46, %c0_47, %c0_48] : memref<1x8x16x32xf32, #tpu.memory_space<vmem>>, vector<1x8x16x32xf32>
    %60 = vector.shape_cast %59 : vector<1x8x16x32xf32> to vector<8x16x32xf32>
    %61 = vector.shape_cast %58 : vector<8x16x32xf32> to vector<1x8x16x32xf32>
    tpu.vector_store %arg8[%c0_45, %c0_46, %c0_47, %c0_48], %61 {strides = array<i32>} : memref<1x8x16x32xf32, #tpu.memory_space<vmem>>, vector<1x8x16x32xf32>,
    return
  }
  func.func @transform_0(%arg0: i32, %arg1: i32) -> (i32, i32, i32, i32) {
    %c0_i32 = arith.constant 0 : i32
    %c0_i32_0 = arith.constant 0 : i32
    %c0_i32_1 = arith.constant 0 : i32
    return %arg0, %arg1, %c0_i32, %c0_i32_0 : i32, i32, i32, i32
  }
  func.func @transform_1(%arg0: i32, %arg1: i32) -> (i32, i32, i32, i32) {
    %c8_i32 = arith.constant 8 : i32
    %0 = arith.muli %arg1, %c8_i32 : i32
    %c1_i32 = arith.constant 1 : i32
    %1 = arith.subi %0, %c1_i32 : i32
    %c0_i32 = arith.constant 0 : i32
    %2 = arith.maxsi %1, %c0_i32 : i32
    %c0_i32_0 = arith.constant 0 : i32
    %c0_i32_1 = arith.constant 0 : i32
    %c0_i32_2 = arith.constant 0 : i32
    return %arg0, %2, %c0_i32_0, %c0_i32_1 : i32, i32, i32, i32
  }
  func.func @transform_2(%arg0: i32, %arg1: i32) -> (i32, i32, i32, i32) {
    %c1_i32 = arith.constant 1 : i32
    %0 = arith.addi %arg1, %c1_i32 : i32
    %c8_i32 = arith.constant 8 : i32
    %1 = arith.muli %0, %c8_i32 : i32
    %c15_i32 = arith.constant 15 : i32
    %2 = arith.minsi %1, %c15_i32 : i32
    %c0_i32 = arith.constant 0 : i32
    %c0_i32_0 = arith.constant 0 : i32
    %c0_i32_1 = arith.constant 0 : i32
    return %arg0, %2, %c0_i32, %c0_i32_0 : i32, i32, i32, i32
  }
  func.func @transform_3(%arg0: i32, %arg1: i32) -> (i32, i32) {
    %c0_i32 = arith.constant 0 : i32
    %c0_i32_0 = arith.constant 0 : i32
    %c0_i32_1 = arith.constant 0 : i32
    return %c0_i32, %c0_i32_0 : i32, i32
  }
  func.func @transform_4(%arg0: i32, %arg1: i32) -> (i32, i32) {
    %c0_i32 = arith.constant 0 : i32
    %c0_i32_0 = arith.constant 0 : i32
    %c0_i32_1 = arith.constant 0 : i32
    return %c0_i32, %c0_i32_0 : i32, i32
  }
  func.func @transform_5(%arg0: i32, %arg1: i32) -> (i32, i32, i32, i32) {
    %c0_i32 = arith.constant 0 : i32
    %c0_i32_0 = arith.constant 0 : i32
    %c0_i32_1 = arith.constant 0 : i32
    return %arg0, %arg1, %c0_i32, %c0_i32_0 : i32, i32, i32, i32
  }
  func.func @transform_6(%arg0: i32, %arg1: i32) -> (i32, i32, i32, i32) {
    %c0_i32 = arith.constant 0 : i32
    %c0_i32_0 = arith.constant 0 : i32
    %c0_i32_1 = arith.constant 0 : i32
    return %arg0, %arg1, %c0_i32, %c0_i32_0 : i32, i32, i32, i32
  }
}

module attributes {stable_mosaic.version = 11 : i64} {
  func.func @kernel(%arg0: i32, %arg1: memref<1x16x16x32xf32, #tpu.memory_space<vmem>>, %arg2: memref<32x32xf32, #tpu.memory_space<vmem>>, %arg3: memref<1x32xf32, #tpu.memory_space<vmem>>, %arg4: memref<32x32xf32, #tpu.memory_space<vmem>>, %arg5: memref<1x32xf32, #tpu.memory_space<vmem>>, %arg6: memref<32x8xf32, #tpu.memory_space<vmem>>, %arg7: memref<1x8xf32, #tpu.memory_space<vmem>>, %arg8: memref<8x32xf32, #tpu.memory_space<vmem>>, %arg9: memref<1x32xf32, #tpu.memory_space<vmem>>, %arg10: memref<1x16x16x32xf32, #tpu.memory_space<vmem>>) attributes {dimension_semantics = [#tpu.dimension_semantics<parallel>], iteration_bounds = array<i64: 2>, scalar_prefetch = 0 : i64, scratch_operands = 0 : i64, tpu.core_type = #tpu.core_type<tc>, window_params = [{transform_indices = @transform_0, window_bounds = array<i64: 1, 16, 16, 32>}, {pipeline_mode = #tpu.pipeline_mode<synchronous>, transform_indices = @transform_1, window_bounds = array<i64: 32, 32>}, {pipeline_mode = #tpu.pipeline_mode<synchronous>, transform_indices = @transform_2, window_bounds = array<i64: 1, 32>}, {pipeline_mode = #tpu.pipeline_mode<synchronous>, transform_indices = @transform_3, window_bounds = array<i64: 32, 32>}, {pipeline_mode = #tpu.pipeline_mode<synchronous>, transform_indices = @transform_4, window_bounds = array<i64: 1, 32>}, {pipeline_mode = #tpu.pipeline_mode<synchronous>, transform_indices = @transform_5, window_bounds = array<i64: 32, 8>}, {pipeline_mode = #tpu.pipeline_mode<synchronous>, transform_indices = @transform_6, window_bounds = array<i64: 1, 8>}, {pipeline_mode = #tpu.pipeline_mode<synchronous>, transform_indices = @transform_7, window_bounds = array<i64: 8, 32>}, {pipeline_mode = #tpu.pipeline_mode<synchronous>, transform_indices = @transform_8, window_bounds = array<i64: 1, 32>}, {transform_indices = @transform_9, window_bounds = array<i64: 1, 16, 16, 32>}]} {
    %c0 = arith.constant 0 : index
    %c0_0 = arith.constant 0 : index
    %c0_1 = arith.constant 0 : index
    %c0_2 = arith.constant 0 : index
    %0 = vector.load %arg1[%c0, %c0_0, %c0_1, %c0_2] : memref<1x16x16x32xf32, #tpu.memory_space<vmem>>, vector<1x16x16x32xf32>
    %1 = vector.shape_cast %0 : vector<1x16x16x32xf32> to vector<16x16x32xf32>
    %2 = vector.shape_cast %1 : vector<16x16x32xf32> to vector<256x32xf32>
    %c0_3 = arith.constant 0 : index
    %c0_4 = arith.constant 0 : index
    %3 = vector.load %arg2[%c0_3, %c0_4] : memref<32x32xf32, #tpu.memory_space<vmem>>, vector<32x32xf32>
    %cst = arith.constant dense<0.000000e+00> : vector<256x32xf32>
    %4 = tpu.matmul %2, %3, %cst {dimension_numbers = #tpu.dot_dimension_numbers<[1], [0], [0], [1], [0, 0, 1, 1], [], []>} : vector<256x32xf32>, vector<32x32xf32>, vector<256x32xf32> -> vector<256x32xf32>
    %c0_5 = arith.constant 0 : index
    %c0_6 = arith.constant 0 : index
    %5 = vector.load %arg3[%c0_5, %c0_6] : memref<1x32xf32, #tpu.memory_space<vmem>>, vector<1x32xf32>
    %6 = vector.broadcast %5 : vector<1x32xf32> to vector<256x32xf32>
    %7 = arith.addf %4, %6 : vector<256x32xf32>
    %cst_7 = arith.constant 0.000000e+00 : f32
    %8 = vector.broadcast %cst_7 : f32 to vector<256x32xf32>
    %9 = arith.maximumf %7, %8 : vector<256x32xf32>
    %c0_8 = arith.constant 0 : index
    %c0_9 = arith.constant 0 : index
    %10 = vector.load %arg4[%c0_8, %c0_9] : memref<32x32xf32, #tpu.memory_space<vmem>>, vector<32x32xf32>
    %cst_10 = arith.constant dense<0.000000e+00> : vector<256x32xf32>
    %11 = tpu.matmul %9, %10, %cst_10 {dimension_numbers = #tpu.dot_dimension_numbers<[1], [0], [0], [1], [0, 0, 1, 1], [], []>} : vector<256x32xf32>, vector<32x32xf32>, vector<256x32xf32> -> vector<256x32xf32>
    %c0_11 = arith.constant 0 : index
    %c0_12 = arith.constant 0 : index
    %12 = vector.load %arg5[%c0_11, %c0_12] : memref<1x32xf32, #tpu.memory_space<vmem>>, vector<1x32xf32>
    %13 = vector.broadcast %12 : vector<1x32xf32> to vector<256x32xf32>
    %14 = arith.addf %11, %13 : vector<256x32xf32>
    %cst_13 = arith.constant dense<0.000000e+00> : vector<32xf32>
    %15 = vector.multi_reduction <add>, %14, %cst_13 [0] : vector<256x32xf32> to vector<32xf32>
    %16 = vector.shape_cast %15 : vector<32xf32> to vector<1x32xf32>
    %cst_14 = arith.constant 2.560000e+02 : f32
    %17 = vector.broadcast %cst_14 : f32 to vector<1x32xf32>
    %18 = arith.divf %16, %17 : vector<1x32xf32>
    %c0_15 = arith.constant 0 : index
    %c0_16 = arith.constant 0 : index
    %19 = vector.load %arg6[%c0_15, %c0_16] : memref<32x8xf32, #tpu.memory_space<vmem>>, vector<32x8xf32>
    %cst_17 = arith.constant dense<0.000000e+00> : vector<1x8xf32>
    %20 = tpu.matmul %18, %19, %cst_17 {dimension_numbers = #tpu.dot_dimension_numbers<[1], [0], [0], [1], [0, 0, 1, 1], [], []>} : vector<1x32xf32>, vector<32x8xf32>, vector<1x8xf32> -> vector<1x8xf32>
    %c0_18 = arith.constant 0 : index
    %c0_19 = arith.constant 0 : index
    %21 = vector.load %arg7[%c0_18, %c0_19] : memref<1x8xf32, #tpu.memory_space<vmem>>, vector<1x8xf32>
    %22 = arith.addf %20, %21 : vector<1x8xf32>
    %cst_20 = arith.constant 0.000000e+00 : f32
    %23 = vector.broadcast %cst_20 : f32 to vector<1x8xf32>
    %24 = arith.maximumf %22, %23 : vector<1x8xf32>
    %c0_21 = arith.constant 0 : index
    %c0_22 = arith.constant 0 : index
    %25 = vector.load %arg8[%c0_21, %c0_22] : memref<8x32xf32, #tpu.memory_space<vmem>>, vector<8x32xf32>
    %cst_23 = arith.constant dense<0.000000e+00> : vector<1x32xf32>
    %26 = tpu.matmul %24, %25, %cst_23 {dimension_numbers = #tpu.dot_dimension_numbers<[1], [0], [0], [1], [0, 0, 1, 1], [], []>} : vector<1x8xf32>, vector<8x32xf32>, vector<1x32xf32> -> vector<1x32xf32>
    %c0_24 = arith.constant 0 : index
    %c0_25 = arith.constant 0 : index
    %27 = vector.load %arg9[%c0_24, %c0_25] : memref<1x32xf32, #tpu.memory_space<vmem>>, vector<1x32xf32>
    %28 = arith.addf %26, %27 : vector<1x32xf32>
    %29 = arith.negf %28 : vector<1x32xf32>
    %30 = math.exp %29 : vector<1x32xf32>
    %cst_26 = arith.constant 1.000000e+00 : f32
    %31 = vector.broadcast %cst_26 : f32 to vector<1x32xf32>
    %32 = arith.addf %31, %30 : vector<1x32xf32>
    %33 = arith.divf %31, %32 : vector<1x32xf32>
    %34 = vector.broadcast %33 : vector<1x32xf32> to vector<256x32xf32>
    %35 = arith.mulf %14, %34 : vector<256x32xf32>
    %36 = arith.addf %2, %35 : vector<256x32xf32>
    %37 = vector.shape_cast %36 : vector<256x32xf32> to vector<16x16x32xf32>
    %c0_27 = arith.constant 0 : index
    %c0_28 = arith.constant 0 : index
    %c0_29 = arith.constant 0 : index
    %c0_30 = arith.constant 0 : index
    %38 = vector.load %arg10[%c0_27, %c0_28, %c0_29, %c0_30] : memref<1x16x16x32xf32, #tpu.memory_space<vmem>>, vector<1x16x16x32xf32>
    %39 = vector.shape_cast %38 : vector<1x16x16x32xf32> to vector<16x16x32xf32>
    %40 = vector.shape_cast %37 : vector<16x16x32xf32> to vector<1x16x16x32xf32>
    tpu.vector_store %arg10[%c0_27, %c0_28, %c0_29, %c0_30], %40 {strides = array<i32>} : memref<1x16x16x32xf32, #tpu.memory_space<vmem>>, vector<1x16x16x32xf32>,
    return
  }
  func.func @transform_0(%arg0: i32) -> (i32, i32, i32, i32) {
    %c0_i32 = arith.constant 0 : i32
    %c0_i32_0 = arith.constant 0 : i32
    %c0_i32_1 = arith.constant 0 : i32
    %c0_i32_2 = arith.constant 0 : i32
    return %arg0, %c0_i32, %c0_i32_0, %c0_i32_1 : i32, i32, i32, i32
  }
  func.func @transform_1(%arg0: i32) -> (i32, i32) {
    %c0_i32 = arith.constant 0 : i32
    %c0_i32_0 = arith.constant 0 : i32
    %c0_i32_1 = arith.constant 0 : i32
    return %c0_i32, %c0_i32_0 : i32, i32
  }
  func.func @transform_2(%arg0: i32) -> (i32, i32) {
    %c0_i32 = arith.constant 0 : i32
    %c0_i32_0 = arith.constant 0 : i32
    %c0_i32_1 = arith.constant 0 : i32
    return %c0_i32, %c0_i32_0 : i32, i32
  }
  func.func @transform_3(%arg0: i32) -> (i32, i32) {
    %c0_i32 = arith.constant 0 : i32
    %c0_i32_0 = arith.constant 0 : i32
    %c0_i32_1 = arith.constant 0 : i32
    return %c0_i32, %c0_i32_0 : i32, i32
  }
  func.func @transform_4(%arg0: i32) -> (i32, i32) {
    %c0_i32 = arith.constant 0 : i32
    %c0_i32_0 = arith.constant 0 : i32
    %c0_i32_1 = arith.constant 0 : i32
    return %c0_i32, %c0_i32_0 : i32, i32
  }
  func.func @transform_5(%arg0: i32) -> (i32, i32) {
    %c0_i32 = arith.constant 0 : i32
    %c0_i32_0 = arith.constant 0 : i32
    %c0_i32_1 = arith.constant 0 : i32
    return %c0_i32, %c0_i32_0 : i32, i32
  }
  func.func @transform_6(%arg0: i32) -> (i32, i32) {
    %c0_i32 = arith.constant 0 : i32
    %c0_i32_0 = arith.constant 0 : i32
    %c0_i32_1 = arith.constant 0 : i32
    return %c0_i32, %c0_i32_0 : i32, i32
  }
  func.func @transform_7(%arg0: i32) -> (i32, i32) {
    %c0_i32 = arith.constant 0 : i32
    %c0_i32_0 = arith.constant 0 : i32
    %c0_i32_1 = arith.constant 0 : i32
    return %c0_i32, %c0_i32_0 : i32, i32
  }
  func.func @transform_8(%arg0: i32) -> (i32, i32) {
    %c0_i32 = arith.constant 0 : i32
    %c0_i32_0 = arith.constant 0 : i32
    %c0_i32_1 = arith.constant 0 : i32
    return %c0_i32, %c0_i32_0 : i32, i32
  }
  func.func @transform_9(%arg0: i32) -> (i32, i32, i32, i32) {
    %c0_i32 = arith.constant 0 : i32
    %c0_i32_0 = arith.constant 0 : i32
    %c0_i32_1 = arith.constant 0 : i32
    %c0_i32_2 = arith.constant 0 : i32
    return %arg0, %c0_i32, %c0_i32_0, %c0_i32_1 : i32, i32, i32, i32
  }
}

module attributes {stable_mosaic.version = 11 : i64} {
  func.func @kernel(%arg0: i32, %arg1: memref<1x16x16x32xf32, #tpu.memory_space<vmem>>, %arg2: memref<32x32xf32, #tpu.memory_space<vmem>>, %arg3: memref<1x32xf32, #tpu.memory_space<vmem>>, %arg4: memref<32x32xf32, #tpu.memory_space<vmem>>, %arg5: memref<1x32xf32, #tpu.memory_space<vmem>>, %arg6: memref<32x8xf32, #tpu.memory_space<vmem>>, %arg7: memref<1x8xf32, #tpu.memory_space<vmem>>, %arg8: memref<8x32xf32, #tpu.memory_space<vmem>>, %arg9: memref<1x32xf32, #tpu.memory_space<vmem>>, %arg10: memref<1x16x16x32xf32, #tpu.memory_space<vmem>>, %arg11: memref<1x16x16x32xf32, #tpu.memory_space<vmem>>) attributes {dimension_semantics = [#tpu.dimension_semantics<parallel>], iteration_bounds = array<i64: 2>, scalar_prefetch = 0 : i64, scratch_operands = 0 : i64, tpu.core_type = #tpu.core_type<tc>, window_params = [{transform_indices = @transform_0, window_bounds = array<i64: 1, 16, 16, 32>}, {pipeline_mode = #tpu.pipeline_mode<synchronous>, transform_indices = @transform_1, window_bounds = array<i64: 32, 32>}, {pipeline_mode = #tpu.pipeline_mode<synchronous>, transform_indices = @transform_2, window_bounds = array<i64: 1, 32>}, {pipeline_mode = #tpu.pipeline_mode<synchronous>, transform_indices = @transform_3, window_bounds = array<i64: 32, 32>}, {pipeline_mode = #tpu.pipeline_mode<synchronous>, transform_indices = @transform_4, window_bounds = array<i64: 1, 32>}, {pipeline_mode = #tpu.pipeline_mode<synchronous>, transform_indices = @transform_5, window_bounds = array<i64: 32, 8>}, {pipeline_mode = #tpu.pipeline_mode<synchronous>, transform_indices = @transform_6, window_bounds = array<i64: 1, 8>}, {pipeline_mode = #tpu.pipeline_mode<synchronous>, transform_indices = @transform_7, window_bounds = array<i64: 8, 32>}, {pipeline_mode = #tpu.pipeline_mode<synchronous>, transform_indices = @transform_8, window_bounds = array<i64: 1, 32>}, {transform_indices = @transform_9, window_bounds = array<i64: 1, 16, 16, 32>}, {transform_indices = @transform_10, window_bounds = array<i64: 1, 16, 16, 32>}]} {
    %c0 = arith.constant 0 : index
    %c0_0 = arith.constant 0 : index
    %c0_1 = arith.constant 0 : index
    %c0_2 = arith.constant 0 : index
    %0 = vector.load %arg1[%c0, %c0_0, %c0_1, %c0_2] : memref<1x16x16x32xf32, #tpu.memory_space<vmem>>, vector<1x16x16x32xf32>
    %1 = vector.shape_cast %0 : vector<1x16x16x32xf32> to vector<16x16x32xf32>
    %2 = vector.shape_cast %1 : vector<16x16x32xf32> to vector<256x32xf32>
    %c0_3 = arith.constant 0 : index
    %c0_4 = arith.constant 0 : index
    %3 = vector.load %arg2[%c0_3, %c0_4] : memref<32x32xf32, #tpu.memory_space<vmem>>, vector<32x32xf32>
    %cst = arith.constant dense<0.000000e+00> : vector<256x32xf32>
    %4 = tpu.matmul %2, %3, %cst {dimension_numbers = #tpu.dot_dimension_numbers<[1], [0], [0], [1], [0, 0, 1, 1], [], []>} : vector<256x32xf32>, vector<32x32xf32>, vector<256x32xf32> -> vector<256x32xf32>
    %c0_5 = arith.constant 0 : index
    %c0_6 = arith.constant 0 : index
    %5 = vector.load %arg3[%c0_5, %c0_6] : memref<1x32xf32, #tpu.memory_space<vmem>>, vector<1x32xf32>
    %6 = vector.broadcast %5 : vector<1x32xf32> to vector<256x32xf32>
    %7 = arith.addf %4, %6 : vector<256x32xf32>
    %cst_7 = arith.constant 0.000000e+00 : f32
    %8 = vector.broadcast %cst_7 : f32 to vector<256x32xf32>
    %9 = arith.maximumf %7, %8 : vector<256x32xf32>
    %c0_8 = arith.constant 0 : index
    %c0_9 = arith.constant 0 : index
    %10 = vector.load %arg4[%c0_8, %c0_9] : memref<32x32xf32, #tpu.memory_space<vmem>>, vector<32x32xf32>
    %cst_10 = arith.constant dense<0.000000e+00> : vector<256x32xf32>
    %11 = tpu.matmul %9, %10, %cst_10 {dimension_numbers = #tpu.dot_dimension_numbers<[1], [0], [0], [1], [0, 0, 1, 1], [], []>} : vector<256x32xf32>, vector<32x32xf32>, vector<256x32xf32> -> vector<256x32xf32>
    %c0_11 = arith.constant 0 : index
    %c0_12 = arith.constant 0 : index
    %12 = vector.load %arg5[%c0_11, %c0_12] : memref<1x32xf32, #tpu.memory_space<vmem>>, vector<1x32xf32>
    %13 = vector.broadcast %12 : vector<1x32xf32> to vector<256x32xf32>
    %14 = arith.addf %11, %13 : vector<256x32xf32>
    %cst_13 = arith.constant dense<0.000000e+00> : vector<32xf32>
    %15 = vector.multi_reduction <add>, %14, %cst_13 [0] : vector<256x32xf32> to vector<32xf32>
    %16 = vector.shape_cast %15 : vector<32xf32> to vector<1x32xf32>
    %cst_14 = arith.constant 2.560000e+02 : f32
    %17 = vector.broadcast %cst_14 : f32 to vector<1x32xf32>
    %18 = arith.divf %16, %17 : vector<1x32xf32>
    %c0_15 = arith.constant 0 : index
    %c0_16 = arith.constant 0 : index
    %19 = vector.load %arg6[%c0_15, %c0_16] : memref<32x8xf32, #tpu.memory_space<vmem>>, vector<32x8xf32>
    %cst_17 = arith.constant dense<0.000000e+00> : vector<1x8xf32>
    %20 = tpu.matmul %18, %19, %cst_17 {dimension_numbers = #tpu.dot_dimension_numbers<[1], [0], [0], [1], [0, 0, 1, 1], [], []>} : vector<1x32xf32>, vector<32x8xf32>, vector<1x8xf32> -> vector<1x8xf32>
    %c0_18 = arith.constant 0 : index
    %c0_19 = arith.constant 0 : index
    %21 = vector.load %arg7[%c0_18, %c0_19] : memref<1x8xf32, #tpu.memory_space<vmem>>, vector<1x8xf32>
    %22 = arith.addf %20, %21 : vector<1x8xf32>
    %cst_20 = arith.constant 0.000000e+00 : f32
    %23 = vector.broadcast %cst_20 : f32 to vector<1x8xf32>
    %24 = arith.maximumf %22, %23 : vector<1x8xf32>
    %c0_21 = arith.constant 0 : index
    %c0_22 = arith.constant 0 : index
    %25 = vector.load %arg8[%c0_21, %c0_22] : memref<8x32xf32, #tpu.memory_space<vmem>>, vector<8x32xf32>
    %cst_23 = arith.constant dense<0.000000e+00> : vector<1x32xf32>
    %26 = tpu.matmul %24, %25, %cst_23 {dimension_numbers = #tpu.dot_dimension_numbers<[1], [0], [0], [1], [0, 0, 1, 1], [], []>} : vector<1x8xf32>, vector<8x32xf32>, vector<1x32xf32> -> vector<1x32xf32>
    %c0_24 = arith.constant 0 : index
    %c0_25 = arith.constant 0 : index
    %27 = vector.load %arg9[%c0_24, %c0_25] : memref<1x32xf32, #tpu.memory_space<vmem>>, vector<1x32xf32>
    %28 = arith.addf %26, %27 : vector<1x32xf32>
    %29 = arith.negf %28 : vector<1x32xf32>
    %30 = math.exp %29 : vector<1x32xf32>
    %cst_26 = arith.constant 1.000000e+00 : f32
    %31 = vector.broadcast %cst_26 : f32 to vector<1x32xf32>
    %32 = arith.addf %31, %30 : vector<1x32xf32>
    %33 = arith.divf %31, %32 : vector<1x32xf32>
    %34 = vector.broadcast %33 : vector<1x32xf32> to vector<256x32xf32>
    %35 = arith.mulf %14, %34 : vector<256x32xf32>
    %36 = arith.addf %2, %35 : vector<256x32xf32>
    %c0_27 = arith.constant 0 : index
    %c0_28 = arith.constant 0 : index
    %c0_29 = arith.constant 0 : index
    %c0_30 = arith.constant 0 : index
    %37 = vector.load %arg10[%c0_27, %c0_28, %c0_29, %c0_30] : memref<1x16x16x32xf32, #tpu.memory_space<vmem>>, vector<1x16x16x32xf32>
    %38 = vector.shape_cast %37 : vector<1x16x16x32xf32> to vector<16x16x32xf32>
    %39 = vector.shape_cast %38 : vector<16x16x32xf32> to vector<256x32xf32>
    %40 = arith.addf %36, %39 : vector<256x32xf32>
    %41 = vector.shape_cast %40 : vector<256x32xf32> to vector<16x16x32xf32>
    %c0_31 = arith.constant 0 : index
    %c0_32 = arith.constant 0 : index
    %c0_33 = arith.constant 0 : index
    %c0_34 = arith.constant 0 : index
    %42 = vector.load %arg11[%c0_31, %c0_32, %c0_33, %c0_34] : memref<1x16x16x32xf32, #tpu.memory_space<vmem>>, vector<1x16x16x32xf32>
    %43 = vector.shape_cast %42 : vector<1x16x16x32xf32> to vector<16x16x32xf32>
    %44 = vector.shape_cast %41 : vector<16x16x32xf32> to vector<1x16x16x32xf32>
    tpu.vector_store %arg11[%c0_31, %c0_32, %c0_33, %c0_34], %44 {strides = array<i32>} : memref<1x16x16x32xf32, #tpu.memory_space<vmem>>, vector<1x16x16x32xf32>,
    return
  }
  func.func @transform_0(%arg0: i32) -> (i32, i32, i32, i32) {
    %c0_i32 = arith.constant 0 : i32
    %c0_i32_0 = arith.constant 0 : i32
    %c0_i32_1 = arith.constant 0 : i32
    %c0_i32_2 = arith.constant 0 : i32
    return %arg0, %c0_i32, %c0_i32_0, %c0_i32_1 : i32, i32, i32, i32
  }
  func.func @transform_1(%arg0: i32) -> (i32, i32) {
    %c0_i32 = arith.constant 0 : i32
    %c0_i32_0 = arith.constant 0 : i32
    %c0_i32_1 = arith.constant 0 : i32
    return %c0_i32, %c0_i32_0 : i32, i32
  }
  func.func @transform_2(%arg0: i32) -> (i32, i32) {
    %c0_i32 = arith.constant 0 : i32
    %c0_i32_0 = arith.constant 0 : i32
    %c0_i32_1 = arith.constant 0 : i32
    return %c0_i32, %c0_i32_0 : i32, i32
  }
  func.func @transform_3(%arg0: i32) -> (i32, i32) {
    %c0_i32 = arith.constant 0 : i32
    %c0_i32_0 = arith.constant 0 : i32
    %c0_i32_1 = arith.constant 0 : i32
    return %c0_i32, %c0_i32_0 : i32, i32
  }
  func.func @transform_4(%arg0: i32) -> (i32, i32) {
    %c0_i32 = arith.constant 0 : i32
    %c0_i32_0 = arith.constant 0 : i32
    %c0_i32_1 = arith.constant 0 : i32
    return %c0_i32, %c0_i32_0 : i32, i32
  }
  func.func @transform_5(%arg0: i32) -> (i32, i32) {
    %c0_i32 = arith.constant 0 : i32
    %c0_i32_0 = arith.constant 0 : i32
    %c0_i32_1 = arith.constant 0 : i32
    return %c0_i32, %c0_i32_0 : i32, i32
  }
  func.func @transform_6(%arg0: i32) -> (i32, i32) {
    %c0_i32 = arith.constant 0 : i32
    %c0_i32_0 = arith.constant 0 : i32
    %c0_i32_1 = arith.constant 0 : i32
    return %c0_i32, %c0_i32_0 : i32, i32
  }
  func.func @transform_7(%arg0: i32) -> (i32, i32) {
    %c0_i32 = arith.constant 0 : i32
    %c0_i32_0 = arith.constant 0 : i32
    %c0_i32_1 = arith.constant 0 : i32
    return %c0_i32, %c0_i32_0 : i32, i32
  }
  func.func @transform_8(%arg0: i32) -> (i32, i32) {
    %c0_i32 = arith.constant 0 : i32
    %c0_i32_0 = arith.constant 0 : i32
    %c0_i32_1 = arith.constant 0 : i32
    return %c0_i32, %c0_i32_0 : i32, i32
  }
  func.func @transform_9(%arg0: i32) -> (i32, i32, i32, i32) {
    %c0_i32 = arith.constant 0 : i32
    %c0_i32_0 = arith.constant 0 : i32
    %c0_i32_1 = arith.constant 0 : i32
    %c0_i32_2 = arith.constant 0 : i32
    return %arg0, %c0_i32, %c0_i32_0, %c0_i32_1 : i32, i32, i32, i32
  }
  func.func @transform_10(%arg0: i32) -> (i32, i32, i32, i32) {
    %c0_i32 = arith.constant 0 : i32
    %c0_i32_0 = arith.constant 0 : i32
    %c0_i32_1 = arith.constant 0 : i32
    %c0_i32_2 = arith.constant 0 : i32
    return %arg0, %c0_i32, %c0_i32_0, %c0_i32_1 : i32, i32, i32, i32
  }
}

</mosaic_0001>

<llo_original>
// kernel: tile.8
$region0: #{tile.8}
  #allocation0 [shape = 's32[1]{0}', space=sflag, size = 0x4, scoped, tag = 'scoped memory for tile.8']
  %s0 = inlined_call_operand.vmem [shape: f32[32], index: 0, kind: input, shape index: {}]
  %s1 = inlined_call_operand.vmem [shape: f32[2,32], index: 1, kind: output, shape index: {}]
  // Predicated region
  $region2: #{tile.8} parent=0 // pred_check
    _
  $region3: #{tile.8} parent=0 // pred_check_branch
    %3 = sbr.rel (0) target = $region5
  $region4: #{tile.8} parent=0 // pred_region
    _
  $region5: #{tile.8} parent=0 // pred_fallthru
    _
  %v4 = vld [vmem:[%s0] ss:$0 sm:$0xff]
  %5 = vst [vmem:[%s1] sm:$0x3] %v4

// kernel: tile.9
$region0: #{tile.9}
  %s0 = inlined_call_operand.vmem [shape: f32[2,32], index: 0, kind: input, shape index: {}]
  %s1 = inlined_call_operand.vmem [shape: f32[1,64], index: 1, kind: output, shape index: {}]
  $region1: #{tile.9} parent=0
    #allocation0 [shape = 'u8[4096]{0}', space=vmem, size = 0x1000, scoped, tag = 'scoped mem for output reshape']
    #allocation1 [shape = 'u8[4096]{0}', space=vmem, size = 0x1000, scoped, tag = 'scoped mem for input reshape']
    %s3 = ssub.s32 4, 1
    %v4 = vld [vmem:[%s0] sm:%s3]
    %5 = vst [vmem:[#allocation1] sm:%s3] %v4
    %v6 = vld [vmem:[#allocation1] sm:$0x1]
    %vm7 = vcmask 261120
    %8 = vst.msk [vmem:[#allocation0] sm:$0x1] %vm7, %v6
    %s9 = scalar_lea.vmem [#allocation1], 1
    %v10 = vld [vmem:[%s9] sm:$0x1]
    %11 = vrot.lane.b32.xlu0 %v10, 32
    %v12 = vpop.permute.xlu0 %11
    %vm13 = vcmask 523520
    %14 = vst.msk [vmem:[#allocation0] sm:$0x1] %vm13, %v12
    %s16 = ssub.s32 2, 1
    %v17 = vld [vmem:[#allocation0] sm:%s16]
    %s19 = ssub.s32 2, 1
    %20 = vst [vmem:[%s1] sm:%s19] %v17

// kernel: decoder_forward.7
$region0: #{decoder_forward.7}
  #allocation0 [shape = 'u32[]', space=smem, size = 0x4, offset = 0x4, fixed_abs, tag = 'smem constant byte address 0x4 - core index']
  #allocation1 [shape = 'u32[72,128]{1,0:T(1,128)}', space=vmem, size = 0x9000, scoped, tag = 'internal scratch']
  %s0 = inlined_call_operand.vmem [shape: f32[2,8,8,32], index: 0, kind: input, shape index: {}]
  %s1 = inlined_call_operand.vmem [shape: f32[2,32,64], index: 1, kind: input, shape index: {}]
  %s2 = inlined_call_operand.vmem [shape: f32[1,64], index: 2, kind: input, shape index: {}]
  %s3 = inlined_call_operand.vmem [shape: f32[2,8,2,8,64], index: 3, kind: output, shape index: {}]
  %s4 = sld [smem:[#allocation0]]
  $region79: #{decoder_forward.7} parent=0
    _
  %s6 = ssub.s32 1, %s4
  %s7 = scalar_select 0, %s6, %s4
  $region1: #{decoder_forward.7} parent=0
    #allocation2 [shape = 'u8[65536]{0}', space=vmem, size = 0x10000, scoped, tag = 'output window, operand 0']
    loop: start=0, step=1, limit=6
    $region2: #{decoder_forward.7} parent=1 // loop_pre_header
      _
    $region3: #{decoder_forward.7} parent=1 // loop_header
      %s9 = sphi 0, %s13
      %p10 = scmp.ge.s32.totalorder %s9, 6
      %s16 = sphi 0, %s35
      %s17 = sphi 0, %s31
      %s18 = sphi 0, %s27
      %s19 = sphi 0, %s16
      %s20 = sphi 0, %s17
      %s21 = sphi 0, %s18
      %s22 = sphi 0, %s19
      %s23 = sphi 0, %s20
      %s24 = sphi 0, %s21
      %s40 = sphi 0, %s42
      %s43 = sphi 0, %s40
      %s44 = sphi 0, %s43
      %s60 = sphi 0, %s44
      %s66 = sphi 0, %s68
      %s69 = sphi 0, %s66
      %s70 = sphi 0, %s69
      %s86 = sphi 0, %s70
      %s90 = sphi 0, %s90
      %s92 = sphi 0, %s90
      %s93 = sphi 0, %s92
      %s107 = sphi 0, %s93
      %s117 = sphi 0, %s119
      %s120 = sphi 0, %s117
      %s121 = sphi 0, %s120
      %s137 = sphi 0, %s121
    $region4: #{decoder_forward.7} parent=1 // loop_header_branch
      %12 = sbr.rel (%p10) target = $region8
    $region5: #{decoder_forward.7} parent=1 // loop_body
      %s14 = ssub.s32 %s9, 1
      %s15 = ssub.s32 %s9, 2
      %s25 = sadd.s32 1, %s18
      %p26 = scmp.ge.s32.totalorder %s25, 2
      %s27 = scalar_select %p26, 0, %s25
      %s28 = sadd.s32 1, %s17
      %s29 = scalar_select %p26, %s28, %s17
      %p30 = scmp.ge.s32.totalorder %s29, 1
      %s31 = scalar_select %p30, 0, %s29
      %s32 = sadd.s32 1, %s16
      %s33 = scalar_select %p30, %s32, %s16
      %p34 = scmp.ge.s32.totalorder %s33, 2
      %s35 = scalar_select %p34, 0, %s33
      %s36 = ssub.s32 %s16, %s35
      %s37 = ssub.s32 %s17, %s31
      %s38 = sor.u32 %s36, %s37
      %p39 = scmp.eq.s32.totalorder %s38, 0
      %s41 = sadd.s32 %s40, 1
      %s42 = scalar_select %p39, %s40, %s41
      %p45 = pneg %p39
      %p46 = scmp.eq.s32.totalorder %s9, 3
      %p47 = por %p45, %p46
      %p48 = scmp.ne.s32.totalorder %s40, %s43
      %p49 = scmp.eq.s32.totalorder %s9, 0
      %p50 = por %p48, %p49
      %p51 = scmp.ne.s32.totalorder %s40, %s43
      %p52 = scmp.eq.s32.totalorder %s14, 3
      %p53 = por %p51, %p52
      %p54 = scmp.ne.s32.totalorder %s43, %s44
      %p55 = scmp.eq.s32.totalorder %s14, 0
      %p56 = por %p54, %p55
      %p57 = scmp.ne.s32.totalorder %s43, %s44
      %p58 = scmp.eq.s32.totalorder %s15, 3
      %p59 = por %p57, %p58
      %p61 = scmp.ne.s32.totalorder %s44, %s60
      %p62 = scmp.eq.s32.totalorder %s15, 0
      %p63 = por %p61, %p62
      %s64 = ssub.s32 %s18, %s27
      %p65 = scmp.eq.s32.totalorder %s64, 0
      %s67 = sadd.s32 %s66, 1
      %s68 = scalar_select %p65, %s66, %s67
      %p71 = pneg %p65
      %p72 = scmp.eq.s32.totalorder %s9, 3
      %p73 = por %p71, %p72
      %p74 = scmp.ne.s32.totalorder %s66, %s69
      %p75 = scmp.eq.s32.totalorder %s9, 0
      %p76 = por %p74, %p75
      %p77 = scmp.ne.s32.totalorder %s66, %s69
      %p78 = scmp.eq.s32.totalorder %s14, 3
      %p79 = por %p77, %p78
      %p80 = scmp.ne.s32.totalorder %s69, %s70
      %p81 = scmp.eq.s32.totalorder %s14, 0
      %p82 = por %p80, %p81
      %p83 = scmp.ne.s32.totalorder %s69, %s70
      %p84 = scmp.eq.s32.totalorder %s15, 3
      %p85 = por %p83, %p84
      %p87 = scmp.ne.s32.totalorder %s70, %s86
      %p88 = scmp.eq.s32.totalorder %s15, 0
      %p89 = por %p87, %p88
      %s91 = sadd.s32 %s90, 1
      %p94 = scmp.eq.s32.totalorder %s9, 3
      %p95 = scmp.ne.s32.totalorder %s90, %s92
      %p96 = scmp.eq.s32.totalorder %s9, 0
      %p97 = por %p95, %p96
      %p98 = scmp.ne.s32.totalorder %s90, %s92
      %p99 = scmp.eq.s32.totalorder %s14, 3
      %p100 = por %p98, %p99
      %p101 = scmp.ne.s32.totalorder %s92, %s93
      %p102 = scmp.eq.s32.totalorder %s14, 0
      %p103 = por %p101, %p102
      %p104 = scmp.ne.s32.totalorder %s92, %s93
      %p105 = scmp.eq.s32.totalorder %s15, 3
      %p106 = por %p104, %p105
      %p108 = scmp.ne.s32.totalorder %s93, %s107
      %p109 = scmp.eq.s32.totalorder %s15, 0
      %p110 = por %p108, %p109
      %s111 = ssub.s32 %s16, %s35
      %s112 = ssub.s32 %s17, %s31
      %s113 = sor.u32 %s111, %s112
      %s114 = ssub.s32 %s18, %s27
      %s115 = sor.u32 %s113, %s114
      %p116 = scmp.eq.s32.totalorder %s115, 0
      %s118 = sadd.s32 %s117, 1
      %s119 = scalar_select %p116, %s117, %s118
      %p122 = pneg %p116
      %p123 = scmp.eq.s32.totalorder %s9, 3
      %p124 = por %p122, %p123
      %p125 = scmp.ne.s32.totalorder %s117, %s120
      %p126 = scmp.eq.s32.totalorder %s9, 0
      %p127 = por %p125, %p126
      %p128 = scmp.ne.s32.totalorder %s117, %s120
      %p129 = scmp.eq.s32.totalorder %s14, 3
      %p130 = por %p128, %p129
      %p131 = scmp.ne.s32.totalorder %s120, %s121
      %p132 = scmp.eq.s32.totalorder %s14, 0
      %p133 = por %p131, %p132
      %p134 = scmp.ne.s32.totalorder %s120, %s121
      %p135 = scmp.eq.s32.totalorder %s15, 3
      %p136 = por %p134, %p135
      %p138 = scmp.ne.s32.totalorder %s121, %s137
      %p139 = scmp.eq.s32.totalorder %s15, 0
      %p140 = por %p138, %p139
      %p141 = scmp.le.s32.totalorder 1, %s9
      %p142 = scmp.lt.s32.totalorder %s9, 5
      %p143 = pnand %p141, %p142
      %p144 = pneg %p143
      // Predicated region
      $region9: #{decoder_forward.7} parent=5 // pred_check
        _
      $region10: #{decoder_forward.7} parent=5 // pred_check_branch
        %146 = sbr.rel (%p143) target = $region12
      $region11: #{decoder_forward.7} parent=5 // pred_region
        %s147 = ssub.s32 %s9, 1
        // Predicated region
        $region13: #{decoder_forward.7} parent=11 // pred_check
          %p148 = pneg %p103
        $region14: #{decoder_forward.7} parent=11 // pred_check_branch
          %150 = sbr.rel (%p148) target = $region16
        $region15: #{decoder_forward.7} parent=11 // pred_region
          _
        $region16: #{decoder_forward.7} parent=11 // pred_fallthru
          _
      $region12: #{decoder_forward.7} parent=5 // pred_fallthru
        _
      %p151 = scmp.lt.s32.totalorder %s9, 4
      // Predicated region
      $region17: #{decoder_forward.7} parent=5 // pred_check
        %p152 = pneg %p151
      $region18: #{decoder_forward.7} parent=5 // pred_check_branch
        %154 = sbr.rel (%p152) target = $region20
      $region19: #{decoder_forward.7} parent=5 // pred_region
        // Predicated region
        $region21: #{decoder_forward.7} parent=19 // pred_check
          %p155 = pneg %p50
        $region22: #{decoder_forward.7} parent=19 // pred_check_branch
          %157 = sbr.rel (%p155) target = $region24
        $region23: #{decoder_forward.7} parent=19 // pred_region
          %s158 = smul.u32 8, %s17
          %p159 = scmp.lt.s32.totalorder %s16, 1
          %s160 = scalar_select %p159, %s16, 1
          %p161 = scmp.lt.s32.totalorder %s158, 7
          %s162 = scalar_select %p161, %s158, 7
          %s163 = smul.addr %s160, 8
          %s164 = sadd.s32 %s162, %s163
          %s165 = smul.addr %s164, 8
          %s166 = scalar_lea.vmem %s0, %s165
          %s167 = smul.u32 8, %s17
        $region24: #{decoder_forward.7} parent=19 // pred_fallthru
          _
        // Predicated region
        $region25: #{decoder_forward.7} parent=19 // pred_check
          %p168 = pneg %p76
        $region26: #{decoder_forward.7} parent=19 // pred_check_branch
          %170 = sbr.rel (%p168) target = $region28
        $region27: #{decoder_forward.7} parent=19 // pred_region
          %p171 = scmp.lt.s32.totalorder %s18, 1
          %s172 = scalar_select %p171, %s18, 1
          %s173 = smul.addr %s172, 4
          %s174 = smul.addr %s173, 8
          %s175 = scalar_lea.vmem %s1, %s174
        $region28: #{decoder_forward.7} parent=19 // pred_fallthru
          _
      $region20: #{decoder_forward.7} parent=5 // pred_fallthru
        _
      %p176 = scmp.le.s32.totalorder 1, %s9
      %p177 = scmp.lt.s32.totalorder %s9, 5
      %p178 = pnand %p176, %p177
      %p179 = pneg %p178
      // Predicated region
      $region29: #{decoder_forward.7} parent=5 // pred_check
        _
      $region30: #{decoder_forward.7} parent=5 // pred_check_branch
        %181 = sbr.rel (%p178) target = $region32
      $region31: #{decoder_forward.7} parent=5 // pred_region
        %s182 = ssub.s32 %s9, 1
        %s183 = smul.u32 8, %s20
        %p184 = scmp.lt.s32.totalorder %s19, 1
        %s185 = scalar_select %p184, %s19, 1
        %p186 = scmp.lt.s32.totalorder %s183, 7
        %s187 = scalar_select %p186, %s183, 7
        %s188 = smul.addr %s185, 8
        %s189 = sadd.s32 %s187, %s188
        %s190 = smul.addr %s189, 8
        %s191 = scalar_lea.vmem %s0, %s190
        %p192 = pneg %p56
        %p193 = pneg %p53
        %p194 = scmp.lt.s32.totalorder %s21, 1
        %s195 = scalar_select %p194, %s21, 1
        %s196 = smul.addr %s195, 4
        %s197 = smul.addr %s196, 8
        %s198 = scalar_lea.vmem %s1, %s197
        %p199 = pneg %p82
        %p200 = pneg %p79
        %p201 = pneg %p103
        %p202 = pneg %p100
        %p203 = pneg %p133
        %p204 = pneg %p130
        %s205 = sand.u32 %s120, 1
        %s206 = sand.u32 %s120, 1
        %s207 = smul.addr %s206, 64
        %s208 = scalar_lea.vmem [#allocation2], %s207
        %s209 = smul.u32 8, %s20
        %p210 = scmp.lt.s32.totalorder %s19, 1
        %s211 = scalar_select %p210, %s19, 1
        %p212 = scmp.lt.s32.totalorder %s209, 7
        %s213 = scalar_select %p212, %s209, 7
        %s214 = smul.addr %s211, 8
        %s215 = sadd.s32 %s213, %s214
        %s216 = smul.addr %s215, 8
        %s217 = scalar_lea.vmem %s0, %s216
        %s218 = smul.u32 8, %s20
        %p219 = scmp.lt.s32.totalorder %s21, 1
        %s220 = scalar_select %p219, %s21, 1
        %s221 = smul.addr %s220, 4
        %s222 = smul.addr %s221, 8
        %s223 = scalar_lea.vmem %s1, %s222
        %s224 = smul.u32 8, %s20
        %v225 = vld [vmem:[%s217] sm:$0xff]
        %v226 = vld [vmem:[%s217 + $0x8] sm:$0xff]
        %v227 = vld [vmem:[%s217 + $0x10] sm:$0xff]
        %v228 = vld [vmem:[%s217 + $0x18] sm:$0xff]
        %v229 = vld [vmem:[%s217 + $0x20] sm:$0xff]
        %v230 = vld [vmem:[%s217 + $0x28] sm:$0xff]
        %v231 = vld [vmem:[%s217 + $0x30] sm:$0xff]
        %v232 = vld [vmem:[%s217 + $0x38] sm:$0xff]
        %v233 = vld [vmem:[%s223] sm:$0xff]
        %v234 = vld [vmem:[%s223 + $0x8] sm:$0xff]
        %v235 = vld [vmem:[%s223 + $0x10] sm:$0xff]
        %v236 = vld [vmem:[%s223 + $0x18] sm:$0xff]
        %v237 = vld [vmem:[%s2] sm:$0x1]
        %v239 = vperm.slane %v237, 0
        %vm241 = vcmask 261120
        %v243 = vsel %vm241, %v225, 0
        %v246 = vsel %vm241, %v226, 0
        %v249 = vsel %vm241, %v227, 0
        %v252 = vsel %vm241, %v228, 0
        %v255 = vsel %vm241, %v229, 0
        %v258 = vsel %vm241, %v230, 0
        %v261 = vsel %vm241, %v231, 0
        %v264 = vsel %vm241, %v232, 0
        %266 = vmatpush.msra.mxu0 0.0
        %267 = vmatpush.msra.mxu0 0.0
        %268 = vmatpush.msra.mxu0 0.0
        %269 = vmatpush.msra.mxu0 0.0
        %270 = vmatpush.msra.mxu0 0.0
        %271 = vmatpush.msra.mxu0 0.0
        %272 = vmatpush.msra.mxu0 0.0
        %273 = vmatpush.msra.mxu0 0.0
        %274 = vmatpush.msra.mxu0 0.0
        %275 = vmatpush.msra.mxu0 0.0
        %276 = vmatpush.msra.mxu0 0.0
        %277 = vmatpush.msra.mxu0 0.0
        %278 = vmatpush.msra.mxu0 %v236
        %279 = vmatpush.msra.mxu0 %v235
        %280 = vmatpush.msra.mxu0 %v234
        %281 = vmatpush.msra.mxu0 %v233
        %282 = vmatmul.f32.gmra.mxu0 %v243
        %v283 = vpop.f32.mrf.mxu0
        %v284 = vadd.f32 %v239, %v283
        %285 = vmatmul.f32.gmra.mxu0 %v246
        %v286 = vpop.f32.mrf.mxu0
        %v287 = vadd.f32 %v239, %v286
        %288 = vmatmul.f32.gmra.mxu0 %v249
        %v289 = vpop.f32.mrf.mxu0
        %v290 = vadd.f32 %v239, %v289
        %291 = vmatmul.f32.gmra.mxu0 %v252
        %v292 = vpop.f32.mrf.mxu0
        %v293 = vadd.f32 %v239, %v292
        %294 = vmatmul.f32.gmra.mxu0 %v255
        %v295 = vpop.f32.mrf.mxu0
        %v296 = vadd.f32 %v239, %v295
        %297 = vmatmul.f32.gmra.mxu0 %v258
        %v298 = vpop.f32.mrf.mxu0
        %v299 = vadd.f32 %v239, %v298
        %300 = vmatmul.f32.gmra.mxu0 %v261
        %v301 = vpop.f32.mrf.mxu0
        %v302 = vadd.f32 %v239, %v301
        %303 = vmatmul.f32.gmra.mxu0 %v264
        %v304 = vpop.f32.mrf.mxu0
        %v305 = vadd.f32 %v239, %v304
        %306 = vdwg.mxu0
        %vm307 = vcmask 523264
        %308 = vst.msk [vmem:[%s208] sm:$0xff] %vm307, %v284
        %309 = vst.msk [vmem:[%s208 + $0x8] sm:$0xff] %vm307, %v287
        %310 = vst.msk [vmem:[%s208 + $0x10] sm:$0xff] %vm307, %v290
        %311 = vst.msk [vmem:[%s208 + $0x18] sm:$0xff] %vm307, %v293
        %312 = vst.msk [vmem:[%s208 + $0x20] sm:$0xff] %vm307, %v296
        %313 = vst.msk [vmem:[%s208 + $0x28] sm:$0xff] %vm307, %v299
        %314 = vst.msk [vmem:[%s208 + $0x30] sm:$0xff] %vm307, %v302
        %315 = vst.msk [vmem:[%s208 + $0x38] sm:$0xff] %vm307, %v305
        %s316 = sand.u32 %s120, 1
        %s317 = sand.u32 %s120, 1
        %s318 = smul.addr %s317, 64
        %s319 = scalar_lea.vmem [#allocation2], %s318
        // Predicated region
        $region33: #{decoder_forward.7} parent=31 // pred_check
          %p320 = pneg %p130
        $region34: #{decoder_forward.7} parent=31 // pred_check_branch
          %322 = sbr.rel (%p320) target = $region36
        $region35: #{decoder_forward.7} parent=31 // pred_region
          %s323 = smul.u32 8, %s20
          %s324 = smul.addr %s323, 2
          %s325 = sadd.s32 %s21, %s324
          %s326 = smul.addr %s19, 16
          %s327 = sadd.s32 %s325, %s326
          %s328 = smul.addr %s327, 8
          %s329 = scalar_lea.vmem %s3, %s328
          // Predicated region
          $region37: #{decoder_forward.7} parent=35 // pred_check
            _
          $region38: #{decoder_forward.7} parent=35 // pred_check_branch
            %331 = sbr.rel (0) target = $region40
          $region39: #{decoder_forward.7} parent=35 // pred_region
            // Predicated region
            $region41: #{decoder_forward.7} parent=39 // pred_check
              _
            $region42: #{decoder_forward.7} parent=39 // pred_check_branch
              %333 = sbr.rel (0) target = $region44
            $region43: #{decoder_forward.7} parent=39 // pred_region
              // Predicated region
              $region56: #{decoder_forward.7} parent=43 // pred_check
                _
              $region57: #{decoder_forward.7} parent=43 // pred_check_branch
                %363 = sbr.rel (0) target = $region59
              $region58: #{decoder_forward.7} parent=43 // pred_region
                loop: start=0, step=1, limit=1
                $region60: #{decoder_forward.7} parent=58 // loop_pre_header
                  _
                $region61: #{decoder_forward.7} parent=58 // loop_header
                  %s365 = sphi 0, %s369
                  %p366 = scmp.ge.s32.totalorder %s365, 1
                  %s370 = sphi %s319, %s319
                  %s371 = sphi %s329, %s329
                $region62: #{decoder_forward.7} parent=58 // loop_header_branch
                  %368 = sbr.rel (%p366) target = $region66
                $region63: #{decoder_forward.7} parent=58 // loop_body
                  %v372 = vld [vmem:[%s370] sm:$0xff]
                  %373 = vst [vmem:[%s371] sm:$0xff] %v372
                  %v374 = vld [vmem:[%s370 + $0x8] sm:$0xff]
                  %375 = vst [vmem:[%s371 + $0x10] sm:$0xff] %v374
                  %v376 = vld [vmem:[%s370 + $0x10] sm:$0xff]
                  %377 = vst [vmem:[%s371 + $0x20] sm:$0xff] %v376
                  %v378 = vld [vmem:[%s370 + $0x18] sm:$0xff]
                  %379 = vst [vmem:[%s371 + $0x30] sm:$0xff] %v378
                  %v380 = vld [vmem:[%s370 + $0x20] sm:$0xff]
                  %381 = vst [vmem:[%s371 + $0x40] sm:$0xff] %v380
                  %v382 = vld [vmem:[%s370 + $0x28] sm:$0xff]
                  %383 = vst [vmem:[%s371 + $0x50] sm:$0xff] %v382
                  %v384 = vld [vmem:[%s370 + $0x30] sm:$0xff]
                  %385 = vst [vmem:[%s371 + $0x60] sm:$0xff] %v384
                  %v386 = vld [vmem:[%s370 + $0x38] sm:$0xff]
                  %387 = vst [vmem:[%s371 + $0x70] sm:$0xff] %v386
                $region64: #{decoder_forward.7} parent=58 // loop_footer
                  %s369 = sadd.s32 1, %s365
                $region65: #{decoder_forward.7} parent=58 // loop_footer_branch
                  %364 = sbr.rel target = $region61
                $region66: #{decoder_forward.7} parent=58 // loop_exit
                  _
              $region59: #{decoder_forward.7} parent=43 // pred_fallthru
                _
              // Predicated region
              $region67: #{decoder_forward.7} parent=43 // pred_check
                _
              $region68: #{decoder_forward.7} parent=43 // pred_check_branch
                %389 = sbr.rel target = $region70
              $region69: #{decoder_forward.7} parent=43 // pred_region
                _
              $region70: #{decoder_forward.7} parent=43 // pred_fallthru
                _
            $region44: #{decoder_forward.7} parent=39 // pred_fallthru
              _
            // Predicated region
            $region45: #{decoder_forward.7} parent=39 // pred_check
              _
            $region46: #{decoder_forward.7} parent=39 // pred_check_branch
              %335 = sbr.rel target = $region48
            $region47: #{decoder_forward.7} parent=39 // pred_region
              %s337 = ssub.s32 256, 1
              loop: start=0, step=1, limit=1
              $region49: #{decoder_forward.7} parent=47 // loop_pre_header
                _
              $region50: #{decoder_forward.7} parent=47 // loop_header
                %s339 = sphi 0, %s343
                %p340 = scmp.ge.s32.totalorder %s339, 1
                %s344 = sphi %s319, %s319
                %s345 = sphi %s329, %s329
              $region51: #{decoder_forward.7} parent=47 // loop_header_branch
                %342 = sbr.rel (%p340) target = $region55
              $region52: #{decoder_forward.7} parent=47 // loop_body
                %v346 = vld [vmem:[%s344] sm:%s337]
                %347 = vst [vmem:[%s345] sm:%s337] %v346
                %v348 = vld [vmem:[%s344 + $0x8] sm:%s337]
                %349 = vst [vmem:[%s345 + $0x10] sm:%s337] %v348
                %v350 = vld [vmem:[%s344 + $0x10] sm:%s337]
                %351 = vst [vmem:[%s345 + $0x20] sm:%s337] %v350
                %v352 = vld [vmem:[%s344 + $0x18] sm:%s337]
                %353 = vst [vmem:[%s345 + $0x30] sm:%s337] %v352
                %v354 = vld [vmem:[%s344 + $0x20] sm:%s337]
                %355 = vst [vmem:[%s345 + $0x40] sm:%s337] %v354
                %v356 = vld [vmem:[%s344 + $0x28] sm:%s337]
                %357 = vst [vmem:[%s345 + $0x50] sm:%s337] %v356
                %v358 = vld [vmem:[%s344 + $0x30] sm:%s337]
                %359 = vst [vmem:[%s345 + $0x60] sm:%s337] %v358
                %v360 = vld [vmem:[%s344 + $0x38] sm:%s337]
                %361 = vst [vmem:[%s345 + $0x70] sm:%s337] %v360
              $region53: #{decoder_forward.7} parent=47 // loop_footer
                %s343 = sadd.s32 1, %s339
              $region54: #{decoder_forward.7} parent=47 // loop_footer_branch
                %338 = sbr.rel target = $region50
              $region55: #{decoder_forward.7} parent=47 // loop_exit
                _
            $region48: #{decoder_forward.7} parent=39 // pred_fallthru
              _
          $region40: #{decoder_forward.7} parent=35 // pred_fallthru
            _
          %390 = vnop
        $region36: #{decoder_forward.7} parent=31 // pred_fallthru
          _
      $region32: #{decoder_forward.7} parent=5 // pred_fallthru
        _
      %p391 = scmp.le.s32.totalorder 2, %s9
      // Predicated region
      $region71: #{decoder_forward.7} parent=5 // pred_check
        %p392 = pneg %p391
      $region72: #{decoder_forward.7} parent=5 // pred_check_branch
        %394 = sbr.rel (%p392) target = $region74
      $region73: #{decoder_forward.7} parent=5 // pred_region
        %s395 = ssub.s32 %s9, 2
        // Predicated region
        $region75: #{decoder_forward.7} parent=73 // pred_check
          %p396 = pneg %p136
        $region76: #{decoder_forward.7} parent=73 // pred_check_branch
          %398 = sbr.rel (%p396) target = $region78
        $region77: #{decoder_forward.7} parent=73 // pred_region
          %s399 = sand.u32 %s121, 1
          %s400 = sand.u32 %s121, 1
          %s401 = smul.addr %s400, 64
          %s402 = scalar_lea.vmem [#allocation2], %s401
        $region78: #{decoder_forward.7} parent=73 // pred_fallthru
          _
      $region74: #{decoder_forward.7} parent=5 // pred_fallthru
        _
    $region6: #{decoder_forward.7} parent=1 // loop_footer
      %s13 = sadd.s32 1, %s9
    $region7: #{decoder_forward.7} parent=1 // loop_footer_branch
      %8 = sbr.rel target = $region3
    $region8: #{decoder_forward.7} parent=1 // loop_exit
      _

// kernel: decoder_forward.10
$region0: #{decoder_forward.10}
  #allocation0 [shape = 'u32[]', space=smem, size = 0x4, offset = 0x4, fixed_abs, tag = 'smem constant byte address 0x4 - core index']
  #allocation1 [shape = 'u32[72,128]{1,0:T(1,128)}', space=vmem, size = 0x9000, scoped, tag = 'internal scratch']
  %s0 = inlined_call_operand.vmem [shape: f32[2,16,16,32], index: 0, kind: input, shape index: {}]
  %s1 = inlined_call_operand.vmem [shape: f32[32,32], index: 1, kind: input, shape index: {}]
  %s2 = inlined_call_operand.vmem [shape: f32[1,32], index: 2, kind: input, shape index: {}]
  %s3 = inlined_call_operand.vmem [shape: f32[32,32], index: 3, kind: input, shape index: {}]
  %s4 = inlined_call_operand.vmem [shape: f32[1,32], index: 4, kind: input, shape index: {}]
  %s5 = inlined_call_operand.vmem [shape: f32[32,8], index: 5, kind: input, shape index: {}]
  %s6 = inlined_call_operand.vmem [shape: f32[1,8], index: 6, kind: input, shape index: {}]
  %s7 = inlined_call_operand.vmem [shape: f32[8,32], index: 7, kind: input, shape index: {}]
  %s8 = inlined_call_operand.vmem [shape: f32[1,32], index: 8, kind: input, shape index: {}]
  %s9 = inlined_call_operand.vmem [shape: f32[2,16,16,32], index: 9, kind: output, shape index: {}]
  %s10 = sld [smem:[#allocation0]]
  $region69: #{decoder_forward.10} parent=0
    _
  %s12 = ssub.s32 1, %s10
  %s13 = scalar_select 0, %s12, %s10
  loop: start=0, step=1, limit=4
  $region2: #{decoder_forward.10} parent=0 // loop_pre_header
    _
  $region3: #{decoder_forward.10} parent=0 // loop_header
    %s15 = sphi 0, %s19
    %p16 = scmp.ge.s32.totalorder %s15, 4
    %s25 = sphi 0, %s27
    %s28 = sphi 0, %s25
    %s29 = sphi 0, %s28
    %s45 = sphi 0, %s29
    %s49 = sphi 0, %s49
    %s51 = sphi 0, %s49
    %s52 = sphi 0, %s51
    %s66 = sphi 0, %s52
    %s70 = sphi 0, %s70
    %s72 = sphi 0, %s70
    %s73 = sphi 0, %s72
    %s87 = sphi 0, %s73
    %s91 = sphi 0, %s91
    %s93 = sphi 0, %s91
    %s94 = sphi 0, %s93
    %s108 = sphi 0, %s94
    %s112 = sphi 0, %s112
    %s114 = sphi 0, %s112
    %s115 = sphi 0, %s114
    %s129 = sphi 0, %s115
    %s133 = sphi 0, %s133
    %s135 = sphi 0, %s133
    %s136 = sphi 0, %s135
    %s150 = sphi 0, %s136
    %s154 = sphi 0, %s154
    %s156 = sphi 0, %s154
    %s157 = sphi 0, %s156
    %s171 = sphi 0, %s157
    %s175 = sphi 0, %s175
    %s177 = sphi 0, %s175
    %s178 = sphi 0, %s177
    %s192 = sphi 0, %s178
    %s196 = sphi 0, %s196
    %s198 = sphi 0, %s196
    %s199 = sphi 0, %s198
    %s213 = sphi 0, %s199
    %s219 = sphi 0, %s221
    %s222 = sphi 0, %s219
    %s223 = sphi 0, %s222
    %s239 = sphi 0, %s223
  $region4: #{decoder_forward.10} parent=0 // loop_header_branch
    %18 = sbr.rel (%p16) target = $region8
  $region5: #{decoder_forward.10} parent=0 // loop_body
    %s20 = ssub.s32 %s15, 1
    %s21 = ssub.s32 %s15, 2
    %s22 = sadd.s32 %s15, 1
    %s23 = ssub.s32 %s15, %s22
    %p24 = scmp.eq.s32.totalorder %s23, 0
    %s26 = sadd.s32 %s25, 1
    %s27 = scalar_select %p24, %s25, %s26
    %p30 = pneg %p24
    %p31 = scmp.eq.s32.totalorder %s15, 1
    %p32 = por %p30, %p31
    %p33 = scmp.ne.s32.totalorder %s25, %s28
    %p34 = scmp.eq.s32.totalorder %s15, 0
    %p35 = por %p33, %p34
    %p36 = scmp.ne.s32.totalorder %s25, %s28
    %p37 = scmp.eq.s32.totalorder %s20, 1
    %p38 = por %p36, %p37
    %p39 = scmp.ne.s32.totalorder %s28, %s29
    %p40 = scmp.eq.s32.totalorder %s20, 0
    %p41 = por %p39, %p40
    %p42 = scmp.ne.s32.totalorder %s28, %s29
    %p43 = scmp.eq.s32.totalorder %s21, 1
    %p44 = por %p42, %p43
    %p46 = scmp.ne.s32.totalorder %s29, %s45
    %p47 = scmp.eq.s32.totalorder %s21, 0
    %p48 = por %p46, %p47
    %s50 = sadd.s32 %s49, 1
    %p53 = scmp.eq.s32.totalorder %s15, 1
    %p54 = scmp.ne.s32.totalorder %s49, %s51
    %p55 = scmp.eq.s32.totalorder %s15, 0
    %p56 = por %p54, %p55
    %p57 = scmp.ne.s32.totalorder %s49, %s51
    %p58 = scmp.eq.s32.totalorder %s20, 1
    %p59 = por %p57, %p58
    %p60 = scmp.ne.s32.totalorder %s51, %s52
    %p61 = scmp.eq.s32.totalorder %s20, 0
    %p62 = por %p60, %p61
    %p63 = scmp.ne.s32.totalorder %s51, %s52
    %p64 = scmp.eq.s32.totalorder %s21, 1
    %p65 = por %p63, %p64
    %p67 = scmp.ne.s32.totalorder %s52, %s66
    %p68 = scmp.eq.s32.totalorder %s21, 0
    %p69 = por %p67, %p68
    %s71 = sadd.s32 %s70, 1
    %p74 = scmp.eq.s32.totalorder %s15, 1
    %p75 = scmp.ne.s32.totalorder %s70, %s72
    %p76 = scmp.eq.s32.totalorder %s15, 0
    %p77 = por %p75, %p76
    %p78 = scmp.ne.s32.totalorder %s70, %s72
    %p79 = scmp.eq.s32.totalorder %s20, 1
    %p80 = por %p78, %p79
    %p81 = scmp.ne.s32.totalorder %s72, %s73
    %p82 = scmp.eq.s32.totalorder %s20, 0
    %p83 = por %p81, %p82
    %p84 = scmp.ne.s32.totalorder %s72, %s73
    %p85 = scmp.eq.s32.totalorder %s21, 1
    %p86 = por %p84, %p85
    %p88 = scmp.ne.s32.totalorder %s73, %s87
    %p89 = scmp.eq.s32.totalorder %s21, 0
    %p90 = por %p88, %p89
    %s92 = sadd.s32 %s91, 1
    %p95 = scmp.eq.s32.totalorder %s15, 1
    %p96 = scmp.ne.s32.totalorder %s91, %s93
    %p97 = scmp.eq.s32.totalorder %s15, 0
    %p98 = por %p96, %p97
    %p99 = scmp.ne.s32.totalorder %s91, %s93
    %p100 = scmp.eq.s32.totalorder %s20, 1
    %p101 = por %p99, %p100
    %p102 = scmp.ne.s32.totalorder %s93, %s94
    %p103 = scmp.eq.s32.totalorder %s20, 0
    %p104 = por %p102, %p103
    %p105 = scmp.ne.s32.totalorder %s93, %s94
    %p106 = scmp.eq.s32.totalorder %s21, 1
    %p107 = por %p105, %p106
    %p109 = scmp.ne.s32.totalorder %s94, %s108
    %p110 = scmp.eq.s32.totalorder %s21, 0
    %p111 = por %p109, %p110
    %s113 = sadd.s32 %s112, 1
    %p116 = scmp.eq.s32.totalorder %s15, 1
    %p117 = scmp.ne.s32.totalorder %s112, %s114
    %p118 = scmp.eq.s32.totalorder %s15, 0
    %p119 = por %p117, %p118
    %p120 = scmp.ne.s32.totalorder %s112, %s114
    %p121 = scmp.eq.s32.totalorder %s20, 1
    %p122 = por %p120, %p121
    %p123 = scmp.ne.s32.totalorder %s114, %s115
    %p124 = scmp.eq.s32.totalorder %s20, 0
    %p125 = por %p123, %p124
    %p126 = scmp.ne.s32.totalorder %s114, %s115
    %p127 = scmp.eq.s32.totalorder %s21, 1
    %p128 = por %p126, %p127
    %p130 = scmp.ne.s32.totalorder %s115, %s129
    %p131 = scmp.eq.s32.totalorder %s21, 0
    %p132 = por %p130, %p131
    %s134 = sadd.s32 %s133, 1
    %p137 = scmp.eq.s32.totalorder %s15, 1
    %p138 = scmp.ne.s32.totalorder %s133, %s135
    %p139 = scmp.eq.s32.totalorder %s15, 0
    %p140 = por %p138, %p139
    %p141 = scmp.ne.s32.totalorder %s133, %s135
    %p142 = scmp.eq.s32.totalorder %s20, 1
    %p143 = por %p141, %p142
    %p144 = scmp.ne.s32.totalorder %s135, %s136
    %p145 = scmp.eq.s32.totalorder %s20, 0
    %p146 = por %p144, %p145
    %p147 = scmp.ne.s32.totalorder %s135, %s136
    %p148 = scmp.eq.s32.totalorder %s21, 1
    %p149 = por %p147, %p148
    %p151 = scmp.ne.s32.totalorder %s136, %s150
    %p152 = scmp.eq.s32.totalorder %s21, 0
    %p153 = por %p151, %p152
    %s155 = sadd.s32 %s154, 1
    %p158 = scmp.eq.s32.totalorder %s15, 1
    %p159 = scmp.ne.s32.totalorder %s154, %s156
    %p160 = scmp.eq.s32.totalorder %s15, 0
    %p161 = por %p159, %p160
    %p162 = scmp.ne.s32.totalorder %s154, %s156
    %p163 = scmp.eq.s32.totalorder %s20, 1
    %p164 = por %p162, %p163
    %p165 = scmp.ne.s32.totalorder %s156, %s157
    %p166 = scmp.eq.s32.totalorder %s20, 0
    %p167 = por %p165, %p166
    %p168 = scmp.ne.s32.totalorder %s156, %s157
    %p169 = scmp.eq.s32.totalorder %s21, 1
    %p170 = por %p168, %p169
    %p172 = scmp.ne.s32.totalorder %s157, %s171
    %p173 = scmp.eq.s32.totalorder %s21, 0
    %p174 = por %p172, %p173
    %s176 = sadd.s32 %s175, 1
    %p179 = scmp.eq.s32.totalorder %s15, 1
    %p180 = scmp.ne.s32.totalorder %s175, %s177
    %p181 = scmp.eq.s32.totalorder %s15, 0
    %p182 = por %p180, %p181
    %p183 = scmp.ne.s32.totalorder %s175, %s177
    %p184 = scmp.eq.s32.totalorder %s20, 1
    %p185 = por %p183, %p184
    %p186 = scmp.ne.s32.totalorder %s177, %s178
    %p187 = scmp.eq.s32.totalorder %s20, 0
    %p188 = por %p186, %p187
    %p189 = scmp.ne.s32.totalorder %s177, %s178
    %p190 = scmp.eq.s32.totalorder %s21, 1
    %p191 = por %p189, %p190
    %p193 = scmp.ne.s32.totalorder %s178, %s192
    %p194 = scmp.eq.s32.totalorder %s21, 0
    %p195 = por %p193, %p194
    %s197 = sadd.s32 %s196, 1
    %p200 = scmp.eq.s32.totalorder %s15, 1
    %p201 = scmp.ne.s32.totalorder %s196, %s198
    %p202 = scmp.eq.s32.totalorder %s15, 0
    %p203 = por %p201, %p202
    %p204 = scmp.ne.s32.totalorder %s196, %s198
    %p205 = scmp.eq.s32.totalorder %s20, 1
    %p206 = por %p204, %p205
    %p207 = scmp.ne.s32.totalorder %s198, %s199
    %p208 = scmp.eq.s32.totalorder %s20, 0
    %p209 = por %p207, %p208
    %p210 = scmp.ne.s32.totalorder %s198, %s199
    %p211 = scmp.eq.s32.totalorder %s21, 1
    %p212 = por %p210, %p211
    %p214 = scmp.ne.s32.totalorder %s199, %s213
    %p215 = scmp.eq.s32.totalorder %s21, 0
    %p216 = por %p214, %p215
    %s217 = ssub.s32 %s15, %s22
    %p218 = scmp.eq.s32.totalorder %s217, 0
    %s220 = sadd.s32 %s219, 1
    %s221 = scalar_select %p218, %s219, %s220
    %p224 = pneg %p218
    %p225 = scmp.eq.s32.totalorder %s15, 1
    %p226 = por %p224, %p225
    %p227 = scmp.ne.s32.totalorder %s219, %s222
    %p228 = scmp.eq.s32.totalorder %s15, 0
    %p229 = por %p227, %p228
    %p230 = scmp.ne.s32.totalorder %s219, %s222
    %p231 = scmp.eq.s32.totalorder %s20, 1
    %p232 = por %p230, %p231
    %p233 = scmp.ne.s32.totalorder %s222, %s223
    %p234 = scmp.eq.s32.totalorder %s20, 0
    %p235 = por %p233, %p234
    %p236 = scmp.ne.s32.totalorder %s222, %s223
    %p237 = scmp.eq.s32.totalorder %s21, 1
    %p238 = por %p236, %p237
    %p240 = scmp.ne.s32.totalorder %s223, %s239
    %p241 = scmp.eq.s32.totalorder %s21, 0
    %p242 = por %p240, %p241
    %p243 = scmp.le.s32.totalorder 1, %s15
    %p244 = scmp.lt.s32.totalorder %s15, 3
    %p245 = pnand %p243, %p244
    %p246 = pneg %p245
    // Predicated region
    $region9: #{decoder_forward.10} parent=5 // pred_check
      _
    $region10: #{decoder_forward.10} parent=5 // pred_check_branch
      %248 = sbr.rel (%p245) target = $region12
    $region11: #{decoder_forward.10} parent=5 // pred_region
      %s249 = ssub.s32 %s15, 1
      // Predicated region
      $region13: #{decoder_forward.10} parent=11 // pred_check
        %p250 = pneg %p62
      $region14: #{decoder_forward.10} parent=11 // pred_check_branch
        %252 = sbr.rel (%p250) target = $region16
      $region15: #{decoder_forward.10} parent=11 // pred_region
        _
      $region16: #{decoder_forward.10} parent=11 // pred_fallthru
        _
      // Predicated region
      $region17: #{decoder_forward.10} parent=11 // pred_check
        %p253 = pneg %p83
      $region18: #{decoder_forward.10} parent=11 // pred_check_branch
        %255 = sbr.rel (%p253) target = $region20
      $region19: #{decoder_forward.10} parent=11 // pred_region
        _
      $region20: #{decoder_forward.10} parent=11 // pred_fallthru
        _
      // Predicated region
      $region21: #{decoder_forward.10} parent=11 // pred_check
        %p256 = pneg %p104
      $region22: #{decoder_forward.10} parent=11 // pred_check_branch
        %258 = sbr.rel (%p256) target = $region24
      $region23: #{decoder_forward.10} parent=11 // pred_region
        _
      $region24: #{decoder_forward.10} parent=11 // pred_fallthru
        _
      // Predicated region
      $region25: #{decoder_forward.10} parent=11 // pred_check
        %p259 = pneg %p125
      $region26: #{decoder_forward.10} parent=11 // pred_check_branch
        %261 = sbr.rel (%p259) target = $region28
      $region27: #{decoder_forward.10} parent=11 // pred_region
        _
      $region28: #{decoder_forward.10} parent=11 // pred_fallthru
        _
      // Predicated region
      $region29: #{decoder_forward.10} parent=11 // pred_check
        %p262 = pneg %p146
      $region30: #{decoder_forward.10} parent=11 // pred_check_branch
        %264 = sbr.rel (%p262) target = $region32
      $region31: #{decoder_forward.10} parent=11 // pred_region
        _
      $region32: #{decoder_forward.10} parent=11 // pred_fallthru
        _
      // Predicated region
      $region33: #{decoder_forward.10} parent=11 // pred_check
        %p265 = pneg %p167
      $region34: #{decoder_forward.10} parent=11 // pred_check_branch
        %267 = sbr.rel (%p265) target = $region36
      $region35: #{decoder_forward.10} parent=11 // pred_region
        _
      $region36: #{decoder_forward.10} parent=11 // pred_fallthru
        _
      // Predicated region
      $region37: #{decoder_forward.10} parent=11 // pred_check
        %p268 = pneg %p188
      $region38: #{decoder_forward.10} parent=11 // pred_check_branch
        %270 = sbr.rel (%p268) target = $region40
      $region39: #{decoder_forward.10} parent=11 // pred_region
        _
      $region40: #{decoder_forward.10} parent=11 // pred_fallthru
        _
      // Predicated region
      $region41: #{decoder_forward.10} parent=11 // pred_check
        %p271 = pneg %p209
      $region42: #{decoder_forward.10} parent=11 // pred_check_branch
        %273 = sbr.rel (%p271) target = $region44
      $region43: #{decoder_forward.10} parent=11 // pred_region
        _
      $region44: #{decoder_forward.10} parent=11 // pred_fallthru
        _
    $region12: #{decoder_forward.10} parent=5 // pred_fallthru
      _
    %p274 = scmp.lt.s32.totalorder %s15, 2
    // Predicated region
    $region45: #{decoder_forward.10} parent=5 // pred_check
      %p275 = pneg %p274
    $region46: #{decoder_forward.10} parent=5 // pred_check_branch
      %277 = sbr.rel (%p275) target = $region48
    $region47: #{decoder_forward.10} parent=5 // pred_region
      // Predicated region
      $region49: #{decoder_forward.10} parent=47 // pred_check
        %p278 = pneg %p35
      $region50: #{decoder_forward.10} parent=47 // pred_check_branch
        %280 = sbr.rel (%p278) target = $region52
      $region51: #{decoder_forward.10} parent=47 // pred_region
        %p281 = scmp.lt.s32.totalorder %s15, 1
        %s282 = scalar_select %p281, %s15, 1
        %s283 = smul.addr %s282, 32
        %s284 = smul.addr %s283, 8
        %s285 = scalar_lea.vmem %s0, %s284
      $region52: #{decoder_forward.10} parent=47 // pred_fallthru
        _
    $region48: #{decoder_forward.10} parent=5 // pred_fallthru
      _
    %p286 = scmp.le.s32.totalorder 1, %s15
    %p287 = scmp.lt.s32.totalorder %s15, 3
    %p288 = pnand %p286, %p287
    %p289 = pneg %p288
    // Predicated region
    $region53: #{decoder_forward.10} parent=5 // pred_check
      _
    $region54: #{decoder_forward.10} parent=5 // pred_check_branch
      %291 = sbr.rel (%p288) target = $region56
    $region55: #{decoder_forward.10} parent=5 // pred_region
      %s292 = ssub.s32 %s15, 1
      %p293 = scmp.lt.s32.totalorder %s20, 1
      %s294 = scalar_select %p293, %s20, 1
      %s295 = smul.addr %s294, 32
      %s296 = smul.addr %s295, 8
      %s297 = scalar_lea.vmem %s0, %s296
      %p298 = pneg %p41
      %p299 = pneg %p38
      %p300 = pneg %p62
      %p301 = pneg %p59
      %p302 = pneg %p83
      %p303 = pneg %p80
      %p304 = pneg %p104
      %p305 = pneg %p101
      %p306 = pneg %p125
      %p307 = pneg %p122
      %p308 = pneg %p146
      %p309 = pneg %p143
      %p310 = pneg %p167
      %p311 = pneg %p164
      %p312 = pneg %p188
      %p313 = pneg %p185
      %p314 = pneg %p209
      %p315 = pneg %p206
      %p316 = pneg %p235
      %p317 = pneg %p232
      %p318 = scmp.lt.s32.totalorder %s20, 1
      %s319 = scalar_select %p318, %s20, 1
      %s320 = smul.addr %s319, 32
      %s321 = smul.addr %s320, 8
      %s322 = scalar_lea.vmem %s9, %s321
      %p323 = scmp.lt.s32.totalorder %s20, 1
      %s324 = scalar_select %p323, %s20, 1
      %s325 = smul.addr %s324, 32
      %s326 = smul.addr %s325, 8
      %s327 = scalar_lea.vmem %s0, %s326
      %p328 = scmp.lt.s32.totalorder %s20, 1
      %s329 = scalar_select %p328, %s20, 1
      %s330 = smul.addr %s329, 32
      %s331 = smul.addr %s330, 8
      %s332 = scalar_lea.vmem %s9, %s331
      %v333 = vld [vmem:[%s327] sm:$0xff]
      %v334 = vld [vmem:[%s327 + $0x8] sm:$0xff]
      %v335 = vld [vmem:[%s327 + $0x10] sm:$0xff]
      %v336 = vld [vmem:[%s327 + $0x18] sm:$0xff]
      %v337 = vld [vmem:[%s327 + $0x20] sm:$0xff]
      %v338 = vld [vmem:[%s327 + $0x28] sm:$0xff]
      %v339 = vld [vmem:[%s327 + $0x30] sm:$0xff]
      %v340 = vld [vmem:[%s327 + $0x38] sm:$0xff]
      %v341 = vld [vmem:[%s327 + $0x40] sm:$0xff]
      %v342 = vld [vmem:[%s327 + $0x48] sm:$0xff]
      %v343 = vld [vmem:[%s327 + $0x50] sm:$0xff]
      %v344 = vld [vmem:[%s327 + $0x58] sm:$0xff]
      %v345 = vld [vmem:[%s327 + $0x60] sm:$0xff]
      %v346 = vld [vmem:[%s327 + $0x68] sm:$0xff]
      %v347 = vld [vmem:[%s327 + $0x70] sm:$0xff]
      %v348 = vld [vmem:[%s327 + $0x78] sm:$0xff]
      %v349 = vld [vmem:[%s327 + $0x80] sm:$0xff]
      %v350 = vld [vmem:[%s327 + $0x88] sm:$0xff]
      %v351 = vld [vmem:[%s327 + $0x90] sm:$0xff]
      %v352 = vld [vmem:[%s327 + $0x98] sm:$0xff]
      %v353 = vld [vmem:[%s327 + $0xa0] sm:$0xff]
      %v354 = vld [vmem:[%s327 + $0xa8] sm:$0xff]
      %v355 = vld [vmem:[%s327 + $0xb0] sm:$0xff]
      %v356 = vld [vmem:[%s327 + $0xb8] sm:$0xff]
      %v357 = vld [vmem:[%s327 + $0xc0] sm:$0xff]
      %v358 = vld [vmem:[%s327 + $0xc8] sm:$0xff]
      %v359 = vld [vmem:[%s327 + $0xd0] sm:$0xff]
      %v360 = vld [vmem:[%s327 + $0xd8] sm:$0xff]
      %v361 = vld [vmem:[%s327 + $0xe0] sm:$0xff]
      %v362 = vld [vmem:[%s327 + $0xe8] sm:$0xff]
      %v363 = vld [vmem:[%s327 + $0xf0] sm:$0xff]
      %v364 = vld [vmem:[%s327 + $0xf8] sm:$0xff]
      %v365 = vld [vmem:[%s1] sm:$0xff]
      %v366 = vld [vmem:[%s1 + $0x8] sm:$0xff]
      %v367 = vld [vmem:[%s1 + $0x10] sm:$0xff]
      %v368 = vld [vmem:[%s1 + $0x18] sm:$0xff]
      %v369 = vld [vmem:[%s2] sm:$0x1]
      %v371 = vperm.slane %v369, 0
      %vm373 = vcmask 261120
      %v375 = vsel %vm373, %v333, 0
      %v378 = vsel %vm373, %v334, 0
      %v381 = vsel %vm373, %v335, 0
      %v384 = vsel %vm373, %v336, 0
      %v387 = vsel %vm373, %v337, 0
      %v390 = vsel %vm373, %v338, 0
      %v393 = vsel %vm373, %v339, 0
      %v396 = vsel %vm373, %v340, 0
      %v399 = vsel %vm373, %v341, 0
      %v402 = vsel %vm373, %v342, 0
      %v405 = vsel %vm373, %v343, 0
      %v408 = vsel %vm373, %v344, 0
      %v411 = vsel %vm373, %v345, 0
      %v414 = vsel %vm373, %v346, 0
      %v417 = vsel %vm373, %v347, 0
      %v420 = vsel %vm373, %v348, 0
      %v423 = vsel %vm373, %v349, 0
      %v426 = vsel %vm373, %v350, 0
      %v429 = vsel %vm373, %v351, 0
      %v432 = vsel %vm373, %v352, 0
      %v435 = vsel %vm373, %v353, 0
      %v438 = vsel %vm373, %v354, 0
      %v441 = vsel %vm373, %v355, 0
      %v444 = vsel %vm373, %v356, 0
      %v447 = vsel %vm373, %v357, 0
      %v450 = vsel %vm373, %v358, 0
      %v453 = vsel %vm373, %v359, 0
      %v456 = vsel %vm373, %v360, 0
      %v459 = vsel %vm373, %v361, 0
      %v462 = vsel %vm373, %v362, 0
      %v465 = vsel %vm373, %v363, 0
      %v468 = vsel %vm373, %v364, 0
      %470 = vmatpush.msra.mxu0 0.0
      %471 = vmatpush.msra.mxu0 0.0
      %472 = vmatpush.msra.mxu0 0.0
      %473 = vmatpush.msra.mxu0 0.0
      %474 = vmatpush.msra.mxu0 0.0
      %475 = vmatpush.msra.mxu0 0.0
      %476 = vmatpush.msra.mxu0 0.0
      %477 = vmatpush.msra.mxu0 0.0
      %478 = vmatpush.msra.mxu0 0.0
      %479 = vmatpush.msra.mxu0 0.0
      %480 = vmatpush.msra.mxu0 0.0
      %481 = vmatpush.msra.mxu0 0.0
      %482 = vmatpush.msra.mxu0 %v368
      %483 = vmatpush.msra.mxu0 %v367
      %484 = vmatpush.msra.mxu0 %v366
      %485 = vmatpush.msra.mxu0 %v365
      %486 = vmatmul.f32.gmra.mxu0 %v375
      %v487 = vpop.f32.mrf.mxu0
      %v488 = vadd.f32 %v371, %v487
      %489 = vmatmul.f32.gmra.mxu0 %v378
      %v490 = vpop.f32.mrf.mxu0
      %v491 = vadd.f32 %v371, %v490
      %492 = vmatmul.f32.gmra.mxu0 %v381
      %v493 = vpop.f32.mrf.mxu0
      %v494 = vadd.f32 %v371, %v493
      %495 = vmatmul.f32.gmra.mxu0 %v384
      %v496 = vpop.f32.mrf.mxu0
      %v497 = vadd.f32 %v371, %v496
      %498 = vmatmul.f32.gmra.mxu0 %v387
      %v499 = vpop.f32.mrf.mxu0
      %v500 = vadd.f32 %v371, %v499
      %501 = vmatmul.f32.gmra.mxu0 %v390
      %v502 = vpop.f32.mrf.mxu0
      %v503 = vadd.f32 %v371, %v502
      %504 = vmatmul.f32.gmra.mxu0 %v393
      %v505 = vpop.f32.mrf.mxu0
      %v506 = vadd.f32 %v371, %v505
      %507 = vmatmul.f32.gmra.mxu0 %v396
      %v508 = vpop.f32.mrf.mxu0
      %v509 = vadd.f32 %v371, %v508
      %510 = vmatmul.f32.gmra.mxu0 %v399
      %v511 = vpop.f32.mrf.mxu0
      %v512 = vadd.f32 %v371, %v511
      %513 = vmatmul.f32.gmra.mxu0 %v402
      %v514 = vpop.f32.mrf.mxu0
      %v515 = vadd.f32 %v371, %v514
      %516 = vmatmul.f32.gmra.mxu0 %v405
      %v517 = vpop.f32.mrf.mxu0
      %v518 = vadd.f32 %v371, %v517
      %519 = vmatmul.f32.gmra.mxu0 %v408
      %v520 = vpop.f32.mrf.mxu0
      %v521 = vadd.f32 %v371, %v520
      %522 = vmatmul.f32.gmra.mxu0 %v411
      %v523 = vpop.f32.mrf.mxu0
      %v524 = vadd.f32 %v371, %v523
      %525 = vmatmul.f32.gmra.mxu0 %v414
      %v526 = vpop.f32.mrf.mxu0
      %v527 = vadd.f32 %v371, %v526
      %528 = vmatmul.f32.gmra.mxu0 %v417
      %v529 = vpop.f32.mrf.mxu0
      %v530 = vadd.f32 %v371, %v529
      %531 = vmatmul.f32.gmra.mxu0 %v420
      %v532 = vpop.f32.mrf.mxu0
      %v533 = vadd.f32 %v371, %v532
      %534 = vmatmul.f32.gmra.mxu0 %v423
      %v535 = vpop.f32.mrf.mxu0
      %v536 = vadd.f32 %v371, %v535
      %537 = vmatmul.f32.gmra.mxu0 %v426
      %v538 = vpop.f32.mrf.mxu0
      %v539 = vadd.f32 %v371, %v538
      %540 = vmatmul.f32.gmra.mxu0 %v429
      %v541 = vpop.f32.mrf.mxu0
      %v542 = vadd.f32 %v371, %v541
      %543 = vmatmul.f32.gmra.mxu0 %v432
      %v544 = vpop.f32.mrf.mxu0
      %v545 = vadd.f32 %v371, %v544
      %546 = vmatmul.f32.gmra.mxu0 %v435
      %v547 = vpop.f32.mrf.mxu0
      %v548 = vadd.f32 %v371, %v547
      %549 = vmatmul.f32.gmra.mxu0 %v438
      %v550 = vpop.f32.mrf.mxu0
      %v551 = vadd.f32 %v371, %v550
      %552 = vmatmul.f32.gmra.mxu0 %v441
      %v553 = vpop.f32.mrf.mxu0
      %v554 = vadd.f32 %v371, %v553
      %555 = vmatmul.f32.gmra.mxu0 %v444
      %v556 = vpop.f32.mrf.mxu0
      %v557 = vadd.f32 %v371, %v556
      %558 = vmatmul.f32.gmra.mxu0 %v447
      %v559 = vpop.f32.mrf.mxu0
      %v560 = vadd.f32 %v371, %v559
      %561 = vmatmul.f32.gmra.mxu0 %v450
      %v562 = vpop.f32.mrf.mxu0
      %v563 = vadd.f32 %v371, %v562
      %564 = vmatmul.f32.gmra.mxu0 %v453
      %v565 = vpop.f32.mrf.mxu0
      %v566 = vadd.f32 %v371, %v565
      %567 = vmatmul.f32.gmra.mxu0 %v456
      %v568 = vpop.f32.mrf.mxu0
      %v569 = vadd.f32 %v371, %v568
      %570 = vmatmul.f32.gmra.mxu0 %v459
      %v571 = vpop.f32.mrf.mxu0
      %v572 = vadd.f32 %v371, %v571
      %573 = vmatmul.f32.gmra.mxu0 %v462
      %v574 = vpop.f32.mrf.mxu0
      %v575 = vadd.f32 %v371, %v574
      %576 = vmatmul.f32.gmra.mxu0 %v465
      %v577 = vpop.f32.mrf.mxu0
      %v578 = vadd.f32 %v371, %v577
      %579 = vmatmul.f32.gmra.mxu0 %v468
      %v580 = vpop.f32.mrf.mxu0
      %v581 = vadd.f32 %v371, %v580
      %582 = vdwg.mxu0
      %v583 = vmax.f32 %v488, 0.0
      %v584 = vmax.f32 %v491, 0.0
      %v585 = vmax.f32 %v494, 0.0
      %v586 = vmax.f32 %v497, 0.0
      %v587 = vmax.f32 %v500, 0.0
      %v588 = vmax.f32 %v503, 0.0
      %v589 = vmax.f32 %v506, 0.0
      %v590 = vmax.f32 %v509, 0.0
      %v591 = vmax.f32 %v512, 0.0
      %v592 = vmax.f32 %v515, 0.0
      %v593 = vmax.f32 %v518, 0.0
      %v594 = vmax.f32 %v521, 0.0
      %v595 = vmax.f32 %v524, 0.0
      %v596 = vmax.f32 %v527, 0.0
      %v597 = vmax.f32 %v530, 0.0
      %v598 = vmax.f32 %v533, 0.0
      %v599 = vmax.f32 %v536, 0.0
      %v600 = vmax.f32 %v539, 0.0
      %v601 = vmax.f32 %v542, 0.0
      %v602 = vmax.f32 %v545, 0.0
      %v603 = vmax.f32 %v548, 0.0
      %v604 = vmax.f32 %v551, 0.0
      %v605 = vmax.f32 %v554, 0.0
      %v606 = vmax.f32 %v557, 0.0
      %v607 = vmax.f32 %v560, 0.0
      %v608 = vmax.f32 %v563, 0.0
      %v609 = vmax.f32 %v566, 0.0
      %v610 = vmax.f32 %v569, 0.0
      %v611 = vmax.f32 %v572, 0.0
      %v612 = vmax.f32 %v575, 0.0
      %v613 = vmax.f32 %v578, 0.0
      %v614 = vmax.f32 %v581, 0.0
      %v615 = vld [vmem:[%s3] sm:$0xff]
      %v616 = vld [vmem:[%s3 + $0x8] sm:$0xff]
      %v617 = vld [vmem:[%s3 + $0x10] sm:$0xff]
      %v618 = vld [vmem:[%s3 + $0x18] sm:$0xff]
      %v619 = vld [vmem:[%s4] sm:$0x1]
      %v621 = vperm.slane %v619, 0
      %v624 = vsel %vm373, %v583, 0
      %v627 = vsel %vm373, %v584, 0
      %v630 = vsel %vm373, %v585, 0
      %v633 = vsel %vm373, %v586, 0
      %v636 = vsel %vm373, %v587, 0
      %v639 = vsel %vm373, %v588, 0
      %v642 = vsel %vm373, %v589, 0
      %v645 = vsel %vm373, %v590, 0
      %v648 = vsel %vm373, %v591, 0
      %v651 = vsel %vm373, %v592, 0
      %v654 = vsel %vm373, %v593, 0
      %v657 = vsel %vm373, %v594, 0
      %v660 = vsel %vm373, %v595, 0
      %v663 = vsel %vm373, %v596, 0
      %v666 = vsel %vm373, %v597, 0
      %v669 = vsel %vm373, %v598, 0
      %v672 = vsel %vm373, %v599, 0
      %v675 = vsel %vm373, %v600, 0
      %v678 = vsel %vm373, %v601, 0
      %v681 = vsel %vm373, %v602, 0
      %v684 = vsel %vm373, %v603, 0
      %v687 = vsel %vm373, %v604, 0
      %v690 = vsel %vm373, %v605, 0
      %v693 = vsel %vm373, %v606, 0
      %v696 = vsel %vm373, %v607, 0
      %v699 = vsel %vm373, %v608, 0
      %v702 = vsel %vm373, %v609, 0
      %v705 = vsel %vm373, %v610, 0
      %v708 = vsel %vm373, %v611, 0
      %v711 = vsel %vm373, %v612, 0
      %v714 = vsel %vm373, %v613, 0
      %v717 = vsel %vm373, %v614, 0
      %719 = vmatpush.msra.mxu0 0.0
      %720 = vmatpush.msra.mxu0 0.0
      %721 = vmatpush.msra.mxu0 0.0
      %722 = vmatpush.msra.mxu0 0.0
      %723 = vmatpush.msra.mxu0 0.0
      %724 = vmatpush.msra.mxu0 0.0
      %725 = vmatpush.msra.mxu0 0.0
      %726 = vmatpush.msra.mxu0 0.0
      %727 = vmatpush.msra.mxu0 0.0
      %728 = vmatpush.msra.mxu0 0.0
      %729 = vmatpush.msra.mxu0 0.0
      %730 = vmatpush.msra.mxu0 0.0
      %731 = vmatpush.msra.mxu0 %v618
      %732 = vmatpush.msra.mxu0 %v617
      %733 = vmatpush.msra.mxu0 %v616
      %734 = vmatpush.msra.mxu0 %v615
      %735 = vmatmul.f32.gmra.mxu0 %v624
      %v736 = vpop.f32.mrf.mxu0
      %v737 = vadd.f32 %v621, %v736
      %738 = vmatmul.f32.gmra.mxu0 %v627
      %v739 = vpop.f32.mrf.mxu0
      %v740 = vadd.f32 %v621, %v739
      %741 = vmatmul.f32.gmra.mxu0 %v630
      %v742 = vpop.f32.mrf.mxu0
      %v743 = vadd.f32 %v621, %v742
      %744 = vmatmul.f32.gmra.mxu0 %v633
      %v745 = vpop.f32.mrf.mxu0
      %v746 = vadd.f32 %v621, %v745
      %747 = vmatmul.f32.gmra.mxu0 %v636
      %v748 = vpop.f32.mrf.mxu0
      %v749 = vadd.f32 %v621, %v748
      %750 = vmatmul.f32.gmra.mxu0 %v639
      %v751 = vpop.f32.mrf.mxu0
      %v752 = vadd.f32 %v621, %v751
      %753 = vmatmul.f32.gmra.mxu0 %v642
      %v754 = vpop.f32.mrf.mxu0
      %v755 = vadd.f32 %v621, %v754
      %756 = vmatmul.f32.gmra.mxu0 %v645
      %v757 = vpop.f32.mrf.mxu0
      %v758 = vadd.f32 %v621, %v757
      %759 = vmatmul.f32.gmra.mxu0 %v648
      %v760 = vpop.f32.mrf.mxu0
      %v761 = vadd.f32 %v621, %v760
      %762 = vmatmul.f32.gmra.mxu0 %v651
      %v763 = vpop.f32.mrf.mxu0
      %v764 = vadd.f32 %v621, %v763
      %765 = vmatmul.f32.gmra.mxu0 %v654
      %v766 = vpop.f32.mrf.mxu0
      %v767 = vadd.f32 %v621, %v766
      %768 = vmatmul.f32.gmra.mxu0 %v657
      %v769 = vpop.f32.mrf.mxu0
      %v770 = vadd.f32 %v621, %v769
      %771 = vmatmul.f32.gmra.mxu0 %v660
      %v772 = vpop.f32.mrf.mxu0
      %v773 = vadd.f32 %v621, %v772
      %774 = vmatmul.f32.gmra.mxu0 %v663
      %v775 = vpop.f32.mrf.mxu0
      %v776 = vadd.f32 %v621, %v775
      %777 = vmatmul.f32.gmra.mxu0 %v666
      %v778 = vpop.f32.mrf.mxu0
      %v779 = vadd.f32 %v621, %v778
      %780 = vmatmul.f32.gmra.mxu0 %v669
      %v781 = vpop.f32.mrf.mxu0
      %v782 = vadd.f32 %v621, %v781
      %783 = vmatmul.f32.gmra.mxu0 %v672
      %v784 = vpop.f32.mrf.mxu0
      %v785 = vadd.f32 %v621, %v784
      %786 = vmatmul.f32.gmra.mxu0 %v675
      %v787 = vpop.f32.mrf.mxu0
      %v788 = vadd.f32 %v621, %v787
      %789 = vmatmul.f32.gmra.mxu0 %v678
      %v790 = vpop.f32.mrf.mxu0
      %v791 = vadd.f32 %v621, %v790
      %792 = vmatmul.f32.gmra.mxu0 %v681
      %v793 = vpop.f32.mrf.mxu0
      %v794 = vadd.f32 %v621, %v793
      %795 = vmatmul.f32.gmra.mxu0 %v684
      %v796 = vpop.f32.mrf.mxu0
      %v797 = vadd.f32 %v621, %v796
      %798 = vmatmul.f32.gmra.mxu0 %v687
      %v799 = vpop.f32.mrf.mxu0
      %v800 = vadd.f32 %v621, %v799
      %801 = vmatmul.f32.gmra.mxu0 %v690
      %v802 = vpop.f32.mrf.mxu0
      %v803 = vadd.f32 %v621, %v802
      %804 = vmatmul.f32.gmra.mxu0 %v693
      %v805 = vpop.f32.mrf.mxu0
      %v806 = vadd.f32 %v621, %v805
      %807 = vmatmul.f32.gmra.mxu0 %v696
      %v808 = vpop.f32.mrf.mxu0
      %v809 = vadd.f32 %v621, %v808
      %810 = vmatmul.f32.gmra.mxu0 %v699
      %v811 = vpop.f32.mrf.mxu0
      %v812 = vadd.f32 %v621, %v811
      %813 = vmatmul.f32.gmra.mxu0 %v702
      %v814 = vpop.f32.mrf.mxu0
      %v815 = vadd.f32 %v621, %v814
      %816 = vmatmul.f32.gmra.mxu0 %v705
      %v817 = vpop.f32.mrf.mxu0
      %v818 = vadd.f32 %v621, %v817
      %819 = vmatmul.f32.gmra.mxu0 %v708
      %v820 = vpop.f32.mrf.mxu0
      %v821 = vadd.f32 %v621, %v820
      %822 = vmatmul.f32.gmra.mxu0 %v711
      %v823 = vpop.f32.mrf.mxu0
      %v824 = vadd.f32 %v621, %v823
      %825 = vmatmul.f32.gmra.mxu0 %v714
      %v826 = vpop.f32.mrf.mxu0
      %v827 = vadd.f32 %v621, %v826
      %828 = vmatmul.f32.gmra.mxu0 %v717
      %v829 = vpop.f32.mrf.mxu0
      %v830 = vadd.f32 %v621, %v829
      %831 = vdwg.mxu0
      %v832 = vsel %vm373, %v737, 0.0
      %v833 = vsel %vm373, %v740, 0.0
      %v834 = vadd.f32 %v832, %v833
      %v835 = vsel %vm373, %v743, 0.0
      %v836 = vadd.f32 %v834, %v835
      %v837 = vsel %vm373, %v746, 0.0
      %v838 = vadd.f32 %v836, %v837
      %v839 = vsel %vm373, %v749, 0.0
      %v840 = vadd.f32 %v838, %v839
      %v841 = vsel %vm373, %v752, 0.0
      %v842 = vadd.f32 %v840, %v841
      %v843 = vsel %vm373, %v755, 0.0
      %v844 = vadd.f32 %v842, %v843
      %v845 = vsel %vm373, %v758, 0.0
      %v846 = vadd.f32 %v844, %v845
      %v847 = vsel %vm373, %v761, 0.0
      %v848 = vadd.f32 %v846, %v847
      %v849 = vsel %vm373, %v764, 0.0
      %v850 = vadd.f32 %v848, %v849
      %v851 = vsel %vm373, %v767, 0.0
      %v852 = vadd.f32 %v850, %v851
      %v853 = vsel %vm373, %v770, 0.0
      %v854 = vadd.f32 %v852, %v853
      %v855 = vsel %vm373, %v773, 0.0
      %v856 = vadd.f32 %v854, %v855
      %v857 = vsel %vm373, %v776, 0.0
      %v858 = vadd.f32 %v856, %v857
      %v859 = vsel %vm373, %v779, 0.0
      %v860 = vadd.f32 %v858, %v859
      %v861 = vsel %vm373, %v782, 0.0
      %v862 = vadd.f32 %v860, %v861
      %v863 = vsel %vm373, %v785, 0.0
      %v864 = vadd.f32 %v862, %v863
      %v865 = vsel %vm373, %v788, 0.0
      %v866 = vadd.f32 %v864, %v865
      %v867 = vsel %vm373, %v791, 0.0
      %v868 = vadd.f32 %v866, %v867
      %v869 = vsel %vm373, %v794, 0.0
      %v870 = vadd.f32 %v868, %v869
      %v871 = vsel %vm373, %v797, 0.0
      %v872 = vadd.f32 %v870, %v871
      %v873 = vsel %vm373, %v800, 0.0
      %v874 = vadd.f32 %v872, %v873
      %v875 = vsel %vm373, %v803, 0.0
      %v876 = vadd.f32 %v874, %v875
      %v877 = vsel %vm373, %v806, 0.0
      %v878 = vadd.f32 %v876, %v877
      %v879 = vsel %vm373, %v809, 0.0
      %v880 = vadd.f32 %v878, %v879
      %v881 = vsel %vm373, %v812, 0.0
      %v882 = vadd.f32 %v880, %v881
      %v883 = vsel %vm373, %v815, 0.0
      %v884 = vadd.f32 %v882, %v883
      %v885 = vsel %vm373, %v818, 0.0
      %v886 = vadd.f32 %v884, %v885
      %v887 = vsel %vm373, %v821, 0.0
      %v888 = vadd.f32 %v886, %v887
      %v889 = vsel %vm373, %v824, 0.0
      %v890 = vadd.f32 %v888, %v889
      %v891 = vsel %vm373, %v827, 0.0
      %v892 = vadd.f32 %v890, %v891
      %v893 = vsel %vm373, %v830, 0.0
      %v894 = vadd.f32 %v892, %v893
      %v895 = vrot.slane %v894, 4
      %v896 = vadd.f32 %v894, %v895
      %v897 = vrot.slane %v896, 2
      %v898 = vadd.f32 %v896, %v897
      %v899 = vrot.slane %v898, 1
      %v900 = vadd.f32 %v898, %v899
      %v901 = vrcp.pop 256.0
      %v902 = vmul.f32 256.0, %v901
      %v903 = vsub.f32 1.0, %v902
      %v904 = vmul.f32 %v901, %v903
      %v905 = vadd.f32 %v901, %v904
      %vm906 = vweird.f32 %v901
      %v907 = vsel %vm906, %v901, %v905
      %v908 = vmul.f32 %v900, %v907
      %v909 = vld [vmem:[%s5] sm:$0xff]
      %v910 = vld [vmem:[%s5 + $0x8] sm:$0xff]
      %v911 = vld [vmem:[%s5 + $0x10] sm:$0xff]
      %v912 = vld [vmem:[%s5 + $0x18] sm:$0xff]
      %v913 = vld [vmem:[%s6] sm:$0x1]
      %v915 = vsel %vm373, %v908, 0
      %917 = vmatpush.msra.mxu0 0.0
      %918 = vmatpush.msra.mxu0 0.0
      %919 = vmatpush.msra.mxu0 0.0
      %920 = vmatpush.msra.mxu0 0.0
      %921 = vmatpush.msra.mxu0 0.0
      %922 = vmatpush.msra.mxu0 0.0
      %923 = vmatpush.msra.mxu0 0.0
      %924 = vmatpush.msra.mxu0 0.0
      %925 = vmatpush.msra.mxu0 0.0
      %926 = vmatpush.msra.mxu0 0.0
      %927 = vmatpush.msra.mxu0 0.0
      %928 = vmatpush.msra.mxu0 0.0
      %929 = vmatpush.msra.mxu0 %v912
      %930 = vmatpush.msra.mxu0 %v911
      %931 = vmatpush.msra.mxu0 %v910
      %932 = vmatpush.msra.mxu0 %v909
      %933 = vmatmul.f32.gmra.mxu0 %v915
      %v934 = vpop.f32.mrf.mxu0
      %v935 = vadd.f32 %v913, %v934
      %936 = vdwg.mxu0
      %v937 = vmax.f32 %v935, 0.0
      %v938 = vld [vmem:[%s7] sm:$0xff]
      %v939 = vld [vmem:[%s8] sm:$0x1]
      %vm940 = vcmask 64512
      %v942 = vsel %vm940, %v937, 0
      %944 = vmatpush.msra.mxu0 0.0
      %945 = vmatpush.msra.mxu0 0.0
      %946 = vmatpush.msra.mxu0 0.0
      %947 = vmatpush.msra.mxu0 0.0
      %948 = vmatpush.msra.mxu0 0.0
      %949 = vmatpush.msra.mxu0 0.0
      %950 = vmatpush.msra.mxu0 0.0
      %951 = vmatpush.msra.mxu0 0.0
      %952 = vmatpush.msra.mxu0 0.0
      %953 = vmatpush.msra.mxu0 0.0
      %954 = vmatpush.msra.mxu0 0.0
      %955 = vmatpush.msra.mxu0 0.0
      %956 = vmatpush.msra.mxu0 0.0
      %957 = vmatpush.msra.mxu0 0.0
      %958 = vmatpush.msra.mxu0 0.0
      %959 = vmatpush.msra.mxu0 %v938
      %960 = vmatmul.f32.gmra.mxu0 %v942
      %v961 = vpop.f32.mrf.mxu0
      %v962 = vadd.f32 %v939, %v961
      %963 = vdwg.mxu0
      %v964 = vxor.u32 %v962, 2147483648
      %v965 = vmul.f32 %v964, 1.442695
      %v966 = vpow.pop %v965
      %v967 = vadd.f32 %v966, 1.0
      %v968 = vrcp.pop %v967
      %v969 = vmul.f32 %v967, %v968
      %v970 = vsub.f32 1.0, %v969
      %v971 = vmul.f32 %v968, %v970
      %v972 = vadd.f32 %v968, %v971
      %vm973 = vweird.f32 %v967
      %vm974 = vweird.f32 %v968
      %vm975 = vmor %vm973, %vm974
      %v976 = vsel %vm975, %v968, %v972
      %v977 = vand.u32 2147483647, %v967
      %vm978 = vcmp.eq.f32.partialorder %v977, 8.507059e+37
      %v979 = vand.u32 %v967, 2147483648
      %v980 = vor.u32 1.1754944e-38, %v979
      %v981 = vsel %vm978, %v980, %v976
      %v982 = vmul.f32 1.0, %v981
      %v983 = vperm.slane %v982, 0
      %v984 = vmul.f32 %v737, %v983
      %v985 = vmul.f32 %v740, %v983
      %v986 = vmul.f32 %v743, %v983
      %v987 = vmul.f32 %v746, %v983
      %v988 = vmul.f32 %v749, %v983
      %v989 = vmul.f32 %v752, %v983
      %v990 = vmul.f32 %v755, %v983
      %v991 = vmul.f32 %v758, %v983
      %v992 = vmul.f32 %v761, %v983
      %v993 = vmul.f32 %v764, %v983
      %v994 = vmul.f32 %v767, %v983
      %v995 = vmul.f32 %v770, %v983
      %v996 = vmul.f32 %v773, %v983
      %v997 = vmul.f32 %v776, %v983
      %v998 = vmul.f32 %v779, %v983
      %v999 = vmul.f32 %v782, %v983
      %v1000 = vmul.f32 %v785, %v983
      %v1001 = vmul.f32 %v788, %v983
      %v1002 = vmul.f32 %v791, %v983
      %v1003 = vmul.f32 %v794, %v983
      %v1004 = vmul.f32 %v797, %v983
      %v1005 = vmul.f32 %v800, %v983
      %v1006 = vmul.f32 %v803, %v983
      %v1007 = vmul.f32 %v806, %v983
      %v1008 = vmul.f32 %v809, %v983
      %v1009 = vmul.f32 %v812, %v983
      %v1010 = vmul.f32 %v815, %v983
      %v1011 = vmul.f32 %v818, %v983
      %v1012 = vmul.f32 %v821, %v983
      %v1013 = vmul.f32 %v824, %v983
      %v1014 = vmul.f32 %v827, %v983
      %v1015 = vmul.f32 %v830, %v983
      %v1016 = vadd.f32 %v333, %v984
      %v1017 = vadd.f32 %v334, %v985
      %v1018 = vadd.f32 %v335, %v986
      %v1019 = vadd.f32 %v336, %v987
      %v1020 = vadd.f32 %v337, %v988
      %v1021 = vadd.f32 %v338, %v989
      %v1022 = vadd.f32 %v339, %v990
      %v1023 = vadd.f32 %v340, %v991
      %v1024 = vadd.f32 %v341, %v992
      %v1025 = vadd.f32 %v342, %v993
      %v1026 = vadd.f32 %v343, %v994
      %v1027 = vadd.f32 %v344, %v995
      %v1028 = vadd.f32 %v345, %v996
      %v1029 = vadd.f32 %v346, %v997
      %v1030 = vadd.f32 %v347, %v998
      %v1031 = vadd.f32 %v348, %v999
      %v1032 = vadd.f32 %v349, %v1000
      %v1033 = vadd.f32 %v350, %v1001
      %v1034 = vadd.f32 %v351, %v1002
      %v1035 = vadd.f32 %v352, %v1003
      %v1036 = vadd.f32 %v353, %v1004
      %v1037 = vadd.f32 %v354, %v1005
      %v1038 = vadd.f32 %v355, %v1006
      %v1039 = vadd.f32 %v356, %v1007
      %v1040 = vadd.f32 %v357, %v1008
      %v1041 = vadd.f32 %v358, %v1009
      %v1042 = vadd.f32 %v359, %v1010
      %v1043 = vadd.f32 %v360, %v1011
      %v1044 = vadd.f32 %v361, %v1012
      %v1045 = vadd.f32 %v362, %v1013
      %v1046 = vadd.f32 %v363, %v1014
      %v1047 = vadd.f32 %v364, %v1015
      %1048 = vst.msk [vmem:[%s332] sm:$0xff] %vm373, %v1016
      %1049 = vst.msk [vmem:[%s332 + $0x8] sm:$0xff] %vm373, %v1017
      %1050 = vst.msk [vmem:[%s332 + $0x10] sm:$0xff] %vm373, %v1018
      %1051 = vst.msk [vmem:[%s332 + $0x18] sm:$0xff] %vm373, %v1019
      %1052 = vst.msk [vmem:[%s332 + $0x20] sm:$0xff] %vm373, %v1020
      %1053 = vst.msk [vmem:[%s332 + $0x28] sm:$0xff] %vm373, %v1021
      %1054 = vst.msk [vmem:[%s332 + $0x30] sm:$0xff] %vm373, %v1022
      %1055 = vst.msk [vmem:[%s332 + $0x38] sm:$0xff] %vm373, %v1023
      %1056 = vst.msk [vmem:[%s332 + $0x40] sm:$0xff] %vm373, %v1024
      %1057 = vst.msk [vmem:[%s332 + $0x48] sm:$0xff] %vm373, %v1025
      %1058 = vst.msk [vmem:[%s332 + $0x50] sm:$0xff] %vm373, %v1026
      %1059 = vst.msk [vmem:[%s332 + $0x58] sm:$0xff] %vm373, %v1027
      %1060 = vst.msk [vmem:[%s332 + $0x60] sm:$0xff] %vm373, %v1028
      %1061 = vst.msk [vmem:[%s332 + $0x68] sm:$0xff] %vm373, %v1029
      %1062 = vst.msk [vmem:[%s332 + $0x70] sm:$0xff] %vm373, %v1030
      %1063 = vst.msk [vmem:[%s332 + $0x78] sm:$0xff] %vm373, %v1031
      %1064 = vst.msk [vmem:[%s332 + $0x80] sm:$0xff] %vm373, %v1032
      %1065 = vst.msk [vmem:[%s332 + $0x88] sm:$0xff] %vm373, %v1033
      %1066 = vst.msk [vmem:[%s332 + $0x90] sm:$0xff] %vm373, %v1034
      %1067 = vst.msk [vmem:[%s332 + $0x98] sm:$0xff] %vm373, %v1035
      %1068 = vst.msk [vmem:[%s332 + $0xa0] sm:$0xff] %vm373, %v1036
      %1069 = vst.msk [vmem:[%s332 + $0xa8] sm:$0xff] %vm373, %v1037
      %1070 = vst.msk [vmem:[%s332 + $0xb0] sm:$0xff] %vm373, %v1038
      %1071 = vst.msk [vmem:[%s332 + $0xb8] sm:$0xff] %vm373, %v1039
      %1072 = vst.msk [vmem:[%s332 + $0xc0] sm:$0xff] %vm373, %v1040
      %1073 = vst.msk [vmem:[%s332 + $0xc8] sm:$0xff] %vm373, %v1041
      %1074 = vst.msk [vmem:[%s332 + $0xd0] sm:$0xff] %vm373, %v1042
      %1075 = vst.msk [vmem:[%s332 + $0xd8] sm:$0xff] %vm373, %v1043
      %1076 = vst.msk [vmem:[%s332 + $0xe0] sm:$0xff] %vm373, %v1044
      %1077 = vst.msk [vmem:[%s332 + $0xe8] sm:$0xff] %vm373, %v1045
      %1078 = vst.msk [vmem:[%s332 + $0xf0] sm:$0xff] %vm373, %v1046
      %1079 = vst.msk [vmem:[%s332 + $0xf8] sm:$0xff] %vm373, %v1047
      %p1080 = scmp.lt.s32.totalorder %s20, 1
      %s1081 = scalar_select %p1080, %s20, 1
      %s1082 = smul.addr %s1081, 32
      %s1083 = smul.addr %s1082, 8
      %s1084 = scalar_lea.vmem %s9, %s1083
      // Predicated region
      $region57: #{decoder_forward.10} parent=55 // pred_check
        %p1085 = pneg %p232
      $region58: #{decoder_forward.10} parent=55 // pred_check_branch
        %1087 = sbr.rel (%p1085) target = $region60
      $region59: #{decoder_forward.10} parent=55 // pred_region
        _
      $region60: #{decoder_forward.10} parent=55 // pred_fallthru
        _
    $region56: #{decoder_forward.10} parent=5 // pred_fallthru
      _
    %p1088 = scmp.le.s32.totalorder 2, %s15
    // Predicated region
    $region61: #{decoder_forward.10} parent=5 // pred_check
      %p1089 = pneg %p1088
    $region62: #{decoder_forward.10} parent=5 // pred_check_branch
      %1091 = sbr.rel (%p1089) target = $region64
    $region63: #{decoder_forward.10} parent=5 // pred_region
      %s1092 = ssub.s32 %s15, 2
      // Predicated region
      $region65: #{decoder_forward.10} parent=63 // pred_check
        %p1093 = pneg %p238
      $region66: #{decoder_forward.10} parent=63 // pred_check_branch
        %1095 = sbr.rel (%p1093) target = $region68
      $region67: #{decoder_forward.10} parent=63 // pred_region
        %p1096 = scmp.lt.s32.totalorder %s21, 1
        %s1097 = scalar_select %p1096, %s21, 1
        %s1098 = smul.addr %s1097, 32
        %s1099 = smul.addr %s1098, 8
        %s1100 = scalar_lea.vmem %s9, %s1099
      $region68: #{decoder_forward.10} parent=63 // pred_fallthru
        _
    $region64: #{decoder_forward.10} parent=5 // pred_fallthru
      _
  $region6: #{decoder_forward.10} parent=0 // loop_footer
    %s19 = sadd.s32 1, %s15
  $region7: #{decoder_forward.10} parent=0 // loop_footer_branch
    %14 = sbr.rel target = $region3
  $region8: #{decoder_forward.10} parent=0 // loop_exit
    _

// kernel: decoder_forward.8
$region0: #{decoder_forward.8}
  #allocation0 [shape = 'u32[]', space=smem, size = 0x4, offset = 0x4, fixed_abs, tag = 'smem constant byte address 0x4 - core index']
  #allocation1 [shape = 'u32[72,128]{1,0:T(1,128)}', space=vmem, size = 0x9000, scoped, tag = 'internal scratch']
  #allocation2 [shape = 'f32[10,18,32]{2,1,0:T(8,128)}', space=vmem, size = 0x1e000, scoped, tag = 'scratch operand']
  #allocation3 [shape = 'f32[128,288]{1,0:T(8,128)}', space=vmem, size = 0x30000, scoped, tag = 'scratch operand']
  %s0 = inlined_call_operand.vmem [shape: f32[2,16,16,32], index: 0, kind: input, shape index: {}, may-alias: {0,1,2}]
  %s1 = inlined_call_operand.vmem [shape: f32[2,16,16,32], index: 1, kind: input, shape index: {}, may-alias: {0,1,2}]
  %s2 = inlined_call_operand.vmem [shape: f32[2,16,16,32], index: 2, kind: input, shape index: {}, may-alias: {0,1,2}]
  %s3 = inlined_call_operand.vmem [shape: f32[288,32], index: 3, kind: input, shape index: {}]
  %s4 = inlined_call_operand.vmem [shape: f32[1,32], index: 4, kind: input, shape index: {}]
  %s5 = inlined_call_operand.vmem [shape: f32[2,16,16,32], index: 5, kind: output, shape index: {}]
  %s6 = sld [smem:[#allocation0]]
  $region53: #{decoder_forward.8} parent=0
    _
  %s8 = ssub.s32 1, %s6
  %s9 = scalar_select 0, %s8, %s6
  loop: start=0, step=1, limit=6
  $region2: #{decoder_forward.8} parent=0 // loop_pre_header
    _
  $region3: #{decoder_forward.8} parent=0 // loop_header
    %s11 = sphi 0, %s15
    %p12 = scmp.ge.s32.totalorder %s11, 6
    %s18 = sphi 0, %s30
    %s19 = sphi 0, %s26
    %s20 = sphi 0, %s18
    %s21 = sphi 0, %s19
    %s22 = sphi 0, %s20
    %s23 = sphi 0, %s21
    %s35 = sphi 0, %s37
    %s38 = sphi 0, %s35
    %s39 = sphi 0, %s38
    %s55 = sphi 0, %s39
    %s71 = sphi 0, %s73
    %s74 = sphi 0, %s71
    %s75 = sphi 0, %s74
    %s91 = sphi 0, %s75
    %s107 = sphi 0, %s109
    %s110 = sphi 0, %s107
    %s111 = sphi 0, %s110
    %s127 = sphi 0, %s111
    %s131 = sphi 0, %s131
    %s133 = sphi 0, %s131
    %s134 = sphi 0, %s133
    %s148 = sphi 0, %s134
    %s152 = sphi 0, %s152
    %s154 = sphi 0, %s152
    %s155 = sphi 0, %s154
    %s169 = sphi 0, %s155
    %s177 = sphi 0, %s179
    %s180 = sphi 0, %s177
    %s181 = sphi 0, %s180
    %s197 = sphi 0, %s181
  $region4: #{decoder_forward.8} parent=0 // loop_header_branch
    %14 = sbr.rel (%p12) target = $region8
  $region5: #{decoder_forward.8} parent=0 // loop_body
    %s16 = ssub.s32 %s11, 1
    %s17 = ssub.s32 %s11, 2
    %s24 = sadd.s32 1, %s19
    %p25 = scmp.ge.s32.totalorder %s24, 2
    %s26 = scalar_select %p25, 0, %s24
    %s27 = sadd.s32 1, %s18
    %s28 = scalar_select %p25, %s27, %s18
    %p29 = scmp.ge.s32.totalorder %s28, 2
    %s30 = scalar_select %p29, 0, %s28
    %s31 = ssub.s32 %s18, %s30
    %s32 = ssub.s32 %s19, %s26
    %s33 = sor.u32 %s31, %s32
    %p34 = scmp.eq.s32.totalorder %s33, 0
    %s36 = sadd.s32 %s35, 1
    %s37 = scalar_select %p34, %s35, %s36
    %p40 = pneg %p34
    %p41 = scmp.eq.s32.totalorder %s11, 3
    %p42 = por %p40, %p41
    %p43 = scmp.ne.s32.totalorder %s35, %s38
    %p44 = scmp.eq.s32.totalorder %s11, 0
    %p45 = por %p43, %p44
    %p46 = scmp.ne.s32.totalorder %s35, %s38
    %p47 = scmp.eq.s32.totalorder %s16, 3
    %p48 = por %p46, %p47
    %p49 = scmp.ne.s32.totalorder %s38, %s39
    %p50 = scmp.eq.s32.totalorder %s16, 0
    %p51 = por %p49, %p50
    %p52 = scmp.ne.s32.totalorder %s38, %s39
    %p53 = scmp.eq.s32.totalorder %s17, 3
    %p54 = por %p52, %p53
    %p56 = scmp.ne.s32.totalorder %s39, %s55
    %p57 = scmp.eq.s32.totalorder %s17, 0
    %p58 = por %p56, %p57
    %s59 = smul.u32 %s19, 8
    %s60 = ssub.s32 %s59, 1
    %p61 = scmp.gt.s32.totalorder %s60, 0
    %s62 = scalar_select %p61, %s60, 0
    %s63 = smul.u32 %s26, 8
    %s64 = ssub.s32 %s63, 1
    %p65 = scmp.gt.s32.totalorder %s64, 0
    %s66 = scalar_select %p65, %s64, 0
    %s67 = ssub.s32 %s18, %s30
    %s68 = ssub.s32 %s62, %s66
    %s69 = sor.u32 %s67, %s68
    %p70 = scmp.eq.s32.totalorder %s69, 0
    %s72 = sadd.s32 %s71, 1
    %s73 = scalar_select %p70, %s71, %s72
    %p76 = pneg %p70
    %p77 = scmp.eq.s32.totalorder %s11, 3
    %p78 = por %p76, %p77
    %p79 = scmp.ne.s32.totalorder %s71, %s74
    %p80 = scmp.eq.s32.totalorder %s11, 0
    %p81 = por %p79, %p80
    %p82 = scmp.ne.s32.totalorder %s71, %s74
    %p83 = scmp.eq.s32.totalorder %s16, 3
    %p84 = por %p82, %p83
    %p85 = scmp.ne.s32.totalorder %s74, %s75
    %p86 = scmp.eq.s32.totalorder %s16, 0
    %p87 = por %p85, %p86
    %p88 = scmp.ne.s32.totalorder %s74, %s75
    %p89 = scmp.eq.s32.totalorder %s17, 3
    %p90 = por %p88, %p89
    %p92 = scmp.ne.s32.totalorder %s75, %s91
    %p93 = scmp.eq.s32.totalorder %s17, 0
    %p94 = por %p92, %p93
    %s95 = sadd.s32 %s19, 1
    %s96 = smul.u32 %s95, 8
    %p97 = scmp.lt.s32.totalorder %s96, 15
    %s98 = scalar_select %p97, %s96, 15
    %s99 = sadd.s32 %s26, 1
    %s100 = smul.u32 %s99, 8
    %p101 = scmp.lt.s32.totalorder %s100, 15
    %s102 = scalar_select %p101, %s100, 15
    %s103 = ssub.s32 %s18, %s30
    %s104 = ssub.s32 %s98, %s102
    %s105 = sor.u32 %s103, %s104
    %p106 = scmp.eq.s32.totalorder %s105, 0
    %s108 = sadd.s32 %s107, 1
    %s109 = scalar_select %p106, %s107, %s108
    %p112 = pneg %p106
    %p113 = scmp.eq.s32.totalorder %s11, 3
    %p114 = por %p112, %p113
    %p115 = scmp.ne.s32.totalorder %s107, %s110
    %p116 = scmp.eq.s32.totalorder %s11, 0
    %p117 = por %p115, %p116
    %p118 = scmp.ne.s32.totalorder %s107, %s110
    %p119 = scmp.eq.s32.totalorder %s16, 3
    %p120 = por %p118, %p119
    %p121 = scmp.ne.s32.totalorder %s110, %s111
    %p122 = scmp.eq.s32.totalorder %s16, 0
    %p123 = por %p121, %p122
    %p124 = scmp.ne.s32.totalorder %s110, %s111
    %p125 = scmp.eq.s32.totalorder %s17, 3
    %p126 = por %p124, %p125
    %p128 = scmp.ne.s32.totalorder %s111, %s127
    %p129 = scmp.eq.s32.totalorder %s17, 0
    %p130 = por %p128, %p129
    %s132 = sadd.s32 %s131, 1
    %p135 = scmp.eq.s32.totalorder %s11, 3
    %p136 = scmp.ne.s32.totalorder %s131, %s133
    %p137 = scmp.eq.s32.totalorder %s11, 0
    %p138 = por %p136, %p137
    %p139 = scmp.ne.s32.totalorder %s131, %s133
    %p140 = scmp.eq.s32.totalorder %s16, 3
    %p141 = por %p139, %p140
    %p142 = scmp.ne.s32.totalorder %s133, %s134
    %p143 = scmp.eq.s32.totalorder %s16, 0
    %p144 = por %p142, %p143
    %p145 = scmp.ne.s32.totalorder %s133, %s134
    %p146 = scmp.eq.s32.totalorder %s17, 3
    %p147 = por %p145, %p146
    %p149 = scmp.ne.s32.totalorder %s134, %s148
    %p150 = scmp.eq.s32.totalorder %s17, 0
    %p151 = por %p149, %p150
    %s153 = sadd.s32 %s152, 1
    %p156 = scmp.eq.s32.totalorder %s11, 3
    %p157 = scmp.ne.s32.totalorder %s152, %s154
    %p158 = scmp.eq.s32.totalorder %s11, 0
    %p159 = por %p157, %p158
    %p160 = scmp.ne.s32.totalorder %s152, %s154
    %p161 = scmp.eq.s32.totalorder %s16, 3
    %p162 = por %p160, %p161
    %p163 = scmp.ne.s32.totalorder %s154, %s155
    %p164 = scmp.eq.s32.totalorder %s16, 0
    %p165 = por %p163, %p164
    %p166 = scmp.ne.s32.totalorder %s154, %s155
    %p167 = scmp.eq.s32.totalorder %s17, 3
    %p168 = por %p166, %p167
    %p170 = scmp.ne.s32.totalorder %s155, %s169
    %p171 = scmp.eq.s32.totalorder %s17, 0
    %p172 = por %p170, %p171
    %s173 = ssub.s32 %s18, %s30
    %s174 = ssub.s32 %s19, %s26
    %s175 = sor.u32 %s173, %s174
    %p176 = scmp.eq.s32.totalorder %s175, 0
    %s178 = sadd.s32 %s177, 1
    %s179 = scalar_select %p176, %s177, %s178
    %p182 = pneg %p176
    %p183 = scmp.eq.s32.totalorder %s11, 3
    %p184 = por %p182, %p183
    %p185 = scmp.ne.s32.totalorder %s177, %s180
    %p186 = scmp.eq.s32.totalorder %s11, 0
    %p187 = por %p185, %p186
    %p188 = scmp.ne.s32.totalorder %s177, %s180
    %p189 = scmp.eq.s32.totalorder %s16, 3
    %p190 = por %p188, %p189
    %p191 = scmp.ne.s32.totalorder %s180, %s181
    %p192 = scmp.eq.s32.totalorder %s16, 0
    %p193 = por %p191, %p192
    %p194 = scmp.ne.s32.totalorder %s180, %s181
    %p195 = scmp.eq.s32.totalorder %s17, 3
    %p196 = por %p194, %p195
    %p198 = scmp.ne.s32.totalorder %s181, %s197
    %p199 = scmp.eq.s32.totalorder %s17, 0
    %p200 = por %p198, %p199
    %p201 = scmp.le.s32.totalorder 1, %s11
    %p202 = scmp.lt.s32.totalorder %s11, 5
    %p203 = pnand %p201, %p202
    %p204 = pneg %p203
    // Predicated region
    $region9: #{decoder_forward.8} parent=5 // pred_check
      _
    $region10: #{decoder_forward.8} parent=5 // pred_check_branch
      %206 = sbr.rel (%p203) target = $region12
    $region11: #{decoder_forward.8} parent=5 // pred_region
      %s207 = ssub.s32 %s11, 1
      // Predicated region
      $region13: #{decoder_forward.8} parent=11 // pred_check
        %p208 = pneg %p144
      $region14: #{decoder_forward.8} parent=11 // pred_check_branch
        %210 = sbr.rel (%p208) target = $region16
      $region15: #{decoder_forward.8} parent=11 // pred_region
        _
      $region16: #{decoder_forward.8} parent=11 // pred_fallthru
        _
      // Predicated region
      $region17: #{decoder_forward.8} parent=11 // pred_check
        %p211 = pneg %p165
      $region18: #{decoder_forward.8} parent=11 // pred_check_branch
        %213 = sbr.rel (%p211) target = $region20
      $region19: #{decoder_forward.8} parent=11 // pred_region
        _
      $region20: #{decoder_forward.8} parent=11 // pred_fallthru
        _
    $region12: #{decoder_forward.8} parent=5 // pred_fallthru
      _
    %p214 = scmp.lt.s32.totalorder %s11, 4
    // Predicated region
    $region21: #{decoder_forward.8} parent=5 // pred_check
      %p215 = pneg %p214
    $region22: #{decoder_forward.8} parent=5 // pred_check_branch
      %217 = sbr.rel (%p215) target = $region24
    $region23: #{decoder_forward.8} parent=5 // pred_region
      // Predicated region
      $region25: #{decoder_forward.8} parent=23 // pred_check
        %p218 = pneg %p45
      $region26: #{decoder_forward.8} parent=23 // pred_check_branch
        %220 = sbr.rel (%p218) target = $region28
      $region27: #{decoder_forward.8} parent=23 // pred_region
        %s221 = smul.u32 8, %s19
        %p222 = scmp.lt.s32.totalorder %s18, 1
        %s223 = scalar_select %p222, %s18, 1
        %p224 = scmp.lt.s32.totalorder %s221, 15
        %s225 = scalar_select %p224, %s221, 15
        %s226 = smul.addr %s225, 2
        %s227 = smul.addr %s223, 32
        %s228 = sadd.s32 %s226, %s227
        %s229 = smul.addr %s228, 8
        %s230 = scalar_lea.vmem %s0, %s229
        %s231 = smul.u32 8, %s19
      $region28: #{decoder_forward.8} parent=23 // pred_fallthru
        _
      // Predicated region
      $region29: #{decoder_forward.8} parent=23 // pred_check
        %p232 = pneg %p81
      $region30: #{decoder_forward.8} parent=23 // pred_check_branch
        %234 = sbr.rel (%p232) target = $region32
      $region31: #{decoder_forward.8} parent=23 // pred_region
        %s235 = smul.u32 %s19, 8
        %s236 = ssub.s32 %s235, 1
        %p237 = scmp.gt.s32.totalorder %s236, 0
        %s238 = scalar_select %p237, %s236, 0
        %p239 = scmp.lt.s32.totalorder %s18, 1
        %s240 = scalar_select %p239, %s18, 1
        %p241 = scmp.lt.s32.totalorder %s238, 15
        %s242 = scalar_select %p241, %s238, 15
        %s243 = smul.addr %s242, 2
        %s244 = smul.addr %s240, 32
        %s245 = sadd.s32 %s243, %s244
        %s246 = smul.addr %s245, 8
        %s247 = scalar_lea.vmem %s1, %s246
        %s248 = smul.u32 %s19, 8
        %s249 = ssub.s32 %s248, 1
        %p250 = scmp.gt.s32.totalorder %s249, 0
        %s251 = scalar_select %p250, %s249, 0
      $region32: #{decoder_forward.8} parent=23 // pred_fallthru
        _
      // Predicated region
      $region33: #{decoder_forward.8} parent=23 // pred_check
        %p252 = pneg %p117
      $region34: #{decoder_forward.8} parent=23 // pred_check_branch
        %254 = sbr.rel (%p252) target = $region36
      $region35: #{decoder_forward.8} parent=23 // pred_region
        %s255 = sadd.s32 %s19, 1
        %s256 = smul.u32 %s255, 8
        %p257 = scmp.lt.s32.totalorder %s256, 15
        %s258 = scalar_select %p257, %s256, 15
        %p259 = scmp.lt.s32.totalorder %s18, 1
        %s260 = scalar_select %p259, %s18, 1
        %p261 = scmp.lt.s32.totalorder %s258, 15
        %s262 = scalar_select %p261, %s258, 15
        %s263 = smul.addr %s262, 2
        %s264 = smul.addr %s260, 32
        %s265 = sadd.s32 %s263, %s264
        %s266 = smul.addr %s265, 8
        %s267 = scalar_lea.vmem %s2, %s266
        %s268 = sadd.s32 %s19, 1
        %s269 = smul.u32 %s268, 8
        %p270 = scmp.lt.s32.totalorder %s269, 15
        %s271 = scalar_select %p270, %s269, 15
      $region36: #{decoder_forward.8} parent=23 // pred_fallthru
        _
    $region24: #{decoder_forward.8} parent=5 // pred_fallthru
      _
    %p272 = scmp.le.s32.totalorder 1, %s11
    %p273 = scmp.lt.s32.totalorder %s11, 5
    %p274 = pnand %p272, %p273
    %p275 = pneg %p274
    // Predicated region
    $region37: #{decoder_forward.8} parent=5 // pred_check
      _
    $region38: #{decoder_forward.8} parent=5 // pred_check_branch
      %277 = sbr.rel (%p274) target = $region40
    $region39: #{decoder_forward.8} parent=5 // pred_region
      %s278 = ssub.s32 %s11, 1
      %s279 = smul.u32 8, %s21
      %p280 = scmp.lt.s32.totalorder %s20, 1
      %s281 = scalar_select %p280, %s20, 1
      %p282 = scmp.lt.s32.totalorder %s279, 15
      %s283 = scalar_select %p282, %s279, 15
      %s284 = smul.addr %s283, 2
      %s285 = smul.addr %s281, 32
      %s286 = sadd.s32 %s284, %s285
      %s287 = smul.addr %s286, 8
      %s288 = scalar_lea.vmem %s0, %s287
      %p289 = pneg %p51
      %p290 = pneg %p48
      %s291 = smul.u32 %s21, 8
      %s292 = ssub.s32 %s291, 1
      %p293 = scmp.gt.s32.totalorder %s292, 0
      %s294 = scalar_select %p293, %s292, 0
      %p295 = scmp.lt.s32.totalorder %s20, 1
      %s296 = scalar_select %p295, %s20, 1
      %p297 = scmp.lt.s32.totalorder %s294, 15
      %s298 = scalar_select %p297, %s294, 15
      %s299 = smul.addr %s298, 2
      %s300 = smul.addr %s296, 32
      %s301 = sadd.s32 %s299, %s300
      %s302 = smul.addr %s301, 8
      %s303 = scalar_lea.vmem %s1, %s302
      %p304 = pneg %p87
      %p305 = pneg %p84
      %s306 = sadd.s32 %s21, 1
      %s307 = smul.u32 %s306, 8
      %p308 = scmp.lt.s32.totalorder %s307, 15
      %s309 = scalar_select %p308, %s307, 15
      %p310 = scmp.lt.s32.totalorder %s20, 1
      %s311 = scalar_select %p310, %s20, 1
      %p312 = scmp.lt.s32.totalorder %s309, 15
      %s313 = scalar_select %p312, %s309, 15
      %s314 = smul.addr %s313, 2
      %s315 = smul.addr %s311, 32
      %s316 = sadd.s32 %s314, %s315
      %s317 = smul.addr %s316, 8
      %s318 = scalar_lea.vmem %s2, %s317
      %p319 = pneg %p123
      %p320 = pneg %p120
      %p321 = pneg %p144
      %p322 = pneg %p141
      %p323 = pneg %p165
      %p324 = pneg %p162
      %p325 = pneg %p193
      %p326 = pneg %p190
      %s327 = smul.u32 8, %s21
      %p328 = scmp.lt.s32.totalorder %s20, 1
      %s329 = scalar_select %p328, %s20, 1
      %p330 = scmp.lt.s32.totalorder %s327, 15
      %s331 = scalar_select %p330, %s327, 15
      %s332 = smul.addr %s331, 2
      %s333 = smul.addr %s329, 32
      %s334 = sadd.s32 %s332, %s333
      %s335 = smul.addr %s334, 8
      %s336 = scalar_lea.vmem %s5, %s335
      %s337 = smul.u32 8, %s21
      %p338 = scmp.lt.s32.totalorder %s20, 1
      %s339 = scalar_select %p338, %s20, 1
      %p340 = scmp.lt.s32.totalorder %s337, 15
      %s341 = scalar_select %p340, %s337, 15
      %s342 = smul.addr %s341, 2
      %s343 = smul.addr %s339, 32
      %s344 = sadd.s32 %s342, %s343
      %s345 = smul.addr %s344, 8
      %s346 = scalar_lea.vmem %s0, %s345
      %s347 = smul.u32 8, %s21
      %s348 = smul.u32 %s21, 8
      %s349 = ssub.s32 %s348, 1
      %p350 = scmp.gt.s32.totalorder %s349, 0
      %s351 = scalar_select %p350, %s349, 0
      %p352 = scmp.lt.s32.totalorder %s20, 1
      %s353 = scalar_select %p352, %s20, 1
      %p354 = scmp.lt.s32.totalorder %s351, 15
      %s355 = scalar_select %p354, %s351, 15
      %s356 = smul.addr %s355, 2
      %s357 = smul.addr %s353, 32
      %s358 = sadd.s32 %s356, %s357
      %s359 = smul.addr %s358, 8
      %s360 = scalar_lea.vmem %s1, %s359
      %s361 = smul.u32 %s21, 8
      %s362 = ssub.s32 %s361, 1
      %p363 = scmp.gt.s32.totalorder %s362, 0
      %s364 = scalar_select %p363, %s362, 0
      %s365 = sadd.s32 %s21, 1
      %s366 = smul.u32 %s365, 8
      %p367 = scmp.lt.s32.totalorder %s366, 15
      %s368 = scalar_select %p367, %s366, 15
      %p369 = scmp.lt.s32.totalorder %s20, 1
      %s370 = scalar_select %p369, %s20, 1
      %p371 = scmp.lt.s32.totalorder %s368, 15
      %s372 = scalar_select %p371, %s368, 15
      %s373 = smul.addr %s372, 2
      %s374 = smul.addr %s370, 32
      %s375 = sadd.s32 %s373, %s374
      %s376 = smul.addr %s375, 8
      %s377 = scalar_lea.vmem %s2, %s376
      %s378 = sadd.s32 %s21, 1
      %s379 = smul.u32 %s378, 8
      %p380 = scmp.lt.s32.totalorder %s379, 15
      %s381 = scalar_select %p380, %s379, 15
      %s382 = smul.u32 8, %s21
      %p383 = scmp.lt.s32.totalorder %s20, 1
      %s384 = scalar_select %p383, %s20, 1
      %p385 = scmp.lt.s32.totalorder %s382, 15
      %s386 = scalar_select %p385, %s382, 15
      %s387 = smul.addr %s386, 2
      %s388 = smul.addr %s384, 32
      %s389 = sadd.s32 %s387, %s388
      %s390 = smul.addr %s389, 8
      %s391 = scalar_lea.vmem %s5, %s390
      %s392 = smul.u32 8, %s21
      %vm393 = vcmask 261120
      %394 = vst.msk [vmem:[#allocation2] sm:$0xff] %vm393, 0.0
      %395 = vst.msk [vmem:[#allocation2 + $0x8] sm:$0xff] %vm393, 0.0
      %vm396 = vcmask 254976
      %397 = vst.msk [vmem:[#allocation2 + $0x10] sm:$0x3] %vm396, 0.0
      %398 = vst.msk [vmem:[#allocation2 + $0x18] sm:$0xff] %vm393, 0.0
      %399 = vst.msk [vmem:[#allocation2 + $0x20] sm:$0xff] %vm393, 0.0
      %400 = vst.msk [vmem:[#allocation2 + $0x28] sm:$0x3] %vm396, 0.0
      %401 = vst.msk [vmem:[#allocation2 + $0x30] sm:$0xff] %vm393, 0.0
      %402 = vst.msk [vmem:[#allocation2 + $0x38] sm:$0xff] %vm393, 0.0
      %403 = vst.msk [vmem:[#allocation2 + $0x40] sm:$0x3] %vm396, 0.0
      %404 = vst.msk [vmem:[#allocation2 + $0x48] sm:$0xff] %vm393, 0.0
      %405 = vst.msk [vmem:[#allocation2 + $0x50] sm:$0xff] %vm393, 0.0
      %406 = vst.msk [vmem:[#allocation2 + $0x58] sm:$0x3] %vm396, 0.0
      %407 = vst.msk [vmem:[#allocation2 + $0x60] sm:$0xff] %vm393, 0.0
      %408 = vst.msk [vmem:[#allocation2 + $0x68] sm:$0xff] %vm393, 0.0
      %409 = vst.msk [vmem:[#allocation2 + $0x70] sm:$0x3] %vm396, 0.0
      %410 = vst.msk [vmem:[#allocation2 + $0x78] sm:$0xff] %vm393, 0.0
      %411 = vst.msk [vmem:[#allocation2 + $0x80] sm:$0xff] %vm393, 0.0
      %412 = vst.msk [vmem:[#allocation2 + $0x88] sm:$0x3] %vm396, 0.0
      %413 = vst.msk [vmem:[#allocation2 + $0x90] sm:$0xff] %vm393, 0.0
      %414 = vst.msk [vmem:[#allocation2 + $0x98] sm:$0xff] %vm393, 0.0
      %415 = vst.msk [vmem:[#allocation2 + $0xa0] sm:$0x3] %vm396, 0.0
      %416 = vst.msk [vmem:[#allocation2 + $0xa8] sm:$0xff] %vm393, 0.0
      %417 = vst.msk [vmem:[#allocation2 + $0xb0] sm:$0xff] %vm393, 0.0
      %418 = vst.msk [vmem:[#allocation2 + $0xb8] sm:$0x3] %vm396, 0.0
      %419 = vst.msk [vmem:[#allocation2 + $0xc0] sm:$0xff] %vm393, 0.0
      %420 = vst.msk [vmem:[#allocation2 + $0xc8] sm:$0xff] %vm393, 0.0
      %421 = vst.msk [vmem:[#allocation2 + $0xd0] sm:$0x3] %vm396, 0.0
      %422 = vst.msk [vmem:[#allocation2 + $0xd8] sm:$0xff] %vm393, 0.0
      %423 = vst.msk [vmem:[#allocation2 + $0xe0] sm:$0xff] %vm393, 0.0
      %424 = vst.msk [vmem:[#allocation2 + $0xe8] sm:$0x3] %vm396, 0.0
      %v425 = vld [vmem:[%s346] sm:$0xff]
      %v426 = vld [vmem:[%s346 + $0x8] sm:$0xff]
      %v427 = vld [vmem:[%s346 + $0x10] sm:$0xff]
      %v428 = vld [vmem:[%s346 + $0x18] sm:$0xff]
      %v429 = vld [vmem:[%s346 + $0x20] sm:$0xff]
      %v430 = vld [vmem:[%s346 + $0x28] sm:$0xff]
      %v431 = vld [vmem:[%s346 + $0x30] sm:$0xff]
      %v432 = vld [vmem:[%s346 + $0x38] sm:$0xff]
      %v433 = vld [vmem:[%s346 + $0x40] sm:$0xff]
      %v434 = vld [vmem:[%s346 + $0x48] sm:$0xff]
      %v435 = vld [vmem:[%s346 + $0x50] sm:$0xff]
      %v436 = vld [vmem:[%s346 + $0x58] sm:$0xff]
      %v437 = vld [vmem:[%s346 + $0x60] sm:$0xff]
      %v438 = vld [vmem:[%s346 + $0x68] sm:$0xff]
      %v439 = vld [vmem:[%s346 + $0x70] sm:$0xff]
      %v440 = vld [vmem:[%s346 + $0x78] sm:$0xff]
      %s441 = scalar_lea.vmem [#allocation2], 24
      %442 = vst.msk [vmem:[%s441 + $0x1] sm:$0xff] %vm393, %v425
      %443 = vst.msk [vmem:[%s441 + $0x9] sm:$0xff] %vm393, %v426
      %444 = vst.msk [vmem:[%s441 + $0x19] sm:$0xff] %vm393, %v427
      %445 = vst.msk [vmem:[%s441 + $0x21] sm:$0xff] %vm393, %v428
      %446 = vst.msk [vmem:[%s441 + $0x31] sm:$0xff] %vm393, %v429
      %447 = vst.msk [vmem:[%s441 + $0x39] sm:$0xff] %vm393, %v430
      %448 = vst.msk [vmem:[%s441 + $0x49] sm:$0xff] %vm393, %v431
      %449 = vst.msk [vmem:[%s441 + $0x51] sm:$0xff] %vm393, %v432
      %450 = vst.msk [vmem:[%s441 + $0x61] sm:$0xff] %vm393, %v433
      %451 = vst.msk [vmem:[%s441 + $0x69] sm:$0xff] %vm393, %v434
      %452 = vst.msk [vmem:[%s441 + $0x79] sm:$0xff] %vm393, %v435
      %453 = vst.msk [vmem:[%s441 + $0x81] sm:$0xff] %vm393, %v436
      %454 = vst.msk [vmem:[%s441 + $0x91] sm:$0xff] %vm393, %v437
      %455 = vst.msk [vmem:[%s441 + $0x99] sm:$0xff] %vm393, %v438
      %456 = vst.msk [vmem:[%s441 + $0xa9] sm:$0xff] %vm393, %v439
      %457 = vst.msk [vmem:[%s441 + $0xb1] sm:$0xff] %vm393, %v440
      %p458 = scmp.gt.s32.totalorder %s21, 0
      %s459 = scalar_select %p458, 1, 0
      %s460 = scvt.s32.f32 %s459
      %p461 = scmp.lt.s32.totalorder %s21, 1
      %s462 = scalar_select %p461, 1, 0
      %s463 = scvt.s32.f32 %s462
      %v464 = vld [vmem:[%s360] sm:$0xff]
      %v465 = vld [vmem:[%s360 + $0x8] sm:$0xff]
      %v466 = vstv %s460
      %v467 = vmul.f32 %v464, %v466
      %v468 = vmul.f32 %v465, %v466
      %469 = vst.msk [vmem:[#allocation2 + $0x1] sm:$0xff] %vm393, %v467
      %470 = vst.msk [vmem:[#allocation2 + $0x9] sm:$0xff] %vm393, %v468
      %v471 = vld [vmem:[%s377] sm:$0xff]
      %v472 = vld [vmem:[%s377 + $0x8] sm:$0xff]
      %v473 = vstv %s463
      %v474 = vmul.f32 %v471, %v473
      %v475 = vmul.f32 %v472, %v473
      %s476 = scalar_lea.vmem [#allocation2], 216
      %477 = vst.msk [vmem:[%s476 + $0x1] sm:$0xff] %vm393, %v474
      %478 = vst.msk [vmem:[%s476 + $0x9] sm:$0xff] %vm393, %v475
      %v479 = vld [vmem:[#allocation2] sm:$0xff]
      %v480 = vld [vmem:[#allocation2 + $0x8] sm:$0xff]
      %v481 = vld [vmem:[#allocation2 + $0x10] sm:$0x3]
      %v482 = vld [vmem:[#allocation2 + $0x18] sm:$0xff]
      %v483 = vld [vmem:[#allocation2 + $0x20] sm:$0xff]
      %v484 = vld [vmem:[#allocation2 + $0x28] sm:$0x3]
      %v485 = vld [vmem:[#allocation2 + $0x30] sm:$0xff]
      %v486 = vld [vmem:[#allocation2 + $0x38] sm:$0xff]
      %v487 = vld [vmem:[#allocation2 + $0x40] sm:$0x3]
      %v488 = vld [vmem:[#allocation2 + $0x48] sm:$0xff]
      %v489 = vld [vmem:[#allocation2 + $0x50] sm:$0xff]
      %v490 = vld [vmem:[#allocation2 + $0x58] sm:$0x3]
      %v491 = vld [vmem:[#allocation2 + $0x60] sm:$0xff]
      %v492 = vld [vmem:[#allocation2 + $0x68] sm:$0xff]
      %v493 = vld [vmem:[#allocation2 + $0x70] sm:$0x3]
      %v494 = vld [vmem:[#allocation2 + $0x78] sm:$0xff]
      %v495 = vld [vmem:[#allocation2 + $0x80] sm:$0xff]
      %v496 = vld [vmem:[#allocation2 + $0x88] sm:$0x3]
      %v497 = vld [vmem:[#allocation2 + $0x90] sm:$0xff]
      %v498 = vld [vmem:[#allocation2 + $0x98] sm:$0xff]
      %v499 = vld [vmem:[#allocation2 + $0xa0] sm:$0x3]
      %v500 = vld [vmem:[#allocation2 + $0xa8] sm:$0xff]
      %v501 = vld [vmem:[#allocation2 + $0xb0] sm:$0xff]
      %v502 = vld [vmem:[#allocation2 + $0xb8] sm:$0x3]
      %v503 = vld [vmem:[#allocation2 + $0xc0] sm:$0xff]
      %v504 = vld [vmem:[#allocation2 + $0xc8] sm:$0xff]
      %v505 = vld [vmem:[#allocation2 + $0xd0] sm:$0x3]
      %v506 = vld [vmem:[#allocation2 + $0xd8] sm:$0xff]
      %v507 = vld [vmem:[#allocation2 + $0xe0] sm:$0xff]
      %v508 = vld [vmem:[#allocation2 + $0xe8] sm:$0x3]
      %509 = vst.msk [vmem:[#allocation3] sm:$0xff] %vm393, %v479
      %510 = vst.msk [vmem:[#allocation3 + $0x18] sm:$0xff] %vm393, %v480
      %511 = vst.msk [vmem:[#allocation3 + $0x30] sm:$0xff] %vm393, %v482
      %512 = vst.msk [vmem:[#allocation3 + $0x48] sm:$0xff] %vm393, %v483
      %513 = vst.msk [vmem:[#allocation3 + $0x60] sm:$0xff] %vm393, %v485
      %514 = vst.msk [vmem:[#allocation3 + $0x78] sm:$0xff] %vm393, %v486
      %515 = vst.msk [vmem:[#allocation3 + $0x90] sm:$0xff] %vm393, %v488
      %516 = vst.msk [vmem:[#allocation3 + $0xa8] sm:$0xff] %vm393, %v489
      %517 = vst.msk [vmem:[#allocation3 + $0xc0] sm:$0xff] %vm393, %v491
      %518 = vst.msk [vmem:[#allocation3 + $0xd8] sm:$0xff] %vm393, %v492
      %519 = vst.msk [vmem:[#allocation3 + $0xf0] sm:$0xff] %vm393, %v494
      %520 = vst.msk [vmem:[#allocation3 + $0x108] sm:$0xff] %vm393, %v495
      %521 = vst.msk [vmem:[#allocation3 + $0x120] sm:$0xff] %vm393, %v497
      %522 = vst.msk [vmem:[#allocation3 + $0x138] sm:$0xff] %vm393, %v498
      %523 = vst.msk [vmem:[#allocation3 + $0x150] sm:$0xff] %vm393, %v500
      %524 = vst.msk [vmem:[#allocation3 + $0x168] sm:$0xff] %vm393, %v501
      %vm549 = vcmask 1046528
      %v550 = vrot.slane %v479, 1
      %v551 = vrot.slane %v480, 1
      %v552 = vsel %vm549, %v550, %v551
      %v553 = vrot.slane %v481, 1
      %v554 = vsel %vm549, %v551, %v553
      %v555 = vrot.slane %v482, 1
      %v556 = vrot.slane %v483, 1
      %v557 = vsel %vm549, %v555, %v556
      %v558 = vrot.slane %v484, 1
      %v559 = vsel %vm549, %v556, %v558
      %v560 = vrot.slane %v485, 1
      %v561 = vrot.slane %v486, 1
      %v562 = vsel %vm549, %v560, %v561
      %v563 = vrot.slane %v487, 1
      %v564 = vsel %vm549, %v561, %v563
      %v565 = vrot.slane %v488, 1
      %v566 = vrot.slane %v489, 1
      %v567 = vsel %vm549, %v565, %v566
      %v568 = vrot.slane %v490, 1
      %v569 = vsel %vm549, %v566, %v568
      %v570 = vrot.slane %v491, 1
      %v571 = vrot.slane %v492, 1
      %v572 = vsel %vm549, %v570, %v571
      %v573 = vrot.slane %v493, 1
      %v574 = vsel %vm549, %v571, %v573
      %v575 = vrot.slane %v494, 1
      %v576 = vrot.slane %v495, 1
      %v577 = vsel %vm549, %v575, %v576
      %v578 = vrot.slane %v496, 1
      %v579 = vsel %vm549, %v576, %v578
      %v580 = vrot.slane %v497, 1
      %v581 = vrot.slane %v498, 1
      %v582 = vsel %vm549, %v580, %v581
      %v583 = vrot.slane %v499, 1
      %v584 = vsel %vm549, %v581, %v583
      %v585 = vrot.slane %v500, 1
      %v586 = vrot.slane %v501, 1
      %v587 = vsel %vm549, %v585, %v586
      %v588 = vrot.slane %v502, 1
      %v589 = vsel %vm549, %v586, %v588
      %590 = vrot.lane.b32.xlu0 %v552, 32
      %v591 = vpop.permute.xlu0 %590
      %592 = vrot.lane.b32.xlu0 %v554, 32
      %v593 = vpop.permute.xlu0 %592
      %594 = vrot.lane.b32.xlu0 %v557, 32
      %v595 = vpop.permute.xlu0 %594
      %596 = vrot.lane.b32.xlu0 %v559, 32
      %v597 = vpop.permute.xlu0 %596
      %598 = vrot.lane.b32.xlu0 %v562, 32
      %v599 = vpop.permute.xlu0 %598
      %600 = vrot.lane.b32.xlu0 %v564, 32
      %v601 = vpop.permute.xlu0 %600
      %602 = vrot.lane.b32.xlu0 %v567, 32
      %v603 = vpop.permute.xlu0 %602
      %604 = vrot.lane.b32.xlu0 %v569, 32
      %v605 = vpop.permute.xlu0 %604
      %606 = vrot.lane.b32.xlu0 %v572, 32
      %v607 = vpop.permute.xlu0 %606
      %608 = vrot.lane.b32.xlu0 %v574, 32
      %v609 = vpop.permute.xlu0 %608
      %610 = vrot.lane.b32.xlu0 %v577, 32
      %v611 = vpop.permute.xlu0 %610
      %612 = vrot.lane.b32.xlu0 %v579, 32
      %v613 = vpop.permute.xlu0 %612
      %614 = vrot.lane.b32.xlu0 %v582, 32
      %v615 = vpop.permute.xlu0 %614
      %616 = vrot.lane.b32.xlu0 %v584, 32
      %v617 = vpop.permute.xlu0 %616
      %618 = vrot.lane.b32.xlu0 %v587, 32
      %v619 = vpop.permute.xlu0 %618
      %620 = vrot.lane.b32.xlu0 %v589, 32
      %v621 = vpop.permute.xlu0 %620
      %vm638 = vcmask 523520
      %639 = vst.msk [vmem:[#allocation3] sm:$0xff] %vm638, %v591
      %640 = vst.msk [vmem:[#allocation3 + $0x18] sm:$0xff] %vm638, %v593
      %641 = vst.msk [vmem:[#allocation3 + $0x30] sm:$0xff] %vm638, %v595
      %642 = vst.msk [vmem:[#allocation3 + $0x48] sm:$0xff] %vm638, %v597
      %643 = vst.msk [vmem:[#allocation3 + $0x60] sm:$0xff] %vm638, %v599
      %644 = vst.msk [vmem:[#allocation3 + $0x78] sm:$0xff] %vm638, %v601
      %645 = vst.msk [vmem:[#allocation3 + $0x90] sm:$0xff] %vm638, %v603
      %646 = vst.msk [vmem:[#allocation3 + $0xa8] sm:$0xff] %vm638, %v605
      %647 = vst.msk [vmem:[#allocation3 + $0xc0] sm:$0xff] %vm638, %v607
      %648 = vst.msk [vmem:[#allocation3 + $0xd8] sm:$0xff] %vm638, %v609
      %649 = vst.msk [vmem:[#allocation3 + $0xf0] sm:$0xff] %vm638, %v611
      %650 = vst.msk [vmem:[#allocation3 + $0x108] sm:$0xff] %vm638, %v613
      %651 = vst.msk [vmem:[#allocation3 + $0x120] sm:$0xff] %vm638, %v615
      %652 = vst.msk [vmem:[#allocation3 + $0x138] sm:$0xff] %vm638, %v617
      %653 = vst.msk [vmem:[#allocation3 + $0x150] sm:$0xff] %vm638, %v619
      %654 = vst.msk [vmem:[#allocation3 + $0x168] sm:$0xff] %vm638, %v621
      %vm655 = vcmask 1045504
      %v656 = vrot.slane %v479, 2
      %v657 = vrot.slane %v480, 2
      %v658 = vsel %vm655, %v656, %v657
      %v659 = vrot.slane %v481, 2
      %v660 = vsel %vm655, %v657, %v659
      %v661 = vrot.slane %v482, 2
      %v662 = vrot.slane %v483, 2
      %v663 = vsel %vm655, %v661, %v662
      %v664 = vrot.slane %v484, 2
      %v665 = vsel %vm655, %v662, %v664
      %v666 = vrot.slane %v485, 2
      %v667 = vrot.slane %v486, 2
      %v668 = vsel %vm655, %v666, %v667
      %v669 = vrot.slane %v487, 2
      %v670 = vsel %vm655, %v667, %v669
      %v671 = vrot.slane %v488, 2
      %v672 = vrot.slane %v489, 2
      %v673 = vsel %vm655, %v671, %v672
      %v674 = vrot.slane %v490, 2
      %v675 = vsel %vm655, %v672, %v674
      %v676 = vrot.slane %v491, 2
      %v677 = vrot.slane %v492, 2
      %v678 = vsel %vm655, %v676, %v677
      %v679 = vrot.slane %v493, 2
      %v680 = vsel %vm655, %v677, %v679
      %v681 = vrot.slane %v494, 2
      %v682 = vrot.slane %v495, 2
      %v683 = vsel %vm655, %v681, %v682
      %v684 = vrot.slane %v496, 2
      %v685 = vsel %vm655, %v682, %v684
      %v686 = vrot.slane %v497, 2
      %v687 = vrot.slane %v498, 2
      %v688 = vsel %vm655, %v686, %v687
      %v689 = vrot.slane %v499, 2
      %v690 = vsel %vm655, %v687, %v689
      %v691 = vrot.slane %v500, 2
      %v692 = vrot.slane %v501, 2
      %v693 = vsel %vm655, %v691, %v692
      %v694 = vrot.slane %v502, 2
      %v695 = vsel %vm655, %v692, %v694
      %696 = vrot.lane.b32.xlu0 %v658, 64
      %v697 = vpop.permute.xlu0 %696
      %698 = vrot.lane.b32.xlu0 %v660, 64
      %v699 = vpop.permute.xlu0 %698
      %700 = vrot.lane.b32.xlu0 %v663, 64
      %v701 = vpop.permute.xlu0 %700
      %702 = vrot.lane.b32.xlu0 %v665, 64
      %v703 = vpop.permute.xlu0 %702
      %704 = vrot.lane.b32.xlu0 %v668, 64
      %v705 = vpop.permute.xlu0 %704
      %706 = vrot.lane.b32.xlu0 %v670, 64
      %v707 = vpop.permute.xlu0 %706
      %708 = vrot.lane.b32.xlu0 %v673, 64
      %v709 = vpop.permute.xlu0 %708
      %710 = vrot.lane.b32.xlu0 %v675, 64
      %v711 = vpop.permute.xlu0 %710
      %712 = vrot.lane.b32.xlu0 %v678, 64
      %v713 = vpop.permute.xlu0 %712
      %714 = vrot.lane.b32.xlu0 %v680, 64
      %v715 = vpop.permute.xlu0 %714
      %716 = vrot.lane.b32.xlu0 %v683, 64
      %v717 = vpop.permute.xlu0 %716
      %718 = vrot.lane.b32.xlu0 %v685, 64
      %v719 = vpop.permute.xlu0 %718
      %720 = vrot.lane.b32.xlu0 %v688, 64
      %v721 = vpop.permute.xlu0 %720
      %722 = vrot.lane.b32.xlu0 %v690, 64
      %v723 = vpop.permute.xlu0 %722
      %724 = vrot.lane.b32.xlu0 %v693, 64
      %v725 = vpop.permute.xlu0 %724
      %726 = vrot.lane.b32.xlu0 %v695, 64
      %v727 = vpop.permute.xlu0 %726
      %vm744 = vcmask 785920
      %745 = vst.msk [vmem:[#allocation3] sm:$0xff] %vm744, %v697
      %746 = vst.msk [vmem:[#allocation3 + $0x18] sm:$0xff] %vm744, %v699
      %747 = vst.msk [vmem:[#allocation3 + $0x30] sm:$0xff] %vm744, %v701
      %748 = vst.msk [vmem:[#allocation3 + $0x48] sm:$0xff] %vm744, %v703
      %749 = vst.msk [vmem:[#allocation3 + $0x60] sm:$0xff] %vm744, %v705
      %750 = vst.msk [vmem:[#allocation3 + $0x78] sm:$0xff] %vm744, %v707
      %751 = vst.msk [vmem:[#allocation3 + $0x90] sm:$0xff] %vm744, %v709
      %752 = vst.msk [vmem:[#allocation3 + $0xa8] sm:$0xff] %vm744, %v711
      %753 = vst.msk [vmem:[#allocation3 + $0xc0] sm:$0xff] %vm744, %v713
      %754 = vst.msk [vmem:[#allocation3 + $0xd8] sm:$0xff] %vm744, %v715
      %755 = vst.msk [vmem:[#allocation3 + $0xf0] sm:$0xff] %vm744, %v717
      %756 = vst.msk [vmem:[#allocation3 + $0x108] sm:$0xff] %vm744, %v719
      %757 = vst.msk [vmem:[#allocation3 + $0x120] sm:$0xff] %vm744, %v721
      %758 = vst.msk [vmem:[#allocation3 + $0x138] sm:$0xff] %vm744, %v723
      %759 = vst.msk [vmem:[#allocation3 + $0x150] sm:$0xff] %vm744, %v725
      %760 = vst.msk [vmem:[#allocation3 + $0x168] sm:$0xff] %vm744, %v727
      %763 = vrot.lane.b32.xlu0 %v482, 96
      %v764 = vpop.permute.xlu0 %763
      %765 = vrot.lane.b32.xlu0 %v483, 96
      %v766 = vpop.permute.xlu0 %765
      %767 = vrot.lane.b32.xlu0 %v485, 96
      %v768 = vpop.permute.xlu0 %767
      %769 = vrot.lane.b32.xlu0 %v486, 96
      %v770 = vpop.permute.xlu0 %769
      %771 = vrot.lane.b32.xlu0 %v488, 96
      %v772 = vpop.permute.xlu0 %771
      %773 = vrot.lane.b32.xlu0 %v489, 96
      %v774 = vpop.permute.xlu0 %773
      %775 = vrot.lane.b32.xlu0 %v491, 96
      %v776 = vpop.permute.xlu0 %775
      %777 = vrot.lane.b32.xlu0 %v492, 96
      %v778 = vpop.permute.xlu0 %777
      %779 = vrot.lane.b32.xlu0 %v494, 96
      %v780 = vpop.permute.xlu0 %779
      %781 = vrot.lane.b32.xlu0 %v495, 96
      %v782 = vpop.permute.xlu0 %781
      %783 = vrot.lane.b32.xlu0 %v497, 96
      %v784 = vpop.permute.xlu0 %783
      %785 = vrot.lane.b32.xlu0 %v498, 96
      %v786 = vpop.permute.xlu0 %785
      %787 = vrot.lane.b32.xlu0 %v500, 96
      %v788 = vpop.permute.xlu0 %787
      %789 = vrot.lane.b32.xlu0 %v501, 96
      %v790 = vpop.permute.xlu0 %789
      %791 = vrot.lane.b32.xlu0 %v503, 96
      %v792 = vpop.permute.xlu0 %791
      %793 = vrot.lane.b32.xlu0 %v504, 96
      %v794 = vpop.permute.xlu0 %793
      %vm811 = vcmask 1048320
      %812 = vst.msk [vmem:[#allocation3] sm:$0xff] %vm811, %v764
      %813 = vst.msk [vmem:[#allocation3 + $0x18] sm:$0xff] %vm811, %v766
      %814 = vst.msk [vmem:[#allocation3 + $0x30] sm:$0xff] %vm811, %v768
      %815 = vst.msk [vmem:[#allocation3 + $0x48] sm:$0xff] %vm811, %v770
      %816 = vst.msk [vmem:[#allocation3 + $0x60] sm:$0xff] %vm811, %v772
      %817 = vst.msk [vmem:[#allocation3 + $0x78] sm:$0xff] %vm811, %v774
      %818 = vst.msk [vmem:[#allocation3 + $0x90] sm:$0xff] %vm811, %v776
      %819 = vst.msk [vmem:[#allocation3 + $0xa8] sm:$0xff] %vm811, %v778
      %820 = vst.msk [vmem:[#allocation3 + $0xc0] sm:$0xff] %vm811, %v780
      %821 = vst.msk [vmem:[#allocation3 + $0xd8] sm:$0xff] %vm811, %v782
      %822 = vst.msk [vmem:[#allocation3 + $0xf0] sm:$0xff] %vm811, %v784
      %823 = vst.msk [vmem:[#allocation3 + $0x108] sm:$0xff] %vm811, %v786
      %824 = vst.msk [vmem:[#allocation3 + $0x120] sm:$0xff] %vm811, %v788
      %825 = vst.msk [vmem:[#allocation3 + $0x138] sm:$0xff] %vm811, %v790
      %826 = vst.msk [vmem:[#allocation3 + $0x150] sm:$0xff] %vm811, %v792
      %827 = vst.msk [vmem:[#allocation3 + $0x168] sm:$0xff] %vm811, %v794
      %v829 = vrot.slane %v503, 1
      %v830 = vrot.slane %v504, 1
      %v831 = vsel %vm549, %v829, %v830
      %v832 = vrot.slane %v505, 1
      %v833 = vsel %vm549, %v830, %v832
      %850 = vst.msk [vmem:[#allocation3 + $0x8] sm:$0xff] %vm393, %v557
      %851 = vst.msk [vmem:[#allocation3 + $0x20] sm:$0xff] %vm393, %v559
      %852 = vst.msk [vmem:[#allocation3 + $0x38] sm:$0xff] %vm393, %v562
      %853 = vst.msk [vmem:[#allocation3 + $0x50] sm:$0xff] %vm393, %v564
      %854 = vst.msk [vmem:[#allocation3 + $0x68] sm:$0xff] %vm393, %v567
      %855 = vst.msk [vmem:[#allocation3 + $0x80] sm:$0xff] %vm393, %v569
      %856 = vst.msk [vmem:[#allocation3 + $0x98] sm:$0xff] %vm393, %v572
      %857 = vst.msk [vmem:[#allocation3 + $0xb0] sm:$0xff] %vm393, %v574
      %858 = vst.msk [vmem:[#allocation3 + $0xc8] sm:$0xff] %vm393, %v577
      %859 = vst.msk [vmem:[#allocation3 + $0xe0] sm:$0xff] %vm393, %v579
      %860 = vst.msk [vmem:[#allocation3 + $0xf8] sm:$0xff] %vm393, %v582
      %861 = vst.msk [vmem:[#allocation3 + $0x110] sm:$0xff] %vm393, %v584
      %862 = vst.msk [vmem:[#allocation3 + $0x128] sm:$0xff] %vm393, %v587
      %863 = vst.msk [vmem:[#allocation3 + $0x140] sm:$0xff] %vm393, %v589
      %864 = vst.msk [vmem:[#allocation3 + $0x158] sm:$0xff] %vm393, %v831
      %865 = vst.msk [vmem:[#allocation3 + $0x170] sm:$0xff] %vm393, %v833
      %v866 = vrot.slane %v503, 2
      %v867 = vrot.slane %v504, 2
      %v868 = vsel %vm655, %v866, %v867
      %v869 = vrot.slane %v505, 2
      %v870 = vsel %vm655, %v867, %v869
      %871 = vrot.lane.b32.xlu0 %v663, 32
      %v872 = vpop.permute.xlu0 %871
      %873 = vrot.lane.b32.xlu0 %v665, 32
      %v874 = vpop.permute.xlu0 %873
      %875 = vrot.lane.b32.xlu0 %v668, 32
      %v876 = vpop.permute.xlu0 %875
      %877 = vrot.lane.b32.xlu0 %v670, 32
      %v878 = vpop.permute.xlu0 %877
      %879 = vrot.lane.b32.xlu0 %v673, 32
      %v880 = vpop.permute.xlu0 %879
      %881 = vrot.lane.b32.xlu0 %v675, 32
      %v882 = vpop.permute.xlu0 %881
      %883 = vrot.lane.b32.xlu0 %v678, 32
      %v884 = vpop.permute.xlu0 %883
      %885 = vrot.lane.b32.xlu0 %v680, 32
      %v886 = vpop.permute.xlu0 %885
      %887 = vrot.lane.b32.xlu0 %v683, 32
      %v888 = vpop.permute.xlu0 %887
      %889 = vrot.lane.b32.xlu0 %v685, 32
      %v890 = vpop.permute.xlu0 %889
      %891 = vrot.lane.b32.xlu0 %v688, 32
      %v892 = vpop.permute.xlu0 %891
      %893 = vrot.lane.b32.xlu0 %v690, 32
      %v894 = vpop.permute.xlu0 %893
      %895 = vrot.lane.b32.xlu0 %v693, 32
      %v896 = vpop.permute.xlu0 %895
      %897 = vrot.lane.b32.xlu0 %v695, 32
      %v898 = vpop.permute.xlu0 %897
      %899 = vrot.lane.b32.xlu0 %v868, 32
      %v900 = vpop.permute.xlu0 %899
      %901 = vrot.lane.b32.xlu0 %v870, 32
      %v902 = vpop.permute.xlu0 %901
      %919 = vst.msk [vmem:[#allocation3 + $0x8] sm:$0xff] %vm638, %v872
      %920 = vst.msk [vmem:[#allocation3 + $0x20] sm:$0xff] %vm638, %v874
      %921 = vst.msk [vmem:[#allocation3 + $0x38] sm:$0xff] %vm638, %v876
      %922 = vst.msk [vmem:[#allocation3 + $0x50] sm:$0xff] %vm638, %v878
      %923 = vst.msk [vmem:[#allocation3 + $0x68] sm:$0xff] %vm638, %v880
      %924 = vst.msk [vmem:[#allocation3 + $0x80] sm:$0xff] %vm638, %v882
      %925 = vst.msk [vmem:[#allocation3 + $0x98] sm:$0xff] %vm638, %v884
      %926 = vst.msk [vmem:[#allocation3 + $0xb0] sm:$0xff] %vm638, %v886
      %927 = vst.msk [vmem:[#allocation3 + $0xc8] sm:$0xff] %vm638, %v888
      %928 = vst.msk [vmem:[#allocation3 + $0xe0] sm:$0xff] %vm638, %v890
      %929 = vst.msk [vmem:[#allocation3 + $0xf8] sm:$0xff] %vm638, %v892
      %930 = vst.msk [vmem:[#allocation3 + $0x110] sm:$0xff] %vm638, %v894
      %931 = vst.msk [vmem:[#allocation3 + $0x128] sm:$0xff] %vm638, %v896
      %932 = vst.msk [vmem:[#allocation3 + $0x140] sm:$0xff] %vm638, %v898
      %933 = vst.msk [vmem:[#allocation3 + $0x158] sm:$0xff] %vm638, %v900
      %934 = vst.msk [vmem:[#allocation3 + $0x170] sm:$0xff] %vm638, %v902
      %937 = vrot.lane.b32.xlu0 %v485, 64
      %v938 = vpop.permute.xlu0 %937
      %939 = vrot.lane.b32.xlu0 %v486, 64
      %v940 = vpop.permute.xlu0 %939
      %941 = vrot.lane.b32.xlu0 %v488, 64
      %v942 = vpop.permute.xlu0 %941
      %943 = vrot.lane.b32.xlu0 %v489, 64
      %v944 = vpop.permute.xlu0 %943
      %945 = vrot.lane.b32.xlu0 %v491, 64
      %v946 = vpop.permute.xlu0 %945
      %947 = vrot.lane.b32.xlu0 %v492, 64
      %v948 = vpop.permute.xlu0 %947
      %949 = vrot.lane.b32.xlu0 %v494, 64
      %v950 = vpop.permute.xlu0 %949
      %951 = vrot.lane.b32.xlu0 %v495, 64
      %v952 = vpop.permute.xlu0 %951
      %953 = vrot.lane.b32.xlu0 %v497, 64
      %v954 = vpop.permute.xlu0 %953
      %955 = vrot.lane.b32.xlu0 %v498, 64
      %v956 = vpop.permute.xlu0 %955
      %957 = vrot.lane.b32.xlu0 %v500, 64
      %v958 = vpop.permute.xlu0 %957
      %959 = vrot.lane.b32.xlu0 %v501, 64
      %v960 = vpop.permute.xlu0 %959
      %961 = vrot.lane.b32.xlu0 %v503, 64
      %v962 = vpop.permute.xlu0 %961
      %963 = vrot.lane.b32.xlu0 %v504, 64
      %v964 = vpop.permute.xlu0 %963
      %965 = vrot.lane.b32.xlu0 %v506, 64
      %v966 = vpop.permute.xlu0 %965
      %967 = vrot.lane.b32.xlu0 %v507, 64
      %v968 = vpop.permute.xlu0 %967
      %985 = vst.msk [vmem:[#allocation3 + $0x8] sm:$0xff] %vm744, %v938
      %986 = vst.msk [vmem:[#allocation3 + $0x20] sm:$0xff] %vm744, %v940
      %987 = vst.msk [vmem:[#allocation3 + $0x38] sm:$0xff] %vm744, %v942
      %988 = vst.msk [vmem:[#allocation3 + $0x50] sm:$0xff] %vm744, %v944
      %989 = vst.msk [vmem:[#allocation3 + $0x68] sm:$0xff] %vm744, %v946
      %990 = vst.msk [vmem:[#allocation3 + $0x80] sm:$0xff] %vm744, %v948
      %991 = vst.msk [vmem:[#allocation3 + $0x98] sm:$0xff] %vm744, %v950
      %992 = vst.msk [vmem:[#allocation3 + $0xb0] sm:$0xff] %vm744, %v952
      %993 = vst.msk [vmem:[#allocation3 + $0xc8] sm:$0xff] %vm744, %v954
      %994 = vst.msk [vmem:[#allocation3 + $0xe0] sm:$0xff] %vm744, %v956
      %995 = vst.msk [vmem:[#allocation3 + $0xf8] sm:$0xff] %vm744, %v958
      %996 = vst.msk [vmem:[#allocation3 + $0x110] sm:$0xff] %vm744, %v960
      %997 = vst.msk [vmem:[#allocation3 + $0x128] sm:$0xff] %vm744, %v962
      %998 = vst.msk [vmem:[#allocation3 + $0x140] sm:$0xff] %vm744, %v964
      %999 = vst.msk [vmem:[#allocation3 + $0x158] sm:$0xff] %vm744, %v966
      %1000 = vst.msk [vmem:[#allocation3 + $0x170] sm:$0xff] %vm744, %v968
      %v1002 = vrot.slane %v506, 1
      %v1003 = vrot.slane %v507, 1
      %v1004 = vsel %vm549, %v1002, %v1003
      %v1005 = vrot.slane %v508, 1
      %v1006 = vsel %vm549, %v1003, %v1005
      %1007 = vrot.lane.b32.xlu0 %v562, 96
      %v1008 = vpop.permute.xlu0 %1007
      %1009 = vrot.lane.b32.xlu0 %v564, 96
      %v1010 = vpop.permute.xlu0 %1009
      %1011 = vrot.lane.b32.xlu0 %v567, 96
      %v1012 = vpop.permute.xlu0 %1011
      %1013 = vrot.lane.b32.xlu0 %v569, 96
      %v1014 = vpop.permute.xlu0 %1013
      %1015 = vrot.lane.b32.xlu0 %v572, 96
      %v1016 = vpop.permute.xlu0 %1015
      %1017 = vrot.lane.b32.xlu0 %v574, 96
      %v1018 = vpop.permute.xlu0 %1017
      %1019 = vrot.lane.b32.xlu0 %v577, 96
      %v1020 = vpop.permute.xlu0 %1019
      %1021 = vrot.lane.b32.xlu0 %v579, 96
      %v1022 = vpop.permute.xlu0 %1021
      %1023 = vrot.lane.b32.xlu0 %v582, 96
      %v1024 = vpop.permute.xlu0 %1023
      %1025 = vrot.lane.b32.xlu0 %v584, 96
      %v1026 = vpop.permute.xlu0 %1025
      %1027 = vrot.lane.b32.xlu0 %v587, 96
      %v1028 = vpop.permute.xlu0 %1027
      %1029 = vrot.lane.b32.xlu0 %v589, 96
      %v1030 = vpop.permute.xlu0 %1029
      %1031 = vrot.lane.b32.xlu0 %v831, 96
      %v1032 = vpop.permute.xlu0 %1031
      %1033 = vrot.lane.b32.xlu0 %v833, 96
      %v1034 = vpop.permute.xlu0 %1033
      %1035 = vrot.lane.b32.xlu0 %v1004, 96
      %v1036 = vpop.permute.xlu0 %1035
      %1037 = vrot.lane.b32.xlu0 %v1006, 96
      %v1038 = vpop.permute.xlu0 %1037
      %1055 = vst.msk [vmem:[#allocation3 + $0x8] sm:$0xff] %vm811, %v1008
      %1056 = vst.msk [vmem:[#allocation3 + $0x20] sm:$0xff] %vm811, %v1010
      %1057 = vst.msk [vmem:[#allocation3 + $0x38] sm:$0xff] %vm811, %v1012
      %1058 = vst.msk [vmem:[#allocation3 + $0x50] sm:$0xff] %vm811, %v1014
      %1059 = vst.msk [vmem:[#allocation3 + $0x68] sm:$0xff] %vm811, %v1016
      %1060 = vst.msk [vmem:[#allocation3 + $0x80] sm:$0xff] %vm811, %v1018
      %1061 = vst.msk [vmem:[#allocation3 + $0x98] sm:$0xff] %vm811, %v1020
      %1062 = vst.msk [vmem:[#allocation3 + $0xb0] sm:$0xff] %vm811, %v1022
      %1063 = vst.msk [vmem:[#allocation3 + $0xc8] sm:$0xff] %vm811, %v1024
      %1064 = vst.msk [vmem:[#allocation3 + $0xe0] sm:$0xff] %vm811, %v1026
      %1065 = vst.msk [vmem:[#allocation3 + $0xf8] sm:$0xff] %vm811, %v1028
      %1066 = vst.msk [vmem:[#allocation3 + $0x110] sm:$0xff] %vm811, %v1030
      %1067 = vst.msk [vmem:[#allocation3 + $0x128] sm:$0xff] %vm811, %v1032
      %1068 = vst.msk [vmem:[#allocation3 + $0x140] sm:$0xff] %vm811, %v1034
      %1069 = vst.msk [vmem:[#allocation3 + $0x158] sm:$0xff] %vm811, %v1036
      %1070 = vst.msk [vmem:[#allocation3 + $0x170] sm:$0xff] %vm811, %v1038
      %v1071 = vrot.slane %v506, 2
      %v1072 = vrot.slane %v507, 2
      %v1073 = vsel %vm655, %v1071, %v1072
      %v1074 = vrot.slane %v508, 2
      %v1075 = vsel %vm655, %v1072, %v1074
      %1092 = vst.msk [vmem:[#allocation3 + $0x10] sm:$0xff] %vm393, %v668
      %1093 = vst.msk [vmem:[#allocation3 + $0x28] sm:$0xff] %vm393, %v670
      %1094 = vst.msk [vmem:[#allocation3 + $0x40] sm:$0xff] %vm393, %v673
      %1095 = vst.msk [vmem:[#allocation3 + $0x58] sm:$0xff] %vm393, %v675
      %1096 = vst.msk [vmem:[#allocation3 + $0x70] sm:$0xff] %vm393, %v678
      %1097 = vst.msk [vmem:[#allocation3 + $0x88] sm:$0xff] %vm393, %v680
      %1098 = vst.msk [vmem:[#allocation3 + $0xa0] sm:$0xff] %vm393, %v683
      %1099 = vst.msk [vmem:[#allocation3 + $0xb8] sm:$0xff] %vm393, %v685
      %1100 = vst.msk [vmem:[#allocation3 + $0xd0] sm:$0xff] %vm393, %v688
      %1101 = vst.msk [vmem:[#allocation3 + $0xe8] sm:$0xff] %vm393, %v690
      %1102 = vst.msk [vmem:[#allocation3 + $0x100] sm:$0xff] %vm393, %v693
      %1103 = vst.msk [vmem:[#allocation3 + $0x118] sm:$0xff] %vm393, %v695
      %1104 = vst.msk [vmem:[#allocation3 + $0x130] sm:$0xff] %vm393, %v868
      %1105 = vst.msk [vmem:[#allocation3 + $0x148] sm:$0xff] %vm393, %v870
      %1106 = vst.msk [vmem:[#allocation3 + $0x160] sm:$0xff] %vm393, %v1073
      %1107 = vst.msk [vmem:[#allocation3 + $0x178] sm:$0xff] %vm393, %v1075
      %v1108 = vld [vmem:[#allocation3] sm:$0xff]
      %v1109 = vld [vmem:[#allocation3 + $0x8] sm:$0xff]
      %v1110 = vld [vmem:[#allocation3 + $0x10] sm:$0xff]
      %v1111 = vld [vmem:[#allocation3 + $0x18] sm:$0xff]
      %v1112 = vld [vmem:[#allocation3 + $0x20] sm:$0xff]
      %v1113 = vld [vmem:[#allocation3 + $0x28] sm:$0xff]
      %v1114 = vld [vmem:[#allocation3 + $0x30] sm:$0xff]
      %v1115 = vld [vmem:[#allocation3 + $0x38] sm:$0xff]
      %v1116 = vld [vmem:[#allocation3 + $0x40] sm:$0xff]
      %v1117 = vld [vmem:[#allocation3 + $0x48] sm:$0xff]
      %v1118 = vld [vmem:[#allocation3 + $0x50] sm:$0xff]
      %v1119 = vld [vmem:[#allocation3 + $0x58] sm:$0xff]
      %v1120 = vld [vmem:[#allocation3 + $0x60] sm:$0xff]
      %v1121 = vld [vmem:[#allocation3 + $0x68] sm:$0xff]
      %v1122 = vld [vmem:[#allocation3 + $0x70] sm:$0xff]
      %v1123 = vld [vmem:[#allocation3 + $0x78] sm:$0xff]
      %v1124 = vld [vmem:[#allocation3 + $0x80] sm:$0xff]
      %v1125 = vld [vmem:[#allocation3 + $0x88] sm:$0xff]
      %v1126 = vld [vmem:[#allocation3 + $0x90] sm:$0xff]
      %v1127 = vld [vmem:[#allocation3 + $0x98] sm:$0xff]
      %v1128 = vld [vmem:[#allocation3 + $0xa0] sm:$0xff]
      %v1129 = vld [vmem:[#allocation3 + $0xa8] sm:$0xff]
      %v1130 = vld [vmem:[#allocation3 + $0xb0] sm:$0xff]
      %v1131 = vld [vmem:[#allocation3 + $0xb8] sm:$0xff]
      %v1132 = vld [vmem:[#allocation3 + $0xc0] sm:$0xff]
      %v1133 = vld [vmem:[#allocation3 + $0xc8] sm:$0xff]
      %v1134 = vld [vmem:[#allocation3 + $0xd0] sm:$0xff]
      %v1135 = vld [vmem:[#allocation3 + $0xd8] sm:$0xff]
      %v1136 = vld [vmem:[#allocation3 + $0xe0] sm:$0xff]
      %v1137 = vld [vmem:[#allocation3 + $0xe8] sm:$0xff]
      %v1138 = vld [vmem:[#allocation3 + $0xf0] sm:$0xff]
      %v1139 = vld [vmem:[#allocation3 + $0xf8] sm:$0xff]
      %v1140 = vld [vmem:[#allocation3 + $0x100] sm:$0xff]
      %v1141 = vld [vmem:[#allocation3 + $0x108] sm:$0xff]
      %v1142 = vld [vmem:[#allocation3 + $0x110] sm:$0xff]
      %v1143 = vld [vmem:[#allocation3 + $0x118] sm:$0xff]
      %v1144 = vld [vmem:[#allocation3 + $0x120] sm:$0xff]
      %v1145 = vld [vmem:[#allocation3 + $0x128] sm:$0xff]
      %v1146 = vld [vmem:[#allocation3 + $0x130] sm:$0xff]
      %v1147 = vld [vmem:[#allocation3 + $0x138] sm:$0xff]
      %v1148 = vld [vmem:[#allocation3 + $0x140] sm:$0xff]
      %v1149 = vld [vmem:[#allocation3 + $0x148] sm:$0xff]
      %v1150 = vld [vmem:[#allocation3 + $0x150] sm:$0xff]
      %v1151 = vld [vmem:[#allocation3 + $0x158] sm:$0xff]
      %v1152 = vld [vmem:[#allocation3 + $0x160] sm:$0xff]
      %v1153 = vld [vmem:[#allocation3 + $0x168] sm:$0xff]
      %v1154 = vld [vmem:[#allocation3 + $0x170] sm:$0xff]
      %v1155 = vld [vmem:[#allocation3 + $0x178] sm:$0xff]
      %v1156 = vld [vmem:[%s3] sm:$0xff]
      %v1157 = vld [vmem:[%s3 + $0x8] sm:$0xff]
      %v1158 = vld [vmem:[%s3 + $0x10] sm:$0xff]
      %v1159 = vld [vmem:[%s3 + $0x18] sm:$0xff]
      %v1160 = vld [vmem:[%s3 + $0x20] sm:$0xff]
      %v1161 = vld [vmem:[%s3 + $0x28] sm:$0xff]
      %v1162 = vld [vmem:[%s3 + $0x30] sm:$0xff]
      %v1163 = vld [vmem:[%s3 + $0x38] sm:$0xff]
      %v1164 = vld [vmem:[%s3 + $0x40] sm:$0xff]
      %v1165 = vld [vmem:[%s3 + $0x48] sm:$0xff]
      %v1166 = vld [vmem:[%s3 + $0x50] sm:$0xff]
      %v1167 = vld [vmem:[%s3 + $0x58] sm:$0xff]
      %v1168 = vld [vmem:[%s3 + $0x60] sm:$0xff]
      %v1169 = vld [vmem:[%s3 + $0x68] sm:$0xff]
      %v1170 = vld [vmem:[%s3 + $0x70] sm:$0xff]
      %v1171 = vld [vmem:[%s3 + $0x78] sm:$0xff]
      %v1172 = vld [vmem:[%s3 + $0x80] sm:$0xff]
      %v1173 = vld [vmem:[%s3 + $0x88] sm:$0xff]
      %v1174 = vld [vmem:[%s3 + $0x90] sm:$0xff]
      %v1175 = vld [vmem:[%s3 + $0x98] sm:$0xff]
      %v1176 = vld [vmem:[%s3 + $0xa0] sm:$0xff]
      %v1177 = vld [vmem:[%s3 + $0xa8] sm:$0xff]
      %v1178 = vld [vmem:[%s3 + $0xb0] sm:$0xff]
      %v1179 = vld [vmem:[%s3 + $0xb8] sm:$0xff]
      %v1180 = vld [vmem:[%s3 + $0xc0] sm:$0xff]
      %v1181 = vld [vmem:[%s3 + $0xc8] sm:$0xff]
      %v1182 = vld [vmem:[%s3 + $0xd0] sm:$0xff]
      %v1183 = vld [vmem:[%s3 + $0xd8] sm:$0xff]
      %v1184 = vld [vmem:[%s3 + $0xe0] sm:$0xff]
      %v1185 = vld [vmem:[%s3 + $0xe8] sm:$0xff]
      %v1186 = vld [vmem:[%s3 + $0xf0] sm:$0xff]
      %v1187 = vld [vmem:[%s3 + $0xf8] sm:$0xff]
      %v1188 = vld [vmem:[%s3 + $0x100] sm:$0xff]
      %v1189 = vld [vmem:[%s3 + $0x108] sm:$0xff]
      %v1190 = vld [vmem:[%s3 + $0x110] sm:$0xff]
      %v1191 = vld [vmem:[%s3 + $0x118] sm:$0xff]
      %v1192 = vld [vmem:[%s4] sm:$0x1]
      %v1194 = vperm.slane %v1192, 0
      %v1197 = vsel %vm393, %v1110, 0
      %v1200 = vsel %vm393, %v1113, 0
      %v1203 = vsel %vm393, %v1116, 0
      %v1206 = vsel %vm393, %v1119, 0
      %v1209 = vsel %vm393, %v1122, 0
      %v1212 = vsel %vm393, %v1125, 0
      %v1215 = vsel %vm393, %v1128, 0
      %v1218 = vsel %vm393, %v1131, 0
      %v1221 = vsel %vm393, %v1134, 0
      %v1224 = vsel %vm393, %v1137, 0
      %v1227 = vsel %vm393, %v1140, 0
      %v1230 = vsel %vm393, %v1143, 0
      %v1233 = vsel %vm393, %v1146, 0
      %v1236 = vsel %vm393, %v1149, 0
      %v1239 = vsel %vm393, %v1152, 0
      %v1242 = vsel %vm393, %v1155, 0
      %1244 = vmatpush.msra.mxu0 %v1171
      %1245 = vmatpush.msra.mxu0 %v1170
      %1246 = vmatpush.msra.mxu0 %v1169
      %1247 = vmatpush.msra.mxu0 %v1168
      %1248 = vmatpush.msra.mxu0 %v1167
      %1249 = vmatpush.msra.mxu0 %v1166
      %1250 = vmatpush.msra.mxu0 %v1165
      %1251 = vmatpush.msra.mxu0 %v1164
      %1252 = vmatpush.msra.mxu0 %v1163
      %1253 = vmatpush.msra.mxu0 %v1162
      %1254 = vmatpush.msra.mxu0 %v1161
      %1255 = vmatpush.msra.mxu0 %v1160
      %1256 = vmatpush.msra.mxu0 %v1159
      %1257 = vmatpush.msra.mxu0 %v1158
      %1258 = vmatpush.msra.mxu0 %v1157
      %1259 = vmatpush.msra.mxu0 %v1156
      %1260 = vmatmul.f32.gmra.mxu0 %v1108
      %v1261 = vpop.f32.mrf.mxu0
      %v1262 = vadd.f32 %v1194, %v1261
      %1263 = vmatmul.f32.gmra.mxu0 %v1111
      %v1264 = vpop.f32.mrf.mxu0
      %v1265 = vadd.f32 %v1194, %v1264
      %1266 = vmatmul.f32.gmra.mxu0 %v1114
      %v1267 = vpop.f32.mrf.mxu0
      %v1268 = vadd.f32 %v1194, %v1267
      %1269 = vmatmul.f32.gmra.mxu0 %v1117
      %v1270 = vpop.f32.mrf.mxu0
      %v1271 = vadd.f32 %v1194, %v1270
      %1272 = vmatmul.f32.gmra.mxu0 %v1120
      %v1273 = vpop.f32.mrf.mxu0
      %v1274 = vadd.f32 %v1194, %v1273
      %1275 = vmatmul.f32.gmra.mxu0 %v1123
      %v1276 = vpop.f32.mrf.mxu0
      %v1277 = vadd.f32 %v1194, %v1276
      %1278 = vmatmul.f32.gmra.mxu0 %v1126
      %v1279 = vpop.f32.mrf.mxu0
      %v1280 = vadd.f32 %v1194, %v1279
      %1281 = vmatmul.f32.gmra.mxu0 %v1129
      %v1282 = vpop.f32.mrf.mxu0
      %v1283 = vadd.f32 %v1194, %v1282
      %1284 = vmatmul.f32.gmra.mxu0 %v1132
      %v1285 = vpop.f32.mrf.mxu0
      %v1286 = vadd.f32 %v1194, %v1285
      %1287 = vmatmul.f32.gmra.mxu0 %v1135
      %v1288 = vpop.f32.mrf.mxu0
      %v1289 = vadd.f32 %v1194, %v1288
      %1290 = vmatmul.f32.gmra.mxu0 %v1138
      %v1291 = vpop.f32.mrf.mxu0
      %v1292 = vadd.f32 %v1194, %v1291
      %1293 = vmatmul.f32.gmra.mxu0 %v1141
      %v1294 = vpop.f32.mrf.mxu0
      %v1295 = vadd.f32 %v1194, %v1294
      %1296 = vmatmul.f32.gmra.mxu0 %v1144
      %v1297 = vpop.f32.mrf.mxu0
      %v1298 = vadd.f32 %v1194, %v1297
      %1299 = vmatmul.f32.gmra.mxu0 %v1147
      %v1300 = vpop.f32.mrf.mxu0
      %v1301 = vadd.f32 %v1194, %v1300
      %1302 = vmatmul.f32.gmra.mxu0 %v1150
      %v1303 = vpop.f32.mrf.mxu0
      %v1304 = vadd.f32 %v1194, %v1303
      %1305 = vmatmul.f32.gmra.mxu0 %v1153
      %v1306 = vpop.f32.mrf.mxu0
      %v1307 = vadd.f32 %v1194, %v1306
      %1308 = vdwg.mxu0
      %1309 = vmatpush.msra.mxu0 %v1187
      %1310 = vmatpush.msra.mxu0 %v1186
      %1311 = vmatpush.msra.mxu0 %v1185
      %1312 = vmatpush.msra.mxu0 %v1184
      %1313 = vmatpush.msra.mxu0 %v1183
      %1314 = vmatpush.msra.mxu0 %v1182
      %1315 = vmatpush.msra.mxu0 %v1181
      %1316 = vmatpush.msra.mxu0 %v1180
      %1317 = vmatpush.msra.mxu0 %v1179
      %1318 = vmatpush.msra.mxu0 %v1178
      %1319 = vmatpush.msra.mxu0 %v1177
      %1320 = vmatpush.msra.mxu0 %v1176
      %1321 = vmatpush.msra.mxu0 %v1175
      %1322 = vmatpush.msra.mxu0 %v1174
      %1323 = vmatpush.msra.mxu0 %v1173
      %1324 = vmatpush.msra.mxu0 %v1172
      %1325 = vmatmul.f32.gmra.mxu0 %v1109
      %v1326 = vpop.f32.mrf.mxu0
      %v1327 = vadd.f32 %v1262, %v1326
      %1328 = vmatmul.f32.gmra.mxu0 %v1112
      %v1329 = vpop.f32.mrf.mxu0
      %v1330 = vadd.f32 %v1265, %v1329
      %1331 = vmatmul.f32.gmra.mxu0 %v1115
      %v1332 = vpop.f32.mrf.mxu0
      %v1333 = vadd.f32 %v1268, %v1332
      %1334 = vmatmul.f32.gmra.mxu0 %v1118
      %v1335 = vpop.f32.mrf.mxu0
      %v1336 = vadd.f32 %v1271, %v1335
      %1337 = vmatmul.f32.gmra.mxu0 %v1121
      %v1338 = vpop.f32.mrf.mxu0
      %v1339 = vadd.f32 %v1274, %v1338
      %1340 = vmatmul.f32.gmra.mxu0 %v1124
      %v1341 = vpop.f32.mrf.mxu0
      %v1342 = vadd.f32 %v1277, %v1341
      %1343 = vmatmul.f32.gmra.mxu0 %v1127
      %v1344 = vpop.f32.mrf.mxu0
      %v1345 = vadd.f32 %v1280, %v1344
      %1346 = vmatmul.f32.gmra.mxu0 %v1130
      %v1347 = vpop.f32.mrf.mxu0
      %v1348 = vadd.f32 %v1283, %v1347
      %1349 = vmatmul.f32.gmra.mxu0 %v1133
      %v1350 = vpop.f32.mrf.mxu0
      %v1351 = vadd.f32 %v1286, %v1350
      %1352 = vmatmul.f32.gmra.mxu0 %v1136
      %v1353 = vpop.f32.mrf.mxu0
      %v1354 = vadd.f32 %v1289, %v1353
      %1355 = vmatmul.f32.gmra.mxu0 %v1139
      %v1356 = vpop.f32.mrf.mxu0
      %v1357 = vadd.f32 %v1292, %v1356
      %1358 = vmatmul.f32.gmra.mxu0 %v1142
      %v1359 = vpop.f32.mrf.mxu0
      %v1360 = vadd.f32 %v1295, %v1359
      %1361 = vmatmul.f32.gmra.mxu0 %v1145
      %v1362 = vpop.f32.mrf.mxu0
      %v1363 = vadd.f32 %v1298, %v1362
      %1364 = vmatmul.f32.gmra.mxu0 %v1148
      %v1365 = vpop.f32.mrf.mxu0
      %v1366 = vadd.f32 %v1301, %v1365
      %1367 = vmatmul.f32.gmra.mxu0 %v1151
      %v1368 = vpop.f32.mrf.mxu0
      %v1369 = vadd.f32 %v1304, %v1368
      %1370 = vmatmul.f32.gmra.mxu0 %v1154
      %v1371 = vpop.f32.mrf.mxu0
      %v1372 = vadd.f32 %v1307, %v1371
      %1373 = vdwg.mxu0
      %1374 = vmatpush.msra.mxu0 0.0
      %1375 = vmatpush.msra.mxu0 0.0
      %1376 = vmatpush.msra.mxu0 0.0
      %1377 = vmatpush.msra.mxu0 0.0
      %1378 = vmatpush.msra.mxu0 0.0
      %1379 = vmatpush.msra.mxu0 0.0
      %1380 = vmatpush.msra.mxu0 0.0
      %1381 = vmatpush.msra.mxu0 0.0
      %1382 = vmatpush.msra.mxu0 0.0
      %1383 = vmatpush.msra.mxu0 0.0
      %1384 = vmatpush.msra.mxu0 0.0
      %1385 = vmatpush.msra.mxu0 0.0
      %1386 = vmatpush.msra.mxu0 %v1191
      %1387 = vmatpush.msra.mxu0 %v1190
      %1388 = vmatpush.msra.mxu0 %v1189
      %1389 = vmatpush.msra.mxu0 %v1188
      %1390 = vmatmul.f32.gmra.mxu0 %v1197
      %v1391 = vpop.f32.mrf.mxu0
      %v1392 = vadd.f32 %v1327, %v1391
      %1393 = vmatmul.f32.gmra.mxu0 %v1200
      %v1394 = vpop.f32.mrf.mxu0
      %v1395 = vadd.f32 %v1330, %v1394
      %1396 = vmatmul.f32.gmra.mxu0 %v1203
      %v1397 = vpop.f32.mrf.mxu0
      %v1398 = vadd.f32 %v1333, %v1397
      %1399 = vmatmul.f32.gmra.mxu0 %v1206
      %v1400 = vpop.f32.mrf.mxu0
      %v1401 = vadd.f32 %v1336, %v1400
      %1402 = vmatmul.f32.gmra.mxu0 %v1209
      %v1403 = vpop.f32.mrf.mxu0
      %v1404 = vadd.f32 %v1339, %v1403
      %1405 = vmatmul.f32.gmra.mxu0 %v1212
      %v1406 = vpop.f32.mrf.mxu0
      %v1407 = vadd.f32 %v1342, %v1406
      %1408 = vmatmul.f32.gmra.mxu0 %v1215
      %v1409 = vpop.f32.mrf.mxu0
      %v1410 = vadd.f32 %v1345, %v1409
      %1411 = vmatmul.f32.gmra.mxu0 %v1218
      %v1412 = vpop.f32.mrf.mxu0
      %v1413 = vadd.f32 %v1348, %v1412
      %1414 = vmatmul.f32.gmra.mxu0 %v1221
      %v1415 = vpop.f32.mrf.mxu0
      %v1416 = vadd.f32 %v1351, %v1415
      %1417 = vmatmul.f32.gmra.mxu0 %v1224
      %v1418 = vpop.f32.mrf.mxu0
      %v1419 = vadd.f32 %v1354, %v1418
      %1420 = vmatmul.f32.gmra.mxu0 %v1227
      %v1421 = vpop.f32.mrf.mxu0
      %v1422 = vadd.f32 %v1357, %v1421
      %1423 = vmatmul.f32.gmra.mxu0 %v1230
      %v1424 = vpop.f32.mrf.mxu0
      %v1425 = vadd.f32 %v1360, %v1424
      %1426 = vmatmul.f32.gmra.mxu0 %v1233
      %v1427 = vpop.f32.mrf.mxu0
      %v1428 = vadd.f32 %v1363, %v1427
      %1429 = vmatmul.f32.gmra.mxu0 %v1236
      %v1430 = vpop.f32.mrf.mxu0
      %v1431 = vadd.f32 %v1366, %v1430
      %1432 = vmatmul.f32.gmra.mxu0 %v1239
      %v1433 = vpop.f32.mrf.mxu0
      %v1434 = vadd.f32 %v1369, %v1433
      %1435 = vmatmul.f32.gmra.mxu0 %v1242
      %v1436 = vpop.f32.mrf.mxu0
      %v1437 = vadd.f32 %v1372, %v1436
      %1438 = vdwg.mxu0
      %v1439 = vmax.f32 %v1392, 0.0
      %v1440 = vmax.f32 %v1395, 0.0
      %v1441 = vmax.f32 %v1398, 0.0
      %v1442 = vmax.f32 %v1401, 0.0
      %v1443 = vmax.f32 %v1404, 0.0
      %v1444 = vmax.f32 %v1407, 0.0
      %v1445 = vmax.f32 %v1410, 0.0
      %v1446 = vmax.f32 %v1413, 0.0
      %v1447 = vmax.f32 %v1416, 0.0
      %v1448 = vmax.f32 %v1419, 0.0
      %v1449 = vmax.f32 %v1422, 0.0
      %v1450 = vmax.f32 %v1425, 0.0
      %v1451 = vmax.f32 %v1428, 0.0
      %v1452 = vmax.f32 %v1431, 0.0
      %v1453 = vmax.f32 %v1434, 0.0
      %v1454 = vmax.f32 %v1437, 0.0
      %1455 = vst.msk [vmem:[%s391] sm:$0xff] %vm393, %v1439
      %1456 = vst.msk [vmem:[%s391 + $0x8] sm:$0xff] %vm393, %v1440
      %1457 = vst.msk [vmem:[%s391 + $0x10] sm:$0xff] %vm393, %v1441
      %1458 = vst.msk [vmem:[%s391 + $0x18] sm:$0xff] %vm393, %v1442
      %1459 = vst.msk [vmem:[%s391 + $0x20] sm:$0xff] %vm393, %v1443
      %1460 = vst.msk [vmem:[%s391 + $0x28] sm:$0xff] %vm393, %v1444
      %1461 = vst.msk [vmem:[%s391 + $0x30] sm:$0xff] %vm393, %v1445
      %1462 = vst.msk [vmem:[%s391 + $0x38] sm:$0xff] %vm393, %v1446
      %1463 = vst.msk [vmem:[%s391 + $0x40] sm:$0xff] %vm393, %v1447
      %1464 = vst.msk [vmem:[%s391 + $0x48] sm:$0xff] %vm393, %v1448
      %1465 = vst.msk [vmem:[%s391 + $0x50] sm:$0xff] %vm393, %v1449
      %1466 = vst.msk [vmem:[%s391 + $0x58] sm:$0xff] %vm393, %v1450
      %1467 = vst.msk [vmem:[%s391 + $0x60] sm:$0xff] %vm393, %v1451
      %1468 = vst.msk [vmem:[%s391 + $0x68] sm:$0xff] %vm393, %v1452
      %1469 = vst.msk [vmem:[%s391 + $0x70] sm:$0xff] %vm393, %v1453
      %1470 = vst.msk [vmem:[%s391 + $0x78] sm:$0xff] %vm393, %v1454
      %s1471 = smul.u32 8, %s21
      %p1472 = scmp.lt.s32.totalorder %s20, 1
      %s1473 = scalar_select %p1472, %s20, 1
      %p1474 = scmp.lt.s32.totalorder %s1471, 15
      %s1475 = scalar_select %p1474, %s1471, 15
      %s1476 = smul.addr %s1475, 2
      %s1477 = smul.addr %s1473, 32
      %s1478 = sadd.s32 %s1476, %s1477
      %s1479 = smul.addr %s1478, 8
      %s1480 = scalar_lea.vmem %s5, %s1479
      // Predicated region
      $region41: #{decoder_forward.8} parent=39 // pred_check
        %p1481 = pneg %p190
      $region42: #{decoder_forward.8} parent=39 // pred_check_branch
        %1483 = sbr.rel (%p1481) target = $region44
      $region43: #{decoder_forward.8} parent=39 // pred_region
        %s1484 = smul.u32 8, %s21
      $region44: #{decoder_forward.8} parent=39 // pred_fallthru
        _
    $region40: #{decoder_forward.8} parent=5 // pred_fallthru
      _
    %p1485 = scmp.le.s32.totalorder 2, %s11
    // Predicated region
    $region45: #{decoder_forward.8} parent=5 // pred_check
      %p1486 = pneg %p1485
    $region46: #{decoder_forward.8} parent=5 // pred_check_branch
      %1488 = sbr.rel (%p1486) target = $region48
    $region47: #{decoder_forward.8} parent=5 // pred_region
      %s1489 = ssub.s32 %s11, 2
      // Predicated region
      $region49: #{decoder_forward.8} parent=47 // pred_check
        %p1490 = pneg %p196
      $region50: #{decoder_forward.8} parent=47 // pred_check_branch
        %1492 = sbr.rel (%p1490) target = $region52
      $region51: #{decoder_forward.8} parent=47 // pred_region
        %s1493 = smul.u32 8, %s23
        %p1494 = scmp.lt.s32.totalorder %s22, 1
        %s1495 = scalar_select %p1494, %s22, 1
        %p1496 = scmp.lt.s32.totalorder %s1493, 15
        %s1497 = scalar_select %p1496, %s1493, 15
        %s1498 = smul.addr %s1497, 2
        %s1499 = smul.addr %s1495, 32
        %s1500 = sadd.s32 %s1498, %s1499
        %s1501 = smul.addr %s1500, 8
        %s1502 = scalar_lea.vmem %s5, %s1501
      $region52: #{decoder_forward.8} parent=47 // pred_fallthru
        _
    $region48: #{decoder_forward.8} parent=5 // pred_fallthru
      _
  $region6: #{decoder_forward.8} parent=0 // loop_footer
    %s15 = sadd.s32 1, %s11
  $region7: #{decoder_forward.8} parent=0 // loop_footer_branch
    %10 = sbr.rel target = $region3
  $region8: #{decoder_forward.8} parent=0 // loop_exit
    _

// kernel: decoder_forward.9
$region0: #{decoder_forward.9}
  #allocation0 [shape = 'u32[]', space=smem, size = 0x4, offset = 0x4, fixed_abs, tag = 'smem constant byte address 0x4 - core index']
  #allocation1 [shape = 'u32[72,128]{1,0:T(1,128)}', space=vmem, size = 0x9000, scoped, tag = 'internal scratch']
  #allocation2 [shape = 'f32[10,18,32]{2,1,0:T(8,128)}', space=vmem, size = 0x1e000, scoped, tag = 'scratch operand']
  #allocation3 [shape = 'f32[128,288]{1,0:T(8,128)}', space=vmem, size = 0x30000, scoped, tag = 'scratch operand']
  %s0 = inlined_call_operand.vmem [shape: f32[2,16,16,32], index: 0, kind: input, shape index: {}, may-alias: {0,1,2}]
  %s1 = inlined_call_operand.vmem [shape: f32[2,16,16,32], index: 1, kind: input, shape index: {}, may-alias: {0,1,2}]
  %s2 = inlined_call_operand.vmem [shape: f32[2,16,16,32], index: 2, kind: input, shape index: {}, may-alias: {0,1,2}]
  %s3 = inlined_call_operand.vmem [shape: f32[288,32], index: 3, kind: input, shape index: {}]
  %s4 = inlined_call_operand.vmem [shape: f32[1,32], index: 4, kind: input, shape index: {}]
  %s5 = inlined_call_operand.vmem [shape: f32[2,16,16,32], index: 5, kind: input, shape index: {}]
  %s6 = inlined_call_operand.vmem [shape: f32[2,16,16,32], index: 6, kind: output, shape index: {}]
  %s7 = sld [smem:[#allocation0]]
  $region57: #{decoder_forward.9} parent=0
    _
  %s9 = ssub.s32 1, %s7
  %s10 = scalar_select 0, %s9, %s7
  loop: start=0, step=1, limit=6
  $region2: #{decoder_forward.9} parent=0 // loop_pre_header
    _
  $region3: #{decoder_forward.9} parent=0 // loop_header
    %s12 = sphi 0, %s16
    %p13 = scmp.ge.s32.totalorder %s12, 6
    %s19 = sphi 0, %s31
    %s20 = sphi 0, %s27
    %s21 = sphi 0, %s19
    %s22 = sphi 0, %s20
    %s23 = sphi 0, %s21
    %s24 = sphi 0, %s22
    %s36 = sphi 0, %s38
    %s39 = sphi 0, %s36
    %s40 = sphi 0, %s39
    %s56 = sphi 0, %s40
    %s72 = sphi 0, %s74
    %s75 = sphi 0, %s72
    %s76 = sphi 0, %s75
    %s92 = sphi 0, %s76
    %s108 = sphi 0, %s110
    %s111 = sphi 0, %s108
    %s112 = sphi 0, %s111
    %s128 = sphi 0, %s112
    %s132 = sphi 0, %s132
    %s134 = sphi 0, %s132
    %s135 = sphi 0, %s134
    %s149 = sphi 0, %s135
    %s153 = sphi 0, %s153
    %s155 = sphi 0, %s153
    %s156 = sphi 0, %s155
    %s170 = sphi 0, %s156
    %s178 = sphi 0, %s180
    %s181 = sphi 0, %s178
    %s182 = sphi 0, %s181
    %s198 = sphi 0, %s182
    %s206 = sphi 0, %s208
    %s209 = sphi 0, %s206
    %s210 = sphi 0, %s209
    %s226 = sphi 0, %s210
  $region4: #{decoder_forward.9} parent=0 // loop_header_branch
    %15 = sbr.rel (%p13) target = $region8
  $region5: #{decoder_forward.9} parent=0 // loop_body
    %s17 = ssub.s32 %s12, 1
    %s18 = ssub.s32 %s12, 2
    %s25 = sadd.s32 1, %s20
    %p26 = scmp.ge.s32.totalorder %s25, 2
    %s27 = scalar_select %p26, 0, %s25
    %s28 = sadd.s32 1, %s19
    %s29 = scalar_select %p26, %s28, %s19
    %p30 = scmp.ge.s32.totalorder %s29, 2
    %s31 = scalar_select %p30, 0, %s29
    %s32 = ssub.s32 %s19, %s31
    %s33 = ssub.s32 %s20, %s27
    %s34 = sor.u32 %s32, %s33
    %p35 = scmp.eq.s32.totalorder %s34, 0
    %s37 = sadd.s32 %s36, 1
    %s38 = scalar_select %p35, %s36, %s37
    %p41 = pneg %p35
    %p42 = scmp.eq.s32.totalorder %s12, 3
    %p43 = por %p41, %p42
    %p44 = scmp.ne.s32.totalorder %s36, %s39
    %p45 = scmp.eq.s32.totalorder %s12, 0
    %p46 = por %p44, %p45
    %p47 = scmp.ne.s32.totalorder %s36, %s39
    %p48 = scmp.eq.s32.totalorder %s17, 3
    %p49 = por %p47, %p48
    %p50 = scmp.ne.s32.totalorder %s39, %s40
    %p51 = scmp.eq.s32.totalorder %s17, 0
    %p52 = por %p50, %p51
    %p53 = scmp.ne.s32.totalorder %s39, %s40
    %p54 = scmp.eq.s32.totalorder %s18, 3
    %p55 = por %p53, %p54
    %p57 = scmp.ne.s32.totalorder %s40, %s56
    %p58 = scmp.eq.s32.totalorder %s18, 0
    %p59 = por %p57, %p58
    %s60 = smul.u32 %s20, 8
    %s61 = ssub.s32 %s60, 1
    %p62 = scmp.gt.s32.totalorder %s61, 0
    %s63 = scalar_select %p62, %s61, 0
    %s64 = smul.u32 %s27, 8
    %s65 = ssub.s32 %s64, 1
    %p66 = scmp.gt.s32.totalorder %s65, 0
    %s67 = scalar_select %p66, %s65, 0
    %s68 = ssub.s32 %s19, %s31
    %s69 = ssub.s32 %s63, %s67
    %s70 = sor.u32 %s68, %s69
    %p71 = scmp.eq.s32.totalorder %s70, 0
    %s73 = sadd.s32 %s72, 1
    %s74 = scalar_select %p71, %s72, %s73
    %p77 = pneg %p71
    %p78 = scmp.eq.s32.totalorder %s12, 3
    %p79 = por %p77, %p78
    %p80 = scmp.ne.s32.totalorder %s72, %s75
    %p81 = scmp.eq.s32.totalorder %s12, 0
    %p82 = por %p80, %p81
    %p83 = scmp.ne.s32.totalorder %s72, %s75
    %p84 = scmp.eq.s32.totalorder %s17, 3
    %p85 = por %p83, %p84
    %p86 = scmp.ne.s32.totalorder %s75, %s76
    %p87 = scmp.eq.s32.totalorder %s17, 0
    %p88 = por %p86, %p87
    %p89 = scmp.ne.s32.totalorder %s75, %s76
    %p90 = scmp.eq.s32.totalorder %s18, 3
    %p91 = por %p89, %p90
    %p93 = scmp.ne.s32.totalorder %s76, %s92
    %p94 = scmp.eq.s32.totalorder %s18, 0
    %p95 = por %p93, %p94
    %s96 = sadd.s32 %s20, 1
    %s97 = smul.u32 %s96, 8
    %p98 = scmp.lt.s32.totalorder %s97, 15
    %s99 = scalar_select %p98, %s97, 15
    %s100 = sadd.s32 %s27, 1
    %s101 = smul.u32 %s100, 8
    %p102 = scmp.lt.s32.totalorder %s101, 15
    %s103 = scalar_select %p102, %s101, 15
    %s104 = ssub.s32 %s19, %s31
    %s105 = ssub.s32 %s99, %s103
    %s106 = sor.u32 %s104, %s105
    %p107 = scmp.eq.s32.totalorder %s106, 0
    %s109 = sadd.s32 %s108, 1
    %s110 = scalar_select %p107, %s108, %s109
    %p113 = pneg %p107
    %p114 = scmp.eq.s32.totalorder %s12, 3
    %p115 = por %p113, %p114
    %p116 = scmp.ne.s32.totalorder %s108, %s111
    %p117 = scmp.eq.s32.totalorder %s12, 0
    %p118 = por %p116, %p117
    %p119 = scmp.ne.s32.totalorder %s108, %s111
    %p120 = scmp.eq.s32.totalorder %s17, 3
    %p121 = por %p119, %p120
    %p122 = scmp.ne.s32.totalorder %s111, %s112
    %p123 = scmp.eq.s32.totalorder %s17, 0
    %p124 = por %p122, %p123
    %p125 = scmp.ne.s32.totalorder %s111, %s112
    %p126 = scmp.eq.s32.totalorder %s18, 3
    %p127 = por %p125, %p126
    %p129 = scmp.ne.s32.totalorder %s112, %s128
    %p130 = scmp.eq.s32.totalorder %s18, 0
    %p131 = por %p129, %p130
    %s133 = sadd.s32 %s132, 1
    %p136 = scmp.eq.s32.totalorder %s12, 3
    %p137 = scmp.ne.s32.totalorder %s132, %s134
    %p138 = scmp.eq.s32.totalorder %s12, 0
    %p139 = por %p137, %p138
    %p140 = scmp.ne.s32.totalorder %s132, %s134
    %p141 = scmp.eq.s32.totalorder %s17, 3
    %p142 = por %p140, %p141
    %p143 = scmp.ne.s32.totalorder %s134, %s135
    %p144 = scmp.eq.s32.totalorder %s17, 0
    %p145 = por %p143, %p144
    %p146 = scmp.ne.s32.totalorder %s134, %s135
    %p147 = scmp.eq.s32.totalorder %s18, 3
    %p148 = por %p146, %p147
    %p150 = scmp.ne.s32.totalorder %s135, %s149
    %p151 = scmp.eq.s32.totalorder %s18, 0
    %p152 = por %p150, %p151
    %s154 = sadd.s32 %s153, 1
    %p157 = scmp.eq.s32.totalorder %s12, 3
    %p158 = scmp.ne.s32.totalorder %s153, %s155
    %p159 = scmp.eq.s32.totalorder %s12, 0
    %p160 = por %p158, %p159
    %p161 = scmp.ne.s32.totalorder %s153, %s155
    %p162 = scmp.eq.s32.totalorder %s17, 3
    %p163 = por %p161, %p162
    %p164 = scmp.ne.s32.totalorder %s155, %s156
    %p165 = scmp.eq.s32.totalorder %s17, 0
    %p166 = por %p164, %p165
    %p167 = scmp.ne.s32.totalorder %s155, %s156
    %p168 = scmp.eq.s32.totalorder %s18, 3
    %p169 = por %p167, %p168
    %p171 = scmp.ne.s32.totalorder %s156, %s170
    %p172 = scmp.eq.s32.totalorder %s18, 0
    %p173 = por %p171, %p172
    %s174 = ssub.s32 %s19, %s31
    %s175 = ssub.s32 %s20, %s27
    %s176 = sor.u32 %s174, %s175
    %p177 = scmp.eq.s32.totalorder %s176, 0
    %s179 = sadd.s32 %s178, 1
    %s180 = scalar_select %p177, %s178, %s179
    %p183 = pneg %p177
    %p184 = scmp.eq.s32.totalorder %s12, 3
    %p185 = por %p183, %p184
    %p186 = scmp.ne.s32.totalorder %s178, %s181
    %p187 = scmp.eq.s32.totalorder %s12, 0
    %p188 = por %p186, %p187
    %p189 = scmp.ne.s32.totalorder %s178, %s181
    %p190 = scmp.eq.s32.totalorder %s17, 3
    %p191 = por %p189, %p190
    %p192 = scmp.ne.s32.totalorder %s181, %s182
    %p193 = scmp.eq.s32.totalorder %s17, 0
    %p194 = por %p192, %p193
    %p195 = scmp.ne.s32.totalorder %s181, %s182
    %p196 = scmp.eq.s32.totalorder %s18, 3
    %p197 = por %p195, %p196
    %p199 = scmp.ne.s32.totalorder %s182, %s198
    %p200 = scmp.eq.s32.totalorder %s18, 0
    %p201 = por %p199, %p200
    %s202 = ssub.s32 %s19, %s31
    %s203 = ssub.s32 %s20, %s27
    %s204 = sor.u32 %s202, %s203
    %p205 = scmp.eq.s32.totalorder %s204, 0
    %s207 = sadd.s32 %s206, 1
    %s208 = scalar_select %p205, %s206, %s207
    %p211 = pneg %p205
    %p212 = scmp.eq.s32.totalorder %s12, 3
    %p213 = por %p211, %p212
    %p214 = scmp.ne.s32.totalorder %s206, %s209
    %p215 = scmp.eq.s32.totalorder %s12, 0
    %p216 = por %p214, %p215
    %p217 = scmp.ne.s32.totalorder %s206, %s209
    %p218 = scmp.eq.s32.totalorder %s17, 3
    %p219 = por %p217, %p218
    %p220 = scmp.ne.s32.totalorder %s209, %s210
    %p221 = scmp.eq.s32.totalorder %s17, 0
    %p222 = por %p220, %p221
    %p223 = scmp.ne.s32.totalorder %s209, %s210
    %p224 = scmp.eq.s32.totalorder %s18, 3
    %p225 = por %p223, %p224
    %p227 = scmp.ne.s32.totalorder %s210, %s226
    %p228 = scmp.eq.s32.totalorder %s18, 0
    %p229 = por %p227, %p228
    %p230 = scmp.le.s32.totalorder 1, %s12
    %p231 = scmp.lt.s32.totalorder %s12, 5
    %p232 = pnand %p230, %p231
    %p233 = pneg %p232
    // Predicated region
    $region9: #{decoder_forward.9} parent=5 // pred_check
      _
    $region10: #{decoder_forward.9} parent=5 // pred_check_branch
      %235 = sbr.rel (%p232) target = $region12
    $region11: #{decoder_forward.9} parent=5 // pred_region
      %s236 = ssub.s32 %s12, 1
      // Predicated region
      $region13: #{decoder_forward.9} parent=11 // pred_check
        %p237 = pneg %p145
      $region14: #{decoder_forward.9} parent=11 // pred_check_branch
        %239 = sbr.rel (%p237) target = $region16
      $region15: #{decoder_forward.9} parent=11 // pred_region
        _
      $region16: #{decoder_forward.9} parent=11 // pred_fallthru
        _
      // Predicated region
      $region17: #{decoder_forward.9} parent=11 // pred_check
        %p240 = pneg %p166
      $region18: #{decoder_forward.9} parent=11 // pred_check_branch
        %242 = sbr.rel (%p240) target = $region20
      $region19: #{decoder_forward.9} parent=11 // pred_region
        _
      $region20: #{decoder_forward.9} parent=11 // pred_fallthru
        _
    $region12: #{decoder_forward.9} parent=5 // pred_fallthru
      _
    %p243 = scmp.lt.s32.totalorder %s12, 4
    // Predicated region
    $region21: #{decoder_forward.9} parent=5 // pred_check
      %p244 = pneg %p243
    $region22: #{decoder_forward.9} parent=5 // pred_check_branch
      %246 = sbr.rel (%p244) target = $region24
    $region23: #{decoder_forward.9} parent=5 // pred_region
      // Predicated region
      $region25: #{decoder_forward.9} parent=23 // pred_check
        %p247 = pneg %p46
      $region26: #{decoder_forward.9} parent=23 // pred_check_branch
        %249 = sbr.rel (%p247) target = $region28
      $region27: #{decoder_forward.9} parent=23 // pred_region
        %s250 = smul.u32 8, %s20
        %p251 = scmp.lt.s32.totalorder %s19, 1
        %s252 = scalar_select %p251, %s19, 1
        %p253 = scmp.lt.s32.totalorder %s250, 15
        %s254 = scalar_select %p253, %s250, 15
        %s255 = smul.addr %s254, 2
        %s256 = smul.addr %s252, 32
        %s257 = sadd.s32 %s255, %s256
        %s258 = smul.addr %s257, 8
        %s259 = scalar_lea.vmem %s0, %s258
        %s260 = smul.u32 8, %s20
      $region28: #{decoder_forward.9} parent=23 // pred_fallthru
        _
      // Predicated region
      $region29: #{decoder_forward.9} parent=23 // pred_check
        %p261 = pneg %p82
      $region30: #{decoder_forward.9} parent=23 // pred_check_branch
        %263 = sbr.rel (%p261) target = $region32
      $region31: #{decoder_forward.9} parent=23 // pred_region
        %s264 = smul.u32 %s20, 8
        %s265 = ssub.s32 %s264, 1
        %p266 = scmp.gt.s32.totalorder %s265, 0
        %s267 = scalar_select %p266, %s265, 0
        %p268 = scmp.lt.s32.totalorder %s19, 1
        %s269 = scalar_select %p268, %s19, 1
        %p270 = scmp.lt.s32.totalorder %s267, 15
        %s271 = scalar_select %p270, %s267, 15
        %s272 = smul.addr %s271, 2
        %s273 = smul.addr %s269, 32
        %s274 = sadd.s32 %s272, %s273
        %s275 = smul.addr %s274, 8
        %s276 = scalar_lea.vmem %s1, %s275
        %s277 = smul.u32 %s20, 8
        %s278 = ssub.s32 %s277, 1
        %p279 = scmp.gt.s32.totalorder %s278, 0
        %s280 = scalar_select %p279, %s278, 0
      $region32: #{decoder_forward.9} parent=23 // pred_fallthru
        _
      // Predicated region
      $region33: #{decoder_forward.9} parent=23 // pred_check
        %p281 = pneg %p118
      $region34: #{decoder_forward.9} parent=23 // pred_check_branch
        %283 = sbr.rel (%p281) target = $region36
      $region35: #{decoder_forward.9} parent=23 // pred_region
        %s284 = sadd.s32 %s20, 1
        %s285 = smul.u32 %s284, 8
        %p286 = scmp.lt.s32.totalorder %s285, 15
        %s287 = scalar_select %p286, %s285, 15
        %p288 = scmp.lt.s32.totalorder %s19, 1
        %s289 = scalar_select %p288, %s19, 1
        %p290 = scmp.lt.s32.totalorder %s287, 15
        %s291 = scalar_select %p290, %s287, 15
        %s292 = smul.addr %s291, 2
        %s293 = smul.addr %s289, 32
        %s294 = sadd.s32 %s292, %s293
        %s295 = smul.addr %s294, 8
        %s296 = scalar_lea.vmem %s2, %s295
        %s297 = sadd.s32 %s20, 1
        %s298 = smul.u32 %s297, 8
        %p299 = scmp.lt.s32.totalorder %s298, 15
        %s300 = scalar_select %p299, %s298, 15
      $region36: #{decoder_forward.9} parent=23 // pred_fallthru
        _
      // Predicated region
      $region37: #{decoder_forward.9} parent=23 // pred_check
        %p301 = pneg %p188
      $region38: #{decoder_forward.9} parent=23 // pred_check_branch
        %303 = sbr.rel (%p301) target = $region40
      $region39: #{decoder_forward.9} parent=23 // pred_region
        %s304 = smul.u32 8, %s20
        %p305 = scmp.lt.s32.totalorder %s19, 1
        %s306 = scalar_select %p305, %s19, 1
        %p307 = scmp.lt.s32.totalorder %s304, 15
        %s308 = scalar_select %p307, %s304, 15
        %s309 = smul.addr %s308, 2
        %s310 = smul.addr %s306, 32
        %s311 = sadd.s32 %s309, %s310
        %s312 = smul.addr %s311, 8
        %s313 = scalar_lea.vmem %s5, %s312
        %s314 = smul.u32 8, %s20
      $region40: #{decoder_forward.9} parent=23 // pred_fallthru
        _
    $region24: #{decoder_forward.9} parent=5 // pred_fallthru
      _
    %p315 = scmp.le.s32.totalorder 1, %s12
    %p316 = scmp.lt.s32.totalorder %s12, 5
    %p317 = pnand %p315, %p316
    %p318 = pneg %p317
    // Predicated region
    $region41: #{decoder_forward.9} parent=5 // pred_check
      _
    $region42: #{decoder_forward.9} parent=5 // pred_check_branch
      %320 = sbr.rel (%p317) target = $region44
    $region43: #{decoder_forward.9} parent=5 // pred_region
      %s321 = ssub.s32 %s12, 1
      %s322 = smul.u32 8, %s22
      %p323 = scmp.lt.s32.totalorder %s21, 1
      %s324 = scalar_select %p323, %s21, 1
      %p325 = scmp.lt.s32.totalorder %s322, 15
      %s326 = scalar_select %p325, %s322, 15
      %s327 = smul.addr %s326, 2
      %s328 = smul.addr %s324, 32
      %s329 = sadd.s32 %s327, %s328
      %s330 = smul.addr %s329, 8
      %s331 = scalar_lea.vmem %s0, %s330
      %p332 = pneg %p52
      %p333 = pneg %p49
      %s334 = smul.u32 %s22, 8
      %s335 = ssub.s32 %s334, 1
      %p336 = scmp.gt.s32.totalorder %s335, 0
      %s337 = scalar_select %p336, %s335, 0
      %p338 = scmp.lt.s32.totalorder %s21, 1
      %s339 = scalar_select %p338, %s21, 1
      %p340 = scmp.lt.s32.totalorder %s337, 15
      %s341 = scalar_select %p340, %s337, 15
      %s342 = smul.addr %s341, 2
      %s343 = smul.addr %s339, 32
      %s344 = sadd.s32 %s342, %s343
      %s345 = smul.addr %s344, 8
      %s346 = scalar_lea.vmem %s1, %s345
      %p347 = pneg %p88
      %p348 = pneg %p85
      %s349 = sadd.s32 %s22, 1
      %s350 = smul.u32 %s349, 8
      %p351 = scmp.lt.s32.totalorder %s350, 15
      %s352 = scalar_select %p351, %s350, 15
      %p353 = scmp.lt.s32.totalorder %s21, 1
      %s354 = scalar_select %p353, %s21, 1
      %p355 = scmp.lt.s32.totalorder %s352, 15
      %s356 = scalar_select %p355, %s352, 15
      %s357 = smul.addr %s356, 2
      %s358 = smul.addr %s354, 32
      %s359 = sadd.s32 %s357, %s358
      %s360 = smul.addr %s359, 8
      %s361 = scalar_lea.vmem %s2, %s360
      %p362 = pneg %p124
      %p363 = pneg %p121
      %p364 = pneg %p145
      %p365 = pneg %p142
      %p366 = pneg %p166
      %p367 = pneg %p163
      %s368 = smul.u32 8, %s22
      %p369 = scmp.lt.s32.totalorder %s21, 1
      %s370 = scalar_select %p369, %s21, 1
      %p371 = scmp.lt.s32.totalorder %s368, 15
      %s372 = scalar_select %p371, %s368, 15
      %s373 = smul.addr %s372, 2
      %s374 = smul.addr %s370, 32
      %s375 = sadd.s32 %s373, %s374
      %s376 = smul.addr %s375, 8
      %s377 = scalar_lea.vmem %s5, %s376
      %p378 = pneg %p194
      %p379 = pneg %p191
      %p380 = pneg %p222
      %p381 = pneg %p219
      %s382 = smul.u32 8, %s22
      %p383 = scmp.lt.s32.totalorder %s21, 1
      %s384 = scalar_select %p383, %s21, 1
      %p385 = scmp.lt.s32.totalorder %s382, 15
      %s386 = scalar_select %p385, %s382, 15
      %s387 = smul.addr %s386, 2
      %s388 = smul.addr %s384, 32
      %s389 = sadd.s32 %s387, %s388
      %s390 = smul.addr %s389, 8
      %s391 = scalar_lea.vmem %s6, %s390
      %s392 = smul.u32 8, %s22
      %p393 = scmp.lt.s32.totalorder %s21, 1
      %s394 = scalar_select %p393, %s21, 1
      %p395 = scmp.lt.s32.totalorder %s392, 15
      %s396 = scalar_select %p395, %s392, 15
      %s397 = smul.addr %s396, 2
      %s398 = smul.addr %s394, 32
      %s399 = sadd.s32 %s397, %s398
      %s400 = smul.addr %s399, 8
      %s401 = scalar_lea.vmem %s0, %s400
      %s402 = smul.u32 8, %s22
      %s403 = smul.u32 %s22, 8
      %s404 = ssub.s32 %s403, 1
      %p405 = scmp.gt.s32.totalorder %s404, 0
      %s406 = scalar_select %p405, %s404, 0
      %p407 = scmp.lt.s32.totalorder %s21, 1
      %s408 = scalar_select %p407, %s21, 1
      %p409 = scmp.lt.s32.totalorder %s406, 15
      %s410 = scalar_select %p409, %s406, 15
      %s411 = smul.addr %s410, 2
      %s412 = smul.addr %s408, 32
      %s413 = sadd.s32 %s411, %s412
      %s414 = smul.addr %s413, 8
      %s415 = scalar_lea.vmem %s1, %s414
      %s416 = smul.u32 %s22, 8
      %s417 = ssub.s32 %s416, 1
      %p418 = scmp.gt.s32.totalorder %s417, 0
      %s419 = scalar_select %p418, %s417, 0
      %s420 = sadd.s32 %s22, 1
      %s421 = smul.u32 %s420, 8
      %p422 = scmp.lt.s32.totalorder %s421, 15
      %s423 = scalar_select %p422, %s421, 15
      %p424 = scmp.lt.s32.totalorder %s21, 1
      %s425 = scalar_select %p424, %s21, 1
      %p426 = scmp.lt.s32.totalorder %s423, 15
      %s427 = scalar_select %p426, %s423, 15
      %s428 = smul.addr %s427, 2
      %s429 = smul.addr %s425, 32
      %s430 = sadd.s32 %s428, %s429
      %s431 = smul.addr %s430, 8
      %s432 = scalar_lea.vmem %s2, %s431
      %s433 = sadd.s32 %s22, 1
      %s434 = smul.u32 %s433, 8
      %p435 = scmp.lt.s32.totalorder %s434, 15
      %s436 = scalar_select %p435, %s434, 15
      %s437 = smul.u32 8, %s22
      %p438 = scmp.lt.s32.totalorder %s21, 1
      %s439 = scalar_select %p438, %s21, 1
      %p440 = scmp.lt.s32.totalorder %s437, 15
      %s441 = scalar_select %p440, %s437, 15
      %s442 = smul.addr %s441, 2
      %s443 = smul.addr %s439, 32
      %s444 = sadd.s32 %s442, %s443
      %s445 = smul.addr %s444, 8
      %s446 = scalar_lea.vmem %s5, %s445
      %s447 = smul.u32 8, %s22
      %s448 = smul.u32 8, %s22
      %p449 = scmp.lt.s32.totalorder %s21, 1
      %s450 = scalar_select %p449, %s21, 1
      %p451 = scmp.lt.s32.totalorder %s448, 15
      %s452 = scalar_select %p451, %s448, 15
      %s453 = smul.addr %s452, 2
      %s454 = smul.addr %s450, 32
      %s455 = sadd.s32 %s453, %s454
      %s456 = smul.addr %s455, 8
      %s457 = scalar_lea.vmem %s6, %s456
      %s458 = smul.u32 8, %s22
      %vm459 = vcmask 261120
      %460 = vst.msk [vmem:[#allocation2] sm:$0xff] %vm459, 0.0
      %461 = vst.msk [vmem:[#allocation2 + $0x8] sm:$0xff] %vm459, 0.0
      %vm462 = vcmask 254976
      %463 = vst.msk [vmem:[#allocation2 + $0x10] sm:$0x3] %vm462, 0.0
      %464 = vst.msk [vmem:[#allocation2 + $0x18] sm:$0xff] %vm459, 0.0
      %465 = vst.msk [vmem:[#allocation2 + $0x20] sm:$0xff] %vm459, 0.0
      %466 = vst.msk [vmem:[#allocation2 + $0x28] sm:$0x3] %vm462, 0.0
      %467 = vst.msk [vmem:[#allocation2 + $0x30] sm:$0xff] %vm459, 0.0
      %468 = vst.msk [vmem:[#allocation2 + $0x38] sm:$0xff] %vm459, 0.0
      %469 = vst.msk [vmem:[#allocation2 + $0x40] sm:$0x3] %vm462, 0.0
      %470 = vst.msk [vmem:[#allocation2 + $0x48] sm:$0xff] %vm459, 0.0
      %471 = vst.msk [vmem:[#allocation2 + $0x50] sm:$0xff] %vm459, 0.0
      %472 = vst.msk [vmem:[#allocation2 + $0x58] sm:$0x3] %vm462, 0.0
      %473 = vst.msk [vmem:[#allocation2 + $0x60] sm:$0xff] %vm459, 0.0
      %474 = vst.msk [vmem:[#allocation2 + $0x68] sm:$0xff] %vm459, 0.0
      %475 = vst.msk [vmem:[#allocation2 + $0x70] sm:$0x3] %vm462, 0.0
      %476 = vst.msk [vmem:[#allocation2 + $0x78] sm:$0xff] %vm459, 0.0
      %477 = vst.msk [vmem:[#allocation2 + $0x80] sm:$0xff] %vm459, 0.0
      %478 = vst.msk [vmem:[#allocation2 + $0x88] sm:$0x3] %vm462, 0.0
      %479 = vst.msk [vmem:[#allocation2 + $0x90] sm:$0xff] %vm459, 0.0
      %480 = vst.msk [vmem:[#allocation2 + $0x98] sm:$0xff] %vm459, 0.0
      %481 = vst.msk [vmem:[#allocation2 + $0xa0] sm:$0x3] %vm462, 0.0
      %482 = vst.msk [vmem:[#allocation2 + $0xa8] sm:$0xff] %vm459, 0.0
      %483 = vst.msk [vmem:[#allocation2 + $0xb0] sm:$0xff] %vm459, 0.0
      %484 = vst.msk [vmem:[#allocation2 + $0xb8] sm:$0x3] %vm462, 0.0
      %485 = vst.msk [vmem:[#allocation2 + $0xc0] sm:$0xff] %vm459, 0.0
      %486 = vst.msk [vmem:[#allocation2 + $0xc8] sm:$0xff] %vm459, 0.0
      %487 = vst.msk [vmem:[#allocation2 + $0xd0] sm:$0x3] %vm462, 0.0
      %488 = vst.msk [vmem:[#allocation2 + $0xd8] sm:$0xff] %vm459, 0.0
      %489 = vst.msk [vmem:[#allocation2 + $0xe0] sm:$0xff] %vm459, 0.0
      %490 = vst.msk [vmem:[#allocation2 + $0xe8] sm:$0x3] %vm462, 0.0
      %v491 = vld [vmem:[%s401] sm:$0xff]
      %v492 = vld [vmem:[%s401 + $0x8] sm:$0xff]
      %v493 = vld [vmem:[%s401 + $0x10] sm:$0xff]
      %v494 = vld [vmem:[%s401 + $0x18] sm:$0xff]
      %v495 = vld [vmem:[%s401 + $0x20] sm:$0xff]
      %v496 = vld [vmem:[%s401 + $0x28] sm:$0xff]
      %v497 = vld [vmem:[%s401 + $0x30] sm:$0xff]
      %v498 = vld [vmem:[%s401 + $0x38] sm:$0xff]
      %v499 = vld [vmem:[%s401 + $0x40] sm:$0xff]
      %v500 = vld [vmem:[%s401 + $0x48] sm:$0xff]
      %v501 = vld [vmem:[%s401 + $0x50] sm:$0xff]
      %v502 = vld [vmem:[%s401 + $0x58] sm:$0xff]
      %v503 = vld [vmem:[%s401 + $0x60] sm:$0xff]
      %v504 = vld [vmem:[%s401 + $0x68] sm:$0xff]
      %v505 = vld [vmem:[%s401 + $0x70] sm:$0xff]
      %v506 = vld [vmem:[%s401 + $0x78] sm:$0xff]
      %s507 = scalar_lea.vmem [#allocation2], 24
      %508 = vst.msk [vmem:[%s507 + $0x1] sm:$0xff] %vm459, %v491
      %509 = vst.msk [vmem:[%s507 + $0x9] sm:$0xff] %vm459, %v492
      %510 = vst.msk [vmem:[%s507 + $0x19] sm:$0xff] %vm459, %v493
      %511 = vst.msk [vmem:[%s507 + $0x21] sm:$0xff] %vm459, %v494
      %512 = vst.msk [vmem:[%s507 + $0x31] sm:$0xff] %vm459, %v495
      %513 = vst.msk [vmem:[%s507 + $0x39] sm:$0xff] %vm459, %v496
      %514 = vst.msk [vmem:[%s507 + $0x49] sm:$0xff] %vm459, %v497
      %515 = vst.msk [vmem:[%s507 + $0x51] sm:$0xff] %vm459, %v498
      %516 = vst.msk [vmem:[%s507 + $0x61] sm:$0xff] %vm459, %v499
      %517 = vst.msk [vmem:[%s507 + $0x69] sm:$0xff] %vm459, %v500
      %518 = vst.msk [vmem:[%s507 + $0x79] sm:$0xff] %vm459, %v501
      %519 = vst.msk [vmem:[%s507 + $0x81] sm:$0xff] %vm459, %v502
      %520 = vst.msk [vmem:[%s507 + $0x91] sm:$0xff] %vm459, %v503
      %521 = vst.msk [vmem:[%s507 + $0x99] sm:$0xff] %vm459, %v504
      %522 = vst.msk [vmem:[%s507 + $0xa9] sm:$0xff] %vm459, %v505
      %523 = vst.msk [vmem:[%s507 + $0xb1] sm:$0xff] %vm459, %v506
      %p524 = scmp.gt.s32.totalorder %s22, 0
      %s525 = scalar_select %p524, 1, 0
      %s526 = scvt.s32.f32 %s525
      %p527 = scmp.lt.s32.totalorder %s22, 1
      %s528 = scalar_select %p527, 1, 0
      %s529 = scvt.s32.f32 %s528
      %v530 = vld [vmem:[%s415] sm:$0xff]
      %v531 = vld [vmem:[%s415 + $0x8] sm:$0xff]
      %v532 = vstv %s526
      %v533 = vmul.f32 %v530, %v532
      %v534 = vmul.f32 %v531, %v532
      %535 = vst.msk [vmem:[#allocation2 + $0x1] sm:$0xff] %vm459, %v533
      %536 = vst.msk [vmem:[#allocation2 + $0x9] sm:$0xff] %vm459, %v534
      %v537 = vld [vmem:[%s432] sm:$0xff]
      %v538 = vld [vmem:[%s432 + $0x8] sm:$0xff]
      %v539 = vstv %s529
      %v540 = vmul.f32 %v537, %v539
      %v541 = vmul.f32 %v538, %v539
      %s542 = scalar_lea.vmem [#allocation2], 216
      %543 = vst.msk [vmem:[%s542 + $0x1] sm:$0xff] %vm459, %v540
      %544 = vst.msk [vmem:[%s542 + $0x9] sm:$0xff] %vm459, %v541
      %v545 = vld [vmem:[#allocation2] sm:$0xff]
      %v546 = vld [vmem:[#allocation2 + $0x8] sm:$0xff]
      %v547 = vld [vmem:[#allocation2 + $0x10] sm:$0x3]
      %v548 = vld [vmem:[#allocation2 + $0x18] sm:$0xff]
      %v549 = vld [vmem:[#allocation2 + $0x20] sm:$0xff]
      %v550 = vld [vmem:[#allocation2 + $0x28] sm:$0x3]
      %v551 = vld [vmem:[#allocation2 + $0x30] sm:$0xff]
      %v552 = vld [vmem:[#allocation2 + $0x38] sm:$0xff]
      %v553 = vld [vmem:[#allocation2 + $0x40] sm:$0x3]
      %v554 = vld [vmem:[#allocation2 + $0x48] sm:$0xff]
      %v555 = vld [vmem:[#allocation2 + $0x50] sm:$0xff]
      %v556 = vld [vmem:[#allocation2 + $0x58] sm:$0x3]
      %v557 = vld [vmem:[#allocation2 + $0x60] sm:$0xff]
      %v558 = vld [vmem:[#allocation2 + $0x68] sm:$0xff]
      %v559 = vld [vmem:[#allocation2 + $0x70] sm:$0x3]
      %v560 = vld [vmem:[#allocation2 + $0x78] sm:$0xff]
      %v561 = vld [vmem:[#allocation2 + $0x80] sm:$0xff]
      %v562 = vld [vmem:[#allocation2 + $0x88] sm:$0x3]
      %v563 = vld [vmem:[#allocation2 + $0x90] sm:$0xff]
      %v564 = vld [vmem:[#allocation2 + $0x98] sm:$0xff]
      %v565 = vld [vmem:[#allocation2 + $0xa0] sm:$0x3]
      %v566 = vld [vmem:[#allocation2 + $0xa8] sm:$0xff]
      %v567 = vld [vmem:[#allocation2 + $0xb0] sm:$0xff]
      %v568 = vld [vmem:[#allocation2 + $0xb8] sm:$0x3]
      %v569 = vld [vmem:[#allocation2 + $0xc0] sm:$0xff]
      %v570 = vld [vmem:[#allocation2 + $0xc8] sm:$0xff]
      %v571 = vld [vmem:[#allocation2 + $0xd0] sm:$0x3]
      %v572 = vld [vmem:[#allocation2 + $0xd8] sm:$0xff]
      %v573 = vld [vmem:[#allocation2 + $0xe0] sm:$0xff]
      %v574 = vld [vmem:[#allocation2 + $0xe8] sm:$0x3]
      %575 = vst.msk [vmem:[#allocation3] sm:$0xff] %vm459, %v545
      %576 = vst.msk [vmem:[#allocation3 + $0x18] sm:$0xff] %vm459, %v546
      %577 = vst.msk [vmem:[#allocation3 + $0x30] sm:$0xff] %vm459, %v548
      %578 = vst.msk [vmem:[#allocation3 + $0x48] sm:$0xff] %vm459, %v549
      %579 = vst.msk [vmem:[#allocation3 + $0x60] sm:$0xff] %vm459, %v551
      %580 = vst.msk [vmem:[#allocation3 + $0x78] sm:$0xff] %vm459, %v552
      %581 = vst.msk [vmem:[#allocation3 + $0x90] sm:$0xff] %vm459, %v554
      %582 = vst.msk [vmem:[#allocation3 + $0xa8] sm:$0xff] %vm459, %v555
      %583 = vst.msk [vmem:[#allocation3 + $0xc0] sm:$0xff] %vm459, %v557
      %584 = vst.msk [vmem:[#allocation3 + $0xd8] sm:$0xff] %vm459, %v558
      %585 = vst.msk [vmem:[#allocation3 + $0xf0] sm:$0xff] %vm459, %v560
      %586 = vst.msk [vmem:[#allocation3 + $0x108] sm:$0xff] %vm459, %v561
      %587 = vst.msk [vmem:[#allocation3 + $0x120] sm:$0xff] %vm459, %v563
      %588 = vst.msk [vmem:[#allocation3 + $0x138] sm:$0xff] %vm459, %v564
      %589 = vst.msk [vmem:[#allocation3 + $0x150] sm:$0xff] %vm459, %v566
      %590 = vst.msk [vmem:[#allocation3 + $0x168] sm:$0xff] %vm459, %v567
      %vm615 = vcmask 1046528
      %v616 = vrot.slane %v545, 1
      %v617 = vrot.slane %v546, 1
      %v618 = vsel %vm615, %v616, %v617
      %v619 = vrot.slane %v547, 1
      %v620 = vsel %vm615, %v617, %v619
      %v621 = vrot.slane %v548, 1
      %v622 = vrot.slane %v549, 1
      %v623 = vsel %vm615, %v621, %v622
      %v624 = vrot.slane %v550, 1
      %v625 = vsel %vm615, %v622, %v624
      %v626 = vrot.slane %v551, 1
      %v627 = vrot.slane %v552, 1
      %v628 = vsel %vm615, %v626, %v627
      %v629 = vrot.slane %v553, 1
      %v630 = vsel %vm615, %v627, %v629
      %v631 = vrot.slane %v554, 1
      %v632 = vrot.slane %v555, 1
      %v633 = vsel %vm615, %v631, %v632
      %v634 = vrot.slane %v556, 1
      %v635 = vsel %vm615, %v632, %v634
      %v636 = vrot.slane %v557, 1
      %v637 = vrot.slane %v558, 1
      %v638 = vsel %vm615, %v636, %v637
      %v639 = vrot.slane %v559, 1
      %v640 = vsel %vm615, %v637, %v639
      %v641 = vrot.slane %v560, 1
      %v642 = vrot.slane %v561, 1
      %v643 = vsel %vm615, %v641, %v642
      %v644 = vrot.slane %v562, 1
      %v645 = vsel %vm615, %v642, %v644
      %v646 = vrot.slane %v563, 1
      %v647 = vrot.slane %v564, 1
      %v648 = vsel %vm615, %v646, %v647
      %v649 = vrot.slane %v565, 1
      %v650 = vsel %vm615, %v647, %v649
      %v651 = vrot.slane %v566, 1
      %v652 = vrot.slane %v567, 1
      %v653 = vsel %vm615, %v651, %v652
      %v654 = vrot.slane %v568, 1
      %v655 = vsel %vm615, %v652, %v654
      %656 = vrot.lane.b32.xlu0 %v618, 32
      %v657 = vpop.permute.xlu0 %656
      %658 = vrot.lane.b32.xlu0 %v620, 32
      %v659 = vpop.permute.xlu0 %658
      %660 = vrot.lane.b32.xlu0 %v623, 32
      %v661 = vpop.permute.xlu0 %660
      %662 = vrot.lane.b32.xlu0 %v625, 32
      %v663 = vpop.permute.xlu0 %662
      %664 = vrot.lane.b32.xlu0 %v628, 32
      %v665 = vpop.permute.xlu0 %664
      %666 = vrot.lane.b32.xlu0 %v630, 32
      %v667 = vpop.permute.xlu0 %666
      %668 = vrot.lane.b32.xlu0 %v633, 32
      %v669 = vpop.permute.xlu0 %668
      %670 = vrot.lane.b32.xlu0 %v635, 32
      %v671 = vpop.permute.xlu0 %670
      %672 = vrot.lane.b32.xlu0 %v638, 32
      %v673 = vpop.permute.xlu0 %672
      %674 = vrot.lane.b32.xlu0 %v640, 32
      %v675 = vpop.permute.xlu0 %674
      %676 = vrot.lane.b32.xlu0 %v643, 32
      %v677 = vpop.permute.xlu0 %676
      %678 = vrot.lane.b32.xlu0 %v645, 32
      %v679 = vpop.permute.xlu0 %678
      %680 = vrot.lane.b32.xlu0 %v648, 32
      %v681 = vpop.permute.xlu0 %680
      %682 = vrot.lane.b32.xlu0 %v650, 32
      %v683 = vpop.permute.xlu0 %682
      %684 = vrot.lane.b32.xlu0 %v653, 32
      %v685 = vpop.permute.xlu0 %684
      %686 = vrot.lane.b32.xlu0 %v655, 32
      %v687 = vpop.permute.xlu0 %686
      %vm704 = vcmask 523520
      %705 = vst.msk [vmem:[#allocation3] sm:$0xff] %vm704, %v657
      %706 = vst.msk [vmem:[#allocation3 + $0x18] sm:$0xff] %vm704, %v659
      %707 = vst.msk [vmem:[#allocation3 + $0x30] sm:$0xff] %vm704, %v661
      %708 = vst.msk [vmem:[#allocation3 + $0x48] sm:$0xff] %vm704, %v663
      %709 = vst.msk [vmem:[#allocation3 + $0x60] sm:$0xff] %vm704, %v665
      %710 = vst.msk [vmem:[#allocation3 + $0x78] sm:$0xff] %vm704, %v667
      %711 = vst.msk [vmem:[#allocation3 + $0x90] sm:$0xff] %vm704, %v669
      %712 = vst.msk [vmem:[#allocation3 + $0xa8] sm:$0xff] %vm704, %v671
      %713 = vst.msk [vmem:[#allocation3 + $0xc0] sm:$0xff] %vm704, %v673
      %714 = vst.msk [vmem:[#allocation3 + $0xd8] sm:$0xff] %vm704, %v675
      %715 = vst.msk [vmem:[#allocation3 + $0xf0] sm:$0xff] %vm704, %v677
      %716 = vst.msk [vmem:[#allocation3 + $0x108] sm:$0xff] %vm704, %v679
      %717 = vst.msk [vmem:[#allocation3 + $0x120] sm:$0xff] %vm704, %v681
      %718 = vst.msk [vmem:[#allocation3 + $0x138] sm:$0xff] %vm704, %v683
      %719 = vst.msk [vmem:[#allocation3 + $0x150] sm:$0xff] %vm704, %v685
      %720 = vst.msk [vmem:[#allocation3 + $0x168] sm:$0xff] %vm704, %v687
      %vm721 = vcmask 1045504
      %v722 = vrot.slane %v545, 2
      %v723 = vrot.slane %v546, 2
      %v724 = vsel %vm721, %v722, %v723
      %v725 = vrot.slane %v547, 2
      %v726 = vsel %vm721, %v723, %v725
      %v727 = vrot.slane %v548, 2
      %v728 = vrot.slane %v549, 2
      %v729 = vsel %vm721, %v727, %v728
      %v730 = vrot.slane %v550, 2
      %v731 = vsel %vm721, %v728, %v730
      %v732 = vrot.slane %v551, 2
      %v733 = vrot.slane %v552, 2
      %v734 = vsel %vm721, %v732, %v733
      %v735 = vrot.slane %v553, 2
      %v736 = vsel %vm721, %v733, %v735
      %v737 = vrot.slane %v554, 2
      %v738 = vrot.slane %v555, 2
      %v739 = vsel %vm721, %v737, %v738
      %v740 = vrot.slane %v556, 2
      %v741 = vsel %vm721, %v738, %v740
      %v742 = vrot.slane %v557, 2
      %v743 = vrot.slane %v558, 2
      %v744 = vsel %vm721, %v742, %v743
      %v745 = vrot.slane %v559, 2
      %v746 = vsel %vm721, %v743, %v745
      %v747 = vrot.slane %v560, 2
      %v748 = vrot.slane %v561, 2
      %v749 = vsel %vm721, %v747, %v748
      %v750 = vrot.slane %v562, 2
      %v751 = vsel %vm721, %v748, %v750
      %v752 = vrot.slane %v563, 2
      %v753 = vrot.slane %v564, 2
      %v754 = vsel %vm721, %v752, %v753
      %v755 = vrot.slane %v565, 2
      %v756 = vsel %vm721, %v753, %v755
      %v757 = vrot.slane %v566, 2
      %v758 = vrot.slane %v567, 2
      %v759 = vsel %vm721, %v757, %v758
      %v760 = vrot.slane %v568, 2
      %v761 = vsel %vm721, %v758, %v760
      %762 = vrot.lane.b32.xlu0 %v724, 64
      %v763 = vpop.permute.xlu0 %762
      %764 = vrot.lane.b32.xlu0 %v726, 64
      %v765 = vpop.permute.xlu0 %764
      %766 = vrot.lane.b32.xlu0 %v729, 64
      %v767 = vpop.permute.xlu0 %766
      %768 = vrot.lane.b32.xlu0 %v731, 64
      %v769 = vpop.permute.xlu0 %768
      %770 = vrot.lane.b32.xlu0 %v734, 64
      %v771 = vpop.permute.xlu0 %770
      %772 = vrot.lane.b32.xlu0 %v736, 64
      %v773 = vpop.permute.xlu0 %772
      %774 = vrot.lane.b32.xlu0 %v739, 64
      %v775 = vpop.permute.xlu0 %774
      %776 = vrot.lane.b32.xlu0 %v741, 64
      %v777 = vpop.permute.xlu0 %776
      %778 = vrot.lane.b32.xlu0 %v744, 64
      %v779 = vpop.permute.xlu0 %778
      %780 = vrot.lane.b32.xlu0 %v746, 64
      %v781 = vpop.permute.xlu0 %780
      %782 = vrot.lane.b32.xlu0 %v749, 64
      %v783 = vpop.permute.xlu0 %782
      %784 = vrot.lane.b32.xlu0 %v751, 64
      %v785 = vpop.permute.xlu0 %784
      %786 = vrot.lane.b32.xlu0 %v754, 64
      %v787 = vpop.permute.xlu0 %786
      %788 = vrot.lane.b32.xlu0 %v756, 64
      %v789 = vpop.permute.xlu0 %788
      %790 = vrot.lane.b32.xlu0 %v759, 64
      %v791 = vpop.permute.xlu0 %790
      %792 = vrot.lane.b32.xlu0 %v761, 64
      %v793 = vpop.permute.xlu0 %792
      %vm810 = vcmask 785920
      %811 = vst.msk [vmem:[#allocation3] sm:$0xff] %vm810, %v763
      %812 = vst.msk [vmem:[#allocation3 + $0x18] sm:$0xff] %vm810, %v765
      %813 = vst.msk [vmem:[#allocation3 + $0x30] sm:$0xff] %vm810, %v767
      %814 = vst.msk [vmem:[#allocation3 + $0x48] sm:$0xff] %vm810, %v769
      %815 = vst.msk [vmem:[#allocation3 + $0x60] sm:$0xff] %vm810, %v771
      %816 = vst.msk [vmem:[#allocation3 + $0x78] sm:$0xff] %vm810, %v773
      %817 = vst.msk [vmem:[#allocation3 + $0x90] sm:$0xff] %vm810, %v775
      %818 = vst.msk [vmem:[#allocation3 + $0xa8] sm:$0xff] %vm810, %v777
      %819 = vst.msk [vmem:[#allocation3 + $0xc0] sm:$0xff] %vm810, %v779
      %820 = vst.msk [vmem:[#allocation3 + $0xd8] sm:$0xff] %vm810, %v781
      %821 = vst.msk [vmem:[#allocation3 + $0xf0] sm:$0xff] %vm810, %v783
      %822 = vst.msk [vmem:[#allocation3 + $0x108] sm:$0xff] %vm810, %v785
      %823 = vst.msk [vmem:[#allocation3 + $0x120] sm:$0xff] %vm810, %v787
      %824 = vst.msk [vmem:[#allocation3 + $0x138] sm:$0xff] %vm810, %v789
      %825 = vst.msk [vmem:[#allocation3 + $0x150] sm:$0xff] %vm810, %v791
      %826 = vst.msk [vmem:[#allocation3 + $0x168] sm:$0xff] %vm810, %v793
      %829 = vrot.lane.b32.xlu0 %v548, 96
      %v830 = vpop.permute.xlu0 %829
      %831 = vrot.lane.b32.xlu0 %v549, 96
      %v832 = vpop.permute.xlu0 %831
      %833 = vrot.lane.b32.xlu0 %v551, 96
      %v834 = vpop.permute.xlu0 %833
      %835 = vrot.lane.b32.xlu0 %v552, 96
      %v836 = vpop.permute.xlu0 %835
      %837 = vrot.lane.b32.xlu0 %v554, 96
      %v838 = vpop.permute.xlu0 %837
      %839 = vrot.lane.b32.xlu0 %v555, 96
      %v840 = vpop.permute.xlu0 %839
      %841 = vrot.lane.b32.xlu0 %v557, 96
      %v842 = vpop.permute.xlu0 %841
      %843 = vrot.lane.b32.xlu0 %v558, 96
      %v844 = vpop.permute.xlu0 %843
      %845 = vrot.lane.b32.xlu0 %v560, 96
      %v846 = vpop.permute.xlu0 %845
      %847 = vrot.lane.b32.xlu0 %v561, 96
      %v848 = vpop.permute.xlu0 %847
      %849 = vrot.lane.b32.xlu0 %v563, 96
      %v850 = vpop.permute.xlu0 %849
      %851 = vrot.lane.b32.xlu0 %v564, 96
      %v852 = vpop.permute.xlu0 %851
      %853 = vrot.lane.b32.xlu0 %v566, 96
      %v854 = vpop.permute.xlu0 %853
      %855 = vrot.lane.b32.xlu0 %v567, 96
      %v856 = vpop.permute.xlu0 %855
      %857 = vrot.lane.b32.xlu0 %v569, 96
      %v858 = vpop.permute.xlu0 %857
      %859 = vrot.lane.b32.xlu0 %v570, 96
      %v860 = vpop.permute.xlu0 %859
      %vm877 = vcmask 1048320
      %878 = vst.msk [vmem:[#allocation3] sm:$0xff] %vm877, %v830
      %879 = vst.msk [vmem:[#allocation3 + $0x18] sm:$0xff] %vm877, %v832
      %880 = vst.msk [vmem:[#allocation3 + $0x30] sm:$0xff] %vm877, %v834
      %881 = vst.msk [vmem:[#allocation3 + $0x48] sm:$0xff] %vm877, %v836
      %882 = vst.msk [vmem:[#allocation3 + $0x60] sm:$0xff] %vm877, %v838
      %883 = vst.msk [vmem:[#allocation3 + $0x78] sm:$0xff] %vm877, %v840
      %884 = vst.msk [vmem:[#allocation3 + $0x90] sm:$0xff] %vm877, %v842
      %885 = vst.msk [vmem:[#allocation3 + $0xa8] sm:$0xff] %vm877, %v844
      %886 = vst.msk [vmem:[#allocation3 + $0xc0] sm:$0xff] %vm877, %v846
      %887 = vst.msk [vmem:[#allocation3 + $0xd8] sm:$0xff] %vm877, %v848
      %888 = vst.msk [vmem:[#allocation3 + $0xf0] sm:$0xff] %vm877, %v850
      %889 = vst.msk [vmem:[#allocation3 + $0x108] sm:$0xff] %vm877, %v852
      %890 = vst.msk [vmem:[#allocation3 + $0x120] sm:$0xff] %vm877, %v854
      %891 = vst.msk [vmem:[#allocation3 + $0x138] sm:$0xff] %vm877, %v856
      %892 = vst.msk [vmem:[#allocation3 + $0x150] sm:$0xff] %vm877, %v858
      %893 = vst.msk [vmem:[#allocation3 + $0x168] sm:$0xff] %vm877, %v860
      %v895 = vrot.slane %v569, 1
      %v896 = vrot.slane %v570, 1
      %v897 = vsel %vm615, %v895, %v896
      %v898 = vrot.slane %v571, 1
      %v899 = vsel %vm615, %v896, %v898
      %916 = vst.msk [vmem:[#allocation3 + $0x8] sm:$0xff] %vm459, %v623
      %917 = vst.msk [vmem:[#allocation3 + $0x20] sm:$0xff] %vm459, %v625
      %918 = vst.msk [vmem:[#allocation3 + $0x38] sm:$0xff] %vm459, %v628
      %919 = vst.msk [vmem:[#allocation3 + $0x50] sm:$0xff] %vm459, %v630
      %920 = vst.msk [vmem:[#allocation3 + $0x68] sm:$0xff] %vm459, %v633
      %921 = vst.msk [vmem:[#allocation3 + $0x80] sm:$0xff] %vm459, %v635
      %922 = vst.msk [vmem:[#allocation3 + $0x98] sm:$0xff] %vm459, %v638
      %923 = vst.msk [vmem:[#allocation3 + $0xb0] sm:$0xff] %vm459, %v640
      %924 = vst.msk [vmem:[#allocation3 + $0xc8] sm:$0xff] %vm459, %v643
      %925 = vst.msk [vmem:[#allocation3 + $0xe0] sm:$0xff] %vm459, %v645
      %926 = vst.msk [vmem:[#allocation3 + $0xf8] sm:$0xff] %vm459, %v648
      %927 = vst.msk [vmem:[#allocation3 + $0x110] sm:$0xff] %vm459, %v650
      %928 = vst.msk [vmem:[#allocation3 + $0x128] sm:$0xff] %vm459, %v653
      %929 = vst.msk [vmem:[#allocation3 + $0x140] sm:$0xff] %vm459, %v655
      %930 = vst.msk [vmem:[#allocation3 + $0x158] sm:$0xff] %vm459, %v897
      %931 = vst.msk [vmem:[#allocation3 + $0x170] sm:$0xff] %vm459, %v899
      %v932 = vrot.slane %v569, 2
      %v933 = vrot.slane %v570, 2
      %v934 = vsel %vm721, %v932, %v933
      %v935 = vrot.slane %v571, 2
      %v936 = vsel %vm721, %v933, %v935
      %937 = vrot.lane.b32.xlu0 %v729, 32
      %v938 = vpop.permute.xlu0 %937
      %939 = vrot.lane.b32.xlu0 %v731, 32
      %v940 = vpop.permute.xlu0 %939
      %941 = vrot.lane.b32.xlu0 %v734, 32
      %v942 = vpop.permute.xlu0 %941
      %943 = vrot.lane.b32.xlu0 %v736, 32
      %v944 = vpop.permute.xlu0 %943
      %945 = vrot.lane.b32.xlu0 %v739, 32
      %v946 = vpop.permute.xlu0 %945
      %947 = vrot.lane.b32.xlu0 %v741, 32
      %v948 = vpop.permute.xlu0 %947
      %949 = vrot.lane.b32.xlu0 %v744, 32
      %v950 = vpop.permute.xlu0 %949
      %951 = vrot.lane.b32.xlu0 %v746, 32
      %v952 = vpop.permute.xlu0 %951
      %953 = vrot.lane.b32.xlu0 %v749, 32
      %v954 = vpop.permute.xlu0 %953
      %955 = vrot.lane.b32.xlu0 %v751, 32
      %v956 = vpop.permute.xlu0 %955
      %957 = vrot.lane.b32.xlu0 %v754, 32
      %v958 = vpop.permute.xlu0 %957
      %959 = vrot.lane.b32.xlu0 %v756, 32
      %v960 = vpop.permute.xlu0 %959
      %961 = vrot.lane.b32.xlu0 %v759, 32
      %v962 = vpop.permute.xlu0 %961
      %963 = vrot.lane.b32.xlu0 %v761, 32
      %v964 = vpop.permute.xlu0 %963
      %965 = vrot.lane.b32.xlu0 %v934, 32
      %v966 = vpop.permute.xlu0 %965
      %967 = vrot.lane.b32.xlu0 %v936, 32
      %v968 = vpop.permute.xlu0 %967
      %985 = vst.msk [vmem:[#allocation3 + $0x8] sm:$0xff] %vm704, %v938
      %986 = vst.msk [vmem:[#allocation3 + $0x20] sm:$0xff] %vm704, %v940
      %987 = vst.msk [vmem:[#allocation3 + $0x38] sm:$0xff] %vm704, %v942
      %988 = vst.msk [vmem:[#allocation3 + $0x50] sm:$0xff] %vm704, %v944
      %989 = vst.msk [vmem:[#allocation3 + $0x68] sm:$0xff] %vm704, %v946
      %990 = vst.msk [vmem:[#allocation3 + $0x80] sm:$0xff] %vm704, %v948
      %991 = vst.msk [vmem:[#allocation3 + $0x98] sm:$0xff] %vm704, %v950
      %992 = vst.msk [vmem:[#allocation3 + $0xb0] sm:$0xff] %vm704, %v952
      %993 = vst.msk [vmem:[#allocation3 + $0xc8] sm:$0xff] %vm704, %v954
      %994 = vst.msk [vmem:[#allocation3 + $0xe0] sm:$0xff] %vm704, %v956
      %995 = vst.msk [vmem:[#allocation3 + $0xf8] sm:$0xff] %vm704, %v958
      %996 = vst.msk [vmem:[#allocation3 + $0x110] sm:$0xff] %vm704, %v960
      %997 = vst.msk [vmem:[#allocation3 + $0x128] sm:$0xff] %vm704, %v962
      %998 = vst.msk [vmem:[#allocation3 + $0x140] sm:$0xff] %vm704, %v964
      %999 = vst.msk [vmem:[#allocation3 + $0x158] sm:$0xff] %vm704, %v966
      %1000 = vst.msk [vmem:[#allocation3 + $0x170] sm:$0xff] %vm704, %v968
      %1003 = vrot.lane.b32.xlu0 %v551, 64
      %v1004 = vpop.permute.xlu0 %1003
      %1005 = vrot.lane.b32.xlu0 %v552, 64
      %v1006 = vpop.permute.xlu0 %1005
      %1007 = vrot.lane.b32.xlu0 %v554, 64
      %v1008 = vpop.permute.xlu0 %1007
      %1009 = vrot.lane.b32.xlu0 %v555, 64
      %v1010 = vpop.permute.xlu0 %1009
      %1011 = vrot.lane.b32.xlu0 %v557, 64
      %v1012 = vpop.permute.xlu0 %1011
      %1013 = vrot.lane.b32.xlu0 %v558, 64
      %v1014 = vpop.permute.xlu0 %1013
      %1015 = vrot.lane.b32.xlu0 %v560, 64
      %v1016 = vpop.permute.xlu0 %1015
      %1017 = vrot.lane.b32.xlu0 %v561, 64
      %v1018 = vpop.permute.xlu0 %1017
      %1019 = vrot.lane.b32.xlu0 %v563, 64
      %v1020 = vpop.permute.xlu0 %1019
      %1021 = vrot.lane.b32.xlu0 %v564, 64
      %v1022 = vpop.permute.xlu0 %1021
      %1023 = vrot.lane.b32.xlu0 %v566, 64
      %v1024 = vpop.permute.xlu0 %1023
      %1025 = vrot.lane.b32.xlu0 %v567, 64
      %v1026 = vpop.permute.xlu0 %1025
      %1027 = vrot.lane.b32.xlu0 %v569, 64
      %v1028 = vpop.permute.xlu0 %1027
      %1029 = vrot.lane.b32.xlu0 %v570, 64
      %v1030 = vpop.permute.xlu0 %1029
      %1031 = vrot.lane.b32.xlu0 %v572, 64
      %v1032 = vpop.permute.xlu0 %1031
      %1033 = vrot.lane.b32.xlu0 %v573, 64
      %v1034 = vpop.permute.xlu0 %1033
      %1051 = vst.msk [vmem:[#allocation3 + $0x8] sm:$0xff] %vm810, %v1004
      %1052 = vst.msk [vmem:[#allocation3 + $0x20] sm:$0xff] %vm810, %v1006
      %1053 = vst.msk [vmem:[#allocation3 + $0x38] sm:$0xff] %vm810, %v1008
      %1054 = vst.msk [vmem:[#allocation3 + $0x50] sm:$0xff] %vm810, %v1010
      %1055 = vst.msk [vmem:[#allocation3 + $0x68] sm:$0xff] %vm810, %v1012
      %1056 = vst.msk [vmem:[#allocation3 + $0x80] sm:$0xff] %vm810, %v1014
      %1057 = vst.msk [vmem:[#allocation3 + $0x98] sm:$0xff] %vm810, %v1016
      %1058 = vst.msk [vmem:[#allocation3 + $0xb0] sm:$0xff] %vm810, %v1018
      %1059 = vst.msk [vmem:[#allocation3 + $0xc8] sm:$0xff] %vm810, %v1020
      %1060 = vst.msk [vmem:[#allocation3 + $0xe0] sm:$0xff] %vm810, %v1022
      %1061 = vst.msk [vmem:[#allocation3 + $0xf8] sm:$0xff] %vm810, %v1024
      %1062 = vst.msk [vmem:[#allocation3 + $0x110] sm:$0xff] %vm810, %v1026
      %1063 = vst.msk [vmem:[#allocation3 + $0x128] sm:$0xff] %vm810, %v1028
      %1064 = vst.msk [vmem:[#allocation3 + $0x140] sm:$0xff] %vm810, %v1030
      %1065 = vst.msk [vmem:[#allocation3 + $0x158] sm:$0xff] %vm810, %v1032
      %1066 = vst.msk [vmem:[#allocation3 + $0x170] sm:$0xff] %vm810, %v1034
      %v1068 = vrot.slane %v572, 1
      %v1069 = vrot.slane %v573, 1
      %v1070 = vsel %vm615, %v1068, %v1069
      %v1071 = vrot.slane %v574, 1
      %v1072 = vsel %vm615, %v1069, %v1071
      %1073 = vrot.lane.b32.xlu0 %v628, 96
      %v1074 = vpop.permute.xlu0 %1073
      %1075 = vrot.lane.b32.xlu0 %v630, 96
      %v1076 = vpop.permute.xlu0 %1075
      %1077 = vrot.lane.b32.xlu0 %v633, 96
      %v1078 = vpop.permute.xlu0 %1077
      %1079 = vrot.lane.b32.xlu0 %v635, 96
      %v1080 = vpop.permute.xlu0 %1079
      %1081 = vrot.lane.b32.xlu0 %v638, 96
      %v1082 = vpop.permute.xlu0 %1081
      %1083 = vrot.lane.b32.xlu0 %v640, 96
      %v1084 = vpop.permute.xlu0 %1083
      %1085 = vrot.lane.b32.xlu0 %v643, 96
      %v1086 = vpop.permute.xlu0 %1085
      %1087 = vrot.lane.b32.xlu0 %v645, 96
      %v1088 = vpop.permute.xlu0 %1087
      %1089 = vrot.lane.b32.xlu0 %v648, 96
      %v1090 = vpop.permute.xlu0 %1089
      %1091 = vrot.lane.b32.xlu0 %v650, 96
      %v1092 = vpop.permute.xlu0 %1091
      %1093 = vrot.lane.b32.xlu0 %v653, 96
      %v1094 = vpop.permute.xlu0 %1093
      %1095 = vrot.lane.b32.xlu0 %v655, 96
      %v1096 = vpop.permute.xlu0 %1095
      %1097 = vrot.lane.b32.xlu0 %v897, 96
      %v1098 = vpop.permute.xlu0 %1097
      %1099 = vrot.lane.b32.xlu0 %v899, 96
      %v1100 = vpop.permute.xlu0 %1099
      %1101 = vrot.lane.b32.xlu0 %v1070, 96
      %v1102 = vpop.permute.xlu0 %1101
      %1103 = vrot.lane.b32.xlu0 %v1072, 96
      %v1104 = vpop.permute.xlu0 %1103
      %1121 = vst.msk [vmem:[#allocation3 + $0x8] sm:$0xff] %vm877, %v1074
      %1122 = vst.msk [vmem:[#allocation3 + $0x20] sm:$0xff] %vm877, %v1076
      %1123 = vst.msk [vmem:[#allocation3 + $0x38] sm:$0xff] %vm877, %v1078
      %1124 = vst.msk [vmem:[#allocation3 + $0x50] sm:$0xff] %vm877, %v1080
      %1125 = vst.msk [vmem:[#allocation3 + $0x68] sm:$0xff] %vm877, %v1082
      %1126 = vst.msk [vmem:[#allocation3 + $0x80] sm:$0xff] %vm877, %v1084
      %1127 = vst.msk [vmem:[#allocation3 + $0x98] sm:$0xff] %vm877, %v1086
      %1128 = vst.msk [vmem:[#allocation3 + $0xb0] sm:$0xff] %vm877, %v1088
      %1129 = vst.msk [vmem:[#allocation3 + $0xc8] sm:$0xff] %vm877, %v1090
      %1130 = vst.msk [vmem:[#allocation3 + $0xe0] sm:$0xff] %vm877, %v1092
      %1131 = vst.msk [vmem:[#allocation3 + $0xf8] sm:$0xff] %vm877, %v1094
      %1132 = vst.msk [vmem:[#allocation3 + $0x110] sm:$0xff] %vm877, %v1096
      %1133 = vst.msk [vmem:[#allocation3 + $0x128] sm:$0xff] %vm877, %v1098
      %1134 = vst.msk [vmem:[#allocation3 + $0x140] sm:$0xff] %vm877, %v1100
      %1135 = vst.msk [vmem:[#allocation3 + $0x158] sm:$0xff] %vm877, %v1102
      %1136 = vst.msk [vmem:[#allocation3 + $0x170] sm:$0xff] %vm877, %v1104
      %v1137 = vrot.slane %v572, 2
      %v1138 = vrot.slane %v573, 2
      %v1139 = vsel %vm721, %v1137, %v1138
      %v1140 = vrot.slane %v574, 2
      %v1141 = vsel %vm721, %v1138, %v1140
      %1158 = vst.msk [vmem:[#allocation3 + $0x10] sm:$0xff] %vm459, %v734
      %1159 = vst.msk [vmem:[#allocation3 + $0x28] sm:$0xff] %vm459, %v736
      %1160 = vst.msk [vmem:[#allocation3 + $0x40] sm:$0xff] %vm459, %v739
      %1161 = vst.msk [vmem:[#allocation3 + $0x58] sm:$0xff] %vm459, %v741
      %1162 = vst.msk [vmem:[#allocation3 + $0x70] sm:$0xff] %vm459, %v744
      %1163 = vst.msk [vmem:[#allocation3 + $0x88] sm:$0xff] %vm459, %v746
      %1164 = vst.msk [vmem:[#allocation3 + $0xa0] sm:$0xff] %vm459, %v749
      %1165 = vst.msk [vmem:[#allocation3 + $0xb8] sm:$0xff] %vm459, %v751
      %1166 = vst.msk [vmem:[#allocation3 + $0xd0] sm:$0xff] %vm459, %v754
      %1167 = vst.msk [vmem:[#allocation3 + $0xe8] sm:$0xff] %vm459, %v756
      %1168 = vst.msk [vmem:[#allocation3 + $0x100] sm:$0xff] %vm459, %v759
      %1169 = vst.msk [vmem:[#allocation3 + $0x118] sm:$0xff] %vm459, %v761
      %1170 = vst.msk [vmem:[#allocation3 + $0x130] sm:$0xff] %vm459, %v934
      %1171 = vst.msk [vmem:[#allocation3 + $0x148] sm:$0xff] %vm459, %v936
      %1172 = vst.msk [vmem:[#allocation3 + $0x160] sm:$0xff] %vm459, %v1139
      %1173 = vst.msk [vmem:[#allocation3 + $0x178] sm:$0xff] %vm459, %v1141
      %v1174 = vld [vmem:[#allocation3] sm:$0xff]
      %v1175 = vld [vmem:[#allocation3 + $0x8] sm:$0xff]
      %v1176 = vld [vmem:[#allocation3 + $0x10] sm:$0xff]
      %v1177 = vld [vmem:[#allocation3 + $0x18] sm:$0xff]
      %v1178 = vld [vmem:[#allocation3 + $0x20] sm:$0xff]
      %v1179 = vld [vmem:[#allocation3 + $0x28] sm:$0xff]
      %v1180 = vld [vmem:[#allocation3 + $0x30] sm:$0xff]
      %v1181 = vld [vmem:[#allocation3 + $0x38] sm:$0xff]
      %v1182 = vld [vmem:[#allocation3 + $0x40] sm:$0xff]
      %v1183 = vld [vmem:[#allocation3 + $0x48] sm:$0xff]
      %v1184 = vld [vmem:[#allocation3 + $0x50] sm:$0xff]
      %v1185 = vld [vmem:[#allocation3 + $0x58] sm:$0xff]
      %v1186 = vld [vmem:[#allocation3 + $0x60] sm:$0xff]
      %v1187 = vld [vmem:[#allocation3 + $0x68] sm:$0xff]
      %v1188 = vld [vmem:[#allocation3 + $0x70] sm:$0xff]
      %v1189 = vld [vmem:[#allocation3 + $0x78] sm:$0xff]
      %v1190 = vld [vmem:[#allocation3 + $0x80] sm:$0xff]
      %v1191 = vld [vmem:[#allocation3 + $0x88] sm:$0xff]
      %v1192 = vld [vmem:[#allocation3 + $0x90] sm:$0xff]
      %v1193 = vld [vmem:[#allocation3 + $0x98] sm:$0xff]
      %v1194 = vld [vmem:[#allocation3 + $0xa0] sm:$0xff]
      %v1195 = vld [vmem:[#allocation3 + $0xa8] sm:$0xff]
      %v1196 = vld [vmem:[#allocation3 + $0xb0] sm:$0xff]
      %v1197 = vld [vmem:[#allocation3 + $0xb8] sm:$0xff]
      %v1198 = vld [vmem:[#allocation3 + $0xc0] sm:$0xff]
      %v1199 = vld [vmem:[#allocation3 + $0xc8] sm:$0xff]
      %v1200 = vld [vmem:[#allocation3 + $0xd0] sm:$0xff]
      %v1201 = vld [vmem:[#allocation3 + $0xd8] sm:$0xff]
      %v1202 = vld [vmem:[#allocation3 + $0xe0] sm:$0xff]
      %v1203 = vld [vmem:[#allocation3 + $0xe8] sm:$0xff]
      %v1204 = vld [vmem:[#allocation3 + $0xf0] sm:$0xff]
      %v1205 = vld [vmem:[#allocation3 + $0xf8] sm:$0xff]
      %v1206 = vld [vmem:[#allocation3 + $0x100] sm:$0xff]
      %v1207 = vld [vmem:[#allocation3 + $0x108] sm:$0xff]
      %v1208 = vld [vmem:[#allocation3 + $0x110] sm:$0xff]
      %v1209 = vld [vmem:[#allocation3 + $0x118] sm:$0xff]
      %v1210 = vld [vmem:[#allocation3 + $0x120] sm:$0xff]
      %v1211 = vld [vmem:[#allocation3 + $0x128] sm:$0xff]
      %v1212 = vld [vmem:[#allocation3 + $0x130] sm:$0xff]
      %v1213 = vld [vmem:[#allocation3 + $0x138] sm:$0xff]
      %v1214 = vld [vmem:[#allocation3 + $0x140] sm:$0xff]
      %v1215 = vld [vmem:[#allocation3 + $0x148] sm:$0xff]
      %v1216 = vld [vmem:[#allocation3 + $0x150] sm:$0xff]
      %v1217 = vld [vmem:[#allocation3 + $0x158] sm:$0xff]
      %v1218 = vld [vmem:[#allocation3 + $0x160] sm:$0xff]
      %v1219 = vld [vmem:[#allocation3 + $0x168] sm:$0xff]
      %v1220 = vld [vmem:[#allocation3 + $0x170] sm:$0xff]
      %v1221 = vld [vmem:[#allocation3 + $0x178] sm:$0xff]
      %v1222 = vld [vmem:[%s3] sm:$0xff]
      %v1223 = vld [vmem:[%s3 + $0x8] sm:$0xff]
      %v1224 = vld [vmem:[%s3 + $0x10] sm:$0xff]
      %v1225 = vld [vmem:[%s3 + $0x18] sm:$0xff]
      %v1226 = vld [vmem:[%s3 + $0x20] sm:$0xff]
      %v1227 = vld [vmem:[%s3 + $0x28] sm:$0xff]
      %v1228 = vld [vmem:[%s3 + $0x30] sm:$0xff]
      %v1229 = vld [vmem:[%s3 + $0x38] sm:$0xff]
      %v1230 = vld [vmem:[%s3 + $0x40] sm:$0xff]
      %v1231 = vld [vmem:[%s3 + $0x48] sm:$0xff]
      %v1232 = vld [vmem:[%s3 + $0x50] sm:$0xff]
      %v1233 = vld [vmem:[%s3 + $0x58] sm:$0xff]
      %v1234 = vld [vmem:[%s3 + $0x60] sm:$0xff]
      %v1235 = vld [vmem:[%s3 + $0x68] sm:$0xff]
      %v1236 = vld [vmem:[%s3 + $0x70] sm:$0xff]
      %v1237 = vld [vmem:[%s3 + $0x78] sm:$0xff]
      %v1238 = vld [vmem:[%s3 + $0x80] sm:$0xff]
      %v1239 = vld [vmem:[%s3 + $0x88] sm:$0xff]
      %v1240 = vld [vmem:[%s3 + $0x90] sm:$0xff]
      %v1241 = vld [vmem:[%s3 + $0x98] sm:$0xff]
      %v1242 = vld [vmem:[%s3 + $0xa0] sm:$0xff]
      %v1243 = vld [vmem:[%s3 + $0xa8] sm:$0xff]
      %v1244 = vld [vmem:[%s3 + $0xb0] sm:$0xff]
      %v1245 = vld [vmem:[%s3 + $0xb8] sm:$0xff]
      %v1246 = vld [vmem:[%s3 + $0xc0] sm:$0xff]
      %v1247 = vld [vmem:[%s3 + $0xc8] sm:$0xff]
      %v1248 = vld [vmem:[%s3 + $0xd0] sm:$0xff]
      %v1249 = vld [vmem:[%s3 + $0xd8] sm:$0xff]
      %v1250 = vld [vmem:[%s3 + $0xe0] sm:$0xff]
      %v1251 = vld [vmem:[%s3 + $0xe8] sm:$0xff]
      %v1252 = vld [vmem:[%s3 + $0xf0] sm:$0xff]
      %v1253 = vld [vmem:[%s3 + $0xf8] sm:$0xff]
      %v1254 = vld [vmem:[%s3 + $0x100] sm:$0xff]
      %v1255 = vld [vmem:[%s3 + $0x108] sm:$0xff]
      %v1256 = vld [vmem:[%s3 + $0x110] sm:$0xff]
      %v1257 = vld [vmem:[%s3 + $0x118] sm:$0xff]
      %v1258 = vld [vmem:[%s4] sm:$0x1]
      %v1260 = vperm.slane %v1258, 0
      %v1263 = vsel %vm459, %v1176, 0
      %v1266 = vsel %vm459, %v1179, 0
      %v1269 = vsel %vm459, %v1182, 0
      %v1272 = vsel %vm459, %v1185, 0
      %v1275 = vsel %vm459, %v1188, 0
      %v1278 = vsel %vm459, %v1191, 0
      %v1281 = vsel %vm459, %v1194, 0
      %v1284 = vsel %vm459, %v1197, 0
      %v1287 = vsel %vm459, %v1200, 0
      %v1290 = vsel %vm459, %v1203, 0
      %v1293 = vsel %vm459, %v1206, 0
      %v1296 = vsel %vm459, %v1209, 0
      %v1299 = vsel %vm459, %v1212, 0
      %v1302 = vsel %vm459, %v1215, 0
      %v1305 = vsel %vm459, %v1218, 0
      %v1308 = vsel %vm459, %v1221, 0
      %1310 = vmatpush.msra.mxu0 %v1237
      %1311 = vmatpush.msra.mxu0 %v1236
      %1312 = vmatpush.msra.mxu0 %v1235
      %1313 = vmatpush.msra.mxu0 %v1234
      %1314 = vmatpush.msra.mxu0 %v1233
      %1315 = vmatpush.msra.mxu0 %v1232
      %1316 = vmatpush.msra.mxu0 %v1231
      %1317 = vmatpush.msra.mxu0 %v1230
      %1318 = vmatpush.msra.mxu0 %v1229
      %1319 = vmatpush.msra.mxu0 %v1228
      %1320 = vmatpush.msra.mxu0 %v1227
      %1321 = vmatpush.msra.mxu0 %v1226
      %1322 = vmatpush.msra.mxu0 %v1225
      %1323 = vmatpush.msra.mxu0 %v1224
      %1324 = vmatpush.msra.mxu0 %v1223
      %1325 = vmatpush.msra.mxu0 %v1222
      %1326 = vmatmul.f32.gmra.mxu0 %v1174
      %v1327 = vpop.f32.mrf.mxu0
      %v1328 = vadd.f32 %v1260, %v1327
      %1329 = vmatmul.f32.gmra.mxu0 %v1177
      %v1330 = vpop.f32.mrf.mxu0
      %v1331 = vadd.f32 %v1260, %v1330
      %1332 = vmatmul.f32.gmra.mxu0 %v1180
      %v1333 = vpop.f32.mrf.mxu0
      %v1334 = vadd.f32 %v1260, %v1333
      %1335 = vmatmul.f32.gmra.mxu0 %v1183
      %v1336 = vpop.f32.mrf.mxu0
      %v1337 = vadd.f32 %v1260, %v1336
      %1338 = vmatmul.f32.gmra.mxu0 %v1186
      %v1339 = vpop.f32.mrf.mxu0
      %v1340 = vadd.f32 %v1260, %v1339
      %1341 = vmatmul.f32.gmra.mxu0 %v1189
      %v1342 = vpop.f32.mrf.mxu0
      %v1343 = vadd.f32 %v1260, %v1342
      %1344 = vmatmul.f32.gmra.mxu0 %v1192
      %v1345 = vpop.f32.mrf.mxu0
      %v1346 = vadd.f32 %v1260, %v1345
      %1347 = vmatmul.f32.gmra.mxu0 %v1195
      %v1348 = vpop.f32.mrf.mxu0
      %v1349 = vadd.f32 %v1260, %v1348
      %1350 = vmatmul.f32.gmra.mxu0 %v1198
      %v1351 = vpop.f32.mrf.mxu0
      %v1352 = vadd.f32 %v1260, %v1351
      %1353 = vmatmul.f32.gmra.mxu0 %v1201
      %v1354 = vpop.f32.mrf.mxu0
      %v1355 = vadd.f32 %v1260, %v1354
      %1356 = vmatmul.f32.gmra.mxu0 %v1204
      %v1357 = vpop.f32.mrf.mxu0
      %v1358 = vadd.f32 %v1260, %v1357
      %1359 = vmatmul.f32.gmra.mxu0 %v1207
      %v1360 = vpop.f32.mrf.mxu0
      %v1361 = vadd.f32 %v1260, %v1360
      %1362 = vmatmul.f32.gmra.mxu0 %v1210
      %v1363 = vpop.f32.mrf.mxu0
      %v1364 = vadd.f32 %v1260, %v1363
      %1365 = vmatmul.f32.gmra.mxu0 %v1213
      %v1366 = vpop.f32.mrf.mxu0
      %v1367 = vadd.f32 %v1260, %v1366
      %1368 = vmatmul.f32.gmra.mxu0 %v1216
      %v1369 = vpop.f32.mrf.mxu0
      %v1370 = vadd.f32 %v1260, %v1369
      %1371 = vmatmul.f32.gmra.mxu0 %v1219
      %v1372 = vpop.f32.mrf.mxu0
      %v1373 = vadd.f32 %v1260, %v1372
      %1374 = vdwg.mxu0
      %1375 = vmatpush.msra.mxu0 %v1253
      %1376 = vmatpush.msra.mxu0 %v1252
      %1377 = vmatpush.msra.mxu0 %v1251
      %1378 = vmatpush.msra.mxu0 %v1250
      %1379 = vmatpush.msra.mxu0 %v1249
      %1380 = vmatpush.msra.mxu0 %v1248
      %1381 = vmatpush.msra.mxu0 %v1247
      %1382 = vmatpush.msra.mxu0 %v1246
      %1383 = vmatpush.msra.mxu0 %v1245
      %1384 = vmatpush.msra.mxu0 %v1244
      %1385 = vmatpush.msra.mxu0 %v1243
      %1386 = vmatpush.msra.mxu0 %v1242
      %1387 = vmatpush.msra.mxu0 %v1241
      %1388 = vmatpush.msra.mxu0 %v1240
      %1389 = vmatpush.msra.mxu0 %v1239
      %1390 = vmatpush.msra.mxu0 %v1238
      %1391 = vmatmul.f32.gmra.mxu0 %v1175
      %v1392 = vpop.f32.mrf.mxu0
      %v1393 = vadd.f32 %v1328, %v1392
      %1394 = vmatmul.f32.gmra.mxu0 %v1178
      %v1395 = vpop.f32.mrf.mxu0
      %v1396 = vadd.f32 %v1331, %v1395
      %1397 = vmatmul.f32.gmra.mxu0 %v1181
      %v1398 = vpop.f32.mrf.mxu0
      %v1399 = vadd.f32 %v1334, %v1398
      %1400 = vmatmul.f32.gmra.mxu0 %v1184
      %v1401 = vpop.f32.mrf.mxu0
      %v1402 = vadd.f32 %v1337, %v1401
      %1403 = vmatmul.f32.gmra.mxu0 %v1187
      %v1404 = vpop.f32.mrf.mxu0
      %v1405 = vadd.f32 %v1340, %v1404
      %1406 = vmatmul.f32.gmra.mxu0 %v1190
      %v1407 = vpop.f32.mrf.mxu0
      %v1408 = vadd.f32 %v1343, %v1407
      %1409 = vmatmul.f32.gmra.mxu0 %v1193
      %v1410 = vpop.f32.mrf.mxu0
      %v1411 = vadd.f32 %v1346, %v1410
      %1412 = vmatmul.f32.gmra.mxu0 %v1196
      %v1413 = vpop.f32.mrf.mxu0
      %v1414 = vadd.f32 %v1349, %v1413
      %1415 = vmatmul.f32.gmra.mxu0 %v1199
      %v1416 = vpop.f32.mrf.mxu0
      %v1417 = vadd.f32 %v1352, %v1416
      %1418 = vmatmul.f32.gmra.mxu0 %v1202
      %v1419 = vpop.f32.mrf.mxu0
      %v1420 = vadd.f32 %v1355, %v1419
      %1421 = vmatmul.f32.gmra.mxu0 %v1205
      %v1422 = vpop.f32.mrf.mxu0
      %v1423 = vadd.f32 %v1358, %v1422
      %1424 = vmatmul.f32.gmra.mxu0 %v1208
      %v1425 = vpop.f32.mrf.mxu0
      %v1426 = vadd.f32 %v1361, %v1425
      %1427 = vmatmul.f32.gmra.mxu0 %v1211
      %v1428 = vpop.f32.mrf.mxu0
      %v1429 = vadd.f32 %v1364, %v1428
      %1430 = vmatmul.f32.gmra.mxu0 %v1214
      %v1431 = vpop.f32.mrf.mxu0
      %v1432 = vadd.f32 %v1367, %v1431
      %1433 = vmatmul.f32.gmra.mxu0 %v1217
      %v1434 = vpop.f32.mrf.mxu0
      %v1435 = vadd.f32 %v1370, %v1434
      %1436 = vmatmul.f32.gmra.mxu0 %v1220
      %v1437 = vpop.f32.mrf.mxu0
      %v1438 = vadd.f32 %v1373, %v1437
      %1439 = vdwg.mxu0
      %1440 = vmatpush.msra.mxu0 0.0
      %1441 = vmatpush.msra.mxu0 0.0
      %1442 = vmatpush.msra.mxu0 0.0
      %1443 = vmatpush.msra.mxu0 0.0
      %1444 = vmatpush.msra.mxu0 0.0
      %1445 = vmatpush.msra.mxu0 0.0
      %1446 = vmatpush.msra.mxu0 0.0
      %1447 = vmatpush.msra.mxu0 0.0
      %1448 = vmatpush.msra.mxu0 0.0
      %1449 = vmatpush.msra.mxu0 0.0
      %1450 = vmatpush.msra.mxu0 0.0
      %1451 = vmatpush.msra.mxu0 0.0
      %1452 = vmatpush.msra.mxu0 %v1257
      %1453 = vmatpush.msra.mxu0 %v1256
      %1454 = vmatpush.msra.mxu0 %v1255
      %1455 = vmatpush.msra.mxu0 %v1254
      %1456 = vmatmul.f32.gmra.mxu0 %v1263
      %v1457 = vpop.f32.mrf.mxu0
      %v1458 = vadd.f32 %v1393, %v1457
      %1459 = vmatmul.f32.gmra.mxu0 %v1266
      %v1460 = vpop.f32.mrf.mxu0
      %v1461 = vadd.f32 %v1396, %v1460
      %1462 = vmatmul.f32.gmra.mxu0 %v1269
      %v1463 = vpop.f32.mrf.mxu0
      %v1464 = vadd.f32 %v1399, %v1463
      %1465 = vmatmul.f32.gmra.mxu0 %v1272
      %v1466 = vpop.f32.mrf.mxu0
      %v1467 = vadd.f32 %v1402, %v1466
      %1468 = vmatmul.f32.gmra.mxu0 %v1275
      %v1469 = vpop.f32.mrf.mxu0
      %v1470 = vadd.f32 %v1405, %v1469
      %1471 = vmatmul.f32.gmra.mxu0 %v1278
      %v1472 = vpop.f32.mrf.mxu0
      %v1473 = vadd.f32 %v1408, %v1472
      %1474 = vmatmul.f32.gmra.mxu0 %v1281
      %v1475 = vpop.f32.mrf.mxu0
      %v1476 = vadd.f32 %v1411, %v1475
      %1477 = vmatmul.f32.gmra.mxu0 %v1284
      %v1478 = vpop.f32.mrf.mxu0
      %v1479 = vadd.f32 %v1414, %v1478
      %1480 = vmatmul.f32.gmra.mxu0 %v1287
      %v1481 = vpop.f32.mrf.mxu0
      %v1482 = vadd.f32 %v1417, %v1481
      %1483 = vmatmul.f32.gmra.mxu0 %v1290
      %v1484 = vpop.f32.mrf.mxu0
      %v1485 = vadd.f32 %v1420, %v1484
      %1486 = vmatmul.f32.gmra.mxu0 %v1293
      %v1487 = vpop.f32.mrf.mxu0
      %v1488 = vadd.f32 %v1423, %v1487
      %1489 = vmatmul.f32.gmra.mxu0 %v1296
      %v1490 = vpop.f32.mrf.mxu0
      %v1491 = vadd.f32 %v1426, %v1490
      %1492 = vmatmul.f32.gmra.mxu0 %v1299
      %v1493 = vpop.f32.mrf.mxu0
      %v1494 = vadd.f32 %v1429, %v1493
      %1495 = vmatmul.f32.gmra.mxu0 %v1302
      %v1496 = vpop.f32.mrf.mxu0
      %v1497 = vadd.f32 %v1432, %v1496
      %1498 = vmatmul.f32.gmra.mxu0 %v1305
      %v1499 = vpop.f32.mrf.mxu0
      %v1500 = vadd.f32 %v1435, %v1499
      %1501 = vmatmul.f32.gmra.mxu0 %v1308
      %v1502 = vpop.f32.mrf.mxu0
      %v1503 = vadd.f32 %v1438, %v1502
      %1504 = vdwg.mxu0
      %v1505 = vld [vmem:[%s446] sm:$0xff]
      %v1506 = vld [vmem:[%s446 + $0x8] sm:$0xff]
      %v1507 = vld [vmem:[%s446 + $0x10] sm:$0xff]
      %v1508 = vld [vmem:[%s446 + $0x18] sm:$0xff]
      %v1509 = vld [vmem:[%s446 + $0x20] sm:$0xff]
      %v1510 = vld [vmem:[%s446 + $0x28] sm:$0xff]
      %v1511 = vld [vmem:[%s446 + $0x30] sm:$0xff]
      %v1512 = vld [vmem:[%s446 + $0x38] sm:$0xff]
      %v1513 = vld [vmem:[%s446 + $0x40] sm:$0xff]
      %v1514 = vld [vmem:[%s446 + $0x48] sm:$0xff]
      %v1515 = vld [vmem:[%s446 + $0x50] sm:$0xff]
      %v1516 = vld [vmem:[%s446 + $0x58] sm:$0xff]
      %v1517 = vld [vmem:[%s446 + $0x60] sm:$0xff]
      %v1518 = vld [vmem:[%s446 + $0x68] sm:$0xff]
      %v1519 = vld [vmem:[%s446 + $0x70] sm:$0xff]
      %v1520 = vld [vmem:[%s446 + $0x78] sm:$0xff]
      %v1521 = vadd.f32 %v1458, %v1505
      %v1522 = vadd.f32 %v1461, %v1506
      %v1523 = vadd.f32 %v1464, %v1507
      %v1524 = vadd.f32 %v1467, %v1508
      %v1525 = vadd.f32 %v1470, %v1509
      %v1526 = vadd.f32 %v1473, %v1510
      %v1527 = vadd.f32 %v1476, %v1511
      %v1528 = vadd.f32 %v1479, %v1512
      %v1529 = vadd.f32 %v1482, %v1513
      %v1530 = vadd.f32 %v1485, %v1514
      %v1531 = vadd.f32 %v1488, %v1515
      %v1532 = vadd.f32 %v1491, %v1516
      %v1533 = vadd.f32 %v1494, %v1517
      %v1534 = vadd.f32 %v1497, %v1518
      %v1535 = vadd.f32 %v1500, %v1519
      %v1536 = vadd.f32 %v1503, %v1520
      %1537 = vst.msk [vmem:[%s457] sm:$0xff] %vm459, %v1521
      %1538 = vst.msk [vmem:[%s457 + $0x8] sm:$0xff] %vm459, %v1522
      %1539 = vst.msk [vmem:[%s457 + $0x10] sm:$0xff] %vm459, %v1523
      %1540 = vst.msk [vmem:[%s457 + $0x18] sm:$0xff] %vm459, %v1524
      %1541 = vst.msk [vmem:[%s457 + $0x20] sm:$0xff] %vm459, %v1525
      %1542 = vst.msk [vmem:[%s457 + $0x28] sm:$0xff] %vm459, %v1526
      %1543 = vst.msk [vmem:[%s457 + $0x30] sm:$0xff] %vm459, %v1527
      %1544 = vst.msk [vmem:[%s457 + $0x38] sm:$0xff] %vm459, %v1528
      %1545 = vst.msk [vmem:[%s457 + $0x40] sm:$0xff] %vm459, %v1529
      %1546 = vst.msk [vmem:[%s457 + $0x48] sm:$0xff] %vm459, %v1530
      %1547 = vst.msk [vmem:[%s457 + $0x50] sm:$0xff] %vm459, %v1531
      %1548 = vst.msk [vmem:[%s457 + $0x58] sm:$0xff] %vm459, %v1532
      %1549 = vst.msk [vmem:[%s457 + $0x60] sm:$0xff] %vm459, %v1533
      %1550 = vst.msk [vmem:[%s457 + $0x68] sm:$0xff] %vm459, %v1534
      %1551 = vst.msk [vmem:[%s457 + $0x70] sm:$0xff] %vm459, %v1535
      %1552 = vst.msk [vmem:[%s457 + $0x78] sm:$0xff] %vm459, %v1536
      %s1553 = smul.u32 8, %s22
      %p1554 = scmp.lt.s32.totalorder %s21, 1
      %s1555 = scalar_select %p1554, %s21, 1
      %p1556 = scmp.lt.s32.totalorder %s1553, 15
      %s1557 = scalar_select %p1556, %s1553, 15
      %s1558 = smul.addr %s1557, 2
      %s1559 = smul.addr %s1555, 32
      %s1560 = sadd.s32 %s1558, %s1559
      %s1561 = smul.addr %s1560, 8
      %s1562 = scalar_lea.vmem %s6, %s1561
      // Predicated region
      $region45: #{decoder_forward.9} parent=43 // pred_check
        %p1563 = pneg %p219
      $region46: #{decoder_forward.9} parent=43 // pred_check_branch
        %1565 = sbr.rel (%p1563) target = $region48
      $region47: #{decoder_forward.9} parent=43 // pred_region
        %s1566 = smul.u32 8, %s22
      $region48: #{decoder_forward.9} parent=43 // pred_fallthru
        _
    $region44: #{decoder_forward.9} parent=5 // pred_fallthru
      _
    %p1567 = scmp.le.s32.totalorder 2, %s12
    // Predicated region
    $region49: #{decoder_forward.9} parent=5 // pred_check
      %p1568 = pneg %p1567
    $region50: #{decoder_forward.9} parent=5 // pred_check_branch
      %1570 = sbr.rel (%p1568) target = $region52
    $region51: #{decoder_forward.9} parent=5 // pred_region
      %s1571 = ssub.s32 %s12, 2
      // Predicated region
      $region53: #{decoder_forward.9} parent=51 // pred_check
        %p1572 = pneg %p225
      $region54: #{decoder_forward.9} parent=51 // pred_check_branch
        %1574 = sbr.rel (%p1572) target = $region56
      $region55: #{decoder_forward.9} parent=51 // pred_region
        %s1575 = smul.u32 8, %s24
        %p1576 = scmp.lt.s32.totalorder %s23, 1
        %s1577 = scalar_select %p1576, %s23, 1
        %p1578 = scmp.lt.s32.totalorder %s1575, 15
        %s1579 = scalar_select %p1578, %s1575, 15
        %s1580 = smul.addr %s1579, 2
        %s1581 = smul.addr %s1577, 32
        %s1582 = sadd.s32 %s1580, %s1581
        %s1583 = smul.addr %s1582, 8
        %s1584 = scalar_lea.vmem %s6, %s1583
      $region56: #{decoder_forward.9} parent=51 // pred_fallthru
        _
    $region52: #{decoder_forward.9} parent=5 // pred_fallthru
      _
  $region6: #{decoder_forward.9} parent=0 // loop_footer
    %s16 = sadd.s32 1, %s12
  $region7: #{decoder_forward.9} parent=0 // loop_footer_branch
    %11 = sbr.rel target = $region3
  $region8: #{decoder_forward.9} parent=0 // loop_exit
    _

// kernel: decoder_forward.13
$region0: #{decoder_forward.13}
  #allocation0 [shape = 'u32[]', space=smem, size = 0x4, offset = 0x4, fixed_abs, tag = 'smem constant byte address 0x4 - core index']
  #allocation1 [shape = 'u32[72,128]{1,0:T(1,128)}', space=vmem, size = 0x9000, scoped, tag = 'internal scratch']
  %s0 = inlined_call_operand.vmem [shape: f32[2,16,16,32], index: 0, kind: input, shape index: {}]
  %s1 = inlined_call_operand.vmem [shape: f32[32,32], index: 1, kind: input, shape index: {}]
  %s2 = inlined_call_operand.vmem [shape: f32[1,32], index: 2, kind: input, shape index: {}]
  %s3 = inlined_call_operand.vmem [shape: f32[32,32], index: 3, kind: input, shape index: {}]
  %s4 = inlined_call_operand.vmem [shape: f32[1,32], index: 4, kind: input, shape index: {}]
  %s5 = inlined_call_operand.vmem [shape: f32[32,8], index: 5, kind: input, shape index: {}]
  %s6 = inlined_call_operand.vmem [shape: f32[1,8], index: 6, kind: input, shape index: {}]
  %s7 = inlined_call_operand.vmem [shape: f32[8,32], index: 7, kind: input, shape index: {}]
  %s8 = inlined_call_operand.vmem [shape: f32[1,32], index: 8, kind: input, shape index: {}]
  %s9 = inlined_call_operand.vmem [shape: f32[2,16,16,32], index: 9, kind: input, shape index: {}]
  %s10 = inlined_call_operand.hbm [shape: f32[2,16,16,32], index: 10, kind: output, shape index: {}]
  %s11 = sld [smem:[#allocation0]]
  $region73: #{decoder_forward.13} parent=0
    _
  %s13 = ssub.s32 1, %s11
  %s14 = scalar_select 0, %s13, %s11
  $region1: #{decoder_forward.13} parent=0
    #allocation2 [shape = 'u8[262144]{0}', space=vmem, size = 0x40000, scoped, tag = 'output window, operand 0']
    #allocation3 [shape = 's32[2]{0}', space=sflag, size = 0x8, scoped, tag = 'scoped memory for decoder_forward.13']
    %15 = vsyncpa [#allocation3], 0
    %s16 = scalar_lea.sflag [#allocation3], 1
    %17 = vsyncpa %s16, 0
    loop: start=0, step=1, limit=4
    $region2: #{decoder_forward.13} parent=1 // loop_pre_header
      _
    $region3: #{decoder_forward.13} parent=1 // loop_header
      %s19 = sphi 0, %s23
      %p20 = scmp.ge.s32.totalorder %s19, 4
      %s29 = sphi 0, %s31
      %s32 = sphi 0, %s29
      %s33 = sphi 0, %s32
      %s49 = sphi 0, %s33
      %s53 = sphi 0, %s53
      %s55 = sphi 0, %s53
      %s56 = sphi 0, %s55
      %s70 = sphi 0, %s56
      %s74 = sphi 0, %s74
      %s76 = sphi 0, %s74
      %s77 = sphi 0, %s76
      %s91 = sphi 0, %s77
      %s95 = sphi 0, %s95
      %s97 = sphi 0, %s95
      %s98 = sphi 0, %s97
      %s112 = sphi 0, %s98
      %s116 = sphi 0, %s116
      %s118 = sphi 0, %s116
      %s119 = sphi 0, %s118
      %s133 = sphi 0, %s119
      %s137 = sphi 0, %s137
      %s139 = sphi 0, %s137
      %s140 = sphi 0, %s139
      %s154 = sphi 0, %s140
      %s158 = sphi 0, %s158
      %s160 = sphi 0, %s158
      %s161 = sphi 0, %s160
      %s175 = sphi 0, %s161
      %s179 = sphi 0, %s179
      %s181 = sphi 0, %s179
      %s182 = sphi 0, %s181
      %s196 = sphi 0, %s182
      %s200 = sphi 0, %s200
      %s202 = sphi 0, %s200
      %s203 = sphi 0, %s202
      %s217 = sphi 0, %s203
      %s223 = sphi 0, %s225
      %s226 = sphi 0, %s223
      %s227 = sphi 0, %s226
      %s243 = sphi 0, %s227
      %s249 = sphi 0, %s251
      %s252 = sphi 0, %s249
      %s253 = sphi 0, %s252
      %s269 = sphi 0, %s253
    $region4: #{decoder_forward.13} parent=1 // loop_header_branch
      %22 = sbr.rel (%p20) target = $region8
    $region5: #{decoder_forward.13} parent=1 // loop_body
      %s24 = ssub.s32 %s19, 1
      %s25 = ssub.s32 %s19, 2
      %s26 = sadd.s32 %s19, 1
      %s27 = ssub.s32 %s19, %s26
      %p28 = scmp.eq.s32.totalorder %s27, 0
      %s30 = sadd.s32 %s29, 1
      %s31 = scalar_select %p28, %s29, %s30
      %p34 = pneg %p28
      %p35 = scmp.eq.s32.totalorder %s19, 1
      %p36 = por %p34, %p35
      %p37 = scmp.ne.s32.totalorder %s29, %s32
      %p38 = scmp.eq.s32.totalorder %s19, 0
      %p39 = por %p37, %p38
      %p40 = scmp.ne.s32.totalorder %s29, %s32
      %p41 = scmp.eq.s32.totalorder %s24, 1
      %p42 = por %p40, %p41
      %p43 = scmp.ne.s32.totalorder %s32, %s33
      %p44 = scmp.eq.s32.totalorder %s24, 0
      %p45 = por %p43, %p44
      %p46 = scmp.ne.s32.totalorder %s32, %s33
      %p47 = scmp.eq.s32.totalorder %s25, 1
      %p48 = por %p46, %p47
      %p50 = scmp.ne.s32.totalorder %s33, %s49
      %p51 = scmp.eq.s32.totalorder %s25, 0
      %p52 = por %p50, %p51
      %s54 = sadd.s32 %s53, 1
      %p57 = scmp.eq.s32.totalorder %s19, 1
      %p58 = scmp.ne.s32.totalorder %s53, %s55
      %p59 = scmp.eq.s32.totalorder %s19, 0
      %p60 = por %p58, %p59
      %p61 = scmp.ne.s32.totalorder %s53, %s55
      %p62 = scmp.eq.s32.totalorder %s24, 1
      %p63 = por %p61, %p62
      %p64 = scmp.ne.s32.totalorder %s55, %s56
      %p65 = scmp.eq.s32.totalorder %s24, 0
      %p66 = por %p64, %p65
      %p67 = scmp.ne.s32.totalorder %s55, %s56
      %p68 = scmp.eq.s32.totalorder %s25, 1
      %p69 = por %p67, %p68
      %p71 = scmp.ne.s32.totalorder %s56, %s70
      %p72 = scmp.eq.s32.totalorder %s25, 0
      %p73 = por %p71, %p72
      %s75 = sadd.s32 %s74, 1
      %p78 = scmp.eq.s32.totalorder %s19, 1
      %p79 = scmp.ne.s32.totalorder %s74, %s76
      %p80 = scmp.eq.s32.totalorder %s19, 0
      %p81 = por %p79, %p80
      %p82 = scmp.ne.s32.totalorder %s74, %s76
      %p83 = scmp.eq.s32.totalorder %s24, 1
      %p84 = por %p82, %p83
      %p85 = scmp.ne.s32.totalorder %s76, %s77
      %p86 = scmp.eq.s32.totalorder %s24, 0
      %p87 = por %p85, %p86
      %p88 = scmp.ne.s32.totalorder %s76, %s77
      %p89 = scmp.eq.s32.totalorder %s25, 1
      %p90 = por %p88, %p89
      %p92 = scmp.ne.s32.totalorder %s77, %s91
      %p93 = scmp.eq.s32.totalorder %s25, 0
      %p94 = por %p92, %p93
      %s96 = sadd.s32 %s95, 1
      %p99 = scmp.eq.s32.totalorder %s19, 1
      %p100 = scmp.ne.s32.totalorder %s95, %s97
      %p101 = scmp.eq.s32.totalorder %s19, 0
      %p102 = por %p100, %p101
      %p103 = scmp.ne.s32.totalorder %s95, %s97
      %p104 = scmp.eq.s32.totalorder %s24, 1
      %p105 = por %p103, %p104
      %p106 = scmp.ne.s32.totalorder %s97, %s98
      %p107 = scmp.eq.s32.totalorder %s24, 0
      %p108 = por %p106, %p107
      %p109 = scmp.ne.s32.totalorder %s97, %s98
      %p110 = scmp.eq.s32.totalorder %s25, 1
      %p111 = por %p109, %p110
      %p113 = scmp.ne.s32.totalorder %s98, %s112
      %p114 = scmp.eq.s32.totalorder %s25, 0
      %p115 = por %p113, %p114
      %s117 = sadd.s32 %s116, 1
      %p120 = scmp.eq.s32.totalorder %s19, 1
      %p121 = scmp.ne.s32.totalorder %s116, %s118
      %p122 = scmp.eq.s32.totalorder %s19, 0
      %p123 = por %p121, %p122
      %p124 = scmp.ne.s32.totalorder %s116, %s118
      %p125 = scmp.eq.s32.totalorder %s24, 1
      %p126 = por %p124, %p125
      %p127 = scmp.ne.s32.totalorder %s118, %s119
      %p128 = scmp.eq.s32.totalorder %s24, 0
      %p129 = por %p127, %p128
      %p130 = scmp.ne.s32.totalorder %s118, %s119
      %p131 = scmp.eq.s32.totalorder %s25, 1
      %p132 = por %p130, %p131
      %p134 = scmp.ne.s32.totalorder %s119, %s133
      %p135 = scmp.eq.s32.totalorder %s25, 0
      %p136 = por %p134, %p135
      %s138 = sadd.s32 %s137, 1
      %p141 = scmp.eq.s32.totalorder %s19, 1
      %p142 = scmp.ne.s32.totalorder %s137, %s139
      %p143 = scmp.eq.s32.totalorder %s19, 0
      %p144 = por %p142, %p143
      %p145 = scmp.ne.s32.totalorder %s137, %s139
      %p146 = scmp.eq.s32.totalorder %s24, 1
      %p147 = por %p145, %p146
      %p148 = scmp.ne.s32.totalorder %s139, %s140
      %p149 = scmp.eq.s32.totalorder %s24, 0
      %p150 = por %p148, %p149
      %p151 = scmp.ne.s32.totalorder %s139, %s140
      %p152 = scmp.eq.s32.totalorder %s25, 1
      %p153 = por %p151, %p152
      %p155 = scmp.ne.s32.totalorder %s140, %s154
      %p156 = scmp.eq.s32.totalorder %s25, 0
      %p157 = por %p155, %p156
      %s159 = sadd.s32 %s158, 1
      %p162 = scmp.eq.s32.totalorder %s19, 1
      %p163 = scmp.ne.s32.totalorder %s158, %s160
      %p164 = scmp.eq.s32.totalorder %s19, 0
      %p165 = por %p163, %p164
      %p166 = scmp.ne.s32.totalorder %s158, %s160
      %p167 = scmp.eq.s32.totalorder %s24, 1
      %p168 = por %p166, %p167
      %p169 = scmp.ne.s32.totalorder %s160, %s161
      %p170 = scmp.eq.s32.totalorder %s24, 0
      %p171 = por %p169, %p170
      %p172 = scmp.ne.s32.totalorder %s160, %s161
      %p173 = scmp.eq.s32.totalorder %s25, 1
      %p174 = por %p172, %p173
      %p176 = scmp.ne.s32.totalorder %s161, %s175
      %p177 = scmp.eq.s32.totalorder %s25, 0
      %p178 = por %p176, %p177
      %s180 = sadd.s32 %s179, 1
      %p183 = scmp.eq.s32.totalorder %s19, 1
      %p184 = scmp.ne.s32.totalorder %s179, %s181
      %p185 = scmp.eq.s32.totalorder %s19, 0
      %p186 = por %p184, %p185
      %p187 = scmp.ne.s32.totalorder %s179, %s181
      %p188 = scmp.eq.s32.totalorder %s24, 1
      %p189 = por %p187, %p188
      %p190 = scmp.ne.s32.totalorder %s181, %s182
      %p191 = scmp.eq.s32.totalorder %s24, 0
      %p192 = por %p190, %p191
      %p193 = scmp.ne.s32.totalorder %s181, %s182
      %p194 = scmp.eq.s32.totalorder %s25, 1
      %p195 = por %p193, %p194
      %p197 = scmp.ne.s32.totalorder %s182, %s196
      %p198 = scmp.eq.s32.totalorder %s25, 0
      %p199 = por %p197, %p198
      %s201 = sadd.s32 %s200, 1
      %p204 = scmp.eq.s32.totalorder %s19, 1
      %p205 = scmp.ne.s32.totalorder %s200, %s202
      %p206 = scmp.eq.s32.totalorder %s19, 0
      %p207 = por %p205, %p206
      %p208 = scmp.ne.s32.totalorder %s200, %s202
      %p209 = scmp.eq.s32.totalorder %s24, 1
      %p210 = por %p208, %p209
      %p211 = scmp.ne.s32.totalorder %s202, %s203
      %p212 = scmp.eq.s32.totalorder %s24, 0
      %p213 = por %p211, %p212
      %p214 = scmp.ne.s32.totalorder %s202, %s203
      %p215 = scmp.eq.s32.totalorder %s25, 1
      %p216 = por %p214, %p215
      %p218 = scmp.ne.s32.totalorder %s203, %s217
      %p219 = scmp.eq.s32.totalorder %s25, 0
      %p220 = por %p218, %p219
      %s221 = ssub.s32 %s19, %s26
      %p222 = scmp.eq.s32.totalorder %s221, 0
      %s224 = sadd.s32 %s223, 1
      %s225 = scalar_select %p222, %s223, %s224
      %p228 = pneg %p222
      %p229 = scmp.eq.s32.totalorder %s19, 1
      %p230 = por %p228, %p229
      %p231 = scmp.ne.s32.totalorder %s223, %s226
      %p232 = scmp.eq.s32.totalorder %s19, 0
      %p233 = por %p231, %p232
      %p234 = scmp.ne.s32.totalorder %s223, %s226
      %p235 = scmp.eq.s32.totalorder %s24, 1
      %p236 = por %p234, %p235
      %p237 = scmp.ne.s32.totalorder %s226, %s227
      %p238 = scmp.eq.s32.totalorder %s24, 0
      %p239 = por %p237, %p238
      %p240 = scmp.ne.s32.totalorder %s226, %s227
      %p241 = scmp.eq.s32.totalorder %s25, 1
      %p242 = por %p240, %p241
      %p244 = scmp.ne.s32.totalorder %s227, %s243
      %p245 = scmp.eq.s32.totalorder %s25, 0
      %p246 = por %p244, %p245
      %s247 = ssub.s32 %s19, %s26
      %p248 = scmp.eq.s32.totalorder %s247, 0
      %s250 = sadd.s32 %s249, 1
      %s251 = scalar_select %p248, %s249, %s250
      %p254 = pneg %p248
      %p255 = scmp.eq.s32.totalorder %s19, 1
      %p256 = por %p254, %p255
      %p257 = scmp.ne.s32.totalorder %s249, %s252
      %p258 = scmp.eq.s32.totalorder %s19, 0
      %p259 = por %p257, %p258
      %p260 = scmp.ne.s32.totalorder %s249, %s252
      %p261 = scmp.eq.s32.totalorder %s24, 1
      %p262 = por %p260, %p261
      %p263 = scmp.ne.s32.totalorder %s252, %s253
      %p264 = scmp.eq.s32.totalorder %s24, 0
      %p265 = por %p263, %p264
      %p266 = scmp.ne.s32.totalorder %s252, %s253
      %p267 = scmp.eq.s32.totalorder %s25, 1
      %p268 = por %p266, %p267
      %p270 = scmp.ne.s32.totalorder %s253, %s269
      %p271 = scmp.eq.s32.totalorder %s25, 0
      %p272 = por %p270, %p271
      %p273 = scmp.le.s32.totalorder 1, %s19
      %p274 = scmp.lt.s32.totalorder %s19, 3
      %p275 = pnand %p273, %p274
      %p276 = pneg %p275
      // Predicated region
      $region9: #{decoder_forward.13} parent=5 // pred_check
        _
      $region10: #{decoder_forward.13} parent=5 // pred_check_branch
        %278 = sbr.rel (%p275) target = $region12
      $region11: #{decoder_forward.13} parent=5 // pred_region
        %s279 = ssub.s32 %s19, 1
        // Predicated region
        $region13: #{decoder_forward.13} parent=11 // pred_check
          %p280 = pneg %p66
        $region14: #{decoder_forward.13} parent=11 // pred_check_branch
          %282 = sbr.rel (%p280) target = $region16
        $region15: #{decoder_forward.13} parent=11 // pred_region
          _
        $region16: #{decoder_forward.13} parent=11 // pred_fallthru
          _
        // Predicated region
        $region17: #{decoder_forward.13} parent=11 // pred_check
          %p283 = pneg %p87
        $region18: #{decoder_forward.13} parent=11 // pred_check_branch
          %285 = sbr.rel (%p283) target = $region20
        $region19: #{decoder_forward.13} parent=11 // pred_region
          _
        $region20: #{decoder_forward.13} parent=11 // pred_fallthru
          _
        // Predicated region
        $region21: #{decoder_forward.13} parent=11 // pred_check
          %p286 = pneg %p108
        $region22: #{decoder_forward.13} parent=11 // pred_check_branch
          %288 = sbr.rel (%p286) target = $region24
        $region23: #{decoder_forward.13} parent=11 // pred_region
          _
        $region24: #{decoder_forward.13} parent=11 // pred_fallthru
          _
        // Predicated region
        $region25: #{decoder_forward.13} parent=11 // pred_check
          %p289 = pneg %p129
        $region26: #{decoder_forward.13} parent=11 // pred_check_branch
          %291 = sbr.rel (%p289) target = $region28
        $region27: #{decoder_forward.13} parent=11 // pred_region
          _
        $region28: #{decoder_forward.13} parent=11 // pred_fallthru
          _
        // Predicated region
        $region29: #{decoder_forward.13} parent=11 // pred_check
          %p292 = pneg %p150
        $region30: #{decoder_forward.13} parent=11 // pred_check_branch
          %294 = sbr.rel (%p292) target = $region32
        $region31: #{decoder_forward.13} parent=11 // pred_region
          _
        $region32: #{decoder_forward.13} parent=11 // pred_fallthru
          _
        // Predicated region
        $region33: #{decoder_forward.13} parent=11 // pred_check
          %p295 = pneg %p171
        $region34: #{decoder_forward.13} parent=11 // pred_check_branch
          %297 = sbr.rel (%p295) target = $region36
        $region35: #{decoder_forward.13} parent=11 // pred_region
          _
        $region36: #{decoder_forward.13} parent=11 // pred_fallthru
          _
        // Predicated region
        $region37: #{decoder_forward.13} parent=11 // pred_check
          %p298 = pneg %p192
        $region38: #{decoder_forward.13} parent=11 // pred_check_branch
          %300 = sbr.rel (%p298) target = $region40
        $region39: #{decoder_forward.13} parent=11 // pred_region
          _
        $region40: #{decoder_forward.13} parent=11 // pred_fallthru
          _
        // Predicated region
        $region41: #{decoder_forward.13} parent=11 // pred_check
          %p301 = pneg %p213
        $region42: #{decoder_forward.13} parent=11 // pred_check_branch
          %303 = sbr.rel (%p301) target = $region44
        $region43: #{decoder_forward.13} parent=11 // pred_region
          _
        $region44: #{decoder_forward.13} parent=11 // pred_fallthru
          _
      $region12: #{decoder_forward.13} parent=5 // pred_fallthru
        _
      %p304 = scmp.lt.s32.totalorder %s19, 2
      // Predicated region
      $region45: #{decoder_forward.13} parent=5 // pred_check
        %p305 = pneg %p304
      $region46: #{decoder_forward.13} parent=5 // pred_check_branch
        %307 = sbr.rel (%p305) target = $region48
      $region47: #{decoder_forward.13} parent=5 // pred_region
        // Predicated region
        $region49: #{decoder_forward.13} parent=47 // pred_check
          %p308 = pneg %p39
        $region50: #{decoder_forward.13} parent=47 // pred_check_branch
          %310 = sbr.rel (%p308) target = $region52
        $region51: #{decoder_forward.13} parent=47 // pred_region
          %p311 = scmp.lt.s32.totalorder %s19, 1
          %s312 = scalar_select %p311, %s19, 1
          %s313 = smul.addr %s312, 32
          %s314 = smul.addr %s313, 8
          %s315 = scalar_lea.vmem %s0, %s314
        $region52: #{decoder_forward.13} parent=47 // pred_fallthru
          _
        // Predicated region
        $region53: #{decoder_forward.13} parent=47 // pred_check
          %p316 = pneg %p233
        $region54: #{decoder_forward.13} parent=47 // pred_check_branch
          %318 = sbr.rel (%p316) target = $region56
        $region55: #{decoder_forward.13} parent=47 // pred_region
          %p319 = scmp.lt.s32.totalorder %s19, 1
          %s320 = scalar_select %p319, %s19, 1
          %s321 = smul.addr %s320, 32
          %s322 = smul.addr %s321, 8
          %s323 = scalar_lea.vmem %s9, %s322
        $region56: #{decoder_forward.13} parent=47 // pred_fallthru
          _
      $region48: #{decoder_forward.13} parent=5 // pred_fallthru
        _
      %p324 = scmp.le.s32.totalorder 1, %s19
      %p325 = scmp.lt.s32.totalorder %s19, 3
      %p326 = pnand %p324, %p325
      %p327 = pneg %p326
      // Predicated region
      $region57: #{decoder_forward.13} parent=5 // pred_check
        _
      $region58: #{decoder_forward.13} parent=5 // pred_check_branch
        %329 = sbr.rel (%p326) target = $region60
      $region59: #{decoder_forward.13} parent=5 // pred_region
        %s330 = ssub.s32 %s19, 1
        %p331 = scmp.lt.s32.totalorder %s24, 1
        %s332 = scalar_select %p331, %s24, 1
        %s333 = smul.addr %s332, 32
        %s334 = smul.addr %s333, 8
        %s335 = scalar_lea.vmem %s0, %s334
        %p336 = pneg %p45
        %p337 = pneg %p42
        %p338 = pneg %p66
        %p339 = pneg %p63
        %p340 = pneg %p87
        %p341 = pneg %p84
        %p342 = pneg %p108
        %p343 = pneg %p105
        %p344 = pneg %p129
        %p345 = pneg %p126
        %p346 = pneg %p150
        %p347 = pneg %p147
        %p348 = pneg %p171
        %p349 = pneg %p168
        %p350 = pneg %p192
        %p351 = pneg %p189
        %p352 = pneg %p213
        %p353 = pneg %p210
        %p354 = scmp.lt.s32.totalorder %s24, 1
        %s355 = scalar_select %p354, %s24, 1
        %s356 = smul.addr %s355, 32
        %s357 = smul.addr %s356, 8
        %s358 = scalar_lea.vmem %s9, %s357
        %p359 = pneg %p239
        %p360 = pneg %p236
        %p361 = pneg %p265
        %p362 = pneg %p262
        %s363 = sand.u32 %s252, 1
        %s364 = scalar_lea.sflag [#allocation3], %s363
        %s365 = sand.u32 %s252, 1
        %s366 = smul.addr %s365, 256
        %s367 = scalar_lea.vmem [#allocation2], %s366
        %p368 = scmp.lt.s32.totalorder %s24, 1
        %s369 = scalar_select %p368, %s24, 1
        %s370 = smul.addr %s369, 32
        %s371 = smul.addr %s370, 8
        %s372 = scalar_lea.vmem %s0, %s371
        %p373 = scmp.lt.s32.totalorder %s24, 1
        %s374 = scalar_select %p373, %s24, 1
        %s375 = smul.addr %s374, 32
        %s376 = smul.addr %s375, 8
        %s377 = scalar_lea.vmem %s9, %s376
        %v378 = vld [vmem:[%s372] sm:$0xff]
        %v379 = vld [vmem:[%s372 + $0x8] sm:$0xff]
        %v380 = vld [vmem:[%s372 + $0x10] sm:$0xff]
        %v381 = vld [vmem:[%s372 + $0x18] sm:$0xff]
        %v382 = vld [vmem:[%s372 + $0x20] sm:$0xff]
        %v383 = vld [vmem:[%s372 + $0x28] sm:$0xff]
        %v384 = vld [vmem:[%s372 + $0x30] sm:$0xff]
        %v385 = vld [vmem:[%s372 + $0x38] sm:$0xff]
        %v386 = vld [vmem:[%s372 + $0x40] sm:$0xff]
        %v387 = vld [vmem:[%s372 + $0x48] sm:$0xff]
        %v388 = vld [vmem:[%s372 + $0x50] sm:$0xff]
        %v389 = vld [vmem:[%s372 + $0x58] sm:$0xff]
        %v390 = vld [vmem:[%s372 + $0x60] sm:$0xff]
        %v391 = vld [vmem:[%s372 + $0x68] sm:$0xff]
        %v392 = vld [vmem:[%s372 + $0x70] sm:$0xff]
        %v393 = vld [vmem:[%s372 + $0x78] sm:$0xff]
        %v394 = vld [vmem:[%s372 + $0x80] sm:$0xff]
        %v395 = vld [vmem:[%s372 + $0x88] sm:$0xff]
        %v396 = vld [vmem:[%s372 + $0x90] sm:$0xff]
        %v397 = vld [vmem:[%s372 + $0x98] sm:$0xff]
        %v398 = vld [vmem:[%s372 + $0xa0] sm:$0xff]
        %v399 = vld [vmem:[%s372 + $0xa8] sm:$0xff]
        %v400 = vld [vmem:[%s372 + $0xb0] sm:$0xff]
        %v401 = vld [vmem:[%s372 + $0xb8] sm:$0xff]
        %v402 = vld [vmem:[%s372 + $0xc0] sm:$0xff]
        %v403 = vld [vmem:[%s372 + $0xc8] sm:$0xff]
        %v404 = vld [vmem:[%s372 + $0xd0] sm:$0xff]
        %v405 = vld [vmem:[%s372 + $0xd8] sm:$0xff]
        %v406 = vld [vmem:[%s372 + $0xe0] sm:$0xff]
        %v407 = vld [vmem:[%s372 + $0xe8] sm:$0xff]
        %v408 = vld [vmem:[%s372 + $0xf0] sm:$0xff]
        %v409 = vld [vmem:[%s372 + $0xf8] sm:$0xff]
        %v410 = vld [vmem:[%s1] sm:$0xff]
        %v411 = vld [vmem:[%s1 + $0x8] sm:$0xff]
        %v412 = vld [vmem:[%s1 + $0x10] sm:$0xff]
        %v413 = vld [vmem:[%s1 + $0x18] sm:$0xff]
        %v414 = vld [vmem:[%s2] sm:$0x1]
        %v416 = vperm.slane %v414, 0
        %vm418 = vcmask 261120
        %v420 = vsel %vm418, %v378, 0
        %v423 = vsel %vm418, %v379, 0
        %v426 = vsel %vm418, %v380, 0
        %v429 = vsel %vm418, %v381, 0
        %v432 = vsel %vm418, %v382, 0
        %v435 = vsel %vm418, %v383, 0
        %v438 = vsel %vm418, %v384, 0
        %v441 = vsel %vm418, %v385, 0
        %v444 = vsel %vm418, %v386, 0
        %v447 = vsel %vm418, %v387, 0
        %v450 = vsel %vm418, %v388, 0
        %v453 = vsel %vm418, %v389, 0
        %v456 = vsel %vm418, %v390, 0
        %v459 = vsel %vm418, %v391, 0
        %v462 = vsel %vm418, %v392, 0
        %v465 = vsel %vm418, %v393, 0
        %v468 = vsel %vm418, %v394, 0
        %v471 = vsel %vm418, %v395, 0
        %v474 = vsel %vm418, %v396, 0
        %v477 = vsel %vm418, %v397, 0
        %v480 = vsel %vm418, %v398, 0
        %v483 = vsel %vm418, %v399, 0
        %v486 = vsel %vm418, %v400, 0
        %v489 = vsel %vm418, %v401, 0
        %v492 = vsel %vm418, %v402, 0
        %v495 = vsel %vm418, %v403, 0
        %v498 = vsel %vm418, %v404, 0
        %v501 = vsel %vm418, %v405, 0
        %v504 = vsel %vm418, %v406, 0
        %v507 = vsel %vm418, %v407, 0
        %v510 = vsel %vm418, %v408, 0
        %v513 = vsel %vm418, %v409, 0
        %515 = vmatpush.msra.mxu0 0.0
        %516 = vmatpush.msra.mxu0 0.0
        %517 = vmatpush.msra.mxu0 0.0
        %518 = vmatpush.msra.mxu0 0.0
        %519 = vmatpush.msra.mxu0 0.0
        %520 = vmatpush.msra.mxu0 0.0
        %521 = vmatpush.msra.mxu0 0.0
        %522 = vmatpush.msra.mxu0 0.0
        %523 = vmatpush.msra.mxu0 0.0
        %524 = vmatpush.msra.mxu0 0.0
        %525 = vmatpush.msra.mxu0 0.0
        %526 = vmatpush.msra.mxu0 0.0
        %527 = vmatpush.msra.mxu0 %v413
        %528 = vmatpush.msra.mxu0 %v412
        %529 = vmatpush.msra.mxu0 %v411
        %530 = vmatpush.msra.mxu0 %v410
        %531 = vmatmul.f32.gmra.mxu0 %v420
        %v532 = vpop.f32.mrf.mxu0
        %v533 = vadd.f32 %v416, %v532
        %534 = vmatmul.f32.gmra.mxu0 %v423
        %v535 = vpop.f32.mrf.mxu0
        %v536 = vadd.f32 %v416, %v535
        %537 = vmatmul.f32.gmra.mxu0 %v426
        %v538 = vpop.f32.mrf.mxu0
        %v539 = vadd.f32 %v416, %v538
        %540 = vmatmul.f32.gmra.mxu0 %v429
        %v541 = vpop.f32.mrf.mxu0
        %v542 = vadd.f32 %v416, %v541
        %543 = vmatmul.f32.gmra.mxu0 %v432
        %v544 = vpop.f32.mrf.mxu0
        %v545 = vadd.f32 %v416, %v544
        %546 = vmatmul.f32.gmra.mxu0 %v435
        %v547 = vpop.f32.mrf.mxu0
        %v548 = vadd.f32 %v416, %v547
        %549 = vmatmul.f32.gmra.mxu0 %v438
        %v550 = vpop.f32.mrf.mxu0
        %v551 = vadd.f32 %v416, %v550
        %552 = vmatmul.f32.gmra.mxu0 %v441
        %v553 = vpop.f32.mrf.mxu0
        %v554 = vadd.f32 %v416, %v553
        %555 = vmatmul.f32.gmra.mxu0 %v444
        %v556 = vpop.f32.mrf.mxu0
        %v557 = vadd.f32 %v416, %v556
        %558 = vmatmul.f32.gmra.mxu0 %v447
        %v559 = vpop.f32.mrf.mxu0
        %v560 = vadd.f32 %v416, %v559
        %561 = vmatmul.f32.gmra.mxu0 %v450
        %v562 = vpop.f32.mrf.mxu0
        %v563 = vadd.f32 %v416, %v562
        %564 = vmatmul.f32.gmra.mxu0 %v453
        %v565 = vpop.f32.mrf.mxu0
        %v566 = vadd.f32 %v416, %v565
        %567 = vmatmul.f32.gmra.mxu0 %v456
        %v568 = vpop.f32.mrf.mxu0
        %v569 = vadd.f32 %v416, %v568
        %570 = vmatmul.f32.gmra.mxu0 %v459
        %v571 = vpop.f32.mrf.mxu0
        %v572 = vadd.f32 %v416, %v571
        %573 = vmatmul.f32.gmra.mxu0 %v462
        %v574 = vpop.f32.mrf.mxu0
        %v575 = vadd.f32 %v416, %v574
        %576 = vmatmul.f32.gmra.mxu0 %v465
        %v577 = vpop.f32.mrf.mxu0
        %v578 = vadd.f32 %v416, %v577
        %579 = vmatmul.f32.gmra.mxu0 %v468
        %v580 = vpop.f32.mrf.mxu0
        %v581 = vadd.f32 %v416, %v580
        %582 = vmatmul.f32.gmra.mxu0 %v471
        %v583 = vpop.f32.mrf.mxu0
        %v584 = vadd.f32 %v416, %v583
        %585 = vmatmul.f32.gmra.mxu0 %v474
        %v586 = vpop.f32.mrf.mxu0
        %v587 = vadd.f32 %v416, %v586
        %588 = vmatmul.f32.gmra.mxu0 %v477
        %v589 = vpop.f32.mrf.mxu0
        %v590 = vadd.f32 %v416, %v589
        %591 = vmatmul.f32.gmra.mxu0 %v480
        %v592 = vpop.f32.mrf.mxu0
        %v593 = vadd.f32 %v416, %v592
        %594 = vmatmul.f32.gmra.mxu0 %v483
        %v595 = vpop.f32.mrf.mxu0
        %v596 = vadd.f32 %v416, %v595
        %597 = vmatmul.f32.gmra.mxu0 %v486
        %v598 = vpop.f32.mrf.mxu0
        %v599 = vadd.f32 %v416, %v598
        %600 = vmatmul.f32.gmra.mxu0 %v489
        %v601 = vpop.f32.mrf.mxu0
        %v602 = vadd.f32 %v416, %v601
        %603 = vmatmul.f32.gmra.mxu0 %v492
        %v604 = vpop.f32.mrf.mxu0
        %v605 = vadd.f32 %v416, %v604
        %606 = vmatmul.f32.gmra.mxu0 %v495
        %v607 = vpop.f32.mrf.mxu0
        %v608 = vadd.f32 %v416, %v607
        %609 = vmatmul.f32.gmra.mxu0 %v498
        %v610 = vpop.f32.mrf.mxu0
        %v611 = vadd.f32 %v416, %v610
        %612 = vmatmul.f32.gmra.mxu0 %v501
        %v613 = vpop.f32.mrf.mxu0
        %v614 = vadd.f32 %v416, %v613
        %615 = vmatmul.f32.gmra.mxu0 %v504
        %v616 = vpop.f32.mrf.mxu0
        %v617 = vadd.f32 %v416, %v616
        %618 = vmatmul.f32.gmra.mxu0 %v507
        %v619 = vpop.f32.mrf.mxu0
        %v620 = vadd.f32 %v416, %v619
        %621 = vmatmul.f32.gmra.mxu0 %v510
        %v622 = vpop.f32.mrf.mxu0
        %v623 = vadd.f32 %v416, %v622
        %624 = vmatmul.f32.gmra.mxu0 %v513
        %v625 = vpop.f32.mrf.mxu0
        %v626 = vadd.f32 %v416, %v625
        %627 = vdwg.mxu0
        %v628 = vmax.f32 %v533, 0.0
        %v629 = vmax.f32 %v536, 0.0
        %v630 = vmax.f32 %v539, 0.0
        %v631 = vmax.f32 %v542, 0.0
        %v632 = vmax.f32 %v545, 0.0
        %v633 = vmax.f32 %v548, 0.0
        %v634 = vmax.f32 %v551, 0.0
        %v635 = vmax.f32 %v554, 0.0
        %v636 = vmax.f32 %v557, 0.0
        %v637 = vmax.f32 %v560, 0.0
        %v638 = vmax.f32 %v563, 0.0
        %v639 = vmax.f32 %v566, 0.0
        %v640 = vmax.f32 %v569, 0.0
        %v641 = vmax.f32 %v572, 0.0
        %v642 = vmax.f32 %v575, 0.0
        %v643 = vmax.f32 %v578, 0.0
        %v644 = vmax.f32 %v581, 0.0
        %v645 = vmax.f32 %v584, 0.0
        %v646 = vmax.f32 %v587, 0.0
        %v647 = vmax.f32 %v590, 0.0
        %v648 = vmax.f32 %v593, 0.0
        %v649 = vmax.f32 %v596, 0.0
        %v650 = vmax.f32 %v599, 0.0
        %v651 = vmax.f32 %v602, 0.0
        %v652 = vmax.f32 %v605, 0.0
        %v653 = vmax.f32 %v608, 0.0
        %v654 = vmax.f32 %v611, 0.0
        %v655 = vmax.f32 %v614, 0.0
        %v656 = vmax.f32 %v617, 0.0
        %v657 = vmax.f32 %v620, 0.0
        %v658 = vmax.f32 %v623, 0.0
        %v659 = vmax.f32 %v626, 0.0
        %v660 = vld [vmem:[%s3] sm:$0xff]
        %v661 = vld [vmem:[%s3 + $0x8] sm:$0xff]
        %v662 = vld [vmem:[%s3 + $0x10] sm:$0xff]
        %v663 = vld [vmem:[%s3 + $0x18] sm:$0xff]
        %v664 = vld [vmem:[%s4] sm:$0x1]
        %v666 = vperm.slane %v664, 0
        %v669 = vsel %vm418, %v628, 0
        %v672 = vsel %vm418, %v629, 0
        %v675 = vsel %vm418, %v630, 0
        %v678 = vsel %vm418, %v631, 0
        %v681 = vsel %vm418, %v632, 0
        %v684 = vsel %vm418, %v633, 0
        %v687 = vsel %vm418, %v634, 0
        %v690 = vsel %vm418, %v635, 0
        %v693 = vsel %vm418, %v636, 0
        %v696 = vsel %vm418, %v637, 0
        %v699 = vsel %vm418, %v638, 0
        %v702 = vsel %vm418, %v639, 0
        %v705 = vsel %vm418, %v640, 0
        %v708 = vsel %vm418, %v641, 0
        %v711 = vsel %vm418, %v642, 0
        %v714 = vsel %vm418, %v643, 0
        %v717 = vsel %vm418, %v644, 0
        %v720 = vsel %vm418, %v645, 0
        %v723 = vsel %vm418, %v646, 0
        %v726 = vsel %vm418, %v647, 0
        %v729 = vsel %vm418, %v648, 0
        %v732 = vsel %vm418, %v649, 0
        %v735 = vsel %vm418, %v650, 0
        %v738 = vsel %vm418, %v651, 0
        %v741 = vsel %vm418, %v652, 0
        %v744 = vsel %vm418, %v653, 0
        %v747 = vsel %vm418, %v654, 0
        %v750 = vsel %vm418, %v655, 0
        %v753 = vsel %vm418, %v656, 0
        %v756 = vsel %vm418, %v657, 0
        %v759 = vsel %vm418, %v658, 0
        %v762 = vsel %vm418, %v659, 0
        %764 = vmatpush.msra.mxu0 0.0
        %765 = vmatpush.msra.mxu0 0.0
        %766 = vmatpush.msra.mxu0 0.0
        %767 = vmatpush.msra.mxu0 0.0
        %768 = vmatpush.msra.mxu0 0.0
        %769 = vmatpush.msra.mxu0 0.0
        %770 = vmatpush.msra.mxu0 0.0
        %771 = vmatpush.msra.mxu0 0.0
        %772 = vmatpush.msra.mxu0 0.0
        %773 = vmatpush.msra.mxu0 0.0
        %774 = vmatpush.msra.mxu0 0.0
        %775 = vmatpush.msra.mxu0 0.0
        %776 = vmatpush.msra.mxu0 %v663
        %777 = vmatpush.msra.mxu0 %v662
        %778 = vmatpush.msra.mxu0 %v661
        %779 = vmatpush.msra.mxu0 %v660
        %780 = vmatmul.f32.gmra.mxu0 %v669
        %v781 = vpop.f32.mrf.mxu0
        %v782 = vadd.f32 %v666, %v781
        %783 = vmatmul.f32.gmra.mxu0 %v672
        %v784 = vpop.f32.mrf.mxu0
        %v785 = vadd.f32 %v666, %v784
        %786 = vmatmul.f32.gmra.mxu0 %v675
        %v787 = vpop.f32.mrf.mxu0
        %v788 = vadd.f32 %v666, %v787
        %789 = vmatmul.f32.gmra.mxu0 %v678
        %v790 = vpop.f32.mrf.mxu0
        %v791 = vadd.f32 %v666, %v790
        %792 = vmatmul.f32.gmra.mxu0 %v681
        %v793 = vpop.f32.mrf.mxu0
        %v794 = vadd.f32 %v666, %v793
        %795 = vmatmul.f32.gmra.mxu0 %v684
        %v796 = vpop.f32.mrf.mxu0
        %v797 = vadd.f32 %v666, %v796
        %798 = vmatmul.f32.gmra.mxu0 %v687
        %v799 = vpop.f32.mrf.mxu0
        %v800 = vadd.f32 %v666, %v799
        %801 = vmatmul.f32.gmra.mxu0 %v690
        %v802 = vpop.f32.mrf.mxu0
        %v803 = vadd.f32 %v666, %v802
        %804 = vmatmul.f32.gmra.mxu0 %v693
        %v805 = vpop.f32.mrf.mxu0
        %v806 = vadd.f32 %v666, %v805
        %807 = vmatmul.f32.gmra.mxu0 %v696
        %v808 = vpop.f32.mrf.mxu0
        %v809 = vadd.f32 %v666, %v808
        %810 = vmatmul.f32.gmra.mxu0 %v699
        %v811 = vpop.f32.mrf.mxu0
        %v812 = vadd.f32 %v666, %v811
        %813 = vmatmul.f32.gmra.mxu0 %v702
        %v814 = vpop.f32.mrf.mxu0
        %v815 = vadd.f32 %v666, %v814
        %816 = vmatmul.f32.gmra.mxu0 %v705
        %v817 = vpop.f32.mrf.mxu0
        %v818 = vadd.f32 %v666, %v817
        %819 = vmatmul.f32.gmra.mxu0 %v708
        %v820 = vpop.f32.mrf.mxu0
        %v821 = vadd.f32 %v666, %v820
        %822 = vmatmul.f32.gmra.mxu0 %v711
        %v823 = vpop.f32.mrf.mxu0
        %v824 = vadd.f32 %v666, %v823
        %825 = vmatmul.f32.gmra.mxu0 %v714
        %v826 = vpop.f32.mrf.mxu0
        %v827 = vadd.f32 %v666, %v826
        %828 = vmatmul.f32.gmra.mxu0 %v717
        %v829 = vpop.f32.mrf.mxu0
        %v830 = vadd.f32 %v666, %v829
        %831 = vmatmul.f32.gmra.mxu0 %v720
        %v832 = vpop.f32.mrf.mxu0
        %v833 = vadd.f32 %v666, %v832
        %834 = vmatmul.f32.gmra.mxu0 %v723
        %v835 = vpop.f32.mrf.mxu0
        %v836 = vadd.f32 %v666, %v835
        %837 = vmatmul.f32.gmra.mxu0 %v726
        %v838 = vpop.f32.mrf.mxu0
        %v839 = vadd.f32 %v666, %v838
        %840 = vmatmul.f32.gmra.mxu0 %v729
        %v841 = vpop.f32.mrf.mxu0
        %v842 = vadd.f32 %v666, %v841
        %843 = vmatmul.f32.gmra.mxu0 %v732
        %v844 = vpop.f32.mrf.mxu0
        %v845 = vadd.f32 %v666, %v844
        %846 = vmatmul.f32.gmra.mxu0 %v735
        %v847 = vpop.f32.mrf.mxu0
        %v848 = vadd.f32 %v666, %v847
        %849 = vmatmul.f32.gmra.mxu0 %v738
        %v850 = vpop.f32.mrf.mxu0
        %v851 = vadd.f32 %v666, %v850
        %852 = vmatmul.f32.gmra.mxu0 %v741
        %v853 = vpop.f32.mrf.mxu0
        %v854 = vadd.f32 %v666, %v853
        %855 = vmatmul.f32.gmra.mxu0 %v744
        %v856 = vpop.f32.mrf.mxu0
        %v857 = vadd.f32 %v666, %v856
        %858 = vmatmul.f32.gmra.mxu0 %v747
        %v859 = vpop.f32.mrf.mxu0
        %v860 = vadd.f32 %v666, %v859
        %861 = vmatmul.f32.gmra.mxu0 %v750
        %v862 = vpop.f32.mrf.mxu0
        %v863 = vadd.f32 %v666, %v862
        %864 = vmatmul.f32.gmra.mxu0 %v753
        %v865 = vpop.f32.mrf.mxu0
        %v866 = vadd.f32 %v666, %v865
        %867 = vmatmul.f32.gmra.mxu0 %v756
        %v868 = vpop.f32.mrf.mxu0
        %v869 = vadd.f32 %v666, %v868
        %870 = vmatmul.f32.gmra.mxu0 %v759
        %v871 = vpop.f32.mrf.mxu0
        %v872 = vadd.f32 %v666, %v871
        %873 = vmatmul.f32.gmra.mxu0 %v762
        %v874 = vpop.f32.mrf.mxu0
        %v875 = vadd.f32 %v666, %v874
        %876 = vdwg.mxu0
        %v877 = vsel %vm418, %v782, 0.0
        %v878 = vsel %vm418, %v785, 0.0
        %v879 = vadd.f32 %v877, %v878
        %v880 = vsel %vm418, %v788, 0.0
        %v881 = vadd.f32 %v879, %v880
        %v882 = vsel %vm418, %v791, 0.0
        %v883 = vadd.f32 %v881, %v882
        %v884 = vsel %vm418, %v794, 0.0
        %v885 = vadd.f32 %v883, %v884
        %v886 = vsel %vm418, %v797, 0.0
        %v887 = vadd.f32 %v885, %v886
        %v888 = vsel %vm418, %v800, 0.0
        %v889 = vadd.f32 %v887, %v888
        %v890 = vsel %vm418, %v803, 0.0
        %v891 = vadd.f32 %v889, %v890
        %v892 = vsel %vm418, %v806, 0.0
        %v893 = vadd.f32 %v891, %v892
        %v894 = vsel %vm418, %v809, 0.0
        %v895 = vadd.f32 %v893, %v894
        %v896 = vsel %vm418, %v812, 0.0
        %v897 = vadd.f32 %v895, %v896
        %v898 = vsel %vm418, %v815, 0.0
        %v899 = vadd.f32 %v897, %v898
        %v900 = vsel %vm418, %v818, 0.0
        %v901 = vadd.f32 %v899, %v900
        %v902 = vsel %vm418, %v821, 0.0
        %v903 = vadd.f32 %v901, %v902
        %v904 = vsel %vm418, %v824, 0.0
        %v905 = vadd.f32 %v903, %v904
        %v906 = vsel %vm418, %v827, 0.0
        %v907 = vadd.f32 %v905, %v906
        %v908 = vsel %vm418, %v830, 0.0
        %v909 = vadd.f32 %v907, %v908
        %v910 = vsel %vm418, %v833, 0.0
        %v911 = vadd.f32 %v909, %v910
        %v912 = vsel %vm418, %v836, 0.0
        %v913 = vadd.f32 %v911, %v912
        %v914 = vsel %vm418, %v839, 0.0
        %v915 = vadd.f32 %v913, %v914
        %v916 = vsel %vm418, %v842, 0.0
        %v917 = vadd.f32 %v915, %v916
        %v918 = vsel %vm418, %v845, 0.0
        %v919 = vadd.f32 %v917, %v918
        %v920 = vsel %vm418, %v848, 0.0
        %v921 = vadd.f32 %v919, %v920
        %v922 = vsel %vm418, %v851, 0.0
        %v923 = vadd.f32 %v921, %v922
        %v924 = vsel %vm418, %v854, 0.0
        %v925 = vadd.f32 %v923, %v924
        %v926 = vsel %vm418, %v857, 0.0
        %v927 = vadd.f32 %v925, %v926
        %v928 = vsel %vm418, %v860, 0.0
        %v929 = vadd.f32 %v927, %v928
        %v930 = vsel %vm418, %v863, 0.0
        %v931 = vadd.f32 %v929, %v930
        %v932 = vsel %vm418, %v866, 0.0
        %v933 = vadd.f32 %v931, %v932
        %v934 = vsel %vm418, %v869, 0.0
        %v935 = vadd.f32 %v933, %v934
        %v936 = vsel %vm418, %v872, 0.0
        %v937 = vadd.f32 %v935, %v936
        %v938 = vsel %vm418, %v875, 0.0
        %v939 = vadd.f32 %v937, %v938
        %v940 = vrot.slane %v939, 4
        %v941 = vadd.f32 %v939, %v940
        %v942 = vrot.slane %v941, 2
        %v943 = vadd.f32 %v941, %v942
        %v944 = vrot.slane %v943, 1
        %v945 = vadd.f32 %v943, %v944
        %v946 = vrcp.pop 256.0
        %v947 = vmul.f32 256.0, %v946
        %v948 = vsub.f32 1.0, %v947
        %v949 = vmul.f32 %v946, %v948
        %v950 = vadd.f32 %v946, %v949
        %vm951 = vweird.f32 %v946
        %v952 = vsel %vm951, %v946, %v950
        %v953 = vmul.f32 %v945, %v952
        %v954 = vld [vmem:[%s5] sm:$0xff]
        %v955 = vld [vmem:[%s5 + $0x8] sm:$0xff]
        %v956 = vld [vmem:[%s5 + $0x10] sm:$0xff]
        %v957 = vld [vmem:[%s5 + $0x18] sm:$0xff]
        %v958 = vld [vmem:[%s6] sm:$0x1]
        %v960 = vsel %vm418, %v953, 0
        %962 = vmatpush.msra.mxu0 0.0
        %963 = vmatpush.msra.mxu0 0.0
        %964 = vmatpush.msra.mxu0 0.0
        %965 = vmatpush.msra.mxu0 0.0
        %966 = vmatpush.msra.mxu0 0.0
        %967 = vmatpush.msra.mxu0 0.0
        %968 = vmatpush.msra.mxu0 0.0
        %969 = vmatpush.msra.mxu0 0.0
        %970 = vmatpush.msra.mxu0 0.0
        %971 = vmatpush.msra.mxu0 0.0
        %972 = vmatpush.msra.mxu0 0.0
        %973 = vmatpush.msra.mxu0 0.0
        %974 = vmatpush.msra.mxu0 %v957
        %975 = vmatpush.msra.mxu0 %v956
        %976 = vmatpush.msra.mxu0 %v955
        %977 = vmatpush.msra.mxu0 %v954
        %978 = vmatmul.f32.gmra.mxu0 %v960
        %v979 = vpop.f32.mrf.mxu0
        %v980 = vadd.f32 %v958, %v979
        %981 = vdwg.mxu0
        %v982 = vmax.f32 %v980, 0.0
        %v983 = vld [vmem:[%s7] sm:$0xff]
        %v984 = vld [vmem:[%s8] sm:$0x1]
        %vm985 = vcmask 64512
        %v987 = vsel %vm985, %v982, 0
        %989 = vmatpush.msra.mxu0 0.0
        %990 = vmatpush.msra.mxu0 0.0
        %991 = vmatpush.msra.mxu0 0.0
        %992 = vmatpush.msra.mxu0 0.0
        %993 = vmatpush.msra.mxu0 0.0
        %994 = vmatpush.msra.mxu0 0.0
        %995 = vmatpush.msra.mxu0 0.0
        %996 = vmatpush.msra.mxu0 0.0
        %997 = vmatpush.msra.mxu0 0.0
        %998 = vmatpush.msra.mxu0 0.0
        %999 = vmatpush.msra.mxu0 0.0
        %1000 = vmatpush.msra.mxu0 0.0
        %1001 = vmatpush.msra.mxu0 0.0
        %1002 = vmatpush.msra.mxu0 0.0
        %1003 = vmatpush.msra.mxu0 0.0
        %1004 = vmatpush.msra.mxu0 %v983
        %1005 = vmatmul.f32.gmra.mxu0 %v987
        %v1006 = vpop.f32.mrf.mxu0
        %v1007 = vadd.f32 %v984, %v1006
        %1008 = vdwg.mxu0
        %v1009 = vxor.u32 %v1007, 2147483648
        %v1010 = vmul.f32 %v1009, 1.442695
        %v1011 = vpow.pop %v1010
        %v1012 = vadd.f32 %v1011, 1.0
        %v1013 = vrcp.pop %v1012
        %v1014 = vmul.f32 %v1012, %v1013
        %v1015 = vsub.f32 1.0, %v1014
        %v1016 = vmul.f32 %v1013, %v1015
        %v1017 = vadd.f32 %v1013, %v1016
        %vm1018 = vweird.f32 %v1012
        %vm1019 = vweird.f32 %v1013
        %vm1020 = vmor %vm1018, %vm1019
        %v1021 = vsel %vm1020, %v1013, %v1017
        %v1022 = vand.u32 2147483647, %v1012
        %vm1023 = vcmp.eq.f32.partialorder %v1022, 8.507059e+37
        %v1024 = vand.u32 %v1012, 2147483648
        %v1025 = vor.u32 1.1754944e-38, %v1024
        %v1026 = vsel %vm1023, %v1025, %v1021
        %v1027 = vmul.f32 1.0, %v1026
        %v1028 = vperm.slane %v1027, 0
        %v1029 = vmul.f32 %v782, %v1028
        %v1030 = vmul.f32 %v785, %v1028
        %v1031 = vmul.f32 %v788, %v1028
        %v1032 = vmul.f32 %v791, %v1028
        %v1033 = vmul.f32 %v794, %v1028
        %v1034 = vmul.f32 %v797, %v1028
        %v1035 = vmul.f32 %v800, %v1028
        %v1036 = vmul.f32 %v803, %v1028
        %v1037 = vmul.f32 %v806, %v1028
        %v1038 = vmul.f32 %v809, %v1028
        %v1039 = vmul.f32 %v812, %v1028
        %v1040 = vmul.f32 %v815, %v1028
        %v1041 = vmul.f32 %v818, %v1028
        %v1042 = vmul.f32 %v821, %v1028
        %v1043 = vmul.f32 %v824, %v1028
        %v1044 = vmul.f32 %v827, %v1028
        %v1045 = vmul.f32 %v830, %v1028
        %v1046 = vmul.f32 %v833, %v1028
        %v1047 = vmul.f32 %v836, %v1028
        %v1048 = vmul.f32 %v839, %v1028
        %v1049 = vmul.f32 %v842, %v1028
        %v1050 = vmul.f32 %v845, %v1028
        %v1051 = vmul.f32 %v848, %v1028
        %v1052 = vmul.f32 %v851, %v1028
        %v1053 = vmul.f32 %v854, %v1028
        %v1054 = vmul.f32 %v857, %v1028
        %v1055 = vmul.f32 %v860, %v1028
        %v1056 = vmul.f32 %v863, %v1028
        %v1057 = vmul.f32 %v866, %v1028
        %v1058 = vmul.f32 %v869, %v1028
        %v1059 = vmul.f32 %v872, %v1028
        %v1060 = vmul.f32 %v875, %v1028
        %v1061 = vadd.f32 %v378, %v1029
        %v1062 = vadd.f32 %v379, %v1030
        %v1063 = vadd.f32 %v380, %v1031
        %v1064 = vadd.f32 %v381, %v1032
        %v1065 = vadd.f32 %v382, %v1033
        %v1066 = vadd.f32 %v383, %v1034
        %v1067 = vadd.f32 %v384, %v1035
        %v1068 = vadd.f32 %v385, %v1036
        %v1069 = vadd.f32 %v386, %v1037
        %v1070 = vadd.f32 %v387, %v1038
        %v1071 = vadd.f32 %v388, %v1039
        %v1072 = vadd.f32 %v389, %v1040
        %v1073 = vadd.f32 %v390, %v1041
        %v1074 = vadd.f32 %v391, %v1042
        %v1075 = vadd.f32 %v392, %v1043
        %v1076 = vadd.f32 %v393, %v1044
        %v1077 = vadd.f32 %v394, %v1045
        %v1078 = vadd.f32 %v395, %v1046
        %v1079 = vadd.f32 %v396, %v1047
        %v1080 = vadd.f32 %v397, %v1048
        %v1081 = vadd.f32 %v398, %v1049
        %v1082 = vadd.f32 %v399, %v1050
        %v1083 = vadd.f32 %v400, %v1051
        %v1084 = vadd.f32 %v401, %v1052
        %v1085 = vadd.f32 %v402, %v1053
        %v1086 = vadd.f32 %v403, %v1054
        %v1087 = vadd.f32 %v404, %v1055
        %v1088 = vadd.f32 %v405, %v1056
        %v1089 = vadd.f32 %v406, %v1057
        %v1090 = vadd.f32 %v407, %v1058
        %v1091 = vadd.f32 %v408, %v1059
        %v1092 = vadd.f32 %v409, %v1060
        %v1093 = vld [vmem:[%s377] sm:$0xff]
        %v1094 = vld [vmem:[%s377 + $0x8] sm:$0xff]
        %v1095 = vld [vmem:[%s377 + $0x10] sm:$0xff]
        %v1096 = vld [vmem:[%s377 + $0x18] sm:$0xff]
        %v1097 = vld [vmem:[%s377 + $0x20] sm:$0xff]
        %v1098 = vld [vmem:[%s377 + $0x28] sm:$0xff]
        %v1099 = vld [vmem:[%s377 + $0x30] sm:$0xff]
        %v1100 = vld [vmem:[%s377 + $0x38] sm:$0xff]
        %v1101 = vld [vmem:[%s377 + $0x40] sm:$0xff]
        %v1102 = vld [vmem:[%s377 + $0x48] sm:$0xff]
        %v1103 = vld [vmem:[%s377 + $0x50] sm:$0xff]
        %v1104 = vld [vmem:[%s377 + $0x58] sm:$0xff]
        %v1105 = vld [vmem:[%s377 + $0x60] sm:$0xff]
        %v1106 = vld [vmem:[%s377 + $0x68] sm:$0xff]
        %v1107 = vld [vmem:[%s377 + $0x70] sm:$0xff]
        %v1108 = vld [vmem:[%s377 + $0x78] sm:$0xff]
        %v1109 = vld [vmem:[%s377 + $0x80] sm:$0xff]
        %v1110 = vld [vmem:[%s377 + $0x88] sm:$0xff]
        %v1111 = vld [vmem:[%s377 + $0x90] sm:$0xff]
        %v1112 = vld [vmem:[%s377 + $0x98] sm:$0xff]
        %v1113 = vld [vmem:[%s377 + $0xa0] sm:$0xff]
        %v1114 = vld [vmem:[%s377 + $0xa8] sm:$0xff]
        %v1115 = vld [vmem:[%s377 + $0xb0] sm:$0xff]
        %v1116 = vld [vmem:[%s377 + $0xb8] sm:$0xff]
        %v1117 = vld [vmem:[%s377 + $0xc0] sm:$0xff]
        %v1118 = vld [vmem:[%s377 + $0xc8] sm:$0xff]
        %v1119 = vld [vmem:[%s377 + $0xd0] sm:$0xff]
        %v1120 = vld [vmem:[%s377 + $0xd8] sm:$0xff]
        %v1121 = vld [vmem:[%s377 + $0xe0] sm:$0xff]
        %v1122 = vld [vmem:[%s377 + $0xe8] sm:$0xff]
        %v1123 = vld [vmem:[%s377 + $0xf0] sm:$0xff]
        %v1124 = vld [vmem:[%s377 + $0xf8] sm:$0xff]
        %v1125 = vadd.f32 %v1061, %v1093
        %v1126 = vadd.f32 %v1062, %v1094
        %v1127 = vadd.f32 %v1063, %v1095
        %v1128 = vadd.f32 %v1064, %v1096
        %v1129 = vadd.f32 %v1065, %v1097
        %v1130 = vadd.f32 %v1066, %v1098
        %v1131 = vadd.f32 %v1067, %v1099
        %v1132 = vadd.f32 %v1068, %v1100
        %v1133 = vadd.f32 %v1069, %v1101
        %v1134 = vadd.f32 %v1070, %v1102
        %v1135 = vadd.f32 %v1071, %v1103
        %v1136 = vadd.f32 %v1072, %v1104
        %v1137 = vadd.f32 %v1073, %v1105
        %v1138 = vadd.f32 %v1074, %v1106
        %v1139 = vadd.f32 %v1075, %v1107
        %v1140 = vadd.f32 %v1076, %v1108
        %v1141 = vadd.f32 %v1077, %v1109
        %v1142 = vadd.f32 %v1078, %v1110
        %v1143 = vadd.f32 %v1079, %v1111
        %v1144 = vadd.f32 %v1080, %v1112
        %v1145 = vadd.f32 %v1081, %v1113
        %v1146 = vadd.f32 %v1082, %v1114
        %v1147 = vadd.f32 %v1083, %v1115
        %v1148 = vadd.f32 %v1084, %v1116
        %v1149 = vadd.f32 %v1085, %v1117
        %v1150 = vadd.f32 %v1086, %v1118
        %v1151 = vadd.f32 %v1087, %v1119
        %v1152 = vadd.f32 %v1088, %v1120
        %v1153 = vadd.f32 %v1089, %v1121
        %v1154 = vadd.f32 %v1090, %v1122
        %v1155 = vadd.f32 %v1091, %v1123
        %v1156 = vadd.f32 %v1092, %v1124
        %1157 = vst.msk [vmem:[%s367] sm:$0xff] %vm418, %v1125
        %1158 = vst.msk [vmem:[%s367 + $0x8] sm:$0xff] %vm418, %v1126
        %1159 = vst.msk [vmem:[%s367 + $0x10] sm:$0xff] %vm418, %v1127
        %1160 = vst.msk [vmem:[%s367 + $0x18] sm:$0xff] %vm418, %v1128
        %1161 = vst.msk [vmem:[%s367 + $0x20] sm:$0xff] %vm418, %v1129
        %1162 = vst.msk [vmem:[%s367 + $0x28] sm:$0xff] %vm418, %v1130
        %1163 = vst.msk [vmem:[%s367 + $0x30] sm:$0xff] %vm418, %v1131
        %1164 = vst.msk [vmem:[%s367 + $0x38] sm:$0xff] %vm418, %v1132
        %1165 = vst.msk [vmem:[%s367 + $0x40] sm:$0xff] %vm418, %v1133
        %1166 = vst.msk [vmem:[%s367 + $0x48] sm:$0xff] %vm418, %v1134
        %1167 = vst.msk [vmem:[%s367 + $0x50] sm:$0xff] %vm418, %v1135
        %1168 = vst.msk [vmem:[%s367 + $0x58] sm:$0xff] %vm418, %v1136
        %1169 = vst.msk [vmem:[%s367 + $0x60] sm:$0xff] %vm418, %v1137
        %1170 = vst.msk [vmem:[%s367 + $0x68] sm:$0xff] %vm418, %v1138
        %1171 = vst.msk [vmem:[%s367 + $0x70] sm:$0xff] %vm418, %v1139
        %1172 = vst.msk [vmem:[%s367 + $0x78] sm:$0xff] %vm418, %v1140
        %1173 = vst.msk [vmem:[%s367 + $0x80] sm:$0xff] %vm418, %v1141
        %1174 = vst.msk [vmem:[%s367 + $0x88] sm:$0xff] %vm418, %v1142
        %1175 = vst.msk [vmem:[%s367 + $0x90] sm:$0xff] %vm418, %v1143
        %1176 = vst.msk [vmem:[%s367 + $0x98] sm:$0xff] %vm418, %v1144
        %1177 = vst.msk [vmem:[%s367 + $0xa0] sm:$0xff] %vm418, %v1145
        %1178 = vst.msk [vmem:[%s367 + $0xa8] sm:$0xff] %vm418, %v1146
        %1179 = vst.msk [vmem:[%s367 + $0xb0] sm:$0xff] %vm418, %v1147
        %1180 = vst.msk [vmem:[%s367 + $0xb8] sm:$0xff] %vm418, %v1148
        %1181 = vst.msk [vmem:[%s367 + $0xc0] sm:$0xff] %vm418, %v1149
        %1182 = vst.msk [vmem:[%s367 + $0xc8] sm:$0xff] %vm418, %v1150
        %1183 = vst.msk [vmem:[%s367 + $0xd0] sm:$0xff] %vm418, %v1151
        %1184 = vst.msk [vmem:[%s367 + $0xd8] sm:$0xff] %vm418, %v1152
        %1185 = vst.msk [vmem:[%s367 + $0xe0] sm:$0xff] %vm418, %v1153
        %1186 = vst.msk [vmem:[%s367 + $0xe8] sm:$0xff] %vm418, %v1154
        %1187 = vst.msk [vmem:[%s367 + $0xf0] sm:$0xff] %vm418, %v1155
        %1188 = vst.msk [vmem:[%s367 + $0xf8] sm:$0xff] %vm418, %v1156
        %s1189 = sand.u32 %s252, 1
        %s1190 = scalar_lea.sflag [#allocation3], %s1189
        %s1191 = sand.u32 %s252, 1
        %s1192 = smul.addr %s1191, 256
        %s1193 = scalar_lea.vmem [#allocation2], %s1192
        // Predicated region
        $region61: #{decoder_forward.13} parent=59 // pred_check
          %p1194 = pneg %p262
        $region62: #{decoder_forward.13} parent=59 // pred_check_branch
          %1196 = sbr.rel (%p1194) target = $region64
        $region63: #{decoder_forward.13} parent=59 // pred_region
          %1198 = vsyncadd %s1190, 0
          %s1199 = smul.addr %s24, 32
          %s1200 = smul.addr %s1199, 8
          %s1201 = scalar_lea.hbm %s10, %s1200
          %s1202 = sshll.u32 %s1193, 4
          %s1203 = int_to_ptr.vmem [resolvable:$true] %s1202
          %s1204 = sshll.u32 %s1201, 4
          %s1205 = int_to_ptr.hbm [resolvable:$true] %s1204
          %1210 = dma.vmem_to_hbm [thread:$0]  %s1203, 4096, %s1205, %s1190, 128, 128, 8
        $region64: #{decoder_forward.13} parent=59 // pred_fallthru
          _
      $region60: #{decoder_forward.13} parent=5 // pred_fallthru
        _
      %p1211 = scmp.le.s32.totalorder 2, %s19
      // Predicated region
      $region65: #{decoder_forward.13} parent=5 // pred_check
        %p1212 = pneg %p1211
      $region66: #{decoder_forward.13} parent=5 // pred_check_branch
        %1214 = sbr.rel (%p1212) target = $region68
      $region67: #{decoder_forward.13} parent=5 // pred_region
        %s1215 = ssub.s32 %s19, 2
        // Predicated region
        $region69: #{decoder_forward.13} parent=67 // pred_check
          %p1216 = pneg %p268
        $region70: #{decoder_forward.13} parent=67 // pred_check_branch
          %1218 = sbr.rel (%p1216) target = $region72
        $region71: #{decoder_forward.13} parent=67 // pred_region
          %s1219 = sand.u32 %s253, 1
          %s1220 = scalar_lea.sflag [#allocation3], %s1219
          %s1221 = sand.u32 %s253, 1
          %s1222 = smul.addr %s1221, 256
          %s1223 = scalar_lea.vmem [#allocation2], %s1222
          %1225 = dma.done %s1220, 4096
        $region72: #{decoder_forward.13} parent=67 // pred_fallthru
          _
      $region68: #{decoder_forward.13} parent=5 // pred_fallthru
        _
    $region6: #{decoder_forward.13} parent=1 // loop_footer
      %s23 = sadd.s32 1, %s19
    $region7: #{decoder_forward.13} parent=1 // loop_footer_branch
      %18 = sbr.rel target = $region3
    $region8: #{decoder_forward.13} parent=1 // loop_exit
      _
    %1226 = vsyncpa [#allocation3], 1
    %s1227 = scalar_lea.sflag [#allocation3], 1
    %1228 = vsyncpa %s1227, 1

</llo_original>
